<compile_context>
chip_gen: v6e
topology: v6e:2x2x1
jax: 0.10.0
libtpu: 0.0.40
codegen_flags: <defaults>
</compile_context>

<pallas_src>
import math

import jax
import jax.numpy as jnp
from jax.experimental import pallas as pl
from jax.experimental.pallas import tpu as pltpu

_BN_EPS = 1e-5
_MXU_DTYPE = jnp.bfloat16   # MXU operand dtype (accumulation is always f32)
_ACT_DTYPE = jnp.bfloat16   # inter-layer activation storage dtype


def _full_spec(shape):
    zeros = (0,) * len(shape)
    return pl.BlockSpec(shape, lambda i, _z=zeros: _z)


# ----------------------------------------------------------------------------
# Fused matmul + train-mode BatchNorm + activation kernel
# (used for the 3 stride-2 encoder convs and the 3 phase-decomposed deconvs)
#   y_ph  = patches[ph] @ w[ph]                       (MXU, f32 accumulate)
#   out   = act( (y - mean) * gamma*rsqrt(var+eps) + beta )
# ----------------------------------------------------------------------------
def _make_matmul_bn_act_kernel(n_phase, act, use_bn, inv_m):
    def kernel(*refs):
        p_ref, w_ref = refs[0], refs[1]
        if use_bn:
            g_ref, b_ref, o_ref = refs[2], refs[3], refs[4]
        else:
            o_ref = refs[2]

        ys = [jnp.dot(p_ref[ph], w_ref[ph], preferred_element_type=jnp.float32)
              for ph in range(n_phase)]

        if use_bn:
            # Two-pass (centered) biased variance over all P*M output pixels.
            mean = sum(jnp.sum(y, axis=0, keepdims=True) for y in ys) * inv_m
            ds = [y - mean for y in ys]
            var = sum(jnp.sum(d * d, axis=0, keepdims=True) for d in ds) * inv_m
            scale = g_ref[...] * jax.lax.rsqrt(var + _BN_EPS)
            outs = [d * scale + b_ref[...] for d in ds]
        else:
            outs = ys

        for ph in range(n_phase):
            o = outs[ph]
            if act == "relu":
                o = jnp.maximum(o, 0.0)
            elif act == "tanh":
                o = jnp.tanh(o)
            o_ref[ph] = o.astype(o_ref.dtype)

    return kernel


def _fused_matmul_layer(patches, w, gamma, beta, act, use_bn, out_dtype):
    """patches: (P, M, K); w: (P, K, Co)  ->  (P, M, Co) in out_dtype."""
    P, M, _ = patches.shape
    Co = w.shape[-1]
    args = [patches, w]
    if use_bn:
        args += [gamma, beta]
    in_specs = [_full_spec(a.shape) for a in args]
    return pl.pallas_call(
        _make_matmul_bn_act_kernel(P, act, use_bn, 1.0 / (P * M)),
        out_shape=jax.ShapeDtypeStruct((P, M, Co), out_dtype),
        grid=(1,),
        in_specs=in_specs,
        out_specs=_full_spec((P, M, Co)),
        compiler_params=pltpu.CompilerParams(
            dimension_semantics=("arbitrary",)),
    )(*args)


# ----------------------------------------------------------------------------
# Residual trunk: ONE kernel for all residual blocks.
# Activations live as 1-padded rasters (rows = padded pixels, lanes = channels)
# in VMEM; each 3x3 stride-1 conv is 9 shifted contiguous row-slice matmuls.
# ----------------------------------------------------------------------------
def _make_res_chain_kernel(n_blocks, N, H, W, C):
    Hp, Wp = H + 2, W + 2
    HpWp = Hp * Wp
    R = N * HpWp
    Mg = R - (2 * Wp + 2)          # rows of the shifted-slice output grid
    shift = Wp + 1                 # output-grid row q  <->  raster row q+shift
    inv_m = 1.0 / (N * H * W)      # BN statistics over the valid pixels only

    def kernel(h_ref, w1_ref, g1_ref, b1_ref, w2_ref, g2_ref, b2_ref,
               mask_ref, o_ref, xt_ref):
        # ---- place the incoming activation into the 1-padded raster --------
        o_ref[...] = jnp.zeros_like(o_ref)
        for n in range(N):
            for oy in range(H):
                dst = n * HpWp + (oy + 1) * Wp + 1
                src = (n * H + oy) * W
                o_ref[dst:dst + W, :] = h_ref[src:src + W, :]

        mask = mask_ref[...]                           # (Mg, 1) validity mask

        def conv3x3(x_ref, w_ref, blk):
            acc = jnp.zeros((Mg, C), jnp.float32)
            for dy in range(3):
                for dx in range(3):
                    d = dy * Wp + dx
                    lhs = x_ref[d:d + Mg, :].astype(_MXU_DTYPE)
                    acc = acc + jnp.dot(lhs, w_ref[blk, dy * 3 + dx],
                                        preferred_element_type=jnp.float32)
            return acc

        def bn(acc, g, b):
            # Masked (valid-row) biased statistics, two-pass centered variance.
            mean = jnp.sum(acc * mask, axis=0, keepdims=True) * inv_m
            d = acc - mean
            var = jnp.sum(d * d * mask, axis=0, keepdims=True) * inv_m
            return d * (g * jax.lax.rsqrt(var + _BN_EPS)) + b

        for blk in range(n_blocks):
            # conv1 -> BN -> ReLU, masked, placed into the intermediate raster.
            a1 = conv3x3(o_ref, w1_ref, blk)
            t1 = jnp.maximum(bn(a1, g1_ref[blk], b1_ref[blk]), 0.0) * mask
            xt_ref[...] = jnp.zeros_like(xt_ref)
            xt_ref[shift:shift + Mg, :] = t1
            # conv2 -> BN, masked, residual-added in place into the raster.
            a2 = conv3x3(xt_ref, w2_ref, blk)
            r2 = bn(a2, g2_ref[blk], b2_ref[blk]) * mask
            o_ref[shift:shift + Mg, :] = o_ref[shift:shift + Mg, :] + r2

    return kernel


def res_chain(h, rp):
    """h: (N, H, W, C) NHWC.  Returns the trunk output as its spatially
    1-padded raster (N, H+2, W+2, C) f32 (exactly what the next deconv needs)."""
    N, H, W, C = h.shape
    B = rp["w1"].shape[0]
    Hp, Wp = H + 2, W + 2
    R = N * Hp * Wp
    # The raster / residual stream is kept in f32 (cheap at this size; avoids
    # packed-bf16 unaligned sublane slicing and keeps the residual sum exact).
    h_rows = h.reshape(N * H * W, C).astype(jnp.float32)
    args = [h_rows, rp["w1"], rp["g1"], rp["b1"],
            rp["w2"], rp["g2"], rp["b2"], rp["mask"]]
    out = pl.pallas_call(
        _make_res_chain_kernel(B, N, H, W, C),
        out_shape=jax.ShapeDtypeStruct((R, C), jnp.float32),
        grid=(1,),
        in_specs=[_full_spec(a.shape) for a in args],
        out_specs=_full_spec((R, C)),
        scratch_shapes=[pltpu.VMEM((R, C), jnp.float32)],
        compiler_params=pltpu.CompilerParams(
            dimension_semantics=("arbitrary",)),
    )(*args)
    return out.reshape(N, Hp, Wp, C)


# ----------------------------------------------------------------------------
# Layer wrappers (NHWC everywhere; im2col / phase split of the stride-2 layers
# stays as XLA glue, compute is in the fused kernels)
# ----------------------------------------------------------------------------
def conv_layer(x, lp, k, stride, padding, act):
    """x: NHWC; lp: prepared {'w': (1, k*k*Cin, Co) bf16, 'g'/'b': (1, Co) f32}."""
    N, H, W, _ = x.shape
    Co = lp["w"].shape[-1]
    Ho = (H + 2 * padding - k) // stride + 1
    Wo = (W + 2 * padding - k) // stride + 1
    xp = jnp.pad(x, ((0, 0), (padding, padding), (padding, padding), (0, 0)))
    cols = [xp[:, i:i + stride * Ho:stride, j:j + stride * Wo:stride, :]
            for i in range(k) for j in range(k)]
    patches = jnp.concatenate(cols, axis=-1).reshape(
        1, N * Ho * Wo, k * k * x.shape[-1]).astype(_MXU_DTYPE)
    out = _fused_matmul_layer(patches, lp["w"], lp["g"], lp["b"],
                              act, True, _ACT_DTYPE)
    return out.reshape(N, Ho, Wo, Co)


def deconv_layer(xp, lp, act, use_bn, out_dtype=_ACT_DTYPE):
    """ConvTranspose2d(k=4, stride=2, pad=1) via 2x2-phase decomposition.
    xp: ALREADY spatially 1-padded NHWC input (N, H+2, W+2, Cin).
    lp['w']: (4, 4*Cin, Co) phase/tap-stacked weight.  Returns (N, 2H, 2W, Co)."""
    N, Hp2, Wp2, Cin = xp.shape
    H, W = Hp2 - 2, Wp2 - 2
    Co = lp["w"].shape[-1]
    patch_ph = []
    for py in range(2):
        for px in range(2):
            cols = [xp[:, py + dy:py + dy + H, px + dx:px + dx + W, :]
                    for dy in range(2) for dx in range(2)]
            patch_ph.append(jnp.concatenate(cols, axis=-1)
                            .reshape(N * H * W, 4 * Cin))
    patches = jnp.stack(patch_ph, axis=0).astype(_MXU_DTYPE)   # (4, N*H*W, 4Cin)
    g = lp["g"] if use_bn else None
    b = lp["b"] if use_bn else None
    out = _fused_matmul_layer(patches, lp["w"], g, b, act, use_bn, out_dtype)
    out = out.reshape(2, 2, N, H, W, Co).transpose(2, 3, 0, 4, 1, 5)
    return out.reshape(N, 2 * H, 2 * W, Co)


# ----------------------------------------------------------------------------
# One-time parameter preparation (kept OUT of the jitted forward pass)
# ----------------------------------------------------------------------------
def _prep_conv_w(w):            # (Co, Cin, kh, kw) -> (1, kh*kw*Cin, Co) bf16
    Co, Cin, kh, kw = w.shape
    return (jnp.transpose(w, (2, 3, 1, 0))
            .reshape(1, kh * kw * Cin, Co).astype(_MXU_DTYPE))


def _prep_res_w(w):             # (Co, Cin, 3, 3) -> (9, Cin, Co) bf16
    Co, Cin, kh, kw = w.shape
    return (jnp.transpose(w, (2, 3, 1, 0))
            .reshape(kh * kw, Cin, Co).astype(_MXU_DTYPE))


def _prep_deconv_w(w_t):        # (Cin, Co, 4, 4) -> (4, 4*Cin, Co) bf16
    Cin, Co, _, _ = w_t.shape
    phases = []
    for py in range(2):
        for px in range(2):
            taps = [w_t[:, :, 3 - py - 2 * dy, 3 - px - 2 * dx]
                    for dy in range(2) for dx in range(2)]
            phases.append(jnp.stack(taps, axis=0).reshape(4 * Cin, Co))
    return jnp.stack(phases, axis=0).astype(_MXU_DTYPE)


def _res_valid_mask(N, H, W):
    Hp, Wp = H + 2, W + 2
    HpWp = Hp * Wp
    Mg = N * HpWp - (2 * Wp + 2)
    q = jnp.arange(Mg)
    r = (q % HpWp) // Wp
    c = q % Wp
    return ((r < H) & (c < W)).astype(jnp.float32).reshape(Mg, 1)


def prepare_params(params, input_shape):
    """Convert PyTorch-layout params to kernel-ready operands once."""
    N, _, H, W = input_shape
    f32 = jnp.float32
    prep = {
        "l1": {"w": _prep_conv_w(params["w1"]),
               "g": params["g1"].astype(f32), "b": params["b1"].astype(f32)},
        "l2": {"w": _prep_conv_w(params["w2"]),
               "g": params["g2"].astype(f32), "b": params["b2"].astype(f32)},
        "l3": {"w": _prep_conv_w(params["w3"]),
               "g": params["g3"].astype(f32), "b": params["b3"].astype(f32)},
        "l4": {"w": _prep_deconv_w(params["w4"]),
               "g": params["g4"].astype(f32), "b": params["b4"].astype(f32)},
        "l5": {"w": _prep_deconv_w(params["w5"]),
               "g": params["g5"].astype(f32), "b": params["b5"].astype(f32)},
        "l6": {"w": _prep_deconv_w(params["w6"])},
        "res": None,
    }
    if params["res"]:
        Hr, Wr = H // 8, W // 8          # spatial size after 3 stride-2 convs
        prep["res"] = {
            "w1": jnp.stack([_prep_res_w(rp["w1"]) for rp in params["res"]]),
            "g1": jnp.stack([rp["g1"].astype(f32) for rp in params["res"]]),
            "b1": jnp.stack([rp["b1"].astype(f32) for rp in params["res"]]),
            "w2": jnp.stack([_prep_res_w(rp["w2"]) for rp in params["res"]]),
            "g2": jnp.stack([rp["g2"].astype(f32) for rp in params["res"]]),
            "b2": jnp.stack([rp["b2"].astype(f32) for rp in params["res"]]),
            "mask": _res_valid_mask(N, Hr, Wr),
        }
    return prep


# ----------------------------------------------------------------------------
# CycleGenerator parameters + forward
# ----------------------------------------------------------------------------
def _winit(key, shape):
    fan_in = shape[1] * shape[2] * shape[3]
    bound = 1.0 / math.sqrt(fan_in)
    return jax.random.uniform(key, shape, jnp.float32, -bound, bound)


def init_params(key, conv_dim=8, n_res_blocks=2):
    cd = conv_dim
    keys = iter(jax.random.split(key, 6 + 2 * n_res_blocks))
    ones = lambda c: jnp.ones((1, c), jnp.float32)
    zeros = lambda c: jnp.zeros((1, c), jnp.float32)
    p = {
        "w1": _winit(next(keys), (cd, 3, 4, 4)), "g1": ones(cd), "b1": zeros(cd),
        "w2": _winit(next(keys), (cd * 2, cd, 4, 4)),
        "g2": ones(cd * 2), "b2": zeros(cd * 2),
        "w3": _winit(next(keys), (cd * 4, cd * 2, 4, 4)),
        "g3": ones(cd * 4), "b3": zeros(cd * 4),
        "res": [],
        # ConvTranspose2d weights are (Cin, Cout, kh, kw); bias=False per spec.
        "w4": _winit(next(keys), (cd * 4, cd * 2, 4, 4)),
        "g4": ones(cd * 2), "b4": zeros(cd * 2),
        "w5": _winit(next(keys), (cd * 2, cd, 4, 4)),
        "g5": ones(cd), "b5": zeros(cd),
        "w6": _winit(next(keys), (cd, 3, 4, 4)),
    }
    for _ in range(n_res_blocks):
        p["res"].append({
            "w1": _winit(next(keys), (cd * 4, cd * 4, 3, 3)),
            "g1": ones(cd * 4), "b1": zeros(cd * 4),
            "w2": _winit(next(keys), (cd * 4, cd * 4, 3, 3)),
            "g2": ones(cd * 4), "b2": zeros(cd * 4),
        })
    return p


def cycle_generator_forward(prep, x):
    # NCHW -> NHWC once; stay NHWC between layers; back to NCHW at the end.
    h = jnp.transpose(x, (0, 2, 3, 1)).astype(_ACT_DTYPE)
    h = conv_layer(h, prep["l1"], 4, 2, 1, "relu")
    h = conv_layer(h, prep["l2"], 4, 2, 1, "relu")
    h = conv_layer(h, prep["l3"], 4, 2, 1, "relu")
    if prep["res"] is not None:
        hp = res_chain(h, prep["res"])     # whole trunk in one kernel; output
    else:                                  # is already 1-padded for layer 4
        hp = jnp.pad(h, ((0, 0), (1, 1), (1, 1), (0, 0)))
    h = deconv_layer(hp, prep["l4"], "relu", True)
    h = deconv_layer(jnp.pad(h, ((0, 0), (1, 1), (1, 1), (0, 0))),
                     prep["l5"], "relu", True)
    h = deconv_layer(jnp.pad(h, ((0, 0), (1, 1), (1, 1), (0, 0))),
                     prep["l6"], "tanh", False, out_dtype=jnp.float32)
    return jnp.transpose(h, (0, 3, 1, 2))


if __name__ == "__main__":
    key = jax.random.PRNGKey(0)
    kx, kp = jax.random.split(key)
    # small shapes: batch=2, 3-channel 16x16 image, conv_dim=8, 2 res blocks
    x = jax.random.normal(kx, (2, 3, 16, 16), jnp.float32)
    params = init_params(kp, conv_dim=8, n_res_blocks=2)
    prep = prepare_params(params, x.shape)          # one-time weight prep

    fwd = jax.jit(cycle_generator_forward)
    out = jax.block_until_ready(fwd(prep, x))

    assert out.shape == (2, 3, 16, 16), out.shape
    assert bool(jnp.all(jnp.isfinite(out)))
    assert bool(jnp.all(jnp.abs(out) <= 1.0 + 1e-6))   # tanh range
    print("KERNEL_OK")
</pallas_src>

<mosaic_0001>
module attributes {stable_mosaic.version = 11 : i64} {
  func.func @kernel(%arg0: i32, %arg1: memref<1x128x48xbf16, #tpu.memory_space<vmem>>, %arg2: memref<1x48x8xbf16, #tpu.memory_space<vmem>>, %arg3: memref<1x8xf32, #tpu.memory_space<vmem>>, %arg4: memref<1x8xf32, #tpu.memory_space<vmem>>, %arg5: memref<1x128x8xbf16, #tpu.memory_space<vmem>>) attributes {dimension_semantics = [#tpu.dimension_semantics<arbitrary>], iteration_bounds = array<i64: 1>, scalar_prefetch = 0 : i64, scratch_operands = 0 : i64, tpu.core_type = #tpu.core_type<tc>, window_params = [{pipeline_mode = #tpu.pipeline_mode<synchronous>, transform_indices = @transform_0, window_bounds = array<i64: 1, 128, 48>}, {pipeline_mode = #tpu.pipeline_mode<synchronous>, transform_indices = @transform_1, window_bounds = array<i64: 1, 48, 8>}, {pipeline_mode = #tpu.pipeline_mode<synchronous>, transform_indices = @transform_2, window_bounds = array<i64: 1, 8>}, {pipeline_mode = #tpu.pipeline_mode<synchronous>, transform_indices = @transform_3, window_bounds = array<i64: 1, 8>}, {pipeline_mode = #tpu.pipeline_mode<synchronous>, transform_indices = @transform_4, window_bounds = array<i64: 1, 128, 8>}]} {
    %c0 = arith.constant 0 : index
    %c0_0 = arith.constant 0 : index
    %c0_1 = arith.constant 0 : index
    %0 = vector.load %arg1[%c0, %c0_0, %c0_1] : memref<1x128x48xbf16, #tpu.memory_space<vmem>>, vector<1x128x48xbf16>
    %1 = vector.shape_cast %0 : vector<1x128x48xbf16> to vector<128x48xbf16>
    %c0_2 = arith.constant 0 : index
    %c0_3 = arith.constant 0 : index
    %c0_4 = arith.constant 0 : index
    %2 = vector.load %arg2[%c0_2, %c0_3, %c0_4] : memref<1x48x8xbf16, #tpu.memory_space<vmem>>, vector<1x48x8xbf16>
    %3 = vector.shape_cast %2 : vector<1x48x8xbf16> to vector<48x8xbf16>
    %cst = arith.constant dense<0.000000e+00> : vector<128x8xf32>
    %4 = tpu.matmul %1, %3, %cst {dimension_numbers = #tpu.dot_dimension_numbers<[1], [0], [0], [1], [0, 0, 1, 1], [], []>} : vector<128x48xbf16>, vector<48x8xbf16>, vector<128x8xf32> -> vector<128x8xf32>
    %cst_5 = arith.constant dense<0.000000e+00> : vector<8xf32>
    %5 = vector.multi_reduction <add>, %4, %cst_5 [0] : vector<128x8xf32> to vector<8xf32>
    %6 = vector.shape_cast %5 : vector<8xf32> to vector<1x8xf32>
    %cst_6 = arith.constant 0.000000e+00 : f32
    %7 = vector.broadcast %cst_6 : f32 to vector<1x8xf32>
    %8 = arith.addf %7, %6 : vector<1x8xf32>
    %cst_7 = arith.constant 7.812500e-03 : f32
    %9 = vector.broadcast %cst_7 : f32 to vector<1x8xf32>
    %10 = arith.mulf %8, %9 : vector<1x8xf32>
    %11 = vector.broadcast %10 : vector<1x8xf32> to vector<128x8xf32>
    %12 = arith.subf %4, %11 : vector<128x8xf32>
    %13 = arith.mulf %12, %12 : vector<128x8xf32>
    %cst_8 = arith.constant dense<0.000000e+00> : vector<8xf32>
    %14 = vector.multi_reduction <add>, %13, %cst_8 [0] : vector<128x8xf32> to vector<8xf32>
    %15 = vector.shape_cast %14 : vector<8xf32> to vector<1x8xf32>
    %cst_9 = arith.constant 0.000000e+00 : f32
    %16 = vector.broadcast %cst_9 : f32 to vector<1x8xf32>
    %17 = arith.addf %16, %15 : vector<1x8xf32>
    %cst_10 = arith.constant 7.812500e-03 : f32
    %18 = vector.broadcast %cst_10 : f32 to vector<1x8xf32>
    %19 = arith.mulf %17, %18 : vector<1x8xf32>
    %c0_11 = arith.constant 0 : index
    %c0_12 = arith.constant 0 : index
    %20 = vector.load %arg3[%c0_11, %c0_12] : memref<1x8xf32, #tpu.memory_space<vmem>>, vector<1x8xf32>
    %cst_13 = arith.constant 9.99999974E-6 : f32
    %21 = vector.broadcast %cst_13 : f32 to vector<1x8xf32>
    %22 = arith.addf %19, %21 : vector<1x8xf32>
    %23 = math.rsqrt %22 : vector<1x8xf32>
    %24 = arith.mulf %20, %23 : vector<1x8xf32>
    %25 = vector.broadcast %24 : vector<1x8xf32> to vector<128x8xf32>
    %26 = arith.mulf %12, %25 : vector<128x8xf32>
    %c0_14 = arith.constant 0 : index
    %c0_15 = arith.constant 0 : index
    %27 = vector.load %arg4[%c0_14, %c0_15] : memref<1x8xf32, #tpu.memory_space<vmem>>, vector<1x8xf32>
    %28 = vector.broadcast %27 : vector<1x8xf32> to vector<128x8xf32>
    %29 = arith.addf %26, %28 : vector<128x8xf32>
    %cst_16 = arith.constant 0.000000e+00 : f32
    %30 = vector.broadcast %cst_16 : f32 to vector<128x8xf32>
    %31 = arith.maximumf %29, %30 : vector<128x8xf32>
    %32 = arith.truncf %31 : vector<128x8xf32> to vector<128x8xbf16>
    %c0_17 = arith.constant 0 : index
    %c0_18 = arith.constant 0 : index
    %c0_19 = arith.constant 0 : index
    %33 = vector.load %arg5[%c0_17, %c0_18, %c0_19] : memref<1x128x8xbf16, #tpu.memory_space<vmem>>, vector<1x128x8xbf16>
    %34 = vector.shape_cast %33 : vector<1x128x8xbf16> to vector<128x8xbf16>
    %35 = vector.shape_cast %32 : vector<128x8xbf16> to vector<1x128x8xbf16>
    tpu.vector_store %arg5[%c0_17, %c0_18, %c0_19], %35 {strides = array<i32>} : memref<1x128x8xbf16, #tpu.memory_space<vmem>>, vector<1x128x8xbf16>,
    return
  }
  func.func @transform_0(%arg0: i32) -> (i32, i32, i32) {
    %c0_i32 = arith.constant 0 : i32
    %c0_i32_0 = arith.constant 0 : i32
    %c0_i32_1 = arith.constant 0 : i32
    %c0_i32_2 = arith.constant 0 : i32
    return %c0_i32, %c0_i32_0, %c0_i32_1 : i32, i32, i32
  }
  func.func @transform_1(%arg0: i32) -> (i32, i32, i32) {
    %c0_i32 = arith.constant 0 : i32
    %c0_i32_0 = arith.constant 0 : i32
    %c0_i32_1 = arith.constant 0 : i32
    %c0_i32_2 = arith.constant 0 : i32
    return %c0_i32, %c0_i32_0, %c0_i32_1 : i32, i32, i32
  }
  func.func @transform_2(%arg0: i32) -> (i32, i32) {
    %c0_i32 = arith.constant 0 : i32
    %c0_i32_0 = arith.constant 0 : i32
    %c0_i32_1 = arith.constant 0 : i32
    return %c0_i32, %c0_i32_0 : i32, i32
  }
  func.func @transform_3(%arg0: i32) -> (i32, i32) {
    %c0_i32 = arith.constant 0 : i32
    %c0_i32_0 = arith.constant 0 : i32
    %c0_i32_1 = arith.constant 0 : i32
    return %c0_i32, %c0_i32_0 : i32, i32
  }
  func.func @transform_4(%arg0: i32) -> (i32, i32, i32) {
    %c0_i32 = arith.constant 0 : i32
    %c0_i32_0 = arith.constant 0 : i32
    %c0_i32_1 = arith.constant 0 : i32
    %c0_i32_2 = arith.constant 0 : i32
    return %c0_i32, %c0_i32_0, %c0_i32_1 : i32, i32, i32
  }
}

module attributes {stable_mosaic.version = 11 : i64} {
  func.func @kernel(%arg0: i32, %arg1: memref<1x32x128xbf16, #tpu.memory_space<vmem>>, %arg2: memref<1x128x16xbf16, #tpu.memory_space<vmem>>, %arg3: memref<1x16xf32, #tpu.memory_space<vmem>>, %arg4: memref<1x16xf32, #tpu.memory_space<vmem>>, %arg5: memref<1x32x16xbf16, #tpu.memory_space<vmem>>) attributes {dimension_semantics = [#tpu.dimension_semantics<arbitrary>], iteration_bounds = array<i64: 1>, scalar_prefetch = 0 : i64, scratch_operands = 0 : i64, tpu.core_type = #tpu.core_type<tc>, window_params = [{pipeline_mode = #tpu.pipeline_mode<synchronous>, transform_indices = @transform_0, window_bounds = array<i64: 1, 32, 128>}, {pipeline_mode = #tpu.pipeline_mode<synchronous>, transform_indices = @transform_1, window_bounds = array<i64: 1, 128, 16>}, {pipeline_mode = #tpu.pipeline_mode<synchronous>, transform_indices = @transform_2, window_bounds = array<i64: 1, 16>}, {pipeline_mode = #tpu.pipeline_mode<synchronous>, transform_indices = @transform_3, window_bounds = array<i64: 1, 16>}, {pipeline_mode = #tpu.pipeline_mode<synchronous>, transform_indices = @transform_4, window_bounds = array<i64: 1, 32, 16>}]} {
    %c0 = arith.constant 0 : index
    %c0_0 = arith.constant 0 : index
    %c0_1 = arith.constant 0 : index
    %0 = vector.load %arg1[%c0, %c0_0, %c0_1] : memref<1x32x128xbf16, #tpu.memory_space<vmem>>, vector<1x32x128xbf16>
    %1 = vector.shape_cast %0 : vector<1x32x128xbf16> to vector<32x128xbf16>
    %c0_2 = arith.constant 0 : index
    %c0_3 = arith.constant 0 : index
    %c0_4 = arith.constant 0 : index
    %2 = vector.load %arg2[%c0_2, %c0_3, %c0_4] : memref<1x128x16xbf16, #tpu.memory_space<vmem>>, vector<1x128x16xbf16>
    %3 = vector.shape_cast %2 : vector<1x128x16xbf16> to vector<128x16xbf16>
    %cst = arith.constant dense<0.000000e+00> : vector<32x16xf32>
    %4 = tpu.matmul %1, %3, %cst {dimension_numbers = #tpu.dot_dimension_numbers<[1], [0], [0], [1], [0, 0, 1, 1], [], []>} : vector<32x128xbf16>, vector<128x16xbf16>, vector<32x16xf32> -> vector<32x16xf32>
    %cst_5 = arith.constant dense<0.000000e+00> : vector<16xf32>
    %5 = vector.multi_reduction <add>, %4, %cst_5 [0] : vector<32x16xf32> to vector<16xf32>
    %6 = vector.shape_cast %5 : vector<16xf32> to vector<1x16xf32>
    %cst_6 = arith.constant 0.000000e+00 : f32
    %7 = vector.broadcast %cst_6 : f32 to vector<1x16xf32>
    %8 = arith.addf %7, %6 : vector<1x16xf32>
    %cst_7 = arith.constant 3.125000e-02 : f32
    %9 = vector.broadcast %cst_7 : f32 to vector<1x16xf32>
    %10 = arith.mulf %8, %9 : vector<1x16xf32>
    %11 = vector.broadcast %10 : vector<1x16xf32> to vector<32x16xf32>
    %12 = arith.subf %4, %11 : vector<32x16xf32>
    %13 = arith.mulf %12, %12 : vector<32x16xf32>
    %cst_8 = arith.constant dense<0.000000e+00> : vector<16xf32>
    %14 = vector.multi_reduction <add>, %13, %cst_8 [0] : vector<32x16xf32> to vector<16xf32>
    %15 = vector.shape_cast %14 : vector<16xf32> to vector<1x16xf32>
    %cst_9 = arith.constant 0.000000e+00 : f32
    %16 = vector.broadcast %cst_9 : f32 to vector<1x16xf32>
    %17 = arith.addf %16, %15 : vector<1x16xf32>
    %cst_10 = arith.constant 3.125000e-02 : f32
    %18 = vector.broadcast %cst_10 : f32 to vector<1x16xf32>
    %19 = arith.mulf %17, %18 : vector<1x16xf32>
    %c0_11 = arith.constant 0 : index
    %c0_12 = arith.constant 0 : index
    %20 = vector.load %arg3[%c0_11, %c0_12] : memref<1x16xf32, #tpu.memory_space<vmem>>, vector<1x16xf32>
    %cst_13 = arith.constant 9.99999974E-6 : f32
    %21 = vector.broadcast %cst_13 : f32 to vector<1x16xf32>
    %22 = arith.addf %19, %21 : vector<1x16xf32>
    %23 = math.rsqrt %22 : vector<1x16xf32>
    %24 = arith.mulf %20, %23 : vector<1x16xf32>
    %25 = vector.broadcast %24 : vector<1x16xf32> to vector<32x16xf32>
    %26 = arith.mulf %12, %25 : vector<32x16xf32>
    %c0_14 = arith.constant 0 : index
    %c0_15 = arith.constant 0 : index
    %27 = vector.load %arg4[%c0_14, %c0_15] : memref<1x16xf32, #tpu.memory_space<vmem>>, vector<1x16xf32>
    %28 = vector.broadcast %27 : vector<1x16xf32> to vector<32x16xf32>
    %29 = arith.addf %26, %28 : vector<32x16xf32>
    %cst_16 = arith.constant 0.000000e+00 : f32
    %30 = vector.broadcast %cst_16 : f32 to vector<32x16xf32>
    %31 = arith.maximumf %29, %30 : vector<32x16xf32>
    %32 = arith.truncf %31 : vector<32x16xf32> to vector<32x16xbf16>
    %c0_17 = arith.constant 0 : index
    %c0_18 = arith.constant 0 : index
    %c0_19 = arith.constant 0 : index
    %33 = vector.load %arg5[%c0_17, %c0_18, %c0_19] : memref<1x32x16xbf16, #tpu.memory_space<vmem>>, vector<1x32x16xbf16>
    %34 = vector.shape_cast %33 : vector<1x32x16xbf16> to vector<32x16xbf16>
    %35 = vector.shape_cast %32 : vector<32x16xbf16> to vector<1x32x16xbf16>
    tpu.vector_store %arg5[%c0_17, %c0_18, %c0_19], %35 {strides = array<i32>} : memref<1x32x16xbf16, #tpu.memory_space<vmem>>, vector<1x32x16xbf16>,
    return
  }
  func.func @transform_0(%arg0: i32) -> (i32, i32, i32) {
    %c0_i32 = arith.constant 0 : i32
    %c0_i32_0 = arith.constant 0 : i32
    %c0_i32_1 = arith.constant 0 : i32
    %c0_i32_2 = arith.constant 0 : i32
    return %c0_i32, %c0_i32_0, %c0_i32_1 : i32, i32, i32
  }
  func.func @transform_1(%arg0: i32) -> (i32, i32, i32) {
    %c0_i32 = arith.constant 0 : i32
    %c0_i32_0 = arith.constant 0 : i32
    %c0_i32_1 = arith.constant 0 : i32
    %c0_i32_2 = arith.constant 0 : i32
    return %c0_i32, %c0_i32_0, %c0_i32_1 : i32, i32, i32
  }
  func.func @transform_2(%arg0: i32) -> (i32, i32) {
    %c0_i32 = arith.constant 0 : i32
    %c0_i32_0 = arith.constant 0 : i32
    %c0_i32_1 = arith.constant 0 : i32
    return %c0_i32, %c0_i32_0 : i32, i32
  }
  func.func @transform_3(%arg0: i32) -> (i32, i32) {
    %c0_i32 = arith.constant 0 : i32
    %c0_i32_0 = arith.constant 0 : i32
    %c0_i32_1 = arith.constant 0 : i32
    return %c0_i32, %c0_i32_0 : i32, i32
  }
  func.func @transform_4(%arg0: i32) -> (i32, i32, i32) {
    %c0_i32 = arith.constant 0 : i32
    %c0_i32_0 = arith.constant 0 : i32
    %c0_i32_1 = arith.constant 0 : i32
    %c0_i32_2 = arith.constant 0 : i32
    return %c0_i32, %c0_i32_0, %c0_i32_1 : i32, i32, i32
  }
}

module attributes {stable_mosaic.version = 11 : i64} {
  func.func @kernel(%arg0: i32, %arg1: memref<1x8x256xbf16, #tpu.memory_space<vmem>>, %arg2: memref<1x256x32xbf16, #tpu.memory_space<vmem>>, %arg3: memref<1x32xf32, #tpu.memory_space<vmem>>, %arg4: memref<1x32xf32, #tpu.memory_space<vmem>>, %arg5: memref<1x8x32xbf16, #tpu.memory_space<vmem>>) attributes {dimension_semantics = [#tpu.dimension_semantics<arbitrary>], iteration_bounds = array<i64: 1>, scalar_prefetch = 0 : i64, scratch_operands = 0 : i64, tpu.core_type = #tpu.core_type<tc>, window_params = [{pipeline_mode = #tpu.pipeline_mode<synchronous>, transform_indices = @transform_0, window_bounds = array<i64: 1, 8, 256>}, {pipeline_mode = #tpu.pipeline_mode<synchronous>, transform_indices = @transform_1, window_bounds = array<i64: 1, 256, 32>}, {pipeline_mode = #tpu.pipeline_mode<synchronous>, transform_indices = @transform_2, window_bounds = array<i64: 1, 32>}, {pipeline_mode = #tpu.pipeline_mode<synchronous>, transform_indices = @transform_3, window_bounds = array<i64: 1, 32>}, {pipeline_mode = #tpu.pipeline_mode<synchronous>, transform_indices = @transform_4, window_bounds = array<i64: 1, 8, 32>}]} {
    %c0 = arith.constant 0 : index
    %c0_0 = arith.constant 0 : index
    %c0_1 = arith.constant 0 : index
    %0 = vector.load %arg1[%c0, %c0_0, %c0_1] : memref<1x8x256xbf16, #tpu.memory_space<vmem>>, vector<1x8x256xbf16>
    %1 = vector.shape_cast %0 : vector<1x8x256xbf16> to vector<8x256xbf16>
    %c0_2 = arith.constant 0 : index
    %c0_3 = arith.constant 0 : index
    %c0_4 = arith.constant 0 : index
    %2 = vector.load %arg2[%c0_2, %c0_3, %c0_4] : memref<1x256x32xbf16, #tpu.memory_space<vmem>>, vector<1x256x32xbf16>
    %3 = vector.shape_cast %2 : vector<1x256x32xbf16> to vector<256x32xbf16>
    %cst = arith.constant dense<0.000000e+00> : vector<8x32xf32>
    %4 = tpu.matmul %1, %3, %cst {dimension_numbers = #tpu.dot_dimension_numbers<[1], [0], [0], [1], [0, 0, 1, 1], [], []>} : vector<8x256xbf16>, vector<256x32xbf16>, vector<8x32xf32> -> vector<8x32xf32>
    %cst_5 = arith.constant dense<0.000000e+00> : vector<32xf32>
    %5 = vector.multi_reduction <add>, %4, %cst_5 [0] : vector<8x32xf32> to vector<32xf32>
    %6 = vector.shape_cast %5 : vector<32xf32> to vector<1x32xf32>
    %cst_6 = arith.constant 0.000000e+00 : f32
    %7 = vector.broadcast %cst_6 : f32 to vector<1x32xf32>
    %8 = arith.addf %7, %6 : vector<1x32xf32>
    %cst_7 = arith.constant 1.250000e-01 : f32
    %9 = vector.broadcast %cst_7 : f32 to vector<1x32xf32>
    %10 = arith.mulf %8, %9 : vector<1x32xf32>
    %11 = vector.broadcast %10 : vector<1x32xf32> to vector<8x32xf32>
    %12 = arith.subf %4, %11 : vector<8x32xf32>
    %13 = arith.mulf %12, %12 : vector<8x32xf32>
    %cst_8 = arith.constant dense<0.000000e+00> : vector<32xf32>
    %14 = vector.multi_reduction <add>, %13, %cst_8 [0] : vector<8x32xf32> to vector<32xf32>
    %15 = vector.shape_cast %14 : vector<32xf32> to vector<1x32xf32>
    %cst_9 = arith.constant 0.000000e+00 : f32
    %16 = vector.broadcast %cst_9 : f32 to vector<1x32xf32>
    %17 = arith.addf %16, %15 : vector<1x32xf32>
    %cst_10 = arith.constant 1.250000e-01 : f32
    %18 = vector.broadcast %cst_10 : f32 to vector<1x32xf32>
    %19 = arith.mulf %17, %18 : vector<1x32xf32>
    %c0_11 = arith.constant 0 : index
    %c0_12 = arith.constant 0 : index
    %20 = vector.load %arg3[%c0_11, %c0_12] : memref<1x32xf32, #tpu.memory_space<vmem>>, vector<1x32xf32>
    %cst_13 = arith.constant 9.99999974E-6 : f32
    %21 = vector.broadcast %cst_13 : f32 to vector<1x32xf32>
    %22 = arith.addf %19, %21 : vector<1x32xf32>
    %23 = math.rsqrt %22 : vector<1x32xf32>
    %24 = arith.mulf %20, %23 : vector<1x32xf32>
    %25 = vector.broadcast %24 : vector<1x32xf32> to vector<8x32xf32>
    %26 = arith.mulf %12, %25 : vector<8x32xf32>
    %c0_14 = arith.constant 0 : index
    %c0_15 = arith.constant 0 : index
    %27 = vector.load %arg4[%c0_14, %c0_15] : memref<1x32xf32, #tpu.memory_space<vmem>>, vector<1x32xf32>
    %28 = vector.broadcast %27 : vector<1x32xf32> to vector<8x32xf32>
    %29 = arith.addf %26, %28 : vector<8x32xf32>
    %cst_16 = arith.constant 0.000000e+00 : f32
    %30 = vector.broadcast %cst_16 : f32 to vector<8x32xf32>
    %31 = arith.maximumf %29, %30 : vector<8x32xf32>
    %32 = arith.truncf %31 : vector<8x32xf32> to vector<8x32xbf16>
    %c0_17 = arith.constant 0 : index
    %c0_18 = arith.constant 0 : index
    %c0_19 = arith.constant 0 : index
    %33 = vector.load %arg5[%c0_17, %c0_18, %c0_19] : memref<1x8x32xbf16, #tpu.memory_space<vmem>>, vector<1x8x32xbf16>
    %34 = vector.shape_cast %33 : vector<1x8x32xbf16> to vector<8x32xbf16>
    %35 = vector.shape_cast %32 : vector<8x32xbf16> to vector<1x8x32xbf16>
    tpu.vector_store %arg5[%c0_17, %c0_18, %c0_19], %35 {strides = array<i32>} : memref<1x8x32xbf16, #tpu.memory_space<vmem>>, vector<1x8x32xbf16>,
    return
  }
  func.func @transform_0(%arg0: i32) -> (i32, i32, i32) {
    %c0_i32 = arith.constant 0 : i32
    %c0_i32_0 = arith.constant 0 : i32
    %c0_i32_1 = arith.constant 0 : i32
    %c0_i32_2 = arith.constant 0 : i32
    return %c0_i32, %c0_i32_0, %c0_i32_1 : i32, i32, i32
  }
  func.func @transform_1(%arg0: i32) -> (i32, i32, i32) {
    %c0_i32 = arith.constant 0 : i32
    %c0_i32_0 = arith.constant 0 : i32
    %c0_i32_1 = arith.constant 0 : i32
    %c0_i32_2 = arith.constant 0 : i32
    return %c0_i32, %c0_i32_0, %c0_i32_1 : i32, i32, i32
  }
  func.func @transform_2(%arg0: i32) -> (i32, i32) {
    %c0_i32 = arith.constant 0 : i32
    %c0_i32_0 = arith.constant 0 : i32
    %c0_i32_1 = arith.constant 0 : i32
    return %c0_i32, %c0_i32_0 : i32, i32
  }
  func.func @transform_3(%arg0: i32) -> (i32, i32) {
    %c0_i32 = arith.constant 0 : i32
    %c0_i32_0 = arith.constant 0 : i32
    %c0_i32_1 = arith.constant 0 : i32
    return %c0_i32, %c0_i32_0 : i32, i32
  }
  func.func @transform_4(%arg0: i32) -> (i32, i32, i32) {
    %c0_i32 = arith.constant 0 : i32
    %c0_i32_0 = arith.constant 0 : i32
    %c0_i32_1 = arith.constant 0 : i32
    %c0_i32_2 = arith.constant 0 : i32
    return %c0_i32, %c0_i32_0, %c0_i32_1 : i32, i32, i32
  }
}

module attributes {stable_mosaic.version = 11 : i64} {
  func.func @kernel(%arg0: i32, %arg1: memref<8x32xf32, #tpu.memory_space<vmem>>, %arg2: memref<2x9x32x32xbf16, #tpu.memory_space<vmem>>, %arg3: memref<2x1x32xf32, #tpu.memory_space<vmem>>, %arg4: memref<2x1x32xf32, #tpu.memory_space<vmem>>, %arg5: memref<2x9x32x32xbf16, #tpu.memory_space<vmem>>, %arg6: memref<2x1x32xf32, #tpu.memory_space<vmem>>, %arg7: memref<2x1x32xf32, #tpu.memory_space<vmem>>, %arg8: memref<22x1xf32, #tpu.memory_space<vmem>>, %arg9: memref<32x32xf32, #tpu.memory_space<vmem>>, %arg10: memref<32x32xf32, #tpu.memory_space<vmem>>) attributes {dimension_semantics = [#tpu.dimension_semantics<arbitrary>], iteration_bounds = array<i64: 1>, scalar_prefetch = 0 : i64, scratch_operands = 1 : i64, tpu.core_type = #tpu.core_type<tc>, window_params = [{pipeline_mode = #tpu.pipeline_mode<synchronous>, transform_indices = @transform_0, window_bounds = array<i64: 8, 32>}, {pipeline_mode = #tpu.pipeline_mode<synchronous>, transform_indices = @transform_1, window_bounds = array<i64: 2, 9, 32, 32>}, {pipeline_mode = #tpu.pipeline_mode<synchronous>, transform_indices = @transform_2, window_bounds = array<i64: 2, 1, 32>}, {pipeline_mode = #tpu.pipeline_mode<synchronous>, transform_indices = @transform_3, window_bounds = array<i64: 2, 1, 32>}, {pipeline_mode = #tpu.pipeline_mode<synchronous>, transform_indices = @transform_4, window_bounds = array<i64: 2, 9, 32, 32>}, {pipeline_mode = #tpu.pipeline_mode<synchronous>, transform_indices = @transform_5, window_bounds = array<i64: 2, 1, 32>}, {pipeline_mode = #tpu.pipeline_mode<synchronous>, transform_indices = @transform_6, window_bounds = array<i64: 2, 1, 32>}, {pipeline_mode = #tpu.pipeline_mode<synchronous>, transform_indices = @transform_7, window_bounds = array<i64: 22, 1>}, {pipeline_mode = #tpu.pipeline_mode<synchronous>, transform_indices = @transform_8, window_bounds = array<i64: 32, 32>}]} {
    %cst = arith.constant 0.000000e+00 : f32
    %0 = vector.broadcast %cst : f32 to vector<32x32xf32>
    %c0 = arith.constant 0 : index
    %c0_0 = arith.constant 0 : index
    %1 = vector.load %arg9[%c0, %c0_0] : memref<32x32xf32, #tpu.memory_space<vmem>>, vector<32x32xf32>
    tpu.vector_store %arg9[%c0, %c0_0], %0 {strides = array<i32>} : memref<32x32xf32, #tpu.memory_space<vmem>>, vector<32x32xf32>,
    %c0_1 = arith.constant 0 : index
    %c0_2 = arith.constant 0 : index
    %2 = vector.load %arg1[%c0_1, %c0_2] : memref<8x32xf32, #tpu.memory_space<vmem>>, vector<2x32xf32>
    %c5 = arith.constant 5 : index
    %c0_3 = arith.constant 0 : index
    %3 = vector.load %arg9[%c5, %c0_3] : memref<32x32xf32, #tpu.memory_space<vmem>>, vector<2x32xf32>
    tpu.vector_store %arg9[%c5, %c0_3], %2 {strides = array<i32>} : memref<32x32xf32, #tpu.memory_space<vmem>>, vector<2x32xf32>,
    %c2 = arith.constant 2 : index
    %c0_4 = arith.constant 0 : index
    %4 = vector.load %arg1[%c2, %c0_4] : memref<8x32xf32, #tpu.memory_space<vmem>>, vector<2x32xf32>
    %c9 = arith.constant 9 : index
    %c0_5 = arith.constant 0 : index
    %5 = vector.load %arg9[%c9, %c0_5] : memref<32x32xf32, #tpu.memory_space<vmem>>, vector<2x32xf32>
    tpu.vector_store %arg9[%c9, %c0_5], %4 {strides = array<i32>} : memref<32x32xf32, #tpu.memory_space<vmem>>, vector<2x32xf32>,
    %c4 = arith.constant 4 : index
    %c0_6 = arith.constant 0 : index
    %6 = vector.load %arg1[%c4, %c0_6] : memref<8x32xf32, #tpu.memory_space<vmem>>, vector<2x32xf32>
    %c21 = arith.constant 21 : index
    %c0_7 = arith.constant 0 : index
    %7 = vector.load %arg9[%c21, %c0_7] : memref<32x32xf32, #tpu.memory_space<vmem>>, vector<2x32xf32>
    tpu.vector_store %arg9[%c21, %c0_7], %6 {strides = array<i32>} : memref<32x32xf32, #tpu.memory_space<vmem>>, vector<2x32xf32>,
    %c6 = arith.constant 6 : index
    %c0_8 = arith.constant 0 : index
    %8 = vector.load %arg1[%c6, %c0_8] : memref<8x32xf32, #tpu.memory_space<vmem>>, vector<2x32xf32>
    %c25 = arith.constant 25 : index
    %c0_9 = arith.constant 0 : index
    %9 = vector.load %arg9[%c25, %c0_9] : memref<32x32xf32, #tpu.memory_space<vmem>>, vector<2x32xf32>
    tpu.vector_store %arg9[%c25, %c0_9], %8 {strides = array<i32>} : memref<32x32xf32, #tpu.memory_space<vmem>>, vector<2x32xf32>,
    %c0_10 = arith.constant 0 : index
    %c0_11 = arith.constant 0 : index
    %10 = vector.load %arg8[%c0_10, %c0_11] : memref<22x1xf32, #tpu.memory_space<vmem>>, vector<22x1xf32>
    %cst_12 = arith.constant 0.000000e+00 : f32
    %11 = vector.broadcast %cst_12 : f32 to vector<22x32xf32>
    %c0_13 = arith.constant 0 : index
    %c0_14 = arith.constant 0 : index
    %12 = vector.load %arg9[%c0_13, %c0_14] : memref<32x32xf32, #tpu.memory_space<vmem>>, vector<22x32xf32>
    %13 = arith.truncf %12 : vector<22x32xf32> to vector<22x32xbf16>
    %c0_15 = arith.constant 0 : index
    %c0_16 = arith.constant 0 : index
    %c0_17 = arith.constant 0 : index
    %c0_18 = arith.constant 0 : index
    %14 = vector.load %arg2[%c0_15, %c0_16, %c0_17, %c0_18] : memref<2x9x32x32xbf16, #tpu.memory_space<vmem>>, vector<1x1x32x32xbf16>
    %15 = vector.shape_cast %14 : vector<1x1x32x32xbf16> to vector<32x32xbf16>
    %cst_19 = arith.constant dense<0.000000e+00> : vector<22x32xf32>
    %16 = tpu.matmul %13, %15, %cst_19 {dimension_numbers = #tpu.dot_dimension_numbers<[1], [0], [0], [1], [0, 0, 1, 1], [], []>} : vector<22x32xbf16>, vector<32x32xbf16>, vector<22x32xf32> -> vector<22x32xf32>
    %17 = arith.addf %11, %16 : vector<22x32xf32>
    %c1 = arith.constant 1 : index
    %c0_20 = arith.constant 0 : index
    %18 = vector.load %arg9[%c1, %c0_20] : memref<32x32xf32, #tpu.memory_space<vmem>>, vector<22x32xf32>
    %19 = arith.truncf %18 : vector<22x32xf32> to vector<22x32xbf16>
    %c0_21 = arith.constant 0 : index
    %c1_22 = arith.constant 1 : index
    %c0_23 = arith.constant 0 : index
    %c0_24 = arith.constant 0 : index
    %20 = vector.load %arg2[%c0_21, %c1_22, %c0_23, %c0_24] : memref<2x9x32x32xbf16, #tpu.memory_space<vmem>>, vector<1x1x32x32xbf16>
    %21 = vector.shape_cast %20 : vector<1x1x32x32xbf16> to vector<32x32xbf16>
    %cst_25 = arith.constant dense<0.000000e+00> : vector<22x32xf32>
    %22 = tpu.matmul %19, %21, %cst_25 {dimension_numbers = #tpu.dot_dimension_numbers<[1], [0], [0], [1], [0, 0, 1, 1], [], []>} : vector<22x32xbf16>, vector<32x32xbf16>, vector<22x32xf32> -> vector<22x32xf32>
    %23 = arith.addf %17, %22 : vector<22x32xf32>
    %c2_26 = arith.constant 2 : index
    %c0_27 = arith.constant 0 : index
    %24 = vector.load %arg9[%c2_26, %c0_27] : memref<32x32xf32, #tpu.memory_space<vmem>>, vector<22x32xf32>
    %25 = arith.truncf %24 : vector<22x32xf32> to vector<22x32xbf16>
    %c0_28 = arith.constant 0 : index
    %c2_29 = arith.constant 2 : index
    %c0_30 = arith.constant 0 : index
    %c0_31 = arith.constant 0 : index
    %26 = vector.load %arg2[%c0_28, %c2_29, %c0_30, %c0_31] : memref<2x9x32x32xbf16, #tpu.memory_space<vmem>>, vector<1x1x32x32xbf16>
    %27 = vector.shape_cast %26 : vector<1x1x32x32xbf16> to vector<32x32xbf16>
    %cst_32 = arith.constant dense<0.000000e+00> : vector<22x32xf32>
    %28 = tpu.matmul %25, %27, %cst_32 {dimension_numbers = #tpu.dot_dimension_numbers<[1], [0], [0], [1], [0, 0, 1, 1], [], []>} : vector<22x32xbf16>, vector<32x32xbf16>, vector<22x32xf32> -> vector<22x32xf32>
    %29 = arith.addf %23, %28 : vector<22x32xf32>
    %c4_33 = arith.constant 4 : index
    %c0_34 = arith.constant 0 : index
    %30 = vector.load %arg9[%c4_33, %c0_34] : memref<32x32xf32, #tpu.memory_space<vmem>>, vector<22x32xf32>
    %31 = arith.truncf %30 : vector<22x32xf32> to vector<22x32xbf16>
    %c0_35 = arith.constant 0 : index
    %c3 = arith.constant 3 : index
    %c0_36 = arith.constant 0 : index
    %c0_37 = arith.constant 0 : index
    %32 = vector.load %arg2[%c0_35, %c3, %c0_36, %c0_37] : memref<2x9x32x32xbf16, #tpu.memory_space<vmem>>, vector<1x1x32x32xbf16>
    %33 = vector.shape_cast %32 : vector<1x1x32x32xbf16> to vector<32x32xbf16>
    %cst_38 = arith.constant dense<0.000000e+00> : vector<22x32xf32>
    %34 = tpu.matmul %31, %33, %cst_38 {dimension_numbers = #tpu.dot_dimension_numbers<[1], [0], [0], [1], [0, 0, 1, 1], [], []>} : vector<22x32xbf16>, vector<32x32xbf16>, vector<22x32xf32> -> vector<22x32xf32>
    %35 = arith.addf %29, %34 : vector<22x32xf32>
    %c5_39 = arith.constant 5 : index
    %c0_40 = arith.constant 0 : index
    %36 = vector.load %arg9[%c5_39, %c0_40] : memref<32x32xf32, #tpu.memory_space<vmem>>, vector<22x32xf32>
    %37 = arith.truncf %36 : vector<22x32xf32> to vector<22x32xbf16>
    %c0_41 = arith.constant 0 : index
    %c4_42 = arith.constant 4 : index
    %c0_43 = arith.constant 0 : index
    %c0_44 = arith.constant 0 : index
    %38 = vector.load %arg2[%c0_41, %c4_42, %c0_43, %c0_44] : memref<2x9x32x32xbf16, #tpu.memory_space<vmem>>, vector<1x1x32x32xbf16>
    %39 = vector.shape_cast %38 : vector<1x1x32x32xbf16> to vector<32x32xbf16>
    %cst_45 = arith.constant dense<0.000000e+00> : vector<22x32xf32>
    %40 = tpu.matmul %37, %39, %cst_45 {dimension_numbers = #tpu.dot_dimension_numbers<[1], [0], [0], [1], [0, 0, 1, 1], [], []>} : vector<22x32xbf16>, vector<32x32xbf16>, vector<22x32xf32> -> vector<22x32xf32>
    %41 = arith.addf %35, %40 : vector<22x32xf32>
    %c6_46 = arith.constant 6 : index
    %c0_47 = arith.constant 0 : index
    %42 = vector.load %arg9[%c6_46, %c0_47] : memref<32x32xf32, #tpu.memory_space<vmem>>, vector<22x32xf32>
    %43 = arith.truncf %42 : vector<22x32xf32> to vector<22x32xbf16>
    %c0_48 = arith.constant 0 : index
    %c5_49 = arith.constant 5 : index
    %c0_50 = arith.constant 0 : index
    %c0_51 = arith.constant 0 : index
    %44 = vector.load %arg2[%c0_48, %c5_49, %c0_50, %c0_51] : memref<2x9x32x32xbf16, #tpu.memory_space<vmem>>, vector<1x1x32x32xbf16>
    %45 = vector.shape_cast %44 : vector<1x1x32x32xbf16> to vector<32x32xbf16>
    %cst_52 = arith.constant dense<0.000000e+00> : vector<22x32xf32>
    %46 = tpu.matmul %43, %45, %cst_52 {dimension_numbers = #tpu.dot_dimension_numbers<[1], [0], [0], [1], [0, 0, 1, 1], [], []>} : vector<22x32xbf16>, vector<32x32xbf16>, vector<22x32xf32> -> vector<22x32xf32>
    %47 = arith.addf %41, %46 : vector<22x32xf32>
    %c8 = arith.constant 8 : index
    %c0_53 = arith.constant 0 : index
    %48 = vector.load %arg9[%c8, %c0_53] : memref<32x32xf32, #tpu.memory_space<vmem>>, vector<22x32xf32>
    %49 = arith.truncf %48 : vector<22x32xf32> to vector<22x32xbf16>
    %c0_54 = arith.constant 0 : index
    %c6_55 = arith.constant 6 : index
    %c0_56 = arith.constant 0 : index
    %c0_57 = arith.constant 0 : index
    %50 = vector.load %arg2[%c0_54, %c6_55, %c0_56, %c0_57] : memref<2x9x32x32xbf16, #tpu.memory_space<vmem>>, vector<1x1x32x32xbf16>
    %51 = vector.shape_cast %50 : vector<1x1x32x32xbf16> to vector<32x32xbf16>
    %cst_58 = arith.constant dense<0.000000e+00> : vector<22x32xf32>
    %52 = tpu.matmul %49, %51, %cst_58 {dimension_numbers = #tpu.dot_dimension_numbers<[1], [0], [0], [1], [0, 0, 1, 1], [], []>} : vector<22x32xbf16>, vector<32x32xbf16>, vector<22x32xf32> -> vector<22x32xf32>
    %53 = arith.addf %47, %52 : vector<22x32xf32>
    %c9_59 = arith.constant 9 : index
    %c0_60 = arith.constant 0 : index
    %54 = vector.load %arg9[%c9_59, %c0_60] : memref<32x32xf32, #tpu.memory_space<vmem>>, vector<22x32xf32>
    %55 = arith.truncf %54 : vector<22x32xf32> to vector<22x32xbf16>
    %c0_61 = arith.constant 0 : index
    %c7 = arith.constant 7 : index
    %c0_62 = arith.constant 0 : index
    %c0_63 = arith.constant 0 : index
    %56 = vector.load %arg2[%c0_61, %c7, %c0_62, %c0_63] : memref<2x9x32x32xbf16, #tpu.memory_space<vmem>>, vector<1x1x32x32xbf16>
    %57 = vector.shape_cast %56 : vector<1x1x32x32xbf16> to vector<32x32xbf16>
    %cst_64 = arith.constant dense<0.000000e+00> : vector<22x32xf32>
    %58 = tpu.matmul %55, %57, %cst_64 {dimension_numbers = #tpu.dot_dimension_numbers<[1], [0], [0], [1], [0, 0, 1, 1], [], []>} : vector<22x32xbf16>, vector<32x32xbf16>, vector<22x32xf32> -> vector<22x32xf32>
    %59 = arith.addf %53, %58 : vector<22x32xf32>
    %c10 = arith.constant 10 : index
    %c0_65 = arith.constant 0 : index
    %60 = vector.load %arg9[%c10, %c0_65] : memref<32x32xf32, #tpu.memory_space<vmem>>, vector<22x32xf32>
    %61 = arith.truncf %60 : vector<22x32xf32> to vector<22x32xbf16>
    %c0_66 = arith.constant 0 : index
    %c8_67 = arith.constant 8 : index
    %c0_68 = arith.constant 0 : index
    %c0_69 = arith.constant 0 : index
    %62 = vector.load %arg2[%c0_66, %c8_67, %c0_68, %c0_69] : memref<2x9x32x32xbf16, #tpu.memory_space<vmem>>, vector<1x1x32x32xbf16>
    %63 = vector.shape_cast %62 : vector<1x1x32x32xbf16> to vector<32x32xbf16>
    %cst_70 = arith.constant dense<0.000000e+00> : vector<22x32xf32>
    %64 = tpu.matmul %61, %63, %cst_70 {dimension_numbers = #tpu.dot_dimension_numbers<[1], [0], [0], [1], [0, 0, 1, 1], [], []>} : vector<22x32xbf16>, vector<32x32xbf16>, vector<22x32xf32> -> vector<22x32xf32>
    %65 = arith.addf %59, %64 : vector<22x32xf32>
    %c0_71 = arith.constant 0 : index
    %c0_72 = arith.constant 0 : index
    %c0_73 = arith.constant 0 : index
    %66 = vector.load %arg3[%c0_71, %c0_72, %c0_73] : memref<2x1x32xf32, #tpu.memory_space<vmem>>, vector<1x1x32xf32>
    %67 = vector.shape_cast %66 : vector<1x1x32xf32> to vector<1x32xf32>
    %c0_74 = arith.constant 0 : index
    %c0_75 = arith.constant 0 : index
    %c0_76 = arith.constant 0 : index
    %68 = vector.load %arg4[%c0_74, %c0_75, %c0_76] : memref<2x1x32xf32, #tpu.memory_space<vmem>>, vector<1x1x32xf32>
    %69 = vector.shape_cast %68 : vector<1x1x32xf32> to vector<1x32xf32>
    %70 = vector.broadcast %10 : vector<22x1xf32> to vector<22x32xf32>
    %71 = arith.mulf %65, %70 : vector<22x32xf32>
    %cst_77 = arith.constant dense<0.000000e+00> : vector<32xf32>
    %72 = vector.multi_reduction <add>, %71, %cst_77 [0] : vector<22x32xf32> to vector<32xf32>
    %73 = vector.shape_cast %72 : vector<32xf32> to vector<1x32xf32>
    %cst_78 = arith.constant 1.250000e-01 : f32
    %74 = vector.broadcast %cst_78 : f32 to vector<1x32xf32>
    %75 = arith.mulf %73, %74 : vector<1x32xf32>
    %76 = vector.broadcast %75 : vector<1x32xf32> to vector<22x32xf32>
    %77 = arith.subf %65, %76 : vector<22x32xf32>
    %78 = arith.mulf %77, %77 : vector<22x32xf32>
    %79 = vector.broadcast %10 : vector<22x1xf32> to vector<22x32xf32>
    %80 = arith.mulf %78, %79 : vector<22x32xf32>
    %cst_79 = arith.constant dense<0.000000e+00> : vector<32xf32>
    %81 = vector.multi_reduction <add>, %80, %cst_79 [0] : vector<22x32xf32> to vector<32xf32>
    %82 = vector.shape_cast %81 : vector<32xf32> to vector<1x32xf32>
    %cst_80 = arith.constant 1.250000e-01 : f32
    %83 = vector.broadcast %cst_80 : f32 to vector<1x32xf32>
    %84 = arith.mulf %82, %83 : vector<1x32xf32>
    %cst_81 = arith.constant 9.99999974E-6 : f32
    %85 = vector.broadcast %cst_81 : f32 to vector<1x32xf32>
    %86 = arith.addf %84, %85 : vector<1x32xf32>
    %87 = math.rsqrt %86 : vector<1x32xf32>
    %88 = arith.mulf %67, %87 : vector<1x32xf32>
    %89 = vector.broadcast %88 : vector<1x32xf32> to vector<22x32xf32>
    %90 = arith.mulf %77, %89 : vector<22x32xf32>
    %91 = vector.broadcast %69 : vector<1x32xf32> to vector<22x32xf32>
    %92 = arith.addf %90, %91 : vector<22x32xf32>
    %cst_82 = arith.constant 0.000000e+00 : f32
    %93 = vector.broadcast %cst_82 : f32 to vector<22x32xf32>
    %94 = arith.maximumf %92, %93 : vector<22x32xf32>
    %95 = vector.broadcast %10 : vector<22x1xf32> to vector<22x32xf32>
    %96 = arith.mulf %94, %95 : vector<22x32xf32>
    %cst_83 = arith.constant 0.000000e+00 : f32
    %97 = vector.broadcast %cst_83 : f32 to vector<32x32xf32>
    %c0_84 = arith.constant 0 : index
    %c0_85 = arith.constant 0 : index
    %98 = vector.load %arg10[%c0_84, %c0_85] : memref<32x32xf32, #tpu.memory_space<vmem>>, vector<32x32xf32>
    tpu.vector_store %arg10[%c0_84, %c0_85], %97 {strides = array<i32>} : memref<32x32xf32, #tpu.memory_space<vmem>>, vector<32x32xf32>,
    %c5_86 = arith.constant 5 : index
    %c0_87 = arith.constant 0 : index
    %99 = vector.load %arg10[%c5_86, %c0_87] : memref<32x32xf32, #tpu.memory_space<vmem>>, vector<22x32xf32>
    tpu.vector_store %arg10[%c5_86, %c0_87], %96 {strides = array<i32>} : memref<32x32xf32, #tpu.memory_space<vmem>>, vector<22x32xf32>,
    %cst_88 = arith.constant 0.000000e+00 : f32
    %100 = vector.broadcast %cst_88 : f32 to vector<22x32xf32>
    %c0_89 = arith.constant 0 : index
    %c0_90 = arith.constant 0 : index
    %101 = vector.load %arg10[%c0_89, %c0_90] : memref<32x32xf32, #tpu.memory_space<vmem>>, vector<22x32xf32>
    %102 = arith.truncf %101 : vector<22x32xf32> to vector<22x32xbf16>
    %c0_91 = arith.constant 0 : index
    %c0_92 = arith.constant 0 : index
    %c0_93 = arith.constant 0 : index
    %c0_94 = arith.constant 0 : index
    %103 = vector.load %arg5[%c0_91, %c0_92, %c0_93, %c0_94] : memref<2x9x32x32xbf16, #tpu.memory_space<vmem>>, vector<1x1x32x32xbf16>
    %104 = vector.shape_cast %103 : vector<1x1x32x32xbf16> to vector<32x32xbf16>
    %cst_95 = arith.constant dense<0.000000e+00> : vector<22x32xf32>
    %105 = tpu.matmul %102, %104, %cst_95 {dimension_numbers = #tpu.dot_dimension_numbers<[1], [0], [0], [1], [0, 0, 1, 1], [], []>} : vector<22x32xbf16>, vector<32x32xbf16>, vector<22x32xf32> -> vector<22x32xf32>
    %106 = arith.addf %100, %105 : vector<22x32xf32>
    %c1_96 = arith.constant 1 : index
    %c0_97 = arith.constant 0 : index
    %107 = vector.load %arg10[%c1_96, %c0_97] : memref<32x32xf32, #tpu.memory_space<vmem>>, vector<22x32xf32>
    %108 = arith.truncf %107 : vector<22x32xf32> to vector<22x32xbf16>
    %c0_98 = arith.constant 0 : index
    %c1_99 = arith.constant 1 : index
    %c0_100 = arith.constant 0 : index
    %c0_101 = arith.constant 0 : index
    %109 = vector.load %arg5[%c0_98, %c1_99, %c0_100, %c0_101] : memref<2x9x32x32xbf16, #tpu.memory_space<vmem>>, vector<1x1x32x32xbf16>
    %110 = vector.shape_cast %109 : vector<1x1x32x32xbf16> to vector<32x32xbf16>
    %cst_102 = arith.constant dense<0.000000e+00> : vector<22x32xf32>
    %111 = tpu.matmul %108, %110, %cst_102 {dimension_numbers = #tpu.dot_dimension_numbers<[1], [0], [0], [1], [0, 0, 1, 1], [], []>} : vector<22x32xbf16>, vector<32x32xbf16>, vector<22x32xf32> -> vector<22x32xf32>
    %112 = arith.addf %106, %111 : vector<22x32xf32>
    %c2_103 = arith.constant 2 : index
    %c0_104 = arith.constant 0 : index
    %113 = vector.load %arg10[%c2_103, %c0_104] : memref<32x32xf32, #tpu.memory_space<vmem>>, vector<22x32xf32>
    %114 = arith.truncf %113 : vector<22x32xf32> to vector<22x32xbf16>
    %c0_105 = arith.constant 0 : index
    %c2_106 = arith.constant 2 : index
    %c0_107 = arith.constant 0 : index
    %c0_108 = arith.constant 0 : index
    %115 = vector.load %arg5[%c0_105, %c2_106, %c0_107, %c0_108] : memref<2x9x32x32xbf16, #tpu.memory_space<vmem>>, vector<1x1x32x32xbf16>
    %116 = vector.shape_cast %115 : vector<1x1x32x32xbf16> to vector<32x32xbf16>
    %cst_109 = arith.constant dense<0.000000e+00> : vector<22x32xf32>
    %117 = tpu.matmul %114, %116, %cst_109 {dimension_numbers = #tpu.dot_dimension_numbers<[1], [0], [0], [1], [0, 0, 1, 1], [], []>} : vector<22x32xbf16>, vector<32x32xbf16>, vector<22x32xf32> -> vector<22x32xf32>
    %118 = arith.addf %112, %117 : vector<22x32xf32>
    %c4_110 = arith.constant 4 : index
    %c0_111 = arith.constant 0 : index
    %119 = vector.load %arg10[%c4_110, %c0_111] : memref<32x32xf32, #tpu.memory_space<vmem>>, vector<22x32xf32>
    %120 = arith.truncf %119 : vector<22x32xf32> to vector<22x32xbf16>
    %c0_112 = arith.constant 0 : index
    %c3_113 = arith.constant 3 : index
    %c0_114 = arith.constant 0 : index
    %c0_115 = arith.constant 0 : index
    %121 = vector.load %arg5[%c0_112, %c3_113, %c0_114, %c0_115] : memref<2x9x32x32xbf16, #tpu.memory_space<vmem>>, vector<1x1x32x32xbf16>
    %122 = vector.shape_cast %121 : vector<1x1x32x32xbf16> to vector<32x32xbf16>
    %cst_116 = arith.constant dense<0.000000e+00> : vector<22x32xf32>
    %123 = tpu.matmul %120, %122, %cst_116 {dimension_numbers = #tpu.dot_dimension_numbers<[1], [0], [0], [1], [0, 0, 1, 1], [], []>} : vector<22x32xbf16>, vector<32x32xbf16>, vector<22x32xf32> -> vector<22x32xf32>
    %124 = arith.addf %118, %123 : vector<22x32xf32>
    %c5_117 = arith.constant 5 : index
    %c0_118 = arith.constant 0 : index
    %125 = vector.load %arg10[%c5_117, %c0_118] : memref<32x32xf32, #tpu.memory_space<vmem>>, vector<22x32xf32>
    %126 = arith.truncf %125 : vector<22x32xf32> to vector<22x32xbf16>
    %c0_119 = arith.constant 0 : index
    %c4_120 = arith.constant 4 : index
    %c0_121 = arith.constant 0 : index
    %c0_122 = arith.constant 0 : index
    %127 = vector.load %arg5[%c0_119, %c4_120, %c0_121, %c0_122] : memref<2x9x32x32xbf16, #tpu.memory_space<vmem>>, vector<1x1x32x32xbf16>
    %128 = vector.shape_cast %127 : vector<1x1x32x32xbf16> to vector<32x32xbf16>
    %cst_123 = arith.constant dense<0.000000e+00> : vector<22x32xf32>
    %129 = tpu.matmul %126, %128, %cst_123 {dimension_numbers = #tpu.dot_dimension_numbers<[1], [0], [0], [1], [0, 0, 1, 1], [], []>} : vector<22x32xbf16>, vector<32x32xbf16>, vector<22x32xf32> -> vector<22x32xf32>
    %130 = arith.addf %124, %129 : vector<22x32xf32>
    %c6_124 = arith.constant 6 : index
    %c0_125 = arith.constant 0 : index
    %131 = vector.load %arg10[%c6_124, %c0_125] : memref<32x32xf32, #tpu.memory_space<vmem>>, vector<22x32xf32>
    %132 = arith.truncf %131 : vector<22x32xf32> to vector<22x32xbf16>
    %c0_126 = arith.constant 0 : index
    %c5_127 = arith.constant 5 : index
    %c0_128 = arith.constant 0 : index
    %c0_129 = arith.constant 0 : index
    %133 = vector.load %arg5[%c0_126, %c5_127, %c0_128, %c0_129] : memref<2x9x32x32xbf16, #tpu.memory_space<vmem>>, vector<1x1x32x32xbf16>
    %134 = vector.shape_cast %133 : vector<1x1x32x32xbf16> to vector<32x32xbf16>
    %cst_130 = arith.constant dense<0.000000e+00> : vector<22x32xf32>
    %135 = tpu.matmul %132, %134, %cst_130 {dimension_numbers = #tpu.dot_dimension_numbers<[1], [0], [0], [1], [0, 0, 1, 1], [], []>} : vector<22x32xbf16>, vector<32x32xbf16>, vector<22x32xf32> -> vector<22x32xf32>
    %136 = arith.addf %130, %135 : vector<22x32xf32>
    %c8_131 = arith.constant 8 : index
    %c0_132 = arith.constant 0 : index
    %137 = vector.load %arg10[%c8_131, %c0_132] : memref<32x32xf32, #tpu.memory_space<vmem>>, vector<22x32xf32>
    %138 = arith.truncf %137 : vector<22x32xf32> to vector<22x32xbf16>
    %c0_133 = arith.constant 0 : index
    %c6_134 = arith.constant 6 : index
    %c0_135 = arith.constant 0 : index
    %c0_136 = arith.constant 0 : index
    %139 = vector.load %arg5[%c0_133, %c6_134, %c0_135, %c0_136] : memref<2x9x32x32xbf16, #tpu.memory_space<vmem>>, vector<1x1x32x32xbf16>
    %140 = vector.shape_cast %139 : vector<1x1x32x32xbf16> to vector<32x32xbf16>
    %cst_137 = arith.constant dense<0.000000e+00> : vector<22x32xf32>
    %141 = tpu.matmul %138, %140, %cst_137 {dimension_numbers = #tpu.dot_dimension_numbers<[1], [0], [0], [1], [0, 0, 1, 1], [], []>} : vector<22x32xbf16>, vector<32x32xbf16>, vector<22x32xf32> -> vector<22x32xf32>
    %142 = arith.addf %136, %141 : vector<22x32xf32>
    %c9_138 = arith.constant 9 : index
    %c0_139 = arith.constant 0 : index
    %143 = vector.load %arg10[%c9_138, %c0_139] : memref<32x32xf32, #tpu.memory_space<vmem>>, vector<22x32xf32>
    %144 = arith.truncf %143 : vector<22x32xf32> to vector<22x32xbf16>
    %c0_140 = arith.constant 0 : index
    %c7_141 = arith.constant 7 : index
    %c0_142 = arith.constant 0 : index
    %c0_143 = arith.constant 0 : index
    %145 = vector.load %arg5[%c0_140, %c7_141, %c0_142, %c0_143] : memref<2x9x32x32xbf16, #tpu.memory_space<vmem>>, vector<1x1x32x32xbf16>
    %146 = vector.shape_cast %145 : vector<1x1x32x32xbf16> to vector<32x32xbf16>
    %cst_144 = arith.constant dense<0.000000e+00> : vector<22x32xf32>
    %147 = tpu.matmul %144, %146, %cst_144 {dimension_numbers = #tpu.dot_dimension_numbers<[1], [0], [0], [1], [0, 0, 1, 1], [], []>} : vector<22x32xbf16>, vector<32x32xbf16>, vector<22x32xf32> -> vector<22x32xf32>
    %148 = arith.addf %142, %147 : vector<22x32xf32>
    %c10_145 = arith.constant 10 : index
    %c0_146 = arith.constant 0 : index
    %149 = vector.load %arg10[%c10_145, %c0_146] : memref<32x32xf32, #tpu.memory_space<vmem>>, vector<22x32xf32>
    %150 = arith.truncf %149 : vector<22x32xf32> to vector<22x32xbf16>
    %c0_147 = arith.constant 0 : index
    %c8_148 = arith.constant 8 : index
    %c0_149 = arith.constant 0 : index
    %c0_150 = arith.constant 0 : index
    %151 = vector.load %arg5[%c0_147, %c8_148, %c0_149, %c0_150] : memref<2x9x32x32xbf16, #tpu.memory_space<vmem>>, vector<1x1x32x32xbf16>
    %152 = vector.shape_cast %151 : vector<1x1x32x32xbf16> to vector<32x32xbf16>
    %cst_151 = arith.constant dense<0.000000e+00> : vector<22x32xf32>
    %153 = tpu.matmul %150, %152, %cst_151 {dimension_numbers = #tpu.dot_dimension_numbers<[1], [0], [0], [1], [0, 0, 1, 1], [], []>} : vector<22x32xbf16>, vector<32x32xbf16>, vector<22x32xf32> -> vector<22x32xf32>
    %154 = arith.addf %148, %153 : vector<22x32xf32>
    %c0_152 = arith.constant 0 : index
    %c0_153 = arith.constant 0 : index
    %c0_154 = arith.constant 0 : index
    %155 = vector.load %arg6[%c0_152, %c0_153, %c0_154] : memref<2x1x32xf32, #tpu.memory_space<vmem>>, vector<1x1x32xf32>
    %156 = vector.shape_cast %155 : vector<1x1x32xf32> to vector<1x32xf32>
    %c0_155 = arith.constant 0 : index
    %c0_156 = arith.constant 0 : index
    %c0_157 = arith.constant 0 : index
    %157 = vector.load %arg7[%c0_155, %c0_156, %c0_157] : memref<2x1x32xf32, #tpu.memory_space<vmem>>, vector<1x1x32xf32>
    %158 = vector.shape_cast %157 : vector<1x1x32xf32> to vector<1x32xf32>
    %159 = vector.broadcast %10 : vector<22x1xf32> to vector<22x32xf32>
    %160 = arith.mulf %154, %159 : vector<22x32xf32>
    %cst_158 = arith.constant dense<0.000000e+00> : vector<32xf32>
    %161 = vector.multi_reduction <add>, %160, %cst_158 [0] : vector<22x32xf32> to vector<32xf32>
    %162 = vector.shape_cast %161 : vector<32xf32> to vector<1x32xf32>
    %cst_159 = arith.constant 1.250000e-01 : f32
    %163 = vector.broadcast %cst_159 : f32 to vector<1x32xf32>
    %164 = arith.mulf %162, %163 : vector<1x32xf32>
    %165 = vector.broadcast %164 : vector<1x32xf32> to vector<22x32xf32>
    %166 = arith.subf %154, %165 : vector<22x32xf32>
    %167 = arith.mulf %166, %166 : vector<22x32xf32>
    %168 = vector.broadcast %10 : vector<22x1xf32> to vector<22x32xf32>
    %169 = arith.mulf %167, %168 : vector<22x32xf32>
    %cst_160 = arith.constant dense<0.000000e+00> : vector<32xf32>
    %170 = vector.multi_reduction <add>, %169, %cst_160 [0] : vector<22x32xf32> to vector<32xf32>
    %171 = vector.shape_cast %170 : vector<32xf32> to vector<1x32xf32>
    %cst_161 = arith.constant 1.250000e-01 : f32
    %172 = vector.broadcast %cst_161 : f32 to vector<1x32xf32>
    %173 = arith.mulf %171, %172 : vector<1x32xf32>
    %cst_162 = arith.constant 9.99999974E-6 : f32
    %174 = vector.broadcast %cst_162 : f32 to vector<1x32xf32>
    %175 = arith.addf %173, %174 : vector<1x32xf32>
    %176 = math.rsqrt %175 : vector<1x32xf32>
    %177 = arith.mulf %156, %176 : vector<1x32xf32>
    %178 = vector.broadcast %177 : vector<1x32xf32> to vector<22x32xf32>
    %179 = arith.mulf %166, %178 : vector<22x32xf32>
    %180 = vector.broadcast %158 : vector<1x32xf32> to vector<22x32xf32>
    %181 = arith.addf %179, %180 : vector<22x32xf32>
    %182 = vector.broadcast %10 : vector<22x1xf32> to vector<22x32xf32>
    %183 = arith.mulf %181, %182 : vector<22x32xf32>
    %c5_163 = arith.constant 5 : index
    %c0_164 = arith.constant 0 : index
    %184 = vector.load %arg9[%c5_163, %c0_164] : memref<32x32xf32, #tpu.memory_space<vmem>>, vector<22x32xf32>
    %185 = arith.addf %184, %183 : vector<22x32xf32>
    %c5_165 = arith.constant 5 : index
    %c0_166 = arith.constant 0 : index
    %186 = vector.load %arg9[%c5_165, %c0_166] : memref<32x32xf32, #tpu.memory_space<vmem>>, vector<22x32xf32>
    tpu.vector_store %arg9[%c5_165, %c0_166], %185 {strides = array<i32>} : memref<32x32xf32, #tpu.memory_space<vmem>>, vector<22x32xf32>,
    %cst_167 = arith.constant 0.000000e+00 : f32
    %187 = vector.broadcast %cst_167 : f32 to vector<22x32xf32>
    %c0_168 = arith.constant 0 : index
    %c0_169 = arith.constant 0 : index
    %188 = vector.load %arg9[%c0_168, %c0_169] : memref<32x32xf32, #tpu.memory_space<vmem>>, vector<22x32xf32>
    %189 = arith.truncf %188 : vector<22x32xf32> to vector<22x32xbf16>
    %c1_170 = arith.constant 1 : index
    %c0_171 = arith.constant 0 : index
    %c0_172 = arith.constant 0 : index
    %c0_173 = arith.constant 0 : index
    %190 = vector.load %arg2[%c1_170, %c0_171, %c0_172, %c0_173] : memref<2x9x32x32xbf16, #tpu.memory_space<vmem>>, vector<1x1x32x32xbf16>
    %191 = vector.shape_cast %190 : vector<1x1x32x32xbf16> to vector<32x32xbf16>
    %cst_174 = arith.constant dense<0.000000e+00> : vector<22x32xf32>
    %192 = tpu.matmul %189, %191, %cst_174 {dimension_numbers = #tpu.dot_dimension_numbers<[1], [0], [0], [1], [0, 0, 1, 1], [], []>} : vector<22x32xbf16>, vector<32x32xbf16>, vector<22x32xf32> -> vector<22x32xf32>
    %193 = arith.addf %187, %192 : vector<22x32xf32>
    %c1_175 = arith.constant 1 : index
    %c0_176 = arith.constant 0 : index
    %194 = vector.load %arg9[%c1_175, %c0_176] : memref<32x32xf32, #tpu.memory_space<vmem>>, vector<22x32xf32>
    %195 = arith.truncf %194 : vector<22x32xf32> to vector<22x32xbf16>
    %c1_177 = arith.constant 1 : index
    %c1_178 = arith.constant 1 : index
    %c0_179 = arith.constant 0 : index
    %c0_180 = arith.constant 0 : index
    %196 = vector.load %arg2[%c1_177, %c1_178, %c0_179, %c0_180] : memref<2x9x32x32xbf16, #tpu.memory_space<vmem>>, vector<1x1x32x32xbf16>
    %197 = vector.shape_cast %196 : vector<1x1x32x32xbf16> to vector<32x32xbf16>
    %cst_181 = arith.constant dense<0.000000e+00> : vector<22x32xf32>
    %198 = tpu.matmul %195, %197, %cst_181 {dimension_numbers = #tpu.dot_dimension_numbers<[1], [0], [0], [1], [0, 0, 1, 1], [], []>} : vector<22x32xbf16>, vector<32x32xbf16>, vector<22x32xf32> -> vector<22x32xf32>
    %199 = arith.addf %193, %198 : vector<22x32xf32>
    %c2_182 = arith.constant 2 : index
    %c0_183 = arith.constant 0 : index
    %200 = vector.load %arg9[%c2_182, %c0_183] : memref<32x32xf32, #tpu.memory_space<vmem>>, vector<22x32xf32>
    %201 = arith.truncf %200 : vector<22x32xf32> to vector<22x32xbf16>
    %c1_184 = arith.constant 1 : index
    %c2_185 = arith.constant 2 : index
    %c0_186 = arith.constant 0 : index
    %c0_187 = arith.constant 0 : index
    %202 = vector.load %arg2[%c1_184, %c2_185, %c0_186, %c0_187] : memref<2x9x32x32xbf16, #tpu.memory_space<vmem>>, vector<1x1x32x32xbf16>
    %203 = vector.shape_cast %202 : vector<1x1x32x32xbf16> to vector<32x32xbf16>
    %cst_188 = arith.constant dense<0.000000e+00> : vector<22x32xf32>
    %204 = tpu.matmul %201, %203, %cst_188 {dimension_numbers = #tpu.dot_dimension_numbers<[1], [0], [0], [1], [0, 0, 1, 1], [], []>} : vector<22x32xbf16>, vector<32x32xbf16>, vector<22x32xf32> -> vector<22x32xf32>
    %205 = arith.addf %199, %204 : vector<22x32xf32>
    %c4_189 = arith.constant 4 : index
    %c0_190 = arith.constant 0 : index
    %206 = vector.load %arg9[%c4_189, %c0_190] : memref<32x32xf32, #tpu.memory_space<vmem>>, vector<22x32xf32>
    %207 = arith.truncf %206 : vector<22x32xf32> to vector<22x32xbf16>
    %c1_191 = arith.constant 1 : index
    %c3_192 = arith.constant 3 : index
    %c0_193 = arith.constant 0 : index
    %c0_194 = arith.constant 0 : index
    %208 = vector.load %arg2[%c1_191, %c3_192, %c0_193, %c0_194] : memref<2x9x32x32xbf16, #tpu.memory_space<vmem>>, vector<1x1x32x32xbf16>
    %209 = vector.shape_cast %208 : vector<1x1x32x32xbf16> to vector<32x32xbf16>
    %cst_195 = arith.constant dense<0.000000e+00> : vector<22x32xf32>
    %210 = tpu.matmul %207, %209, %cst_195 {dimension_numbers = #tpu.dot_dimension_numbers<[1], [0], [0], [1], [0, 0, 1, 1], [], []>} : vector<22x32xbf16>, vector<32x32xbf16>, vector<22x32xf32> -> vector<22x32xf32>
    %211 = arith.addf %205, %210 : vector<22x32xf32>
    %c5_196 = arith.constant 5 : index
    %c0_197 = arith.constant 0 : index
    %212 = vector.load %arg9[%c5_196, %c0_197] : memref<32x32xf32, #tpu.memory_space<vmem>>, vector<22x32xf32>
    %213 = arith.truncf %212 : vector<22x32xf32> to vector<22x32xbf16>
    %c1_198 = arith.constant 1 : index
    %c4_199 = arith.constant 4 : index
    %c0_200 = arith.constant 0 : index
    %c0_201 = arith.constant 0 : index
    %214 = vector.load %arg2[%c1_198, %c4_199, %c0_200, %c0_201] : memref<2x9x32x32xbf16, #tpu.memory_space<vmem>>, vector<1x1x32x32xbf16>
    %215 = vector.shape_cast %214 : vector<1x1x32x32xbf16> to vector<32x32xbf16>
    %cst_202 = arith.constant dense<0.000000e+00> : vector<22x32xf32>
    %216 = tpu.matmul %213, %215, %cst_202 {dimension_numbers = #tpu.dot_dimension_numbers<[1], [0], [0], [1], [0, 0, 1, 1], [], []>} : vector<22x32xbf16>, vector<32x32xbf16>, vector<22x32xf32> -> vector<22x32xf32>
    %217 = arith.addf %211, %216 : vector<22x32xf32>
    %c6_203 = arith.constant 6 : index
    %c0_204 = arith.constant 0 : index
    %218 = vector.load %arg9[%c6_203, %c0_204] : memref<32x32xf32, #tpu.memory_space<vmem>>, vector<22x32xf32>
    %219 = arith.truncf %218 : vector<22x32xf32> to vector<22x32xbf16>
    %c1_205 = arith.constant 1 : index
    %c5_206 = arith.constant 5 : index
    %c0_207 = arith.constant 0 : index
    %c0_208 = arith.constant 0 : index
    %220 = vector.load %arg2[%c1_205, %c5_206, %c0_207, %c0_208] : memref<2x9x32x32xbf16, #tpu.memory_space<vmem>>, vector<1x1x32x32xbf16>
    %221 = vector.shape_cast %220 : vector<1x1x32x32xbf16> to vector<32x32xbf16>
    %cst_209 = arith.constant dense<0.000000e+00> : vector<22x32xf32>
    %222 = tpu.matmul %219, %221, %cst_209 {dimension_numbers = #tpu.dot_dimension_numbers<[1], [0], [0], [1], [0, 0, 1, 1], [], []>} : vector<22x32xbf16>, vector<32x32xbf16>, vector<22x32xf32> -> vector<22x32xf32>
    %223 = arith.addf %217, %222 : vector<22x32xf32>
    %c8_210 = arith.constant 8 : index
    %c0_211 = arith.constant 0 : index
    %224 = vector.load %arg9[%c8_210, %c0_211] : memref<32x32xf32, #tpu.memory_space<vmem>>, vector<22x32xf32>
    %225 = arith.truncf %224 : vector<22x32xf32> to vector<22x32xbf16>
    %c1_212 = arith.constant 1 : index
    %c6_213 = arith.constant 6 : index
    %c0_214 = arith.constant 0 : index
    %c0_215 = arith.constant 0 : index
    %226 = vector.load %arg2[%c1_212, %c6_213, %c0_214, %c0_215] : memref<2x9x32x32xbf16, #tpu.memory_space<vmem>>, vector<1x1x32x32xbf16>
    %227 = vector.shape_cast %226 : vector<1x1x32x32xbf16> to vector<32x32xbf16>
    %cst_216 = arith.constant dense<0.000000e+00> : vector<22x32xf32>
    %228 = tpu.matmul %225, %227, %cst_216 {dimension_numbers = #tpu.dot_dimension_numbers<[1], [0], [0], [1], [0, 0, 1, 1], [], []>} : vector<22x32xbf16>, vector<32x32xbf16>, vector<22x32xf32> -> vector<22x32xf32>
    %229 = arith.addf %223, %228 : vector<22x32xf32>
    %c9_217 = arith.constant 9 : index
    %c0_218 = arith.constant 0 : index
    %230 = vector.load %arg9[%c9_217, %c0_218] : memref<32x32xf32, #tpu.memory_space<vmem>>, vector<22x32xf32>
    %231 = arith.truncf %230 : vector<22x32xf32> to vector<22x32xbf16>
    %c1_219 = arith.constant 1 : index
    %c7_220 = arith.constant 7 : index
    %c0_221 = arith.constant 0 : index
    %c0_222 = arith.constant 0 : index
    %232 = vector.load %arg2[%c1_219, %c7_220, %c0_221, %c0_222] : memref<2x9x32x32xbf16, #tpu.memory_space<vmem>>, vector<1x1x32x32xbf16>
    %233 = vector.shape_cast %232 : vector<1x1x32x32xbf16> to vector<32x32xbf16>
    %cst_223 = arith.constant dense<0.000000e+00> : vector<22x32xf32>
    %234 = tpu.matmul %231, %233, %cst_223 {dimension_numbers = #tpu.dot_dimension_numbers<[1], [0], [0], [1], [0, 0, 1, 1], [], []>} : vector<22x32xbf16>, vector<32x32xbf16>, vector<22x32xf32> -> vector<22x32xf32>
    %235 = arith.addf %229, %234 : vector<22x32xf32>
    %c10_224 = arith.constant 10 : index
    %c0_225 = arith.constant 0 : index
    %236 = vector.load %arg9[%c10_224, %c0_225] : memref<32x32xf32, #tpu.memory_space<vmem>>, vector<22x32xf32>
    %237 = arith.truncf %236 : vector<22x32xf32> to vector<22x32xbf16>
    %c1_226 = arith.constant 1 : index
    %c8_227 = arith.constant 8 : index
    %c0_228 = arith.constant 0 : index
    %c0_229 = arith.constant 0 : index
    %238 = vector.load %arg2[%c1_226, %c8_227, %c0_228, %c0_229] : memref<2x9x32x32xbf16, #tpu.memory_space<vmem>>, vector<1x1x32x32xbf16>
    %239 = vector.shape_cast %238 : vector<1x1x32x32xbf16> to vector<32x32xbf16>
    %cst_230 = arith.constant dense<0.000000e+00> : vector<22x32xf32>
    %240 = tpu.matmul %237, %239, %cst_230 {dimension_numbers = #tpu.dot_dimension_numbers<[1], [0], [0], [1], [0, 0, 1, 1], [], []>} : vector<22x32xbf16>, vector<32x32xbf16>, vector<22x32xf32> -> vector<22x32xf32>
    %241 = arith.addf %235, %240 : vector<22x32xf32>
    %c1_231 = arith.constant 1 : index
    %c0_232 = arith.constant 0 : index
    %c0_233 = arith.constant 0 : index
    %242 = vector.load %arg3[%c1_231, %c0_232, %c0_233] : memref<2x1x32xf32, #tpu.memory_space<vmem>>, vector<1x1x32xf32>
    %243 = vector.shape_cast %242 : vector<1x1x32xf32> to vector<1x32xf32>
    %c1_234 = arith.constant 1 : index
    %c0_235 = arith.constant 0 : index
    %c0_236 = arith.constant 0 : index
    %244 = vector.load %arg4[%c1_234, %c0_235, %c0_236] : memref<2x1x32xf32, #tpu.memory_space<vmem>>, vector<1x1x32xf32>
    %245 = vector.shape_cast %244 : vector<1x1x32xf32> to vector<1x32xf32>
    %246 = vector.broadcast %10 : vector<22x1xf32> to vector<22x32xf32>
    %247 = arith.mulf %241, %246 : vector<22x32xf32>
    %cst_237 = arith.constant dense<0.000000e+00> : vector<32xf32>
    %248 = vector.multi_reduction <add>, %247, %cst_237 [0] : vector<22x32xf32> to vector<32xf32>
    %249 = vector.shape_cast %248 : vector<32xf32> to vector<1x32xf32>
    %cst_238 = arith.constant 1.250000e-01 : f32
    %250 = vector.broadcast %cst_238 : f32 to vector<1x32xf32>
    %251 = arith.mulf %249, %250 : vector<1x32xf32>
    %252 = vector.broadcast %251 : vector<1x32xf32> to vector<22x32xf32>
    %253 = arith.subf %241, %252 : vector<22x32xf32>
    %254 = arith.mulf %253, %253 : vector<22x32xf32>
    %255 = vector.broadcast %10 : vector<22x1xf32> to vector<22x32xf32>
    %256 = arith.mulf %254, %255 : vector<22x32xf32>
    %cst_239 = arith.constant dense<0.000000e+00> : vector<32xf32>
    %257 = vector.multi_reduction <add>, %256, %cst_239 [0] : vector<22x32xf32> to vector<32xf32>
    %258 = vector.shape_cast %257 : vector<32xf32> to vector<1x32xf32>
    %cst_240 = arith.constant 1.250000e-01 : f32
    %259 = vector.broadcast %cst_240 : f32 to vector<1x32xf32>
    %260 = arith.mulf %258, %259 : vector<1x32xf32>
    %cst_241 = arith.constant 9.99999974E-6 : f32
    %261 = vector.broadcast %cst_241 : f32 to vector<1x32xf32>
    %262 = arith.addf %260, %261 : vector<1x32xf32>
    %263 = math.rsqrt %262 : vector<1x32xf32>
    %264 = arith.mulf %243, %263 : vector<1x32xf32>
    %265 = vector.broadcast %264 : vector<1x32xf32> to vector<22x32xf32>
    %266 = arith.mulf %253, %265 : vector<22x32xf32>
    %267 = vector.broadcast %245 : vector<1x32xf32> to vector<22x32xf32>
    %268 = arith.addf %266, %267 : vector<22x32xf32>
    %cst_242 = arith.constant 0.000000e+00 : f32
    %269 = vector.broadcast %cst_242 : f32 to vector<22x32xf32>
    %270 = arith.maximumf %268, %269 : vector<22x32xf32>
    %271 = vector.broadcast %10 : vector<22x1xf32> to vector<22x32xf32>
    %272 = arith.mulf %270, %271 : vector<22x32xf32>
    %cst_243 = arith.constant 0.000000e+00 : f32
    %273 = vector.broadcast %cst_243 : f32 to vector<32x32xf32>
    %c0_244 = arith.constant 0 : index
    %c0_245 = arith.constant 0 : index
    %274 = vector.load %arg10[%c0_244, %c0_245] : memref<32x32xf32, #tpu.memory_space<vmem>>, vector<32x32xf32>
    tpu.vector_store %arg10[%c0_244, %c0_245], %273 {strides = array<i32>} : memref<32x32xf32, #tpu.memory_space<vmem>>, vector<32x32xf32>,
    %c5_246 = arith.constant 5 : index
    %c0_247 = arith.constant 0 : index
    %275 = vector.load %arg10[%c5_246, %c0_247] : memref<32x32xf32, #tpu.memory_space<vmem>>, vector<22x32xf32>
    tpu.vector_store %arg10[%c5_246, %c0_247], %272 {strides = array<i32>} : memref<32x32xf32, #tpu.memory_space<vmem>>, vector<22x32xf32>,
    %cst_248 = arith.constant 0.000000e+00 : f32
    %276 = vector.broadcast %cst_248 : f32 to vector<22x32xf32>
    %c0_249 = arith.constant 0 : index
    %c0_250 = arith.constant 0 : index
    %277 = vector.load %arg10[%c0_249, %c0_250] : memref<32x32xf32, #tpu.memory_space<vmem>>, vector<22x32xf32>
    %278 = arith.truncf %277 : vector<22x32xf32> to vector<22x32xbf16>
    %c1_251 = arith.constant 1 : index
    %c0_252 = arith.constant 0 : index
    %c0_253 = arith.constant 0 : index
    %c0_254 = arith.constant 0 : index
    %279 = vector.load %arg5[%c1_251, %c0_252, %c0_253, %c0_254] : memref<2x9x32x32xbf16, #tpu.memory_space<vmem>>, vector<1x1x32x32xbf16>
    %280 = vector.shape_cast %279 : vector<1x1x32x32xbf16> to vector<32x32xbf16>
    %cst_255 = arith.constant dense<0.000000e+00> : vector<22x32xf32>
    %281 = tpu.matmul %278, %280, %cst_255 {dimension_numbers = #tpu.dot_dimension_numbers<[1], [0], [0], [1], [0, 0, 1, 1], [], []>} : vector<22x32xbf16>, vector<32x32xbf16>, vector<22x32xf32> -> vector<22x32xf32>
    %282 = arith.addf %276, %281 : vector<22x32xf32>
    %c1_256 = arith.constant 1 : index
    %c0_257 = arith.constant 0 : index
    %283 = vector.load %arg10[%c1_256, %c0_257] : memref<32x32xf32, #tpu.memory_space<vmem>>, vector<22x32xf32>
    %284 = arith.truncf %283 : vector<22x32xf32> to vector<22x32xbf16>
    %c1_258 = arith.constant 1 : index
    %c1_259 = arith.constant 1 : index
    %c0_260 = arith.constant 0 : index
    %c0_261 = arith.constant 0 : index
    %285 = vector.load %arg5[%c1_258, %c1_259, %c0_260, %c0_261] : memref<2x9x32x32xbf16, #tpu.memory_space<vmem>>, vector<1x1x32x32xbf16>
    %286 = vector.shape_cast %285 : vector<1x1x32x32xbf16> to vector<32x32xbf16>
    %cst_262 = arith.constant dense<0.000000e+00> : vector<22x32xf32>
    %287 = tpu.matmul %284, %286, %cst_262 {dimension_numbers = #tpu.dot_dimension_numbers<[1], [0], [0], [1], [0, 0, 1, 1], [], []>} : vector<22x32xbf16>, vector<32x32xbf16>, vector<22x32xf32> -> vector<22x32xf32>
    %288 = arith.addf %282, %287 : vector<22x32xf32>
    %c2_263 = arith.constant 2 : index
    %c0_264 = arith.constant 0 : index
    %289 = vector.load %arg10[%c2_263, %c0_264] : memref<32x32xf32, #tpu.memory_space<vmem>>, vector<22x32xf32>
    %290 = arith.truncf %289 : vector<22x32xf32> to vector<22x32xbf16>
    %c1_265 = arith.constant 1 : index
    %c2_266 = arith.constant 2 : index
    %c0_267 = arith.constant 0 : index
    %c0_268 = arith.constant 0 : index
    %291 = vector.load %arg5[%c1_265, %c2_266, %c0_267, %c0_268] : memref<2x9x32x32xbf16, #tpu.memory_space<vmem>>, vector<1x1x32x32xbf16>
    %292 = vector.shape_cast %291 : vector<1x1x32x32xbf16> to vector<32x32xbf16>
    %cst_269 = arith.constant dense<0.000000e+00> : vector<22x32xf32>
    %293 = tpu.matmul %290, %292, %cst_269 {dimension_numbers = #tpu.dot_dimension_numbers<[1], [0], [0], [1], [0, 0, 1, 1], [], []>} : vector<22x32xbf16>, vector<32x32xbf16>, vector<22x32xf32> -> vector<22x32xf32>
    %294 = arith.addf %288, %293 : vector<22x32xf32>
    %c4_270 = arith.constant 4 : index
    %c0_271 = arith.constant 0 : index
    %295 = vector.load %arg10[%c4_270, %c0_271] : memref<32x32xf32, #tpu.memory_space<vmem>>, vector<22x32xf32>
    %296 = arith.truncf %295 : vector<22x32xf32> to vector<22x32xbf16>
    %c1_272 = arith.constant 1 : index
    %c3_273 = arith.constant 3 : index
    %c0_274 = arith.constant 0 : index
    %c0_275 = arith.constant 0 : index
    %297 = vector.load %arg5[%c1_272, %c3_273, %c0_274, %c0_275] : memref<2x9x32x32xbf16, #tpu.memory_space<vmem>>, vector<1x1x32x32xbf16>
    %298 = vector.shape_cast %297 : vector<1x1x32x32xbf16> to vector<32x32xbf16>
    %cst_276 = arith.constant dense<0.000000e+00> : vector<22x32xf32>
    %299 = tpu.matmul %296, %298, %cst_276 {dimension_numbers = #tpu.dot_dimension_numbers<[1], [0], [0], [1], [0, 0, 1, 1], [], []>} : vector<22x32xbf16>, vector<32x32xbf16>, vector<22x32xf32> -> vector<22x32xf32>
    %300 = arith.addf %294, %299 : vector<22x32xf32>
    %c5_277 = arith.constant 5 : index
    %c0_278 = arith.constant 0 : index
    %301 = vector.load %arg10[%c5_277, %c0_278] : memref<32x32xf32, #tpu.memory_space<vmem>>, vector<22x32xf32>
    %302 = arith.truncf %301 : vector<22x32xf32> to vector<22x32xbf16>
    %c1_279 = arith.constant 1 : index
    %c4_280 = arith.constant 4 : index
    %c0_281 = arith.constant 0 : index
    %c0_282 = arith.constant 0 : index
    %303 = vector.load %arg5[%c1_279, %c4_280, %c0_281, %c0_282] : memref<2x9x32x32xbf16, #tpu.memory_space<vmem>>, vector<1x1x32x32xbf16>
    %304 = vector.shape_cast %303 : vector<1x1x32x32xbf16> to vector<32x32xbf16>
    %cst_283 = arith.constant dense<0.000000e+00> : vector<22x32xf32>
    %305 = tpu.matmul %302, %304, %cst_283 {dimension_numbers = #tpu.dot_dimension_numbers<[1], [0], [0], [1], [0, 0, 1, 1], [], []>} : vector<22x32xbf16>, vector<32x32xbf16>, vector<22x32xf32> -> vector<22x32xf32>
    %306 = arith.addf %300, %305 : vector<22x32xf32>
    %c6_284 = arith.constant 6 : index
    %c0_285 = arith.constant 0 : index
    %307 = vector.load %arg10[%c6_284, %c0_285] : memref<32x32xf32, #tpu.memory_space<vmem>>, vector<22x32xf32>
    %308 = arith.truncf %307 : vector<22x32xf32> to vector<22x32xbf16>
    %c1_286 = arith.constant 1 : index
    %c5_287 = arith.constant 5 : index
    %c0_288 = arith.constant 0 : index
    %c0_289 = arith.constant 0 : index
    %309 = vector.load %arg5[%c1_286, %c5_287, %c0_288, %c0_289] : memref<2x9x32x32xbf16, #tpu.memory_space<vmem>>, vector<1x1x32x32xbf16>
    %310 = vector.shape_cast %309 : vector<1x1x32x32xbf16> to vector<32x32xbf16>
    %cst_290 = arith.constant dense<0.000000e+00> : vector<22x32xf32>
    %311 = tpu.matmul %308, %310, %cst_290 {dimension_numbers = #tpu.dot_dimension_numbers<[1], [0], [0], [1], [0, 0, 1, 1], [], []>} : vector<22x32xbf16>, vector<32x32xbf16>, vector<22x32xf32> -> vector<22x32xf32>
    %312 = arith.addf %306, %311 : vector<22x32xf32>
    %c8_291 = arith.constant 8 : index
    %c0_292 = arith.constant 0 : index
    %313 = vector.load %arg10[%c8_291, %c0_292] : memref<32x32xf32, #tpu.memory_space<vmem>>, vector<22x32xf32>
    %314 = arith.truncf %313 : vector<22x32xf32> to vector<22x32xbf16>
    %c1_293 = arith.constant 1 : index
    %c6_294 = arith.constant 6 : index
    %c0_295 = arith.constant 0 : index
    %c0_296 = arith.constant 0 : index
    %315 = vector.load %arg5[%c1_293, %c6_294, %c0_295, %c0_296] : memref<2x9x32x32xbf16, #tpu.memory_space<vmem>>, vector<1x1x32x32xbf16>
    %316 = vector.shape_cast %315 : vector<1x1x32x32xbf16> to vector<32x32xbf16>
    %cst_297 = arith.constant dense<0.000000e+00> : vector<22x32xf32>
    %317 = tpu.matmul %314, %316, %cst_297 {dimension_numbers = #tpu.dot_dimension_numbers<[1], [0], [0], [1], [0, 0, 1, 1], [], []>} : vector<22x32xbf16>, vector<32x32xbf16>, vector<22x32xf32> -> vector<22x32xf32>
    %318 = arith.addf %312, %317 : vector<22x32xf32>
    %c9_298 = arith.constant 9 : index
    %c0_299 = arith.constant 0 : index
    %319 = vector.load %arg10[%c9_298, %c0_299] : memref<32x32xf32, #tpu.memory_space<vmem>>, vector<22x32xf32>
    %320 = arith.truncf %319 : vector<22x32xf32> to vector<22x32xbf16>
    %c1_300 = arith.constant 1 : index
    %c7_301 = arith.constant 7 : index
    %c0_302 = arith.constant 0 : index
    %c0_303 = arith.constant 0 : index
    %321 = vector.load %arg5[%c1_300, %c7_301, %c0_302, %c0_303] : memref<2x9x32x32xbf16, #tpu.memory_space<vmem>>, vector<1x1x32x32xbf16>
    %322 = vector.shape_cast %321 : vector<1x1x32x32xbf16> to vector<32x32xbf16>
    %cst_304 = arith.constant dense<0.000000e+00> : vector<22x32xf32>
    %323 = tpu.matmul %320, %322, %cst_304 {dimension_numbers = #tpu.dot_dimension_numbers<[1], [0], [0], [1], [0, 0, 1, 1], [], []>} : vector<22x32xbf16>, vector<32x32xbf16>, vector<22x32xf32> -> vector<22x32xf32>
    %324 = arith.addf %318, %323 : vector<22x32xf32>
    %c10_305 = arith.constant 10 : index
    %c0_306 = arith.constant 0 : index
    %325 = vector.load %arg10[%c10_305, %c0_306] : memref<32x32xf32, #tpu.memory_space<vmem>>, vector<22x32xf32>
    %326 = arith.truncf %325 : vector<22x32xf32> to vector<22x32xbf16>
    %c1_307 = arith.constant 1 : index
    %c8_308 = arith.constant 8 : index
    %c0_309 = arith.constant 0 : index
    %c0_310 = arith.constant 0 : index
    %327 = vector.load %arg5[%c1_307, %c8_308, %c0_309, %c0_310] : memref<2x9x32x32xbf16, #tpu.memory_space<vmem>>, vector<1x1x32x32xbf16>
    %328 = vector.shape_cast %327 : vector<1x1x32x32xbf16> to vector<32x32xbf16>
    %cst_311 = arith.constant dense<0.000000e+00> : vector<22x32xf32>
    %329 = tpu.matmul %326, %328, %cst_311 {dimension_numbers = #tpu.dot_dimension_numbers<[1], [0], [0], [1], [0, 0, 1, 1], [], []>} : vector<22x32xbf16>, vector<32x32xbf16>, vector<22x32xf32> -> vector<22x32xf32>
    %330 = arith.addf %324, %329 : vector<22x32xf32>
    %c1_312 = arith.constant 1 : index
    %c0_313 = arith.constant 0 : index
    %c0_314 = arith.constant 0 : index
    %331 = vector.load %arg6[%c1_312, %c0_313, %c0_314] : memref<2x1x32xf32, #tpu.memory_space<vmem>>, vector<1x1x32xf32>
    %332 = vector.shape_cast %331 : vector<1x1x32xf32> to vector<1x32xf32>
    %c1_315 = arith.constant 1 : index
    %c0_316 = arith.constant 0 : index
    %c0_317 = arith.constant 0 : index
    %333 = vector.load %arg7[%c1_315, %c0_316, %c0_317] : memref<2x1x32xf32, #tpu.memory_space<vmem>>, vector<1x1x32xf32>
    %334 = vector.shape_cast %333 : vector<1x1x32xf32> to vector<1x32xf32>
    %335 = vector.broadcast %10 : vector<22x1xf32> to vector<22x32xf32>
    %336 = arith.mulf %330, %335 : vector<22x32xf32>
    %cst_318 = arith.constant dense<0.000000e+00> : vector<32xf32>
    %337 = vector.multi_reduction <add>, %336, %cst_318 [0] : vector<22x32xf32> to vector<32xf32>
    %338 = vector.shape_cast %337 : vector<32xf32> to vector<1x32xf32>
    %cst_319 = arith.constant 1.250000e-01 : f32
    %339 = vector.broadcast %cst_319 : f32 to vector<1x32xf32>
    %340 = arith.mulf %338, %339 : vector<1x32xf32>
    %341 = vector.broadcast %340 : vector<1x32xf32> to vector<22x32xf32>
    %342 = arith.subf %330, %341 : vector<22x32xf32>
    %343 = arith.mulf %342, %342 : vector<22x32xf32>
    %344 = vector.broadcast %10 : vector<22x1xf32> to vector<22x32xf32>
    %345 = arith.mulf %343, %344 : vector<22x32xf32>
    %cst_320 = arith.constant dense<0.000000e+00> : vector<32xf32>
    %346 = vector.multi_reduction <add>, %345, %cst_320 [0] : vector<22x32xf32> to vector<32xf32>
    %347 = vector.shape_cast %346 : vector<32xf32> to vector<1x32xf32>
    %cst_321 = arith.constant 1.250000e-01 : f32
    %348 = vector.broadcast %cst_321 : f32 to vector<1x32xf32>
    %349 = arith.mulf %347, %348 : vector<1x32xf32>
    %cst_322 = arith.constant 9.99999974E-6 : f32
    %350 = vector.broadcast %cst_322 : f32 to vector<1x32xf32>
    %351 = arith.addf %349, %350 : vector<1x32xf32>
    %352 = math.rsqrt %351 : vector<1x32xf32>
    %353 = arith.mulf %332, %352 : vector<1x32xf32>
    %354 = vector.broadcast %353 : vector<1x32xf32> to vector<22x32xf32>
    %355 = arith.mulf %342, %354 : vector<22x32xf32>
    %356 = vector.broadcast %334 : vector<1x32xf32> to vector<22x32xf32>
    %357 = arith.addf %355, %356 : vector<22x32xf32>
    %358 = vector.broadcast %10 : vector<22x1xf32> to vector<22x32xf32>
    %359 = arith.mulf %357, %358 : vector<22x32xf32>
    %c5_323 = arith.constant 5 : index
    %c0_324 = arith.constant 0 : index
    %360 = vector.load %arg9[%c5_323, %c0_324] : memref<32x32xf32, #tpu.memory_space<vmem>>, vector<22x32xf32>
    %361 = arith.addf %360, %359 : vector<22x32xf32>
    %c5_325 = arith.constant 5 : index
    %c0_326 = arith.constant 0 : index
    %362 = vector.load %arg9[%c5_325, %c0_326] : memref<32x32xf32, #tpu.memory_space<vmem>>, vector<22x32xf32>
    tpu.vector_store %arg9[%c5_325, %c0_326], %361 {strides = array<i32>} : memref<32x32xf32, #tpu.memory_space<vmem>>, vector<22x32xf32>,
    return
  }
  func.func @transform_0(%arg0: i32) -> (i32, i32) {
    %c0_i32 = arith.constant 0 : i32
    %c0_i32_0 = arith.constant 0 : i32
    %c0_i32_1 = arith.constant 0 : i32
    return %c0_i32, %c0_i32_0 : i32, i32
  }
  func.func @transform_1(%arg0: i32) -> (i32, i32, i32, i32) {
    %c0_i32 = arith.constant 0 : i32
    %c0_i32_0 = arith.constant 0 : i32
    %c0_i32_1 = arith.constant 0 : i32
    %c0_i32_2 = arith.constant 0 : i32
    %c0_i32_3 = arith.constant 0 : i32
    return %c0_i32, %c0_i32_0, %c0_i32_1, %c0_i32_2 : i32, i32, i32, i32
  }
  func.func @transform_2(%arg0: i32) -> (i32, i32, i32) {
    %c0_i32 = arith.constant 0 : i32
    %c0_i32_0 = arith.constant 0 : i32
    %c0_i32_1 = arith.constant 0 : i32
    %c0_i32_2 = arith.constant 0 : i32
    return %c0_i32, %c0_i32_0, %c0_i32_1 : i32, i32, i32
  }
  func.func @transform_3(%arg0: i32) -> (i32, i32, i32) {
    %c0_i32 = arith.constant 0 : i32
    %c0_i32_0 = arith.constant 0 : i32
    %c0_i32_1 = arith.constant 0 : i32
    %c0_i32_2 = arith.constant 0 : i32
    return %c0_i32, %c0_i32_0, %c0_i32_1 : i32, i32, i32
  }
  func.func @transform_4(%arg0: i32) -> (i32, i32, i32, i32) {
    %c0_i32 = arith.constant 0 : i32
    %c0_i32_0 = arith.constant 0 : i32
    %c0_i32_1 = arith.constant 0 : i32
    %c0_i32_2 = arith.constant 0 : i32
    %c0_i32_3 = arith.constant 0 : i32
    return %c0_i32, %c0_i32_0, %c0_i32_1, %c0_i32_2 : i32, i32, i32, i32
  }
  func.func @transform_5(%arg0: i32) -> (i32, i32, i32) {
    %c0_i32 = arith.constant 0 : i32
    %c0_i32_0 = arith.constant 0 : i32
    %c0_i32_1 = arith.constant 0 : i32
    %c0_i32_2 = arith.constant 0 : i32
    return %c0_i32, %c0_i32_0, %c0_i32_1 : i32, i32, i32
  }
  func.func @transform_6(%arg0: i32) -> (i32, i32, i32) {
    %c0_i32 = arith.constant 0 : i32
    %c0_i32_0 = arith.constant 0 : i32
    %c0_i32_1 = arith.constant 0 : i32
    %c0_i32_2 = arith.constant 0 : i32
    return %c0_i32, %c0_i32_0, %c0_i32_1 : i32, i32, i32
  }
  func.func @transform_7(%arg0: i32) -> (i32, i32) {
    %c0_i32 = arith.constant 0 : i32
    %c0_i32_0 = arith.constant 0 : i32
    %c0_i32_1 = arith.constant 0 : i32
    return %c0_i32, %c0_i32_0 : i32, i32
  }
  func.func @transform_8(%arg0: i32) -> (i32, i32) {
    %c0_i32 = arith.constant 0 : i32
    %c0_i32_0 = arith.constant 0 : i32
    %c0_i32_1 = arith.constant 0 : i32
    return %c0_i32, %c0_i32_0 : i32, i32
  }
}

module attributes {stable_mosaic.version = 11 : i64} {
  func.func @kernel(%arg0: i32, %arg1: memref<4x8x128xbf16, #tpu.memory_space<vmem>>, %arg2: memref<4x128x16xbf16, #tpu.memory_space<vmem>>, %arg3: memref<1x16xf32, #tpu.memory_space<vmem>>, %arg4: memref<1x16xf32, #tpu.memory_space<vmem>>, %arg5: memref<4x8x16xbf16, #tpu.memory_space<vmem>>) attributes {dimension_semantics = [#tpu.dimension_semantics<arbitrary>], iteration_bounds = array<i64: 1>, scalar_prefetch = 0 : i64, scratch_operands = 0 : i64, tpu.core_type = #tpu.core_type<tc>, window_params = [{pipeline_mode = #tpu.pipeline_mode<synchronous>, transform_indices = @transform_0, window_bounds = array<i64: 4, 8, 128>}, {pipeline_mode = #tpu.pipeline_mode<synchronous>, transform_indices = @transform_1, window_bounds = array<i64: 4, 128, 16>}, {pipeline_mode = #tpu.pipeline_mode<synchronous>, transform_indices = @transform_2, window_bounds = array<i64: 1, 16>}, {pipeline_mode = #tpu.pipeline_mode<synchronous>, transform_indices = @transform_3, window_bounds = array<i64: 1, 16>}, {pipeline_mode = #tpu.pipeline_mode<synchronous>, transform_indices = @transform_4, window_bounds = array<i64: 4, 8, 16>}]} {
    %c0 = arith.constant 0 : index
    %c0_0 = arith.constant 0 : index
    %c0_1 = arith.constant 0 : index
    %0 = vector.load %arg1[%c0, %c0_0, %c0_1] : memref<4x8x128xbf16, #tpu.memory_space<vmem>>, vector<1x8x128xbf16>
    %1 = vector.shape_cast %0 : vector<1x8x128xbf16> to vector<8x128xbf16>
    %c0_2 = arith.constant 0 : index
    %c0_3 = arith.constant 0 : index
    %c0_4 = arith.constant 0 : index
    %2 = vector.load %arg2[%c0_2, %c0_3, %c0_4] : memref<4x128x16xbf16, #tpu.memory_space<vmem>>, vector<1x128x16xbf16>
    %3 = vector.shape_cast %2 : vector<1x128x16xbf16> to vector<128x16xbf16>
    %cst = arith.constant dense<0.000000e+00> : vector<8x16xf32>
    %4 = tpu.matmul %1, %3, %cst {dimension_numbers = #tpu.dot_dimension_numbers<[1], [0], [0], [1], [0, 0, 1, 1], [], []>} : vector<8x128xbf16>, vector<128x16xbf16>, vector<8x16xf32> -> vector<8x16xf32>
    %c1 = arith.constant 1 : index
    %c0_5 = arith.constant 0 : index
    %c0_6 = arith.constant 0 : index
    %5 = vector.load %arg1[%c1, %c0_5, %c0_6] : memref<4x8x128xbf16, #tpu.memory_space<vmem>>, vector<1x8x128xbf16>
    %6 = vector.shape_cast %5 : vector<1x8x128xbf16> to vector<8x128xbf16>
    %c1_7 = arith.constant 1 : index
    %c0_8 = arith.constant 0 : index
    %c0_9 = arith.constant 0 : index
    %7 = vector.load %arg2[%c1_7, %c0_8, %c0_9] : memref<4x128x16xbf16, #tpu.memory_space<vmem>>, vector<1x128x16xbf16>
    %8 = vector.shape_cast %7 : vector<1x128x16xbf16> to vector<128x16xbf16>
    %cst_10 = arith.constant dense<0.000000e+00> : vector<8x16xf32>
    %9 = tpu.matmul %6, %8, %cst_10 {dimension_numbers = #tpu.dot_dimension_numbers<[1], [0], [0], [1], [0, 0, 1, 1], [], []>} : vector<8x128xbf16>, vector<128x16xbf16>, vector<8x16xf32> -> vector<8x16xf32>
    %c2 = arith.constant 2 : index
    %c0_11 = arith.constant 0 : index
    %c0_12 = arith.constant 0 : index
    %10 = vector.load %arg1[%c2, %c0_11, %c0_12] : memref<4x8x128xbf16, #tpu.memory_space<vmem>>, vector<1x8x128xbf16>
    %11 = vector.shape_cast %10 : vector<1x8x128xbf16> to vector<8x128xbf16>
    %c2_13 = arith.constant 2 : index
    %c0_14 = arith.constant 0 : index
    %c0_15 = arith.constant 0 : index
    %12 = vector.load %arg2[%c2_13, %c0_14, %c0_15] : memref<4x128x16xbf16, #tpu.memory_space<vmem>>, vector<1x128x16xbf16>
    %13 = vector.shape_cast %12 : vector<1x128x16xbf16> to vector<128x16xbf16>
    %cst_16 = arith.constant dense<0.000000e+00> : vector<8x16xf32>
    %14 = tpu.matmul %11, %13, %cst_16 {dimension_numbers = #tpu.dot_dimension_numbers<[1], [0], [0], [1], [0, 0, 1, 1], [], []>} : vector<8x128xbf16>, vector<128x16xbf16>, vector<8x16xf32> -> vector<8x16xf32>
    %c3 = arith.constant 3 : index
    %c0_17 = arith.constant 0 : index
    %c0_18 = arith.constant 0 : index
    %15 = vector.load %arg1[%c3, %c0_17, %c0_18] : memref<4x8x128xbf16, #tpu.memory_space<vmem>>, vector<1x8x128xbf16>
    %16 = vector.shape_cast %15 : vector<1x8x128xbf16> to vector<8x128xbf16>
    %c3_19 = arith.constant 3 : index
    %c0_20 = arith.constant 0 : index
    %c0_21 = arith.constant 0 : index
    %17 = vector.load %arg2[%c3_19, %c0_20, %c0_21] : memref<4x128x16xbf16, #tpu.memory_space<vmem>>, vector<1x128x16xbf16>
    %18 = vector.shape_cast %17 : vector<1x128x16xbf16> to vector<128x16xbf16>
    %cst_22 = arith.constant dense<0.000000e+00> : vector<8x16xf32>
    %19 = tpu.matmul %16, %18, %cst_22 {dimension_numbers = #tpu.dot_dimension_numbers<[1], [0], [0], [1], [0, 0, 1, 1], [], []>} : vector<8x128xbf16>, vector<128x16xbf16>, vector<8x16xf32> -> vector<8x16xf32>
    %cst_23 = arith.constant dense<0.000000e+00> : vector<16xf32>
    %20 = vector.multi_reduction <add>, %4, %cst_23 [0] : vector<8x16xf32> to vector<16xf32>
    %21 = vector.shape_cast %20 : vector<16xf32> to vector<1x16xf32>
    %cst_24 = arith.constant 0.000000e+00 : f32
    %22 = vector.broadcast %cst_24 : f32 to vector<1x16xf32>
    %23 = arith.addf %22, %21 : vector<1x16xf32>
    %cst_25 = arith.constant dense<0.000000e+00> : vector<16xf32>
    %24 = vector.multi_reduction <add>, %9, %cst_25 [0] : vector<8x16xf32> to vector<16xf32>
    %25 = vector.shape_cast %24 : vector<16xf32> to vector<1x16xf32>
    %26 = arith.addf %23, %25 : vector<1x16xf32>
    %cst_26 = arith.constant dense<0.000000e+00> : vector<16xf32>
    %27 = vector.multi_reduction <add>, %14, %cst_26 [0] : vector<8x16xf32> to vector<16xf32>
    %28 = vector.shape_cast %27 : vector<16xf32> to vector<1x16xf32>
    %29 = arith.addf %26, %28 : vector<1x16xf32>
    %cst_27 = arith.constant dense<0.000000e+00> : vector<16xf32>
    %30 = vector.multi_reduction <add>, %19, %cst_27 [0] : vector<8x16xf32> to vector<16xf32>
    %31 = vector.shape_cast %30 : vector<16xf32> to vector<1x16xf32>
    %32 = arith.addf %29, %31 : vector<1x16xf32>
    %cst_28 = arith.constant 3.125000e-02 : f32
    %33 = vector.broadcast %cst_28 : f32 to vector<1x16xf32>
    %34 = arith.mulf %32, %33 : vector<1x16xf32>
    %35 = vector.broadcast %34 : vector<1x16xf32> to vector<8x16xf32>
    %36 = arith.subf %4, %35 : vector<8x16xf32>
    %37 = vector.broadcast %34 : vector<1x16xf32> to vector<8x16xf32>
    %38 = arith.subf %9, %37 : vector<8x16xf32>
    %39 = vector.broadcast %34 : vector<1x16xf32> to vector<8x16xf32>
    %40 = arith.subf %14, %39 : vector<8x16xf32>
    %41 = vector.broadcast %34 : vector<1x16xf32> to vector<8x16xf32>
    %42 = arith.subf %19, %41 : vector<8x16xf32>
    %43 = arith.mulf %36, %36 : vector<8x16xf32>
    %cst_29 = arith.constant dense<0.000000e+00> : vector<16xf32>
    %44 = vector.multi_reduction <add>, %43, %cst_29 [0] : vector<8x16xf32> to vector<16xf32>
    %45 = vector.shape_cast %44 : vector<16xf32> to vector<1x16xf32>
    %cst_30 = arith.constant 0.000000e+00 : f32
    %46 = vector.broadcast %cst_30 : f32 to vector<1x16xf32>
    %47 = arith.addf %46, %45 : vector<1x16xf32>
    %48 = arith.mulf %38, %38 : vector<8x16xf32>
    %cst_31 = arith.constant dense<0.000000e+00> : vector<16xf32>
    %49 = vector.multi_reduction <add>, %48, %cst_31 [0] : vector<8x16xf32> to vector<16xf32>
    %50 = vector.shape_cast %49 : vector<16xf32> to vector<1x16xf32>
    %51 = arith.addf %47, %50 : vector<1x16xf32>
    %52 = arith.mulf %40, %40 : vector<8x16xf32>
    %cst_32 = arith.constant dense<0.000000e+00> : vector<16xf32>
    %53 = vector.multi_reduction <add>, %52, %cst_32 [0] : vector<8x16xf32> to vector<16xf32>
    %54 = vector.shape_cast %53 : vector<16xf32> to vector<1x16xf32>
    %55 = arith.addf %51, %54 : vector<1x16xf32>
    %56 = arith.mulf %42, %42 : vector<8x16xf32>
    %cst_33 = arith.constant dense<0.000000e+00> : vector<16xf32>
    %57 = vector.multi_reduction <add>, %56, %cst_33 [0] : vector<8x16xf32> to vector<16xf32>
    %58 = vector.shape_cast %57 : vector<16xf32> to vector<1x16xf32>
    %59 = arith.addf %55, %58 : vector<1x16xf32>
    %cst_34 = arith.constant 3.125000e-02 : f32
    %60 = vector.broadcast %cst_34 : f32 to vector<1x16xf32>
    %61 = arith.mulf %59, %60 : vector<1x16xf32>
    %c0_35 = arith.constant 0 : index
    %c0_36 = arith.constant 0 : index
    %62 = vector.load %arg3[%c0_35, %c0_36] : memref<1x16xf32, #tpu.memory_space<vmem>>, vector<1x16xf32>
    %cst_37 = arith.constant 9.99999974E-6 : f32
    %63 = vector.broadcast %cst_37 : f32 to vector<1x16xf32>
    %64 = arith.addf %61, %63 : vector<1x16xf32>
    %65 = math.rsqrt %64 : vector<1x16xf32>
    %66 = arith.mulf %62, %65 : vector<1x16xf32>
    %67 = vector.broadcast %66 : vector<1x16xf32> to vector<8x16xf32>
    %68 = arith.mulf %36, %67 : vector<8x16xf32>
    %c0_38 = arith.constant 0 : index
    %c0_39 = arith.constant 0 : index
    %69 = vector.load %arg4[%c0_38, %c0_39] : memref<1x16xf32, #tpu.memory_space<vmem>>, vector<1x16xf32>
    %70 = vector.broadcast %69 : vector<1x16xf32> to vector<8x16xf32>
    %71 = arith.addf %68, %70 : vector<8x16xf32>
    %72 = vector.broadcast %66 : vector<1x16xf32> to vector<8x16xf32>
    %73 = arith.mulf %38, %72 : vector<8x16xf32>
    %c0_40 = arith.constant 0 : index
    %c0_41 = arith.constant 0 : index
    %74 = vector.load %arg4[%c0_40, %c0_41] : memref<1x16xf32, #tpu.memory_space<vmem>>, vector<1x16xf32>
    %75 = vector.broadcast %74 : vector<1x16xf32> to vector<8x16xf32>
    %76 = arith.addf %73, %75 : vector<8x16xf32>
    %77 = vector.broadcast %66 : vector<1x16xf32> to vector<8x16xf32>
    %78 = arith.mulf %40, %77 : vector<8x16xf32>
    %c0_42 = arith.constant 0 : index
    %c0_43 = arith.constant 0 : index
    %79 = vector.load %arg4[%c0_42, %c0_43] : memref<1x16xf32, #tpu.memory_space<vmem>>, vector<1x16xf32>
    %80 = vector.broadcast %79 : vector<1x16xf32> to vector<8x16xf32>
    %81 = arith.addf %78, %80 : vector<8x16xf32>
    %82 = vector.broadcast %66 : vector<1x16xf32> to vector<8x16xf32>
    %83 = arith.mulf %42, %82 : vector<8x16xf32>
    %c0_44 = arith.constant 0 : index
    %c0_45 = arith.constant 0 : index
    %84 = vector.load %arg4[%c0_44, %c0_45] : memref<1x16xf32, #tpu.memory_space<vmem>>, vector<1x16xf32>
    %85 = vector.broadcast %84 : vector<1x16xf32> to vector<8x16xf32>
    %86 = arith.addf %83, %85 : vector<8x16xf32>
    %cst_46 = arith.constant 0.000000e+00 : f32
    %87 = vector.broadcast %cst_46 : f32 to vector<8x16xf32>
    %88 = arith.maximumf %71, %87 : vector<8x16xf32>
    %89 = arith.truncf %88 : vector<8x16xf32> to vector<8x16xbf16>
    %c0_47 = arith.constant 0 : index
    %c0_48 = arith.constant 0 : index
    %c0_49 = arith.constant 0 : index
    %90 = vector.load %arg5[%c0_47, %c0_48, %c0_49] : memref<4x8x16xbf16, #tpu.memory_space<vmem>>, vector<1x8x16xbf16>
    %91 = vector.shape_cast %90 : vector<1x8x16xbf16> to vector<8x16xbf16>
    %92 = vector.shape_cast %89 : vector<8x16xbf16> to vector<1x8x16xbf16>
    tpu.vector_store %arg5[%c0_47, %c0_48, %c0_49], %92 {strides = array<i32>} : memref<4x8x16xbf16, #tpu.memory_space<vmem>>, vector<1x8x16xbf16>,
    %cst_50 = arith.constant 0.000000e+00 : f32
    %93 = vector.broadcast %cst_50 : f32 to vector<8x16xf32>
    %94 = arith.maximumf %76, %93 : vector<8x16xf32>
    %95 = arith.truncf %94 : vector<8x16xf32> to vector<8x16xbf16>
    %c1_51 = arith.constant 1 : index
    %c0_52 = arith.constant 0 : index
    %c0_53 = arith.constant 0 : index
    %96 = vector.load %arg5[%c1_51, %c0_52, %c0_53] : memref<4x8x16xbf16, #tpu.memory_space<vmem>>, vector<1x8x16xbf16>
    %97 = vector.shape_cast %96 : vector<1x8x16xbf16> to vector<8x16xbf16>
    %98 = vector.shape_cast %95 : vector<8x16xbf16> to vector<1x8x16xbf16>
    tpu.vector_store %arg5[%c1_51, %c0_52, %c0_53], %98 {strides = array<i32>} : memref<4x8x16xbf16, #tpu.memory_space<vmem>>, vector<1x8x16xbf16>,
    %cst_54 = arith.constant 0.000000e+00 : f32
    %99 = vector.broadcast %cst_54 : f32 to vector<8x16xf32>
    %100 = arith.maximumf %81, %99 : vector<8x16xf32>
    %101 = arith.truncf %100 : vector<8x16xf32> to vector<8x16xbf16>
    %c2_55 = arith.constant 2 : index
    %c0_56 = arith.constant 0 : index
    %c0_57 = arith.constant 0 : index
    %102 = vector.load %arg5[%c2_55, %c0_56, %c0_57] : memref<4x8x16xbf16, #tpu.memory_space<vmem>>, vector<1x8x16xbf16>
    %103 = vector.shape_cast %102 : vector<1x8x16xbf16> to vector<8x16xbf16>
    %104 = vector.shape_cast %101 : vector<8x16xbf16> to vector<1x8x16xbf16>
    tpu.vector_store %arg5[%c2_55, %c0_56, %c0_57], %104 {strides = array<i32>} : memref<4x8x16xbf16, #tpu.memory_space<vmem>>, vector<1x8x16xbf16>,
    %cst_58 = arith.constant 0.000000e+00 : f32
    %105 = vector.broadcast %cst_58 : f32 to vector<8x16xf32>
    %106 = arith.maximumf %86, %105 : vector<8x16xf32>
    %107 = arith.truncf %106 : vector<8x16xf32> to vector<8x16xbf16>
    %c3_59 = arith.constant 3 : index
    %c0_60 = arith.constant 0 : index
    %c0_61 = arith.constant 0 : index
    %108 = vector.load %arg5[%c3_59, %c0_60, %c0_61] : memref<4x8x16xbf16, #tpu.memory_space<vmem>>, vector<1x8x16xbf16>
    %109 = vector.shape_cast %108 : vector<1x8x16xbf16> to vector<8x16xbf16>
    %110 = vector.shape_cast %107 : vector<8x16xbf16> to vector<1x8x16xbf16>
    tpu.vector_store %arg5[%c3_59, %c0_60, %c0_61], %110 {strides = array<i32>} : memref<4x8x16xbf16, #tpu.memory_space<vmem>>, vector<1x8x16xbf16>,
    return
  }
  func.func @transform_0(%arg0: i32) -> (i32, i32, i32) {
    %c0_i32 = arith.constant 0 : i32
    %c0_i32_0 = arith.constant 0 : i32
    %c0_i32_1 = arith.constant 0 : i32
    %c0_i32_2 = arith.constant 0 : i32
    return %c0_i32, %c0_i32_0, %c0_i32_1 : i32, i32, i32
  }
  func.func @transform_1(%arg0: i32) -> (i32, i32, i32) {
    %c0_i32 = arith.constant 0 : i32
    %c0_i32_0 = arith.constant 0 : i32
    %c0_i32_1 = arith.constant 0 : i32
    %c0_i32_2 = arith.constant 0 : i32
    return %c0_i32, %c0_i32_0, %c0_i32_1 : i32, i32, i32
  }
  func.func @transform_2(%arg0: i32) -> (i32, i32) {
    %c0_i32 = arith.constant 0 : i32
    %c0_i32_0 = arith.constant 0 : i32
    %c0_i32_1 = arith.constant 0 : i32
    return %c0_i32, %c0_i32_0 : i32, i32
  }
  func.func @transform_3(%arg0: i32) -> (i32, i32) {
    %c0_i32 = arith.constant 0 : i32
    %c0_i32_0 = arith.constant 0 : i32
    %c0_i32_1 = arith.constant 0 : i32
    return %c0_i32, %c0_i32_0 : i32, i32
  }
  func.func @transform_4(%arg0: i32) -> (i32, i32, i32) {
    %c0_i32 = arith.constant 0 : i32
    %c0_i32_0 = arith.constant 0 : i32
    %c0_i32_1 = arith.constant 0 : i32
    %c0_i32_2 = arith.constant 0 : i32
    return %c0_i32, %c0_i32_0, %c0_i32_1 : i32, i32, i32
  }
}

module attributes {stable_mosaic.version = 11 : i64} {
  func.func @kernel(%arg0: i32, %arg1: memref<4x32x64xbf16, #tpu.memory_space<vmem>>, %arg2: memref<4x64x8xbf16, #tpu.memory_space<vmem>>, %arg3: memref<1x8xf32, #tpu.memory_space<vmem>>, %arg4: memref<1x8xf32, #tpu.memory_space<vmem>>, %arg5: memref<4x32x8xbf16, #tpu.memory_space<vmem>>) attributes {dimension_semantics = [#tpu.dimension_semantics<arbitrary>], iteration_bounds = array<i64: 1>, scalar_prefetch = 0 : i64, scratch_operands = 0 : i64, tpu.core_type = #tpu.core_type<tc>, window_params = [{pipeline_mode = #tpu.pipeline_mode<synchronous>, transform_indices = @transform_0, window_bounds = array<i64: 4, 32, 64>}, {pipeline_mode = #tpu.pipeline_mode<synchronous>, transform_indices = @transform_1, window_bounds = array<i64: 4, 64, 8>}, {pipeline_mode = #tpu.pipeline_mode<synchronous>, transform_indices = @transform_2, window_bounds = array<i64: 1, 8>}, {pipeline_mode = #tpu.pipeline_mode<synchronous>, transform_indices = @transform_3, window_bounds = array<i64: 1, 8>}, {pipeline_mode = #tpu.pipeline_mode<synchronous>, transform_indices = @transform_4, window_bounds = array<i64: 4, 32, 8>}]} {
    %c0 = arith.constant 0 : index
    %c0_0 = arith.constant 0 : index
    %c0_1 = arith.constant 0 : index
    %0 = vector.load %arg1[%c0, %c0_0, %c0_1] : memref<4x32x64xbf16, #tpu.memory_space<vmem>>, vector<1x32x64xbf16>
    %1 = vector.shape_cast %0 : vector<1x32x64xbf16> to vector<32x64xbf16>
    %c0_2 = arith.constant 0 : index
    %c0_3 = arith.constant 0 : index
    %c0_4 = arith.constant 0 : index
    %2 = vector.load %arg2[%c0_2, %c0_3, %c0_4] : memref<4x64x8xbf16, #tpu.memory_space<vmem>>, vector<1x64x8xbf16>
    %3 = vector.shape_cast %2 : vector<1x64x8xbf16> to vector<64x8xbf16>
    %cst = arith.constant dense<0.000000e+00> : vector<32x8xf32>
    %4 = tpu.matmul %1, %3, %cst {dimension_numbers = #tpu.dot_dimension_numbers<[1], [0], [0], [1], [0, 0, 1, 1], [], []>} : vector<32x64xbf16>, vector<64x8xbf16>, vector<32x8xf32> -> vector<32x8xf32>
    %c1 = arith.constant 1 : index
    %c0_5 = arith.constant 0 : index
    %c0_6 = arith.constant 0 : index
    %5 = vector.load %arg1[%c1, %c0_5, %c0_6] : memref<4x32x64xbf16, #tpu.memory_space<vmem>>, vector<1x32x64xbf16>
    %6 = vector.shape_cast %5 : vector<1x32x64xbf16> to vector<32x64xbf16>
    %c1_7 = arith.constant 1 : index
    %c0_8 = arith.constant 0 : index
    %c0_9 = arith.constant 0 : index
    %7 = vector.load %arg2[%c1_7, %c0_8, %c0_9] : memref<4x64x8xbf16, #tpu.memory_space<vmem>>, vector<1x64x8xbf16>
    %8 = vector.shape_cast %7 : vector<1x64x8xbf16> to vector<64x8xbf16>
    %cst_10 = arith.constant dense<0.000000e+00> : vector<32x8xf32>
    %9 = tpu.matmul %6, %8, %cst_10 {dimension_numbers = #tpu.dot_dimension_numbers<[1], [0], [0], [1], [0, 0, 1, 1], [], []>} : vector<32x64xbf16>, vector<64x8xbf16>, vector<32x8xf32> -> vector<32x8xf32>
    %c2 = arith.constant 2 : index
    %c0_11 = arith.constant 0 : index
    %c0_12 = arith.constant 0 : index
    %10 = vector.load %arg1[%c2, %c0_11, %c0_12] : memref<4x32x64xbf16, #tpu.memory_space<vmem>>, vector<1x32x64xbf16>
    %11 = vector.shape_cast %10 : vector<1x32x64xbf16> to vector<32x64xbf16>
    %c2_13 = arith.constant 2 : index
    %c0_14 = arith.constant 0 : index
    %c0_15 = arith.constant 0 : index
    %12 = vector.load %arg2[%c2_13, %c0_14, %c0_15] : memref<4x64x8xbf16, #tpu.memory_space<vmem>>, vector<1x64x8xbf16>
    %13 = vector.shape_cast %12 : vector<1x64x8xbf16> to vector<64x8xbf16>
    %cst_16 = arith.constant dense<0.000000e+00> : vector<32x8xf32>
    %14 = tpu.matmul %11, %13, %cst_16 {dimension_numbers = #tpu.dot_dimension_numbers<[1], [0], [0], [1], [0, 0, 1, 1], [], []>} : vector<32x64xbf16>, vector<64x8xbf16>, vector<32x8xf32> -> vector<32x8xf32>
    %c3 = arith.constant 3 : index
    %c0_17 = arith.constant 0 : index
    %c0_18 = arith.constant 0 : index
    %15 = vector.load %arg1[%c3, %c0_17, %c0_18] : memref<4x32x64xbf16, #tpu.memory_space<vmem>>, vector<1x32x64xbf16>
    %16 = vector.shape_cast %15 : vector<1x32x64xbf16> to vector<32x64xbf16>
    %c3_19 = arith.constant 3 : index
    %c0_20 = arith.constant 0 : index
    %c0_21 = arith.constant 0 : index
    %17 = vector.load %arg2[%c3_19, %c0_20, %c0_21] : memref<4x64x8xbf16, #tpu.memory_space<vmem>>, vector<1x64x8xbf16>
    %18 = vector.shape_cast %17 : vector<1x64x8xbf16> to vector<64x8xbf16>
    %cst_22 = arith.constant dense<0.000000e+00> : vector<32x8xf32>
    %19 = tpu.matmul %16, %18, %cst_22 {dimension_numbers = #tpu.dot_dimension_numbers<[1], [0], [0], [1], [0, 0, 1, 1], [], []>} : vector<32x64xbf16>, vector<64x8xbf16>, vector<32x8xf32> -> vector<32x8xf32>
    %cst_23 = arith.constant dense<0.000000e+00> : vector<8xf32>
    %20 = vector.multi_reduction <add>, %4, %cst_23 [0] : vector<32x8xf32> to vector<8xf32>
    %21 = vector.shape_cast %20 : vector<8xf32> to vector<1x8xf32>
    %cst_24 = arith.constant 0.000000e+00 : f32
    %22 = vector.broadcast %cst_24 : f32 to vector<1x8xf32>
    %23 = arith.addf %22, %21 : vector<1x8xf32>
    %cst_25 = arith.constant dense<0.000000e+00> : vector<8xf32>
    %24 = vector.multi_reduction <add>, %9, %cst_25 [0] : vector<32x8xf32> to vector<8xf32>
    %25 = vector.shape_cast %24 : vector<8xf32> to vector<1x8xf32>
    %26 = arith.addf %23, %25 : vector<1x8xf32>
    %cst_26 = arith.constant dense<0.000000e+00> : vector<8xf32>
    %27 = vector.multi_reduction <add>, %14, %cst_26 [0] : vector<32x8xf32> to vector<8xf32>
    %28 = vector.shape_cast %27 : vector<8xf32> to vector<1x8xf32>
    %29 = arith.addf %26, %28 : vector<1x8xf32>
    %cst_27 = arith.constant dense<0.000000e+00> : vector<8xf32>
    %30 = vector.multi_reduction <add>, %19, %cst_27 [0] : vector<32x8xf32> to vector<8xf32>
    %31 = vector.shape_cast %30 : vector<8xf32> to vector<1x8xf32>
    %32 = arith.addf %29, %31 : vector<1x8xf32>
    %cst_28 = arith.constant 7.812500e-03 : f32
    %33 = vector.broadcast %cst_28 : f32 to vector<1x8xf32>
    %34 = arith.mulf %32, %33 : vector<1x8xf32>
    %35 = vector.broadcast %34 : vector<1x8xf32> to vector<32x8xf32>
    %36 = arith.subf %4, %35 : vector<32x8xf32>
    %37 = vector.broadcast %34 : vector<1x8xf32> to vector<32x8xf32>
    %38 = arith.subf %9, %37 : vector<32x8xf32>
    %39 = vector.broadcast %34 : vector<1x8xf32> to vector<32x8xf32>
    %40 = arith.subf %14, %39 : vector<32x8xf32>
    %41 = vector.broadcast %34 : vector<1x8xf32> to vector<32x8xf32>
    %42 = arith.subf %19, %41 : vector<32x8xf32>
    %43 = arith.mulf %36, %36 : vector<32x8xf32>
    %cst_29 = arith.constant dense<0.000000e+00> : vector<8xf32>
    %44 = vector.multi_reduction <add>, %43, %cst_29 [0] : vector<32x8xf32> to vector<8xf32>
    %45 = vector.shape_cast %44 : vector<8xf32> to vector<1x8xf32>
    %cst_30 = arith.constant 0.000000e+00 : f32
    %46 = vector.broadcast %cst_30 : f32 to vector<1x8xf32>
    %47 = arith.addf %46, %45 : vector<1x8xf32>
    %48 = arith.mulf %38, %38 : vector<32x8xf32>
    %cst_31 = arith.constant dense<0.000000e+00> : vector<8xf32>
    %49 = vector.multi_reduction <add>, %48, %cst_31 [0] : vector<32x8xf32> to vector<8xf32>
    %50 = vector.shape_cast %49 : vector<8xf32> to vector<1x8xf32>
    %51 = arith.addf %47, %50 : vector<1x8xf32>
    %52 = arith.mulf %40, %40 : vector<32x8xf32>
    %cst_32 = arith.constant dense<0.000000e+00> : vector<8xf32>
    %53 = vector.multi_reduction <add>, %52, %cst_32 [0] : vector<32x8xf32> to vector<8xf32>
    %54 = vector.shape_cast %53 : vector<8xf32> to vector<1x8xf32>
    %55 = arith.addf %51, %54 : vector<1x8xf32>
    %56 = arith.mulf %42, %42 : vector<32x8xf32>
    %cst_33 = arith.constant dense<0.000000e+00> : vector<8xf32>
    %57 = vector.multi_reduction <add>, %56, %cst_33 [0] : vector<32x8xf32> to vector<8xf32>
    %58 = vector.shape_cast %57 : vector<8xf32> to vector<1x8xf32>
    %59 = arith.addf %55, %58 : vector<1x8xf32>
    %cst_34 = arith.constant 7.812500e-03 : f32
    %60 = vector.broadcast %cst_34 : f32 to vector<1x8xf32>
    %61 = arith.mulf %59, %60 : vector<1x8xf32>
    %c0_35 = arith.constant 0 : index
    %c0_36 = arith.constant 0 : index
    %62 = vector.load %arg3[%c0_35, %c0_36] : memref<1x8xf32, #tpu.memory_space<vmem>>, vector<1x8xf32>
    %cst_37 = arith.constant 9.99999974E-6 : f32
    %63 = vector.broadcast %cst_37 : f32 to vector<1x8xf32>
    %64 = arith.addf %61, %63 : vector<1x8xf32>
    %65 = math.rsqrt %64 : vector<1x8xf32>
    %66 = arith.mulf %62, %65 : vector<1x8xf32>
    %67 = vector.broadcast %66 : vector<1x8xf32> to vector<32x8xf32>
    %68 = arith.mulf %36, %67 : vector<32x8xf32>
    %c0_38 = arith.constant 0 : index
    %c0_39 = arith.constant 0 : index
    %69 = vector.load %arg4[%c0_38, %c0_39] : memref<1x8xf32, #tpu.memory_space<vmem>>, vector<1x8xf32>
    %70 = vector.broadcast %69 : vector<1x8xf32> to vector<32x8xf32>
    %71 = arith.addf %68, %70 : vector<32x8xf32>
    %72 = vector.broadcast %66 : vector<1x8xf32> to vector<32x8xf32>
    %73 = arith.mulf %38, %72 : vector<32x8xf32>
    %c0_40 = arith.constant 0 : index
    %c0_41 = arith.constant 0 : index
    %74 = vector.load %arg4[%c0_40, %c0_41] : memref<1x8xf32, #tpu.memory_space<vmem>>, vector<1x8xf32>
    %75 = vector.broadcast %74 : vector<1x8xf32> to vector<32x8xf32>
    %76 = arith.addf %73, %75 : vector<32x8xf32>
    %77 = vector.broadcast %66 : vector<1x8xf32> to vector<32x8xf32>
    %78 = arith.mulf %40, %77 : vector<32x8xf32>
    %c0_42 = arith.constant 0 : index
    %c0_43 = arith.constant 0 : index
    %79 = vector.load %arg4[%c0_42, %c0_43] : memref<1x8xf32, #tpu.memory_space<vmem>>, vector<1x8xf32>
    %80 = vector.broadcast %79 : vector<1x8xf32> to vector<32x8xf32>
    %81 = arith.addf %78, %80 : vector<32x8xf32>
    %82 = vector.broadcast %66 : vector<1x8xf32> to vector<32x8xf32>
    %83 = arith.mulf %42, %82 : vector<32x8xf32>
    %c0_44 = arith.constant 0 : index
    %c0_45 = arith.constant 0 : index
    %84 = vector.load %arg4[%c0_44, %c0_45] : memref<1x8xf32, #tpu.memory_space<vmem>>, vector<1x8xf32>
    %85 = vector.broadcast %84 : vector<1x8xf32> to vector<32x8xf32>
    %86 = arith.addf %83, %85 : vector<32x8xf32>
    %cst_46 = arith.constant 0.000000e+00 : f32
    %87 = vector.broadcast %cst_46 : f32 to vector<32x8xf32>
    %88 = arith.maximumf %71, %87 : vector<32x8xf32>
    %89 = arith.truncf %88 : vector<32x8xf32> to vector<32x8xbf16>
    %c0_47 = arith.constant 0 : index
    %c0_48 = arith.constant 0 : index
    %c0_49 = arith.constant 0 : index
    %90 = vector.load %arg5[%c0_47, %c0_48, %c0_49] : memref<4x32x8xbf16, #tpu.memory_space<vmem>>, vector<1x32x8xbf16>
    %91 = vector.shape_cast %90 : vector<1x32x8xbf16> to vector<32x8xbf16>
    %92 = vector.shape_cast %89 : vector<32x8xbf16> to vector<1x32x8xbf16>
    tpu.vector_store %arg5[%c0_47, %c0_48, %c0_49], %92 {strides = array<i32>} : memref<4x32x8xbf16, #tpu.memory_space<vmem>>, vector<1x32x8xbf16>,
    %cst_50 = arith.constant 0.000000e+00 : f32
    %93 = vector.broadcast %cst_50 : f32 to vector<32x8xf32>
    %94 = arith.maximumf %76, %93 : vector<32x8xf32>
    %95 = arith.truncf %94 : vector<32x8xf32> to vector<32x8xbf16>
    %c1_51 = arith.constant 1 : index
    %c0_52 = arith.constant 0 : index
    %c0_53 = arith.constant 0 : index
    %96 = vector.load %arg5[%c1_51, %c0_52, %c0_53] : memref<4x32x8xbf16, #tpu.memory_space<vmem>>, vector<1x32x8xbf16>
    %97 = vector.shape_cast %96 : vector<1x32x8xbf16> to vector<32x8xbf16>
    %98 = vector.shape_cast %95 : vector<32x8xbf16> to vector<1x32x8xbf16>
    tpu.vector_store %arg5[%c1_51, %c0_52, %c0_53], %98 {strides = array<i32>} : memref<4x32x8xbf16, #tpu.memory_space<vmem>>, vector<1x32x8xbf16>,
    %cst_54 = arith.constant 0.000000e+00 : f32
    %99 = vector.broadcast %cst_54 : f32 to vector<32x8xf32>
    %100 = arith.maximumf %81, %99 : vector<32x8xf32>
    %101 = arith.truncf %100 : vector<32x8xf32> to vector<32x8xbf16>
    %c2_55 = arith.constant 2 : index
    %c0_56 = arith.constant 0 : index
    %c0_57 = arith.constant 0 : index
    %102 = vector.load %arg5[%c2_55, %c0_56, %c0_57] : memref<4x32x8xbf16, #tpu.memory_space<vmem>>, vector<1x32x8xbf16>
    %103 = vector.shape_cast %102 : vector<1x32x8xbf16> to vector<32x8xbf16>
    %104 = vector.shape_cast %101 : vector<32x8xbf16> to vector<1x32x8xbf16>
    tpu.vector_store %arg5[%c2_55, %c0_56, %c0_57], %104 {strides = array<i32>} : memref<4x32x8xbf16, #tpu.memory_space<vmem>>, vector<1x32x8xbf16>,
    %cst_58 = arith.constant 0.000000e+00 : f32
    %105 = vector.broadcast %cst_58 : f32 to vector<32x8xf32>
    %106 = arith.maximumf %86, %105 : vector<32x8xf32>
    %107 = arith.truncf %106 : vector<32x8xf32> to vector<32x8xbf16>
    %c3_59 = arith.constant 3 : index
    %c0_60 = arith.constant 0 : index
    %c0_61 = arith.constant 0 : index
    %108 = vector.load %arg5[%c3_59, %c0_60, %c0_61] : memref<4x32x8xbf16, #tpu.memory_space<vmem>>, vector<1x32x8xbf16>
    %109 = vector.shape_cast %108 : vector<1x32x8xbf16> to vector<32x8xbf16>
    %110 = vector.shape_cast %107 : vector<32x8xbf16> to vector<1x32x8xbf16>
    tpu.vector_store %arg5[%c3_59, %c0_60, %c0_61], %110 {strides = array<i32>} : memref<4x32x8xbf16, #tpu.memory_space<vmem>>, vector<1x32x8xbf16>,
    return
  }
  func.func @transform_0(%arg0: i32) -> (i32, i32, i32) {
    %c0_i32 = arith.constant 0 : i32
    %c0_i32_0 = arith.constant 0 : i32
    %c0_i32_1 = arith.constant 0 : i32
    %c0_i32_2 = arith.constant 0 : i32
    return %c0_i32, %c0_i32_0, %c0_i32_1 : i32, i32, i32
  }
  func.func @transform_1(%arg0: i32) -> (i32, i32, i32) {
    %c0_i32 = arith.constant 0 : i32
    %c0_i32_0 = arith.constant 0 : i32
    %c0_i32_1 = arith.constant 0 : i32
    %c0_i32_2 = arith.constant 0 : i32
    return %c0_i32, %c0_i32_0, %c0_i32_1 : i32, i32, i32
  }
  func.func @transform_2(%arg0: i32) -> (i32, i32) {
    %c0_i32 = arith.constant 0 : i32
    %c0_i32_0 = arith.constant 0 : i32
    %c0_i32_1 = arith.constant 0 : i32
    return %c0_i32, %c0_i32_0 : i32, i32
  }
  func.func @transform_3(%arg0: i32) -> (i32, i32) {
    %c0_i32 = arith.constant 0 : i32
    %c0_i32_0 = arith.constant 0 : i32
    %c0_i32_1 = arith.constant 0 : i32
    return %c0_i32, %c0_i32_0 : i32, i32
  }
  func.func @transform_4(%arg0: i32) -> (i32, i32, i32) {
    %c0_i32 = arith.constant 0 : i32
    %c0_i32_0 = arith.constant 0 : i32
    %c0_i32_1 = arith.constant 0 : i32
    %c0_i32_2 = arith.constant 0 : i32
    return %c0_i32, %c0_i32_0, %c0_i32_1 : i32, i32, i32
  }
}

module attributes {stable_mosaic.version = 11 : i64} {
  func.func @kernel(%arg0: i32, %arg1: memref<4x128x32xbf16, #tpu.memory_space<vmem>>, %arg2: memref<4x32x3xbf16, #tpu.memory_space<vmem>>, %arg3: memref<4x128x3xf32, #tpu.memory_space<vmem>>) attributes {dimension_semantics = [#tpu.dimension_semantics<arbitrary>], iteration_bounds = array<i64: 1>, scalar_prefetch = 0 : i64, scratch_operands = 0 : i64, tpu.core_type = #tpu.core_type<tc>, window_params = [{pipeline_mode = #tpu.pipeline_mode<synchronous>, transform_indices = @transform_0, window_bounds = array<i64: 4, 128, 32>}, {pipeline_mode = #tpu.pipeline_mode<synchronous>, transform_indices = @transform_1, window_bounds = array<i64: 4, 32, 3>}, {pipeline_mode = #tpu.pipeline_mode<synchronous>, transform_indices = @transform_2, window_bounds = array<i64: 4, 128, 3>}]} {
    %c0 = arith.constant 0 : index
    %c0_0 = arith.constant 0 : index
    %c0_1 = arith.constant 0 : index
    %0 = vector.load %arg1[%c0, %c0_0, %c0_1] : memref<4x128x32xbf16, #tpu.memory_space<vmem>>, vector<1x128x32xbf16>
    %1 = vector.shape_cast %0 : vector<1x128x32xbf16> to vector<128x32xbf16>
    %c0_2 = arith.constant 0 : index
    %c0_3 = arith.constant 0 : index
    %c0_4 = arith.constant 0 : index
    %2 = vector.load %arg2[%c0_2, %c0_3, %c0_4] : memref<4x32x3xbf16, #tpu.memory_space<vmem>>, vector<1x32x3xbf16>
    %3 = vector.shape_cast %2 : vector<1x32x3xbf16> to vector<32x3xbf16>
    %cst = arith.constant dense<0.000000e+00> : vector<128x3xf32>
    %4 = tpu.matmul %1, %3, %cst {dimension_numbers = #tpu.dot_dimension_numbers<[1], [0], [0], [1], [0, 0, 1, 1], [], []>} : vector<128x32xbf16>, vector<32x3xbf16>, vector<128x3xf32> -> vector<128x3xf32>
    %c1 = arith.constant 1 : index
    %c0_5 = arith.constant 0 : index
    %c0_6 = arith.constant 0 : index
    %5 = vector.load %arg1[%c1, %c0_5, %c0_6] : memref<4x128x32xbf16, #tpu.memory_space<vmem>>, vector<1x128x32xbf16>
    %6 = vector.shape_cast %5 : vector<1x128x32xbf16> to vector<128x32xbf16>
    %c1_7 = arith.constant 1 : index
    %c0_8 = arith.constant 0 : index
    %c0_9 = arith.constant 0 : index
    %7 = vector.load %arg2[%c1_7, %c0_8, %c0_9] : memref<4x32x3xbf16, #tpu.memory_space<vmem>>, vector<1x32x3xbf16>
    %8 = vector.shape_cast %7 : vector<1x32x3xbf16> to vector<32x3xbf16>
    %cst_10 = arith.constant dense<0.000000e+00> : vector<128x3xf32>
    %9 = tpu.matmul %6, %8, %cst_10 {dimension_numbers = #tpu.dot_dimension_numbers<[1], [0], [0], [1], [0, 0, 1, 1], [], []>} : vector<128x32xbf16>, vector<32x3xbf16>, vector<128x3xf32> -> vector<128x3xf32>
    %c2 = arith.constant 2 : index
    %c0_11 = arith.constant 0 : index
    %c0_12 = arith.constant 0 : index
    %10 = vector.load %arg1[%c2, %c0_11, %c0_12] : memref<4x128x32xbf16, #tpu.memory_space<vmem>>, vector<1x128x32xbf16>
    %11 = vector.shape_cast %10 : vector<1x128x32xbf16> to vector<128x32xbf16>
    %c2_13 = arith.constant 2 : index
    %c0_14 = arith.constant 0 : index
    %c0_15 = arith.constant 0 : index
    %12 = vector.load %arg2[%c2_13, %c0_14, %c0_15] : memref<4x32x3xbf16, #tpu.memory_space<vmem>>, vector<1x32x3xbf16>
    %13 = vector.shape_cast %12 : vector<1x32x3xbf16> to vector<32x3xbf16>
    %cst_16 = arith.constant dense<0.000000e+00> : vector<128x3xf32>
    %14 = tpu.matmul %11, %13, %cst_16 {dimension_numbers = #tpu.dot_dimension_numbers<[1], [0], [0], [1], [0, 0, 1, 1], [], []>} : vector<128x32xbf16>, vector<32x3xbf16>, vector<128x3xf32> -> vector<128x3xf32>
    %c3 = arith.constant 3 : index
    %c0_17 = arith.constant 0 : index
    %c0_18 = arith.constant 0 : index
    %15 = vector.load %arg1[%c3, %c0_17, %c0_18] : memref<4x128x32xbf16, #tpu.memory_space<vmem>>, vector<1x128x32xbf16>
    %16 = vector.shape_cast %15 : vector<1x128x32xbf16> to vector<128x32xbf16>
    %c3_19 = arith.constant 3 : index
    %c0_20 = arith.constant 0 : index
    %c0_21 = arith.constant 0 : index
    %17 = vector.load %arg2[%c3_19, %c0_20, %c0_21] : memref<4x32x3xbf16, #tpu.memory_space<vmem>>, vector<1x32x3xbf16>
    %18 = vector.shape_cast %17 : vector<1x32x3xbf16> to vector<32x3xbf16>
    %cst_22 = arith.constant dense<0.000000e+00> : vector<128x3xf32>
    %19 = tpu.matmul %16, %18, %cst_22 {dimension_numbers = #tpu.dot_dimension_numbers<[1], [0], [0], [1], [0, 0, 1, 1], [], []>} : vector<128x32xbf16>, vector<32x3xbf16>, vector<128x3xf32> -> vector<128x3xf32>
    %20 = math.tanh %4 : vector<128x3xf32>
    %c0_23 = arith.constant 0 : index
    %c0_24 = arith.constant 0 : index
    %c0_25 = arith.constant 0 : index
    %21 = vector.load %arg3[%c0_23, %c0_24, %c0_25] : memref<4x128x3xf32, #tpu.memory_space<vmem>>, vector<1x128x3xf32>
    %22 = vector.shape_cast %21 : vector<1x128x3xf32> to vector<128x3xf32>
    %23 = vector.shape_cast %20 : vector<128x3xf32> to vector<1x128x3xf32>
    tpu.vector_store %arg3[%c0_23, %c0_24, %c0_25], %23 {strides = array<i32>} : memref<4x128x3xf32, #tpu.memory_space<vmem>>, vector<1x128x3xf32>,
    %24 = math.tanh %9 : vector<128x3xf32>
    %c1_26 = arith.constant 1 : index
    %c0_27 = arith.constant 0 : index
    %c0_28 = arith.constant 0 : index
    %25 = vector.load %arg3[%c1_26, %c0_27, %c0_28] : memref<4x128x3xf32, #tpu.memory_space<vmem>>, vector<1x128x3xf32>
    %26 = vector.shape_cast %25 : vector<1x128x3xf32> to vector<128x3xf32>
    %27 = vector.shape_cast %24 : vector<128x3xf32> to vector<1x128x3xf32>
    tpu.vector_store %arg3[%c1_26, %c0_27, %c0_28], %27 {strides = array<i32>} : memref<4x128x3xf32, #tpu.memory_space<vmem>>, vector<1x128x3xf32>,
    %28 = math.tanh %14 : vector<128x3xf32>
    %c2_29 = arith.constant 2 : index
    %c0_30 = arith.constant 0 : index
    %c0_31 = arith.constant 0 : index
    %29 = vector.load %arg3[%c2_29, %c0_30, %c0_31] : memref<4x128x3xf32, #tpu.memory_space<vmem>>, vector<1x128x3xf32>
    %30 = vector.shape_cast %29 : vector<1x128x3xf32> to vector<128x3xf32>
    %31 = vector.shape_cast %28 : vector<128x3xf32> to vector<1x128x3xf32>
    tpu.vector_store %arg3[%c2_29, %c0_30, %c0_31], %31 {strides = array<i32>} : memref<4x128x3xf32, #tpu.memory_space<vmem>>, vector<1x128x3xf32>,
    %32 = math.tanh %19 : vector<128x3xf32>
    %c3_32 = arith.constant 3 : index
    %c0_33 = arith.constant 0 : index
    %c0_34 = arith.constant 0 : index
    %33 = vector.load %arg3[%c3_32, %c0_33, %c0_34] : memref<4x128x3xf32, #tpu.memory_space<vmem>>, vector<1x128x3xf32>
    %34 = vector.shape_cast %33 : vector<1x128x3xf32> to vector<128x3xf32>
    %35 = vector.shape_cast %32 : vector<128x3xf32> to vector<1x128x3xf32>
    tpu.vector_store %arg3[%c3_32, %c0_33, %c0_34], %35 {strides = array<i32>} : memref<4x128x3xf32, #tpu.memory_space<vmem>>, vector<1x128x3xf32>,
    return
  }
  func.func @transform_0(%arg0: i32) -> (i32, i32, i32) {
    %c0_i32 = arith.constant 0 : i32
    %c0_i32_0 = arith.constant 0 : i32
    %c0_i32_1 = arith.constant 0 : i32
    %c0_i32_2 = arith.constant 0 : i32
    return %c0_i32, %c0_i32_0, %c0_i32_1 : i32, i32, i32
  }
  func.func @transform_1(%arg0: i32) -> (i32, i32, i32) {
    %c0_i32 = arith.constant 0 : i32
    %c0_i32_0 = arith.constant 0 : i32
    %c0_i32_1 = arith.constant 0 : i32
    %c0_i32_2 = arith.constant 0 : i32
    return %c0_i32, %c0_i32_0, %c0_i32_1 : i32, i32, i32
  }
  func.func @transform_2(%arg0: i32) -> (i32, i32, i32) {
    %c0_i32 = arith.constant 0 : i32
    %c0_i32_0 = arith.constant 0 : i32
    %c0_i32_1 = arith.constant 0 : i32
    %c0_i32_2 = arith.constant 0 : i32
    return %c0_i32, %c0_i32_0, %c0_i32_1 : i32, i32, i32
  }
}

</mosaic_0001>

<llo_original>
// kernel: cycle_generator_forward.7
$region0: #{cycle_generator_forward.7}
  #allocation0 [shape = 'u32[]', space=smem, size = 0x4, offset = 0x4, fixed_abs, tag = 'smem constant byte address 0x4 - core index']
  #allocation1 [shape = 'u32[144,128]{1,0:T(1,128)}', space=vmem, size = 0x12000, scoped, tag = 'internal scratch']
  %s0 = inlined_call_operand.vmem [shape: bf16[1,128,48], index: 0, kind: input, shape index: {}]
  %s1 = inlined_call_operand.vmem [shape: bf16[1,48,8], index: 1, kind: input, shape index: {}]
  %s2 = inlined_call_operand.vmem [shape: f32[1,8], index: 2, kind: input, shape index: {}]
  %s3 = inlined_call_operand.vmem [shape: f32[1,8], index: 3, kind: input, shape index: {}]
  %s4 = inlined_call_operand.vmem [shape: bf16[1,128,8], index: 4, kind: output, shape index: {}]
  %s5 = sld [smem:[#allocation0]]
  $region26: #{cycle_generator_forward.7} parent=0
    _
  %s7 = ssub.s32 1, %s5
  %s8 = scalar_select 0, %s7, %s5
  // Predicated region
  $region2: #{cycle_generator_forward.7} parent=0 // pred_check
    _
  $region3: #{cycle_generator_forward.7} parent=0 // pred_check_branch
    %10 = sbr.rel (0) target = $region5
  $region4: #{cycle_generator_forward.7} parent=0 // pred_region
    _
  $region5: #{cycle_generator_forward.7} parent=0 // pred_fallthru
    _
  // Predicated region
  $region6: #{cycle_generator_forward.7} parent=0 // pred_check
    _
  $region7: #{cycle_generator_forward.7} parent=0 // pred_check_branch
    %12 = sbr.rel (0) target = $region9
  $region8: #{cycle_generator_forward.7} parent=0 // pred_region
    _
  $region9: #{cycle_generator_forward.7} parent=0 // pred_fallthru
    _
  // Predicated region
  $region10: #{cycle_generator_forward.7} parent=0 // pred_check
    _
  $region11: #{cycle_generator_forward.7} parent=0 // pred_check_branch
    %14 = sbr.rel (0) target = $region13
  $region12: #{cycle_generator_forward.7} parent=0 // pred_region
    _
  $region13: #{cycle_generator_forward.7} parent=0 // pred_fallthru
    _
  // Predicated region
  $region14: #{cycle_generator_forward.7} parent=0 // pred_check
    _
  $region15: #{cycle_generator_forward.7} parent=0 // pred_check_branch
    %16 = sbr.rel (0) target = $region17
  $region16: #{cycle_generator_forward.7} parent=0 // pred_region
    _
  $region17: #{cycle_generator_forward.7} parent=0 // pred_fallthru
    _
  %v18 = vld [vmem:[%s0] sm:$0xf]
  %v19 = vld [vmem:[%s0 + $0x4] sm:$0xf]
  %v20 = vld [vmem:[%s0 + $0x8] sm:$0xf]
  %v21 = vld [vmem:[%s0 + $0xc] sm:$0xf]
  %v22 = vld [vmem:[%s0 + $0x10] sm:$0xf]
  %v23 = vld [vmem:[%s0 + $0x14] sm:$0xf]
  %v24 = vld [vmem:[%s0 + $0x18] sm:$0xf]
  %v25 = vld [vmem:[%s0 + $0x1c] sm:$0xf]
  %v26 = vld [vmem:[%s0 + $0x20] sm:$0xf]
  %v27 = vld [vmem:[%s0 + $0x24] sm:$0xf]
  %v28 = vld [vmem:[%s0 + $0x28] sm:$0xf]
  %v29 = vld [vmem:[%s0 + $0x2c] sm:$0xf]
  %v30 = vld [vmem:[%s0 + $0x30] sm:$0xf]
  %v31 = vld [vmem:[%s0 + $0x34] sm:$0xf]
  %v32 = vld [vmem:[%s0 + $0x38] sm:$0xf]
  %v33 = vld [vmem:[%s0 + $0x3c] sm:$0xf]
  %v34 = vld [vmem:[%s1] sm:$0xf]
  %v35 = vld [vmem:[%s1 + $0x4] sm:$0xf]
  %v36 = vld [vmem:[%s1 + $0x8] sm:$0xf]
  %v37 = vld [vmem:[%s1 + $0xc] sm:$0xf]
  %v38 = vld [vmem:[%s1 + $0x10] sm:$0xf]
  %v39 = vld [vmem:[%s1 + $0x14] sm:$0xf]
  %v56 = vunpack.c.l.b16 %v18
  %v57 = vunpack.c.l.b16 %v19
  %v58 = vunpack.c.l.b16 %v20
  %v59 = vunpack.c.l.b16 %v21
  %v60 = vunpack.c.l.b16 %v22
  %v61 = vunpack.c.l.b16 %v23
  %v62 = vunpack.c.l.b16 %v24
  %v63 = vunpack.c.l.b16 %v25
  %v64 = vunpack.c.l.b16 %v26
  %v65 = vunpack.c.l.b16 %v27
  %v66 = vunpack.c.l.b16 %v28
  %v67 = vunpack.c.l.b16 %v29
  %v68 = vunpack.c.l.b16 %v30
  %v69 = vunpack.c.l.b16 %v31
  %v70 = vunpack.c.l.b16 %v32
  %v71 = vunpack.c.l.b16 %v33
  %v72 = vpack.c.b16 %v57, %v56
  %v73 = vpack.c.b16 %v59, %v58
  %v74 = vpack.c.b16 %v61, %v60
  %v75 = vpack.c.b16 %v63, %v62
  %v76 = vpack.c.b16 %v65, %v64
  %v77 = vpack.c.b16 %v67, %v66
  %v78 = vpack.c.b16 %v69, %v68
  %v79 = vpack.c.b16 %v71, %v70
  %v86 = vunpack.c.l.b16 %v34
  %v87 = vunpack.c.l.b16 %v35
  %v88 = vunpack.c.l.b16 %v36
  %v89 = vunpack.c.l.b16 %v37
  %v90 = vunpack.c.l.b16 %v38
  %v91 = vunpack.c.l.b16 %v39
  %v92 = vpack.c.b16 %v87, %v86
  %v93 = vpack.c.b16 %v89, %v88
  %v94 = vpack.c.b16 %v91, %v90
  %vm98 = vcmask 392192
  %v100 = vsel %vm98, %v72, 0
  %v103 = vsel %vm98, %v73, 0
  %v106 = vsel %vm98, %v74, 0
  %v109 = vsel %vm98, %v75, 0
  %v112 = vsel %vm98, %v76, 0
  %v115 = vsel %vm98, %v77, 0
  %v118 = vsel %vm98, %v78, 0
  %v121 = vsel %vm98, %v79, 0
  %123 = vmatprep.subr.bf16.mxu0 0
  %124 = vmatpush1.bf16.msra.mxu0 0
  %125 = vmatprep.subr.bf16.mxu0 0
  %126 = vmatpush1.bf16.msra.mxu0 0
  %127 = vmatprep.subr.bf16.mxu0 0
  %128 = vmatpush1.bf16.msra.mxu0 0
  %129 = vmatprep.subr.bf16.mxu0 0
  %130 = vmatpush1.bf16.msra.mxu0 0
  %131 = vmatprep.subr.bf16.mxu0 0
  %132 = vmatpush1.bf16.msra.mxu0 0
  %133 = vmatprep.subr.bf16.mxu0 0
  %134 = vmatpush1.bf16.msra.mxu0 %v94
  %135 = vmatprep.subr.bf16.mxu0 0
  %136 = vmatpush1.bf16.msra.mxu0 %v93
  %137 = vmatprep.subr.bf16.mxu0 0
  %138 = vmatpush1.bf16.msra.mxu0 %v92
  %139 = vmatprep.subr.bf16.mxu0 0
  %140 = vmatpush2.bf16.msra.mxu0 0
  %141 = vmatprep.subr.bf16.mxu0 0
  %142 = vmatpush2.bf16.msra.mxu0 0
  %143 = vmatprep.subr.bf16.mxu0 0
  %144 = vmatpush2.bf16.msra.mxu0 0
  %145 = vmatprep.subr.bf16.mxu0 0
  %146 = vmatpush2.bf16.msra.mxu0 0
  %147 = vmatprep.subr.bf16.mxu0 0
  %148 = vmatpush2.bf16.msra.mxu0 0
  %149 = vmatprep.subr.bf16.mxu0 0
  %150 = vmatpush2.bf16.msra.mxu0 0
  %151 = vmatprep.subr.bf16.mxu0 0
  %152 = vmatpush2.bf16.msra.mxu0 0
  %153 = vmatprep.subr.bf16.mxu0 0
  %154 = vmatpush2.bf16.msra.mxu0 0
  %155 = vmatprep.mubr.bf16.mxu0 0
  %156 = vmatmul.mubr.bf16.gmra.mxu0 %v100
  %v157 = vpop.f32.mrf.mxu0
  %v158 = vadd.f32 0.0, %v157
  %v159 = vpop.f32.mrf.mxu0
  %v160 = vpop.f32.mrf.mxu0
  %v161 = vadd.f32 0.0, %v160
  %v162 = vpop.f32.mrf.mxu0
  %163 = vmatprep.mubr.bf16.mxu0 0
  %164 = vmatmul.mubr.bf16.gmra.mxu0 %v103
  %v165 = vpop.f32.mrf.mxu0
  %v166 = vadd.f32 0.0, %v165
  %v167 = vpop.f32.mrf.mxu0
  %v168 = vpop.f32.mrf.mxu0
  %v169 = vadd.f32 0.0, %v168
  %v170 = vpop.f32.mrf.mxu0
  %171 = vmatprep.mubr.bf16.mxu0 0
  %172 = vmatmul.mubr.bf16.gmra.mxu0 %v106
  %v173 = vpop.f32.mrf.mxu0
  %v174 = vadd.f32 0.0, %v173
  %v175 = vpop.f32.mrf.mxu0
  %v176 = vpop.f32.mrf.mxu0
  %v177 = vadd.f32 0.0, %v176
  %v178 = vpop.f32.mrf.mxu0
  %179 = vmatprep.mubr.bf16.mxu0 0
  %180 = vmatmul.mubr.bf16.gmra.mxu0 %v109
  %v181 = vpop.f32.mrf.mxu0
  %v182 = vadd.f32 0.0, %v181
  %v183 = vpop.f32.mrf.mxu0
  %v184 = vpop.f32.mrf.mxu0
  %v185 = vadd.f32 0.0, %v184
  %v186 = vpop.f32.mrf.mxu0
  %187 = vmatprep.mubr.bf16.mxu0 0
  %188 = vmatmul.mubr.bf16.gmra.mxu0 %v112
  %v189 = vpop.f32.mrf.mxu0
  %v190 = vadd.f32 0.0, %v189
  %v191 = vpop.f32.mrf.mxu0
  %v192 = vpop.f32.mrf.mxu0
  %v193 = vadd.f32 0.0, %v192
  %v194 = vpop.f32.mrf.mxu0
  %195 = vmatprep.mubr.bf16.mxu0 0
  %196 = vmatmul.mubr.bf16.gmra.mxu0 %v115
  %v197 = vpop.f32.mrf.mxu0
  %v198 = vadd.f32 0.0, %v197
  %v199 = vpop.f32.mrf.mxu0
  %v200 = vpop.f32.mrf.mxu0
  %v201 = vadd.f32 0.0, %v200
  %v202 = vpop.f32.mrf.mxu0
  %203 = vmatprep.mubr.bf16.mxu0 0
  %204 = vmatmul.mubr.bf16.gmra.mxu0 %v118
  %v205 = vpop.f32.mrf.mxu0
  %v206 = vadd.f32 0.0, %v205
  %v207 = vpop.f32.mrf.mxu0
  %v208 = vpop.f32.mrf.mxu0
  %v209 = vadd.f32 0.0, %v208
  %v210 = vpop.f32.mrf.mxu0
  %211 = vmatprep.mubr.bf16.mxu0 0
  %212 = vmatmul.mubr.bf16.gmra.mxu0 %v121
  %v213 = vpop.f32.mrf.mxu0
  %v214 = vadd.f32 0.0, %v213
  %v215 = vpop.f32.mrf.mxu0
  %v216 = vpop.f32.mrf.mxu0
  %v217 = vadd.f32 0.0, %v216
  %v218 = vpop.f32.mrf.mxu0
  %219 = vdwg.mxu0
  %vm220 = vcmask 64512
  %v221 = vsel %vm220, %v158, 0.0
  %v222 = vsel %vm220, %v161, 0.0
  %v223 = vadd.f32 %v221, %v222
  %v224 = vsel %vm220, %v166, 0.0
  %v225 = vadd.f32 %v223, %v224
  %v226 = vsel %vm220, %v169, 0.0
  %v227 = vadd.f32 %v225, %v226
  %v228 = vsel %vm220, %v174, 0.0
  %v229 = vadd.f32 %v227, %v228
  %v230 = vsel %vm220, %v177, 0.0
  %v231 = vadd.f32 %v229, %v230
  %v232 = vsel %vm220, %v182, 0.0
  %v233 = vadd.f32 %v231, %v232
  %v234 = vsel %vm220, %v185, 0.0
  %v235 = vadd.f32 %v233, %v234
  %v236 = vsel %vm220, %v190, 0.0
  %v237 = vadd.f32 %v235, %v236
  %v238 = vsel %vm220, %v193, 0.0
  %v239 = vadd.f32 %v237, %v238
  %v240 = vsel %vm220, %v198, 0.0
  %v241 = vadd.f32 %v239, %v240
  %v242 = vsel %vm220, %v201, 0.0
  %v243 = vadd.f32 %v241, %v242
  %v244 = vsel %vm220, %v206, 0.0
  %v245 = vadd.f32 %v243, %v244
  %v246 = vsel %vm220, %v209, 0.0
  %v247 = vadd.f32 %v245, %v246
  %v248 = vsel %vm220, %v214, 0.0
  %v249 = vadd.f32 %v247, %v248
  %v250 = vsel %vm220, %v217, 0.0
  %v251 = vadd.f32 %v249, %v250
  %v252 = vrot.slane %v251, 4
  %v253 = vadd.f32 %v251, %v252
  %v254 = vrot.slane %v253, 2
  %v255 = vadd.f32 %v253, %v254
  %v256 = vrot.slane %v255, 1
  %v257 = vadd.f32 %v255, %v256
  %v258 = vadd.f32 %v257, 0.0
  %v259 = vmul.f32 %v258, 0.0078125
  %v260 = vsub.f32 %v158, %v259
  %v261 = vsub.f32 %v161, %v259
  %v262 = vsub.f32 %v166, %v259
  %v263 = vsub.f32 %v169, %v259
  %v264 = vsub.f32 %v174, %v259
  %v265 = vsub.f32 %v177, %v259
  %v266 = vsub.f32 %v182, %v259
  %v267 = vsub.f32 %v185, %v259
  %v268 = vsub.f32 %v190, %v259
  %v269 = vsub.f32 %v193, %v259
  %v270 = vsub.f32 %v198, %v259
  %v271 = vsub.f32 %v201, %v259
  %v272 = vsub.f32 %v206, %v259
  %v273 = vsub.f32 %v209, %v259
  %v274 = vsub.f32 %v214, %v259
  %v275 = vsub.f32 %v217, %v259
  %v276 = vmul.f32 %v260, %v260
  %v277 = vmul.f32 %v261, %v261
  %v278 = vmul.f32 %v262, %v262
  %v279 = vmul.f32 %v263, %v263
  %v280 = vmul.f32 %v264, %v264
  %v281 = vmul.f32 %v265, %v265
  %v282 = vmul.f32 %v266, %v266
  %v283 = vmul.f32 %v267, %v267
  %v284 = vmul.f32 %v268, %v268
  %v285 = vmul.f32 %v269, %v269
  %v286 = vmul.f32 %v270, %v270
  %v287 = vmul.f32 %v271, %v271
  %v288 = vmul.f32 %v272, %v272
  %v289 = vmul.f32 %v273, %v273
  %v290 = vmul.f32 %v274, %v274
  %v291 = vmul.f32 %v275, %v275
  %v292 = vsel %vm220, %v276, 0.0
  %v293 = vsel %vm220, %v277, 0.0
  %v294 = vadd.f32 %v292, %v293
  %v295 = vsel %vm220, %v278, 0.0
  %v296 = vadd.f32 %v294, %v295
  %v297 = vsel %vm220, %v279, 0.0
  %v298 = vadd.f32 %v296, %v297
  %v299 = vsel %vm220, %v280, 0.0
  %v300 = vadd.f32 %v298, %v299
  %v301 = vsel %vm220, %v281, 0.0
  %v302 = vadd.f32 %v300, %v301
  %v303 = vsel %vm220, %v282, 0.0
  %v304 = vadd.f32 %v302, %v303
  %v305 = vsel %vm220, %v283, 0.0
  %v306 = vadd.f32 %v304, %v305
  %v307 = vsel %vm220, %v284, 0.0
  %v308 = vadd.f32 %v306, %v307
  %v309 = vsel %vm220, %v285, 0.0
  %v310 = vadd.f32 %v308, %v309
  %v311 = vsel %vm220, %v286, 0.0
  %v312 = vadd.f32 %v310, %v311
  %v313 = vsel %vm220, %v287, 0.0
  %v314 = vadd.f32 %v312, %v313
  %v315 = vsel %vm220, %v288, 0.0
  %v316 = vadd.f32 %v314, %v315
  %v317 = vsel %vm220, %v289, 0.0
  %v318 = vadd.f32 %v316, %v317
  %v319 = vsel %vm220, %v290, 0.0
  %v320 = vadd.f32 %v318, %v319
  %v321 = vsel %vm220, %v291, 0.0
  %v322 = vadd.f32 %v320, %v321
  %v323 = vrot.slane %v322, 4
  %v324 = vadd.f32 %v322, %v323
  %v325 = vrot.slane %v324, 2
  %v326 = vadd.f32 %v324, %v325
  %v327 = vrot.slane %v326, 1
  %v328 = vadd.f32 %v326, %v327
  %v329 = vadd.f32 %v328, 0.0
  %v330 = vmul.f32 %v329, 0.0078125
  %v331 = vld [vmem:[%s2] sm:$0x1]
  %v332 = vadd.f32 %v330, 1e-05
  %v333 = vrsqrt.pop %v332
  %v334 = vmul.f32 %v331, %v333
  %v336 = vlaneseq
  %v337 = vshrl.u32 %v336, 7
  %v338 = vsub.s32 0, %v337
  %v339 = vrot.slane %v334, %v338
  %v341 = vmul.f32 %v260, %v339
  %v342 = vmul.f32 %v261, %v339
  %v343 = vmul.f32 %v262, %v339
  %v344 = vmul.f32 %v263, %v339
  %v345 = vmul.f32 %v264, %v339
  %v346 = vmul.f32 %v265, %v339
  %v347 = vmul.f32 %v266, %v339
  %v348 = vmul.f32 %v267, %v339
  %v349 = vmul.f32 %v268, %v339
  %v350 = vmul.f32 %v269, %v339
  %v351 = vmul.f32 %v270, %v339
  %v352 = vmul.f32 %v271, %v339
  %v353 = vmul.f32 %v272, %v339
  %v354 = vmul.f32 %v273, %v339
  %v355 = vmul.f32 %v274, %v339
  %v356 = vmul.f32 %v275, %v339
  %v357 = vld [vmem:[%s3] sm:$0x1]
  %v359 = vlaneseq
  %v360 = vshrl.u32 %v359, 7
  %v361 = vsub.s32 0, %v360
  %v362 = vrot.slane %v357, %v361
  %v364 = vadd.f32 %v341, %v362
  %v365 = vadd.f32 %v342, %v362
  %v366 = vadd.f32 %v343, %v362
  %v367 = vadd.f32 %v344, %v362
  %v368 = vadd.f32 %v345, %v362
  %v369 = vadd.f32 %v346, %v362
  %v370 = vadd.f32 %v347, %v362
  %v371 = vadd.f32 %v348, %v362
  %v372 = vadd.f32 %v349, %v362
  %v373 = vadd.f32 %v350, %v362
  %v374 = vadd.f32 %v351, %v362
  %v375 = vadd.f32 %v352, %v362
  %v376 = vadd.f32 %v353, %v362
  %v377 = vadd.f32 %v354, %v362
  %v378 = vadd.f32 %v355, %v362
  %v379 = vadd.f32 %v356, %v362
  %v380 = vmax.f32 %v364, 0.0
  %v381 = vmax.f32 %v365, 0.0
  %v382 = vmax.f32 %v366, 0.0
  %v383 = vmax.f32 %v367, 0.0
  %v384 = vmax.f32 %v368, 0.0
  %v385 = vmax.f32 %v369, 0.0
  %v386 = vmax.f32 %v370, 0.0
  %v387 = vmax.f32 %v371, 0.0
  %v388 = vmax.f32 %v372, 0.0
  %v389 = vmax.f32 %v373, 0.0
  %v390 = vmax.f32 %v374, 0.0
  %v391 = vmax.f32 %v375, 0.0
  %v392 = vmax.f32 %v376, 0.0
  %v393 = vmax.f32 %v377, 0.0
  %v394 = vmax.f32 %v378, 0.0
  %v395 = vmax.f32 %v379, 0.0
  %v396 = vpack.c.bf16 %v381, %v380
  %v397 = vpack.c.bf16 %v383, %v382
  %v398 = vpack.c.bf16 %v385, %v384
  %v399 = vpack.c.bf16 %v387, %v386
  %v400 = vpack.c.bf16 %v389, %v388
  %v401 = vpack.c.bf16 %v391, %v390
  %v402 = vpack.c.bf16 %v393, %v392
  %v403 = vpack.c.bf16 %v395, %v394
  %v412 = vunpack.c.l.b16 %v396
  %v413 = vunpack.c.h.b16 %v396
  %v414 = vunpack.c.l.b16 %v397
  %v415 = vunpack.c.h.b16 %v397
  %v416 = vunpack.c.l.b16 %v398
  %v417 = vunpack.c.h.b16 %v398
  %v418 = vunpack.c.l.b16 %v399
  %v419 = vunpack.c.h.b16 %v399
  %v420 = vunpack.c.l.b16 %v400
  %v421 = vunpack.c.h.b16 %v400
  %v422 = vunpack.c.l.b16 %v401
  %v423 = vunpack.c.h.b16 %v401
  %v424 = vunpack.c.l.b16 %v402
  %v425 = vunpack.c.h.b16 %v402
  %v426 = vunpack.c.l.b16 %v403
  %v427 = vunpack.c.h.b16 %v403
  %v428 = vpack.c.b16 %v412, %v412
  %v429 = vpack.c.b16 %v413, %v413
  %v430 = vpack.c.b16 %v414, %v414
  %v431 = vpack.c.b16 %v415, %v415
  %v432 = vpack.c.b16 %v416, %v416
  %v433 = vpack.c.b16 %v417, %v417
  %v434 = vpack.c.b16 %v418, %v418
  %v435 = vpack.c.b16 %v419, %v419
  %v436 = vpack.c.b16 %v420, %v420
  %v437 = vpack.c.b16 %v421, %v421
  %v438 = vpack.c.b16 %v422, %v422
  %v439 = vpack.c.b16 %v423, %v423
  %v440 = vpack.c.b16 %v424, %v424
  %v441 = vpack.c.b16 %v425, %v425
  %v442 = vpack.c.b16 %v426, %v426
  %v443 = vpack.c.b16 %v427, %v427
  %vm460 = vcmask 60416
  %461 = vst.msk [vmem:[%s4] sm:$0xf] %vm460, %v428
  %462 = vst.msk [vmem:[%s4 + $0x4] sm:$0xf] %vm460, %v429
  %463 = vst.msk [vmem:[%s4 + $0x8] sm:$0xf] %vm460, %v430
  %464 = vst.msk [vmem:[%s4 + $0xc] sm:$0xf] %vm460, %v431
  %465 = vst.msk [vmem:[%s4 + $0x10] sm:$0xf] %vm460, %v432
  %466 = vst.msk [vmem:[%s4 + $0x14] sm:$0xf] %vm460, %v433
  %467 = vst.msk [vmem:[%s4 + $0x18] sm:$0xf] %vm460, %v434
  %468 = vst.msk [vmem:[%s4 + $0x1c] sm:$0xf] %vm460, %v435
  %469 = vst.msk [vmem:[%s4 + $0x20] sm:$0xf] %vm460, %v436
  %470 = vst.msk [vmem:[%s4 + $0x24] sm:$0xf] %vm460, %v437
  %471 = vst.msk [vmem:[%s4 + $0x28] sm:$0xf] %vm460, %v438
  %472 = vst.msk [vmem:[%s4 + $0x2c] sm:$0xf] %vm460, %v439
  %473 = vst.msk [vmem:[%s4 + $0x30] sm:$0xf] %vm460, %v440
  %474 = vst.msk [vmem:[%s4 + $0x34] sm:$0xf] %vm460, %v441
  %475 = vst.msk [vmem:[%s4 + $0x38] sm:$0xf] %vm460, %v442
  %476 = vst.msk [vmem:[%s4 + $0x3c] sm:$0xf] %vm460, %v443
  // Predicated region
  $region18: #{cycle_generator_forward.7} parent=0 // pred_check
    _
  $region19: #{cycle_generator_forward.7} parent=0 // pred_check_branch
    %478 = sbr.rel (0) target = $region21
  $region20: #{cycle_generator_forward.7} parent=0 // pred_region
    _
  $region21: #{cycle_generator_forward.7} parent=0 // pred_fallthru
    _
  // Predicated region
  $region22: #{cycle_generator_forward.7} parent=0 // pred_check
    _
  $region23: #{cycle_generator_forward.7} parent=0 // pred_check_branch
    %480 = sbr.rel (0) target = $region25
  $region24: #{cycle_generator_forward.7} parent=0 // pred_region
    _
  $region25: #{cycle_generator_forward.7} parent=0 // pred_fallthru
    _

// kernel: cycle_generator_forward.8
$region0: #{cycle_generator_forward.8}
  #allocation0 [shape = 'u32[]', space=smem, size = 0x4, offset = 0x4, fixed_abs, tag = 'smem constant byte address 0x4 - core index']
  #allocation1 [shape = 'u32[144,128]{1,0:T(1,128)}', space=vmem, size = 0x12000, scoped, tag = 'internal scratch']
  %s0 = inlined_call_operand.vmem [shape: bf16[1,32,128], index: 0, kind: input, shape index: {}]
  %s1 = inlined_call_operand.vmem [shape: bf16[1,128,16], index: 1, kind: input, shape index: {}]
  %s2 = inlined_call_operand.vmem [shape: f32[1,16], index: 2, kind: input, shape index: {}]
  %s3 = inlined_call_operand.vmem [shape: f32[1,16], index: 3, kind: input, shape index: {}]
  %s4 = inlined_call_operand.vmem [shape: bf16[1,32,16], index: 4, kind: output, shape index: {}]
  %s5 = sld [smem:[#allocation0]]
  $region26: #{cycle_generator_forward.8} parent=0
    _
  %s7 = ssub.s32 1, %s5
  %s8 = scalar_select 0, %s7, %s5
  // Predicated region
  $region2: #{cycle_generator_forward.8} parent=0 // pred_check
    _
  $region3: #{cycle_generator_forward.8} parent=0 // pred_check_branch
    %10 = sbr.rel (0) target = $region5
  $region4: #{cycle_generator_forward.8} parent=0 // pred_region
    _
  $region5: #{cycle_generator_forward.8} parent=0 // pred_fallthru
    _
  // Predicated region
  $region6: #{cycle_generator_forward.8} parent=0 // pred_check
    _
  $region7: #{cycle_generator_forward.8} parent=0 // pred_check_branch
    %12 = sbr.rel (0) target = $region9
  $region8: #{cycle_generator_forward.8} parent=0 // pred_region
    _
  $region9: #{cycle_generator_forward.8} parent=0 // pred_fallthru
    _
  // Predicated region
  $region10: #{cycle_generator_forward.8} parent=0 // pred_check
    _
  $region11: #{cycle_generator_forward.8} parent=0 // pred_check_branch
    %14 = sbr.rel (0) target = $region13
  $region12: #{cycle_generator_forward.8} parent=0 // pred_region
    _
  $region13: #{cycle_generator_forward.8} parent=0 // pred_fallthru
    _
  // Predicated region
  $region14: #{cycle_generator_forward.8} parent=0 // pred_check
    _
  $region15: #{cycle_generator_forward.8} parent=0 // pred_check_branch
    %16 = sbr.rel (0) target = $region17
  $region16: #{cycle_generator_forward.8} parent=0 // pred_region
    _
  $region17: #{cycle_generator_forward.8} parent=0 // pred_fallthru
    _
  %v18 = vld [vmem:[%s0] sm:$0xf]
  %v19 = vld [vmem:[%s0 + $0x4] sm:$0xf]
  %v20 = vld [vmem:[%s0 + $0x8] sm:$0xf]
  %v21 = vld [vmem:[%s0 + $0xc] sm:$0xf]
  %v22 = vld [vmem:[%s1] sm:$0xf]
  %v23 = vld [vmem:[%s1 + $0x4] sm:$0xf]
  %v24 = vld [vmem:[%s1 + $0x8] sm:$0xf]
  %v25 = vld [vmem:[%s1 + $0xc] sm:$0xf]
  %v26 = vld [vmem:[%s1 + $0x10] sm:$0xf]
  %v27 = vld [vmem:[%s1 + $0x14] sm:$0xf]
  %v28 = vld [vmem:[%s1 + $0x18] sm:$0xf]
  %v29 = vld [vmem:[%s1 + $0x1c] sm:$0xf]
  %v30 = vld [vmem:[%s1 + $0x20] sm:$0xf]
  %v31 = vld [vmem:[%s1 + $0x24] sm:$0xf]
  %v32 = vld [vmem:[%s1 + $0x28] sm:$0xf]
  %v33 = vld [vmem:[%s1 + $0x2c] sm:$0xf]
  %v34 = vld [vmem:[%s1 + $0x30] sm:$0xf]
  %v35 = vld [vmem:[%s1 + $0x34] sm:$0xf]
  %v36 = vld [vmem:[%s1 + $0x38] sm:$0xf]
  %v37 = vld [vmem:[%s1 + $0x3c] sm:$0xf]
  %v42 = vunpack.c.l.b16 %v18
  %v43 = vunpack.c.l.b16 %v19
  %v44 = vunpack.c.l.b16 %v20
  %v45 = vunpack.c.l.b16 %v21
  %v46 = vpack.c.b16 %v43, %v42
  %v47 = vpack.c.b16 %v45, %v44
  %v66 = vunpack.c.l.b16 %v22
  %v67 = vunpack.c.l.b16 %v23
  %v68 = vunpack.c.l.b16 %v24
  %v69 = vunpack.c.l.b16 %v25
  %v70 = vunpack.c.l.b16 %v26
  %v71 = vunpack.c.l.b16 %v27
  %v72 = vunpack.c.l.b16 %v28
  %v73 = vunpack.c.l.b16 %v29
  %v74 = vunpack.c.l.b16 %v30
  %v75 = vunpack.c.l.b16 %v31
  %v76 = vunpack.c.l.b16 %v32
  %v77 = vunpack.c.l.b16 %v33
  %v78 = vunpack.c.l.b16 %v34
  %v79 = vunpack.c.l.b16 %v35
  %v80 = vunpack.c.l.b16 %v36
  %v81 = vunpack.c.l.b16 %v37
  %v82 = vpack.c.b16 %v67, %v66
  %v83 = vpack.c.b16 %v69, %v68
  %v84 = vpack.c.b16 %v71, %v70
  %v85 = vpack.c.b16 %v73, %v72
  %v86 = vpack.c.b16 %v75, %v74
  %v87 = vpack.c.b16 %v77, %v76
  %v88 = vpack.c.b16 %v79, %v78
  %v89 = vpack.c.b16 %v81, %v80
  %98 = vmatprep.subr.bf16.mxu0 0
  %99 = vmatpush1.bf16.msra.mxu0 %v89
  %100 = vmatprep.subr.bf16.mxu0 0
  %101 = vmatpush1.bf16.msra.mxu0 %v88
  %102 = vmatprep.subr.bf16.mxu0 0
  %103 = vmatpush1.bf16.msra.mxu0 %v87
  %104 = vmatprep.subr.bf16.mxu0 0
  %105 = vmatpush1.bf16.msra.mxu0 %v86
  %106 = vmatprep.subr.bf16.mxu0 0
  %107 = vmatpush1.bf16.msra.mxu0 %v85
  %108 = vmatprep.subr.bf16.mxu0 0
  %109 = vmatpush1.bf16.msra.mxu0 %v84
  %110 = vmatprep.subr.bf16.mxu0 0
  %111 = vmatpush1.bf16.msra.mxu0 %v83
  %112 = vmatprep.subr.bf16.mxu0 0
  %113 = vmatpush1.bf16.msra.mxu0 %v82
  %114 = vmatprep.subr.bf16.mxu0 0
  %115 = vmatpush2.bf16.msra.mxu0 0
  %116 = vmatprep.subr.bf16.mxu0 0
  %117 = vmatpush2.bf16.msra.mxu0 0
  %118 = vmatprep.subr.bf16.mxu0 0
  %119 = vmatpush2.bf16.msra.mxu0 0
  %120 = vmatprep.subr.bf16.mxu0 0
  %121 = vmatpush2.bf16.msra.mxu0 0
  %122 = vmatprep.subr.bf16.mxu0 0
  %123 = vmatpush2.bf16.msra.mxu0 0
  %124 = vmatprep.subr.bf16.mxu0 0
  %125 = vmatpush2.bf16.msra.mxu0 0
  %126 = vmatprep.subr.bf16.mxu0 0
  %127 = vmatpush2.bf16.msra.mxu0 0
  %128 = vmatprep.subr.bf16.mxu0 0
  %129 = vmatpush2.bf16.msra.mxu0 0
  %130 = vmatprep.mubr.bf16.mxu0 0
  %131 = vmatmul.mubr.bf16.gmra.mxu0 %v46
  %v132 = vpop.f32.mrf.mxu0
  %v133 = vadd.f32 0.0, %v132
  %v134 = vpop.f32.mrf.mxu0
  %v135 = vpop.f32.mrf.mxu0
  %v136 = vadd.f32 0.0, %v135
  %v137 = vpop.f32.mrf.mxu0
  %138 = vmatprep.mubr.bf16.mxu0 0
  %139 = vmatmul.mubr.bf16.gmra.mxu0 %v47
  %v140 = vpop.f32.mrf.mxu0
  %v141 = vadd.f32 0.0, %v140
  %v142 = vpop.f32.mrf.mxu0
  %v143 = vpop.f32.mrf.mxu0
  %v144 = vadd.f32 0.0, %v143
  %v145 = vpop.f32.mrf.mxu0
  %146 = vdwg.mxu0
  %vm147 = vcmask 130048
  %v148 = vsel %vm147, %v133, 0.0
  %v149 = vsel %vm147, %v136, 0.0
  %v150 = vadd.f32 %v148, %v149
  %v151 = vsel %vm147, %v141, 0.0
  %v152 = vadd.f32 %v150, %v151
  %v153 = vsel %vm147, %v144, 0.0
  %v154 = vadd.f32 %v152, %v153
  %v155 = vrot.slane %v154, 4
  %v156 = vadd.f32 %v154, %v155
  %v157 = vrot.slane %v156, 2
  %v158 = vadd.f32 %v156, %v157
  %v159 = vrot.slane %v158, 1
  %v160 = vadd.f32 %v158, %v159
  %v161 = vadd.f32 %v160, 0.0
  %v162 = vmul.f32 %v161, 0.03125
  %v163 = vsub.f32 %v133, %v162
  %v164 = vsub.f32 %v136, %v162
  %v165 = vsub.f32 %v141, %v162
  %v166 = vsub.f32 %v144, %v162
  %v167 = vmul.f32 %v163, %v163
  %v168 = vmul.f32 %v164, %v164
  %v169 = vmul.f32 %v165, %v165
  %v170 = vmul.f32 %v166, %v166
  %v171 = vsel %vm147, %v167, 0.0
  %v172 = vsel %vm147, %v168, 0.0
  %v173 = vadd.f32 %v171, %v172
  %v174 = vsel %vm147, %v169, 0.0
  %v175 = vadd.f32 %v173, %v174
  %v176 = vsel %vm147, %v170, 0.0
  %v177 = vadd.f32 %v175, %v176
  %v178 = vrot.slane %v177, 4
  %v179 = vadd.f32 %v177, %v178
  %v180 = vrot.slane %v179, 2
  %v181 = vadd.f32 %v179, %v180
  %v182 = vrot.slane %v181, 1
  %v183 = vadd.f32 %v181, %v182
  %v184 = vadd.f32 %v183, 0.0
  %v185 = vmul.f32 %v184, 0.03125
  %v186 = vld [vmem:[%s2] sm:$0x1]
  %v187 = vadd.f32 %v185, 1e-05
  %v188 = vrsqrt.pop %v187
  %v189 = vmul.f32 %v186, %v188
  %v191 = vlaneseq
  %v192 = vshrl.u32 %v191, 7
  %v193 = vsub.s32 0, %v192
  %v194 = vrot.slane %v189, %v193
  %v196 = vmul.f32 %v163, %v194
  %v197 = vmul.f32 %v164, %v194
  %v198 = vmul.f32 %v165, %v194
  %v199 = vmul.f32 %v166, %v194
  %v200 = vld [vmem:[%s3] sm:$0x1]
  %v202 = vlaneseq
  %v203 = vshrl.u32 %v202, 7
  %v204 = vsub.s32 0, %v203
  %v205 = vrot.slane %v200, %v204
  %v207 = vadd.f32 %v196, %v205
  %v208 = vadd.f32 %v197, %v205
  %v209 = vadd.f32 %v198, %v205
  %v210 = vadd.f32 %v199, %v205
  %v211 = vmax.f32 %v207, 0.0
  %v212 = vmax.f32 %v208, 0.0
  %v213 = vmax.f32 %v209, 0.0
  %v214 = vmax.f32 %v210, 0.0
  %v215 = vpack.c.bf16 %v212, %v211
  %v216 = vpack.c.bf16 %v214, %v213
  %v219 = vunpack.c.l.b16 %v215
  %v220 = vunpack.c.h.b16 %v215
  %v221 = vunpack.c.l.b16 %v216
  %v222 = vunpack.c.h.b16 %v216
  %v223 = vpack.c.b16 %v219, %v219
  %v224 = vpack.c.b16 %v220, %v220
  %v225 = vpack.c.b16 %v221, %v221
  %v226 = vpack.c.b16 %v222, %v222
  %vm231 = vcmask 125952
  %232 = vst.msk [vmem:[%s4] sm:$0xf] %vm231, %v223
  %233 = vst.msk [vmem:[%s4 + $0x4] sm:$0xf] %vm231, %v224
  %234 = vst.msk [vmem:[%s4 + $0x8] sm:$0xf] %vm231, %v225
  %235 = vst.msk [vmem:[%s4 + $0xc] sm:$0xf] %vm231, %v226
  // Predicated region
  $region18: #{cycle_generator_forward.8} parent=0 // pred_check
    _
  $region19: #{cycle_generator_forward.8} parent=0 // pred_check_branch
    %237 = sbr.rel (0) target = $region21
  $region20: #{cycle_generator_forward.8} parent=0 // pred_region
    _
  $region21: #{cycle_generator_forward.8} parent=0 // pred_fallthru
    _
  // Predicated region
  $region22: #{cycle_generator_forward.8} parent=0 // pred_check
    _
  $region23: #{cycle_generator_forward.8} parent=0 // pred_check_branch
    %239 = sbr.rel (0) target = $region25
  $region24: #{cycle_generator_forward.8} parent=0 // pred_region
    _
  $region25: #{cycle_generator_forward.8} parent=0 // pred_fallthru
    _

// kernel: cycle_generator_forward.9
$region0: #{cycle_generator_forward.9}
  #allocation0 [shape = 'u32[]', space=smem, size = 0x4, offset = 0x4, fixed_abs, tag = 'smem constant byte address 0x4 - core index']
  #allocation1 [shape = 'u32[144,128]{1,0:T(1,128)}', space=vmem, size = 0x12000, scoped, tag = 'internal scratch']
  %s0 = inlined_call_operand.vmem [shape: bf16[1,8,256], index: 0, kind: input, shape index: {}]
  %s1 = inlined_call_operand.vmem [shape: bf16[1,256,32], index: 1, kind: input, shape index: {}]
  %s2 = inlined_call_operand.vmem [shape: f32[1,32], index: 2, kind: input, shape index: {}]
  %s3 = inlined_call_operand.vmem [shape: f32[1,32], index: 3, kind: input, shape index: {}]
  %s4 = inlined_call_operand.vmem [shape: bf16[1,8,32], index: 4, kind: output, shape index: {}]
  %s5 = sld [smem:[#allocation0]]
  $region26: #{cycle_generator_forward.9} parent=0
    _
  %s7 = ssub.s32 1, %s5
  %s8 = scalar_select 0, %s7, %s5
  // Predicated region
  $region2: #{cycle_generator_forward.9} parent=0 // pred_check
    _
  $region3: #{cycle_generator_forward.9} parent=0 // pred_check_branch
    %10 = sbr.rel (0) target = $region5
  $region4: #{cycle_generator_forward.9} parent=0 // pred_region
    _
  $region5: #{cycle_generator_forward.9} parent=0 // pred_fallthru
    _
  // Predicated region
  $region6: #{cycle_generator_forward.9} parent=0 // pred_check
    _
  $region7: #{cycle_generator_forward.9} parent=0 // pred_check_branch
    %12 = sbr.rel (0) target = $region9
  $region8: #{cycle_generator_forward.9} parent=0 // pred_region
    _
  $region9: #{cycle_generator_forward.9} parent=0 // pred_fallthru
    _
  // Predicated region
  $region10: #{cycle_generator_forward.9} parent=0 // pred_check
    _
  $region11: #{cycle_generator_forward.9} parent=0 // pred_check_branch
    %14 = sbr.rel (0) target = $region13
  $region12: #{cycle_generator_forward.9} parent=0 // pred_region
    _
  $region13: #{cycle_generator_forward.9} parent=0 // pred_fallthru
    _
  // Predicated region
  $region14: #{cycle_generator_forward.9} parent=0 // pred_check
    _
  $region15: #{cycle_generator_forward.9} parent=0 // pred_check_branch
    %16 = sbr.rel (0) target = $region17
  $region16: #{cycle_generator_forward.9} parent=0 // pred_region
    _
  $region17: #{cycle_generator_forward.9} parent=0 // pred_fallthru
    _
  %v18 = vld [vmem:[%s0] sm:$0xff]
  %v19 = vld [vmem:[%s1] sm:$0xf]
  %v20 = vld [vmem:[%s1 + $0x4] sm:$0xf]
  %v21 = vld [vmem:[%s1 + $0x8] sm:$0xf]
  %v22 = vld [vmem:[%s1 + $0xc] sm:$0xf]
  %v23 = vld [vmem:[%s1 + $0x10] sm:$0xf]
  %v24 = vld [vmem:[%s1 + $0x14] sm:$0xf]
  %v25 = vld [vmem:[%s1 + $0x18] sm:$0xf]
  %v26 = vld [vmem:[%s1 + $0x1c] sm:$0xf]
  %v27 = vld [vmem:[%s1 + $0x20] sm:$0xf]
  %v28 = vld [vmem:[%s1 + $0x24] sm:$0xf]
  %v29 = vld [vmem:[%s1 + $0x28] sm:$0xf]
  %v30 = vld [vmem:[%s1 + $0x2c] sm:$0xf]
  %v31 = vld [vmem:[%s1 + $0x30] sm:$0xf]
  %v32 = vld [vmem:[%s1 + $0x34] sm:$0xf]
  %v33 = vld [vmem:[%s1 + $0x38] sm:$0xf]
  %v34 = vld [vmem:[%s1 + $0x3c] sm:$0xf]
  %v35 = vld [vmem:[%s1 + $0x40] sm:$0xf]
  %v36 = vld [vmem:[%s1 + $0x44] sm:$0xf]
  %v37 = vld [vmem:[%s1 + $0x48] sm:$0xf]
  %v38 = vld [vmem:[%s1 + $0x4c] sm:$0xf]
  %v39 = vld [vmem:[%s1 + $0x50] sm:$0xf]
  %v40 = vld [vmem:[%s1 + $0x54] sm:$0xf]
  %v41 = vld [vmem:[%s1 + $0x58] sm:$0xf]
  %v42 = vld [vmem:[%s1 + $0x5c] sm:$0xf]
  %v43 = vld [vmem:[%s1 + $0x60] sm:$0xf]
  %v44 = vld [vmem:[%s1 + $0x64] sm:$0xf]
  %v45 = vld [vmem:[%s1 + $0x68] sm:$0xf]
  %v46 = vld [vmem:[%s1 + $0x6c] sm:$0xf]
  %v47 = vld [vmem:[%s1 + $0x70] sm:$0xf]
  %v48 = vld [vmem:[%s1 + $0x74] sm:$0xf]
  %v49 = vld [vmem:[%s1 + $0x78] sm:$0xf]
  %v50 = vld [vmem:[%s1 + $0x7c] sm:$0xf]
  %v52 = vunpack.c.l.b16 %v18
  %v53 = vunpack.c.h.b16 %v18
  %v54 = vpack.c.b16 %v52, %v52
  %v55 = vpack.c.b16 %v53, %v53
  %v90 = vunpack.c.l.b16 %v19
  %v91 = vunpack.c.l.b16 %v20
  %v92 = vunpack.c.l.b16 %v21
  %v93 = vunpack.c.l.b16 %v22
  %v94 = vunpack.c.l.b16 %v23
  %v95 = vunpack.c.l.b16 %v24
  %v96 = vunpack.c.l.b16 %v25
  %v97 = vunpack.c.l.b16 %v26
  %v98 = vunpack.c.l.b16 %v27
  %v99 = vunpack.c.l.b16 %v28
  %v100 = vunpack.c.l.b16 %v29
  %v101 = vunpack.c.l.b16 %v30
  %v102 = vunpack.c.l.b16 %v31
  %v103 = vunpack.c.l.b16 %v32
  %v104 = vunpack.c.l.b16 %v33
  %v105 = vunpack.c.l.b16 %v34
  %v106 = vunpack.c.l.b16 %v35
  %v107 = vunpack.c.l.b16 %v36
  %v108 = vunpack.c.l.b16 %v37
  %v109 = vunpack.c.l.b16 %v38
  %v110 = vunpack.c.l.b16 %v39
  %v111 = vunpack.c.l.b16 %v40
  %v112 = vunpack.c.l.b16 %v41
  %v113 = vunpack.c.l.b16 %v42
  %v114 = vunpack.c.l.b16 %v43
  %v115 = vunpack.c.l.b16 %v44
  %v116 = vunpack.c.l.b16 %v45
  %v117 = vunpack.c.l.b16 %v46
  %v118 = vunpack.c.l.b16 %v47
  %v119 = vunpack.c.l.b16 %v48
  %v120 = vunpack.c.l.b16 %v49
  %v121 = vunpack.c.l.b16 %v50
  %v122 = vpack.c.b16 %v91, %v90
  %v123 = vpack.c.b16 %v93, %v92
  %v124 = vpack.c.b16 %v95, %v94
  %v125 = vpack.c.b16 %v97, %v96
  %v126 = vpack.c.b16 %v99, %v98
  %v127 = vpack.c.b16 %v101, %v100
  %v128 = vpack.c.b16 %v103, %v102
  %v129 = vpack.c.b16 %v105, %v104
  %v130 = vpack.c.b16 %v107, %v106
  %v131 = vpack.c.b16 %v109, %v108
  %v132 = vpack.c.b16 %v111, %v110
  %v133 = vpack.c.b16 %v113, %v112
  %v134 = vpack.c.b16 %v115, %v114
  %v135 = vpack.c.b16 %v117, %v116
  %v136 = vpack.c.b16 %v119, %v118
  %v137 = vpack.c.b16 %v121, %v120
  %154 = vmatprep.subr.bf16.mxu0 0
  %155 = vmatpush1.bf16.msra.mxu0 %v129
  %156 = vmatprep.subr.bf16.mxu0 0
  %157 = vmatpush1.bf16.msra.mxu0 %v128
  %158 = vmatprep.subr.bf16.mxu0 0
  %159 = vmatpush1.bf16.msra.mxu0 %v127
  %160 = vmatprep.subr.bf16.mxu0 0
  %161 = vmatpush1.bf16.msra.mxu0 %v126
  %162 = vmatprep.subr.bf16.mxu0 0
  %163 = vmatpush1.bf16.msra.mxu0 %v125
  %164 = vmatprep.subr.bf16.mxu0 0
  %165 = vmatpush1.bf16.msra.mxu0 %v124
  %166 = vmatprep.subr.bf16.mxu0 0
  %167 = vmatpush1.bf16.msra.mxu0 %v123
  %168 = vmatprep.subr.bf16.mxu0 0
  %169 = vmatpush1.bf16.msra.mxu0 %v122
  %170 = vmatprep.subr.bf16.mxu0 0
  %171 = vmatpush2.bf16.msra.mxu0 %v137
  %172 = vmatprep.subr.bf16.mxu0 0
  %173 = vmatpush2.bf16.msra.mxu0 %v136
  %174 = vmatprep.subr.bf16.mxu0 0
  %175 = vmatpush2.bf16.msra.mxu0 %v135
  %176 = vmatprep.subr.bf16.mxu0 0
  %177 = vmatpush2.bf16.msra.mxu0 %v134
  %178 = vmatprep.subr.bf16.mxu0 0
  %179 = vmatpush2.bf16.msra.mxu0 %v133
  %180 = vmatprep.subr.bf16.mxu0 0
  %181 = vmatpush2.bf16.msra.mxu0 %v132
  %182 = vmatprep.subr.bf16.mxu0 0
  %183 = vmatpush2.bf16.msra.mxu0 %v131
  %184 = vmatprep.subr.bf16.mxu0 0
  %185 = vmatpush2.bf16.msra.mxu0 %v130
  %186 = vmatprep.mubr.bf16.mxu0 %v55
  %187 = vmatmul.mubr.bf16.gmra.mxu0 %v54
  %v188 = vpop.f32.mrf.mxu0
  %v189 = vadd.f32 0.0, %v188
  %v190 = vpop.f32.mrf.mxu0
  %v191 = vpop.f32.mrf.mxu0
  %v192 = vpop.f32.mrf.mxu0
  %193 = vdwg.mxu0
  %vm194 = vcmask 261120
  %v195 = vsel %vm194, %v189, 0.0
  %v196 = vrot.slane %v195, 4
  %v197 = vadd.f32 %v195, %v196
  %v198 = vrot.slane %v197, 2
  %v199 = vadd.f32 %v197, %v198
  %v200 = vrot.slane %v199, 1
  %v201 = vadd.f32 %v199, %v200
  %v202 = vadd.f32 %v201, 0.0
  %v203 = vmul.f32 %v202, 0.125
  %v204 = vsub.f32 %v189, %v203
  %v205 = vmul.f32 %v204, %v204
  %v206 = vsel %vm194, %v205, 0.0
  %v207 = vrot.slane %v206, 4
  %v208 = vadd.f32 %v206, %v207
  %v209 = vrot.slane %v208, 2
  %v210 = vadd.f32 %v208, %v209
  %v211 = vrot.slane %v210, 1
  %v212 = vadd.f32 %v210, %v211
  %v213 = vadd.f32 %v212, 0.0
  %v214 = vmul.f32 %v213, 0.125
  %v215 = vld [vmem:[%s2] sm:$0x1]
  %v216 = vadd.f32 %v214, 1e-05
  %v217 = vrsqrt.pop %v216
  %v218 = vmul.f32 %v215, %v217
  %v220 = vlaneseq
  %v221 = vshrl.u32 %v220, 7
  %v222 = vsub.s32 0, %v221
  %v223 = vrot.slane %v218, %v222
  %v225 = vmul.f32 %v204, %v223
  %v226 = vld [vmem:[%s3] sm:$0x1]
  %v228 = vlaneseq
  %v229 = vshrl.u32 %v228, 7
  %v230 = vsub.s32 0, %v229
  %v231 = vrot.slane %v226, %v230
  %v233 = vadd.f32 %v225, %v231
  %v234 = vmax.f32 %v233, 0.0
  %v235 = vpack.c.bf16 %v234, %v234
  %vm236 = vcmask 257024
  %237 = vst.msk [vmem:[%s4] sm:$0xf] %vm236, %v235
  // Predicated region
  $region18: #{cycle_generator_forward.9} parent=0 // pred_check
    _
  $region19: #{cycle_generator_forward.9} parent=0 // pred_check_branch
    %239 = sbr.rel (0) target = $region21
  $region20: #{cycle_generator_forward.9} parent=0 // pred_region
    _
  $region21: #{cycle_generator_forward.9} parent=0 // pred_fallthru
    _
  // Predicated region
  $region22: #{cycle_generator_forward.9} parent=0 // pred_check
    _
  $region23: #{cycle_generator_forward.9} parent=0 // pred_check_branch
    %241 = sbr.rel (0) target = $region25
  $region24: #{cycle_generator_forward.9} parent=0 // pred_region
    _
  $region25: #{cycle_generator_forward.9} parent=0 // pred_fallthru
    _

// kernel: cycle_generator_forward.11
$region0: #{cycle_generator_forward.11}
  #allocation0 [shape = 'u32[]', space=smem, size = 0x4, offset = 0x4, fixed_abs, tag = 'smem constant byte address 0x4 - core index']
  #allocation1 [shape = 'u32[144,128]{1,0:T(1,128)}', space=vmem, size = 0x12000, scoped, tag = 'internal scratch']
  %s0 = inlined_call_operand.vmem [shape: bf16[4,8,128], index: 0, kind: input, shape index: {}]
  %s1 = inlined_call_operand.vmem [shape: bf16[4,128,16], index: 1, kind: input, shape index: {}]
  %s2 = inlined_call_operand.vmem [shape: f32[1,16], index: 2, kind: input, shape index: {}]
  %s3 = inlined_call_operand.vmem [shape: f32[1,16], index: 3, kind: input, shape index: {}]
  %s4 = inlined_call_operand.vmem [shape: bf16[4,8,16], index: 4, kind: output, shape index: {}]
  %s5 = sld [smem:[#allocation0]]
  $region26: #{cycle_generator_forward.11} parent=0
    _
  %s7 = ssub.s32 1, %s5
  %s8 = scalar_select 0, %s7, %s5
  // Predicated region
  $region2: #{cycle_generator_forward.11} parent=0 // pred_check
    _
  $region3: #{cycle_generator_forward.11} parent=0 // pred_check_branch
    %10 = sbr.rel (0) target = $region5
  $region4: #{cycle_generator_forward.11} parent=0 // pred_region
    _
  $region5: #{cycle_generator_forward.11} parent=0 // pred_fallthru
    _
  // Predicated region
  $region6: #{cycle_generator_forward.11} parent=0 // pred_check
    _
  $region7: #{cycle_generator_forward.11} parent=0 // pred_check_branch
    %12 = sbr.rel (0) target = $region9
  $region8: #{cycle_generator_forward.11} parent=0 // pred_region
    _
  $region9: #{cycle_generator_forward.11} parent=0 // pred_fallthru
    _
  // Predicated region
  $region10: #{cycle_generator_forward.11} parent=0 // pred_check
    _
  $region11: #{cycle_generator_forward.11} parent=0 // pred_check_branch
    %14 = sbr.rel (0) target = $region13
  $region12: #{cycle_generator_forward.11} parent=0 // pred_region
    _
  $region13: #{cycle_generator_forward.11} parent=0 // pred_fallthru
    _
  // Predicated region
  $region14: #{cycle_generator_forward.11} parent=0 // pred_check
    _
  $region15: #{cycle_generator_forward.11} parent=0 // pred_check_branch
    %16 = sbr.rel (0) target = $region17
  $region16: #{cycle_generator_forward.11} parent=0 // pred_region
    _
  $region17: #{cycle_generator_forward.11} parent=0 // pred_fallthru
    _
  %v18 = vld [vmem:[%s0] sm:$0xf]
  %v19 = vld [vmem:[%s1] sm:$0xf]
  %v20 = vld [vmem:[%s1 + $0x4] sm:$0xf]
  %v21 = vld [vmem:[%s1 + $0x8] sm:$0xf]
  %v22 = vld [vmem:[%s1 + $0xc] sm:$0xf]
  %v23 = vld [vmem:[%s1 + $0x10] sm:$0xf]
  %v24 = vld [vmem:[%s1 + $0x14] sm:$0xf]
  %v25 = vld [vmem:[%s1 + $0x18] sm:$0xf]
  %v26 = vld [vmem:[%s1 + $0x1c] sm:$0xf]
  %v27 = vld [vmem:[%s1 + $0x20] sm:$0xf]
  %v28 = vld [vmem:[%s1 + $0x24] sm:$0xf]
  %v29 = vld [vmem:[%s1 + $0x28] sm:$0xf]
  %v30 = vld [vmem:[%s1 + $0x2c] sm:$0xf]
  %v31 = vld [vmem:[%s1 + $0x30] sm:$0xf]
  %v32 = vld [vmem:[%s1 + $0x34] sm:$0xf]
  %v33 = vld [vmem:[%s1 + $0x38] sm:$0xf]
  %v34 = vld [vmem:[%s1 + $0x3c] sm:$0xf]
  %v51 = vunpack.c.l.b16 %v19
  %v52 = vunpack.c.l.b16 %v20
  %v53 = vunpack.c.l.b16 %v21
  %v54 = vunpack.c.l.b16 %v22
  %v55 = vunpack.c.l.b16 %v23
  %v56 = vunpack.c.l.b16 %v24
  %v57 = vunpack.c.l.b16 %v25
  %v58 = vunpack.c.l.b16 %v26
  %v59 = vunpack.c.l.b16 %v27
  %v60 = vunpack.c.l.b16 %v28
  %v61 = vunpack.c.l.b16 %v29
  %v62 = vunpack.c.l.b16 %v30
  %v63 = vunpack.c.l.b16 %v31
  %v64 = vunpack.c.l.b16 %v32
  %v65 = vunpack.c.l.b16 %v33
  %v66 = vunpack.c.l.b16 %v34
  %v67 = vpack.c.b16 %v52, %v51
  %v68 = vpack.c.b16 %v54, %v53
  %v69 = vpack.c.b16 %v56, %v55
  %v70 = vpack.c.b16 %v58, %v57
  %v71 = vpack.c.b16 %v60, %v59
  %v72 = vpack.c.b16 %v62, %v61
  %v73 = vpack.c.b16 %v64, %v63
  %v74 = vpack.c.b16 %v66, %v65
  %83 = vmatprep.subr.bf16.mxu0 0
  %84 = vmatpush1.bf16.msra.mxu0 %v74
  %85 = vmatprep.subr.bf16.mxu0 0
  %86 = vmatpush1.bf16.msra.mxu0 %v73
  %87 = vmatprep.subr.bf16.mxu0 0
  %88 = vmatpush1.bf16.msra.mxu0 %v72
  %89 = vmatprep.subr.bf16.mxu0 0
  %90 = vmatpush1.bf16.msra.mxu0 %v71
  %91 = vmatprep.subr.bf16.mxu0 0
  %92 = vmatpush1.bf16.msra.mxu0 %v70
  %93 = vmatprep.subr.bf16.mxu0 0
  %94 = vmatpush1.bf16.msra.mxu0 %v69
  %95 = vmatprep.subr.bf16.mxu0 0
  %96 = vmatpush1.bf16.msra.mxu0 %v68
  %97 = vmatprep.subr.bf16.mxu0 0
  %98 = vmatpush1.bf16.msra.mxu0 %v67
  %99 = vmatprep.subr.bf16.mxu0 0
  %100 = vmatpush2.bf16.msra.mxu0 0
  %101 = vmatprep.subr.bf16.mxu0 0
  %102 = vmatpush2.bf16.msra.mxu0 0
  %103 = vmatprep.subr.bf16.mxu0 0
  %104 = vmatpush2.bf16.msra.mxu0 0
  %105 = vmatprep.subr.bf16.mxu0 0
  %106 = vmatpush2.bf16.msra.mxu0 0
  %107 = vmatprep.subr.bf16.mxu0 0
  %108 = vmatpush2.bf16.msra.mxu0 0
  %109 = vmatprep.subr.bf16.mxu0 0
  %110 = vmatpush2.bf16.msra.mxu0 0
  %111 = vmatprep.subr.bf16.mxu0 0
  %112 = vmatpush2.bf16.msra.mxu0 0
  %113 = vmatprep.subr.bf16.mxu0 0
  %114 = vmatpush2.bf16.msra.mxu0 0
  %115 = vmatprep.mubr.bf16.mxu0 0
  %116 = vmatmul.mubr.bf16.gmra.mxu0 %v18
  %v117 = vpop.f32.mrf.mxu0
  %v118 = vadd.f32 0.0, %v117
  %v119 = vpop.f32.mrf.mxu0
  %v120 = vpop.f32.mrf.mxu0
  %v121 = vpop.f32.mrf.mxu0
  %122 = vdwg.mxu0
  %s123 = scalar_lea.vmem %s0, 4
  %v124 = vld [vmem:[%s123] sm:$0xf]
  %s125 = scalar_lea.vmem %s1, 64
  %v126 = vld [vmem:[%s125] sm:$0xf]
  %v127 = vld [vmem:[%s125 + $0x4] sm:$0xf]
  %v128 = vld [vmem:[%s125 + $0x8] sm:$0xf]
  %v129 = vld [vmem:[%s125 + $0xc] sm:$0xf]
  %v130 = vld [vmem:[%s125 + $0x10] sm:$0xf]
  %v131 = vld [vmem:[%s125 + $0x14] sm:$0xf]
  %v132 = vld [vmem:[%s125 + $0x18] sm:$0xf]
  %v133 = vld [vmem:[%s125 + $0x1c] sm:$0xf]
  %v134 = vld [vmem:[%s125 + $0x20] sm:$0xf]
  %v135 = vld [vmem:[%s125 + $0x24] sm:$0xf]
  %v136 = vld [vmem:[%s125 + $0x28] sm:$0xf]
  %v137 = vld [vmem:[%s125 + $0x2c] sm:$0xf]
  %v138 = vld [vmem:[%s125 + $0x30] sm:$0xf]
  %v139 = vld [vmem:[%s125 + $0x34] sm:$0xf]
  %v140 = vld [vmem:[%s125 + $0x38] sm:$0xf]
  %v141 = vld [vmem:[%s125 + $0x3c] sm:$0xf]
  %v158 = vunpack.c.l.b16 %v126
  %v159 = vunpack.c.l.b16 %v127
  %v160 = vunpack.c.l.b16 %v128
  %v161 = vunpack.c.l.b16 %v129
  %v162 = vunpack.c.l.b16 %v130
  %v163 = vunpack.c.l.b16 %v131
  %v164 = vunpack.c.l.b16 %v132
  %v165 = vunpack.c.l.b16 %v133
  %v166 = vunpack.c.l.b16 %v134
  %v167 = vunpack.c.l.b16 %v135
  %v168 = vunpack.c.l.b16 %v136
  %v169 = vunpack.c.l.b16 %v137
  %v170 = vunpack.c.l.b16 %v138
  %v171 = vunpack.c.l.b16 %v139
  %v172 = vunpack.c.l.b16 %v140
  %v173 = vunpack.c.l.b16 %v141
  %v174 = vpack.c.b16 %v159, %v158
  %v175 = vpack.c.b16 %v161, %v160
  %v176 = vpack.c.b16 %v163, %v162
  %v177 = vpack.c.b16 %v165, %v164
  %v178 = vpack.c.b16 %v167, %v166
  %v179 = vpack.c.b16 %v169, %v168
  %v180 = vpack.c.b16 %v171, %v170
  %v181 = vpack.c.b16 %v173, %v172
  %190 = vmatprep.subr.bf16.mxu0 0
  %191 = vmatpush1.bf16.msra.mxu0 %v181
  %192 = vmatprep.subr.bf16.mxu0 0
  %193 = vmatpush1.bf16.msra.mxu0 %v180
  %194 = vmatprep.subr.bf16.mxu0 0
  %195 = vmatpush1.bf16.msra.mxu0 %v179
  %196 = vmatprep.subr.bf16.mxu0 0
  %197 = vmatpush1.bf16.msra.mxu0 %v178
  %198 = vmatprep.subr.bf16.mxu0 0
  %199 = vmatpush1.bf16.msra.mxu0 %v177
  %200 = vmatprep.subr.bf16.mxu0 0
  %201 = vmatpush1.bf16.msra.mxu0 %v176
  %202 = vmatprep.subr.bf16.mxu0 0
  %203 = vmatpush1.bf16.msra.mxu0 %v175
  %204 = vmatprep.subr.bf16.mxu0 0
  %205 = vmatpush1.bf16.msra.mxu0 %v174
  %206 = vmatprep.subr.bf16.mxu0 0
  %207 = vmatpush2.bf16.msra.mxu0 0
  %208 = vmatprep.subr.bf16.mxu0 0
  %209 = vmatpush2.bf16.msra.mxu0 0
  %210 = vmatprep.subr.bf16.mxu0 0
  %211 = vmatpush2.bf16.msra.mxu0 0
  %212 = vmatprep.subr.bf16.mxu0 0
  %213 = vmatpush2.bf16.msra.mxu0 0
  %214 = vmatprep.subr.bf16.mxu0 0
  %215 = vmatpush2.bf16.msra.mxu0 0
  %216 = vmatprep.subr.bf16.mxu0 0
  %217 = vmatpush2.bf16.msra.mxu0 0
  %218 = vmatprep.subr.bf16.mxu0 0
  %219 = vmatpush2.bf16.msra.mxu0 0
  %220 = vmatprep.subr.bf16.mxu0 0
  %221 = vmatpush2.bf16.msra.mxu0 0
  %222 = vmatprep.mubr.bf16.mxu0 0
  %223 = vmatmul.mubr.bf16.gmra.mxu0 %v124
  %v224 = vpop.f32.mrf.mxu0
  %v225 = vadd.f32 0.0, %v224
  %v226 = vpop.f32.mrf.mxu0
  %v227 = vpop.f32.mrf.mxu0
  %v228 = vpop.f32.mrf.mxu0
  %229 = vdwg.mxu0
  %s230 = scalar_lea.vmem %s0, 8
  %v231 = vld [vmem:[%s230] sm:$0xf]
  %s232 = scalar_lea.vmem %s1, 128
  %v233 = vld [vmem:[%s232] sm:$0xf]
  %v234 = vld [vmem:[%s232 + $0x4] sm:$0xf]
  %v235 = vld [vmem:[%s232 + $0x8] sm:$0xf]
  %v236 = vld [vmem:[%s232 + $0xc] sm:$0xf]
  %v237 = vld [vmem:[%s232 + $0x10] sm:$0xf]
  %v238 = vld [vmem:[%s232 + $0x14] sm:$0xf]
  %v239 = vld [vmem:[%s232 + $0x18] sm:$0xf]
  %v240 = vld [vmem:[%s232 + $0x1c] sm:$0xf]
  %v241 = vld [vmem:[%s232 + $0x20] sm:$0xf]
  %v242 = vld [vmem:[%s232 + $0x24] sm:$0xf]
  %v243 = vld [vmem:[%s232 + $0x28] sm:$0xf]
  %v244 = vld [vmem:[%s232 + $0x2c] sm:$0xf]
  %v245 = vld [vmem:[%s232 + $0x30] sm:$0xf]
  %v246 = vld [vmem:[%s232 + $0x34] sm:$0xf]
  %v247 = vld [vmem:[%s232 + $0x38] sm:$0xf]
  %v248 = vld [vmem:[%s232 + $0x3c] sm:$0xf]
  %v265 = vunpack.c.l.b16 %v233
  %v266 = vunpack.c.l.b16 %v234
  %v267 = vunpack.c.l.b16 %v235
  %v268 = vunpack.c.l.b16 %v236
  %v269 = vunpack.c.l.b16 %v237
  %v270 = vunpack.c.l.b16 %v238
  %v271 = vunpack.c.l.b16 %v239
  %v272 = vunpack.c.l.b16 %v240
  %v273 = vunpack.c.l.b16 %v241
  %v274 = vunpack.c.l.b16 %v242
  %v275 = vunpack.c.l.b16 %v243
  %v276 = vunpack.c.l.b16 %v244
  %v277 = vunpack.c.l.b16 %v245
  %v278 = vunpack.c.l.b16 %v246
  %v279 = vunpack.c.l.b16 %v247
  %v280 = vunpack.c.l.b16 %v248
  %v281 = vpack.c.b16 %v266, %v265
  %v282 = vpack.c.b16 %v268, %v267
  %v283 = vpack.c.b16 %v270, %v269
  %v284 = vpack.c.b16 %v272, %v271
  %v285 = vpack.c.b16 %v274, %v273
  %v286 = vpack.c.b16 %v276, %v275
  %v287 = vpack.c.b16 %v278, %v277
  %v288 = vpack.c.b16 %v280, %v279
  %297 = vmatprep.subr.bf16.mxu0 0
  %298 = vmatpush1.bf16.msra.mxu0 %v288
  %299 = vmatprep.subr.bf16.mxu0 0
  %300 = vmatpush1.bf16.msra.mxu0 %v287
  %301 = vmatprep.subr.bf16.mxu0 0
  %302 = vmatpush1.bf16.msra.mxu0 %v286
  %303 = vmatprep.subr.bf16.mxu0 0
  %304 = vmatpush1.bf16.msra.mxu0 %v285
  %305 = vmatprep.subr.bf16.mxu0 0
  %306 = vmatpush1.bf16.msra.mxu0 %v284
  %307 = vmatprep.subr.bf16.mxu0 0
  %308 = vmatpush1.bf16.msra.mxu0 %v283
  %309 = vmatprep.subr.bf16.mxu0 0
  %310 = vmatpush1.bf16.msra.mxu0 %v282
  %311 = vmatprep.subr.bf16.mxu0 0
  %312 = vmatpush1.bf16.msra.mxu0 %v281
  %313 = vmatprep.subr.bf16.mxu0 0
  %314 = vmatpush2.bf16.msra.mxu0 0
  %315 = vmatprep.subr.bf16.mxu0 0
  %316 = vmatpush2.bf16.msra.mxu0 0
  %317 = vmatprep.subr.bf16.mxu0 0
  %318 = vmatpush2.bf16.msra.mxu0 0
  %319 = vmatprep.subr.bf16.mxu0 0
  %320 = vmatpush2.bf16.msra.mxu0 0
  %321 = vmatprep.subr.bf16.mxu0 0
  %322 = vmatpush2.bf16.msra.mxu0 0
  %323 = vmatprep.subr.bf16.mxu0 0
  %324 = vmatpush2.bf16.msra.mxu0 0
  %325 = vmatprep.subr.bf16.mxu0 0
  %326 = vmatpush2.bf16.msra.mxu0 0
  %327 = vmatprep.subr.bf16.mxu0 0
  %328 = vmatpush2.bf16.msra.mxu0 0
  %329 = vmatprep.mubr.bf16.mxu0 0
  %330 = vmatmul.mubr.bf16.gmra.mxu0 %v231
  %v331 = vpop.f32.mrf.mxu0
  %v332 = vadd.f32 0.0, %v331
  %v333 = vpop.f32.mrf.mxu0
  %v334 = vpop.f32.mrf.mxu0
  %v335 = vpop.f32.mrf.mxu0
  %336 = vdwg.mxu0
  %s337 = scalar_lea.vmem %s0, 12
  %v338 = vld [vmem:[%s337] sm:$0xf]
  %s339 = scalar_lea.vmem %s1, 192
  %v340 = vld [vmem:[%s339] sm:$0xf]
  %v341 = vld [vmem:[%s339 + $0x4] sm:$0xf]
  %v342 = vld [vmem:[%s339 + $0x8] sm:$0xf]
  %v343 = vld [vmem:[%s339 + $0xc] sm:$0xf]
  %v344 = vld [vmem:[%s339 + $0x10] sm:$0xf]
  %v345 = vld [vmem:[%s339 + $0x14] sm:$0xf]
  %v346 = vld [vmem:[%s339 + $0x18] sm:$0xf]
  %v347 = vld [vmem:[%s339 + $0x1c] sm:$0xf]
  %v348 = vld [vmem:[%s339 + $0x20] sm:$0xf]
  %v349 = vld [vmem:[%s339 + $0x24] sm:$0xf]
  %v350 = vld [vmem:[%s339 + $0x28] sm:$0xf]
  %v351 = vld [vmem:[%s339 + $0x2c] sm:$0xf]
  %v352 = vld [vmem:[%s339 + $0x30] sm:$0xf]
  %v353 = vld [vmem:[%s339 + $0x34] sm:$0xf]
  %v354 = vld [vmem:[%s339 + $0x38] sm:$0xf]
  %v355 = vld [vmem:[%s339 + $0x3c] sm:$0xf]
  %v372 = vunpack.c.l.b16 %v340
  %v373 = vunpack.c.l.b16 %v341
  %v374 = vunpack.c.l.b16 %v342
  %v375 = vunpack.c.l.b16 %v343
  %v376 = vunpack.c.l.b16 %v344
  %v377 = vunpack.c.l.b16 %v345
  %v378 = vunpack.c.l.b16 %v346
  %v379 = vunpack.c.l.b16 %v347
  %v380 = vunpack.c.l.b16 %v348
  %v381 = vunpack.c.l.b16 %v349
  %v382 = vunpack.c.l.b16 %v350
  %v383 = vunpack.c.l.b16 %v351
  %v384 = vunpack.c.l.b16 %v352
  %v385 = vunpack.c.l.b16 %v353
  %v386 = vunpack.c.l.b16 %v354
  %v387 = vunpack.c.l.b16 %v355
  %v388 = vpack.c.b16 %v373, %v372
  %v389 = vpack.c.b16 %v375, %v374
  %v390 = vpack.c.b16 %v377, %v376
  %v391 = vpack.c.b16 %v379, %v378
  %v392 = vpack.c.b16 %v381, %v380
  %v393 = vpack.c.b16 %v383, %v382
  %v394 = vpack.c.b16 %v385, %v384
  %v395 = vpack.c.b16 %v387, %v386
  %404 = vmatprep.subr.bf16.mxu0 0
  %405 = vmatpush1.bf16.msra.mxu0 %v395
  %406 = vmatprep.subr.bf16.mxu0 0
  %407 = vmatpush1.bf16.msra.mxu0 %v394
  %408 = vmatprep.subr.bf16.mxu0 0
  %409 = vmatpush1.bf16.msra.mxu0 %v393
  %410 = vmatprep.subr.bf16.mxu0 0
  %411 = vmatpush1.bf16.msra.mxu0 %v392
  %412 = vmatprep.subr.bf16.mxu0 0
  %413 = vmatpush1.bf16.msra.mxu0 %v391
  %414 = vmatprep.subr.bf16.mxu0 0
  %415 = vmatpush1.bf16.msra.mxu0 %v390
  %416 = vmatprep.subr.bf16.mxu0 0
  %417 = vmatpush1.bf16.msra.mxu0 %v389
  %418 = vmatprep.subr.bf16.mxu0 0
  %419 = vmatpush1.bf16.msra.mxu0 %v388
  %420 = vmatprep.subr.bf16.mxu0 0
  %421 = vmatpush2.bf16.msra.mxu0 0
  %422 = vmatprep.subr.bf16.mxu0 0
  %423 = vmatpush2.bf16.msra.mxu0 0
  %424 = vmatprep.subr.bf16.mxu0 0
  %425 = vmatpush2.bf16.msra.mxu0 0
  %426 = vmatprep.subr.bf16.mxu0 0
  %427 = vmatpush2.bf16.msra.mxu0 0
  %428 = vmatprep.subr.bf16.mxu0 0
  %429 = vmatpush2.bf16.msra.mxu0 0
  %430 = vmatprep.subr.bf16.mxu0 0
  %431 = vmatpush2.bf16.msra.mxu0 0
  %432 = vmatprep.subr.bf16.mxu0 0
  %433 = vmatpush2.bf16.msra.mxu0 0
  %434 = vmatprep.subr.bf16.mxu0 0
  %435 = vmatpush2.bf16.msra.mxu0 0
  %436 = vmatprep.mubr.bf16.mxu0 0
  %437 = vmatmul.mubr.bf16.gmra.mxu0 %v338
  %v438 = vpop.f32.mrf.mxu0
  %v439 = vadd.f32 0.0, %v438
  %v440 = vpop.f32.mrf.mxu0
  %v441 = vpop.f32.mrf.mxu0
  %v442 = vpop.f32.mrf.mxu0
  %443 = vdwg.mxu0
  %vm444 = vcmask 130048
  %v445 = vsel %vm444, %v118, 0.0
  %v446 = vrot.slane %v445, 4
  %v447 = vadd.f32 %v445, %v446
  %v448 = vrot.slane %v447, 2
  %v449 = vadd.f32 %v447, %v448
  %v450 = vrot.slane %v449, 1
  %v451 = vadd.f32 %v449, %v450
  %v452 = vadd.f32 %v451, 0.0
  %v453 = vsel %vm444, %v225, 0.0
  %v454 = vrot.slane %v453, 4
  %v455 = vadd.f32 %v453, %v454
  %v456 = vrot.slane %v455, 2
  %v457 = vadd.f32 %v455, %v456
  %v458 = vrot.slane %v457, 1
  %v459 = vadd.f32 %v457, %v458
  %v460 = vadd.f32 %v452, %v459
  %v461 = vsel %vm444, %v332, 0.0
  %v462 = vrot.slane %v461, 4
  %v463 = vadd.f32 %v461, %v462
  %v464 = vrot.slane %v463, 2
  %v465 = vadd.f32 %v463, %v464
  %v466 = vrot.slane %v465, 1
  %v467 = vadd.f32 %v465, %v466
  %v468 = vadd.f32 %v460, %v467
  %v469 = vsel %vm444, %v439, 0.0
  %v470 = vrot.slane %v469, 4
  %v471 = vadd.f32 %v469, %v470
  %v472 = vrot.slane %v471, 2
  %v473 = vadd.f32 %v471, %v472
  %v474 = vrot.slane %v473, 1
  %v475 = vadd.f32 %v473, %v474
  %v476 = vadd.f32 %v468, %v475
  %v477 = vmul.f32 %v476, 0.03125
  %v478 = vsub.f32 %v118, %v477
  %v479 = vsub.f32 %v225, %v477
  %v480 = vsub.f32 %v332, %v477
  %v481 = vsub.f32 %v439, %v477
  %v482 = vmul.f32 %v478, %v478
  %v483 = vsel %vm444, %v482, 0.0
  %v484 = vrot.slane %v483, 4
  %v485 = vadd.f32 %v483, %v484
  %v486 = vrot.slane %v485, 2
  %v487 = vadd.f32 %v485, %v486
  %v488 = vrot.slane %v487, 1
  %v489 = vadd.f32 %v487, %v488
  %v490 = vadd.f32 %v489, 0.0
  %v491 = vmul.f32 %v479, %v479
  %v492 = vsel %vm444, %v491, 0.0
  %v493 = vrot.slane %v492, 4
  %v494 = vadd.f32 %v492, %v493
  %v495 = vrot.slane %v494, 2
  %v496 = vadd.f32 %v494, %v495
  %v497 = vrot.slane %v496, 1
  %v498 = vadd.f32 %v496, %v497
  %v499 = vadd.f32 %v490, %v498
  %v500 = vmul.f32 %v480, %v480
  %v501 = vsel %vm444, %v500, 0.0
  %v502 = vrot.slane %v501, 4
  %v503 = vadd.f32 %v501, %v502
  %v504 = vrot.slane %v503, 2
  %v505 = vadd.f32 %v503, %v504
  %v506 = vrot.slane %v505, 1
  %v507 = vadd.f32 %v505, %v506
  %v508 = vadd.f32 %v499, %v507
  %v509 = vmul.f32 %v481, %v481
  %v510 = vsel %vm444, %v509, 0.0
  %v511 = vrot.slane %v510, 4
  %v512 = vadd.f32 %v510, %v511
  %v513 = vrot.slane %v512, 2
  %v514 = vadd.f32 %v512, %v513
  %v515 = vrot.slane %v514, 1
  %v516 = vadd.f32 %v514, %v515
  %v517 = vadd.f32 %v508, %v516
  %v518 = vmul.f32 %v517, 0.03125
  %v519 = vld [vmem:[%s2] sm:$0x1]
  %v520 = vadd.f32 %v518, 1e-05
  %v521 = vrsqrt.pop %v520
  %v522 = vmul.f32 %v519, %v521
  %v524 = vlaneseq
  %v525 = vshrl.u32 %v524, 7
  %v526 = vsub.s32 0, %v525
  %v527 = vrot.slane %v522, %v526
  %v529 = vmul.f32 %v478, %v527
  %v530 = vld [vmem:[%s3] sm:$0x1]
  %v532 = vlaneseq
  %v533 = vshrl.u32 %v532, 7
  %v534 = vsub.s32 0, %v533
  %v535 = vrot.slane %v530, %v534
  %v537 = vadd.f32 %v529, %v535
  %v538 = vmul.f32 %v479, %v527
  %v539 = vadd.f32 %v538, %v535
  %v540 = vmul.f32 %v480, %v527
  %v541 = vadd.f32 %v540, %v535
  %v542 = vmul.f32 %v481, %v527
  %v543 = vadd.f32 %v542, %v535
  %v544 = vmax.f32 %v537, 0.0
  %v545 = vpack.c.bf16 %v544, %v544
  %vm546 = vcmask 125952
  %547 = vst.msk [vmem:[%s4] sm:$0xf] %vm546, %v545
  %v548 = vmax.f32 %v539, 0.0
  %v549 = vpack.c.bf16 %v548, %v548
  %s550 = scalar_lea.vmem %s4, 4
  %551 = vst.msk [vmem:[%s550] sm:$0xf] %vm546, %v549
  %v552 = vmax.f32 %v541, 0.0
  %v553 = vpack.c.bf16 %v552, %v552
  %s554 = scalar_lea.vmem %s4, 8
  %555 = vst.msk [vmem:[%s554] sm:$0xf] %vm546, %v553
  %v556 = vmax.f32 %v543, 0.0
  %v557 = vpack.c.bf16 %v556, %v556
  %s558 = scalar_lea.vmem %s4, 12
  %559 = vst.msk [vmem:[%s558] sm:$0xf] %vm546, %v557
  // Predicated region
  $region18: #{cycle_generator_forward.11} parent=0 // pred_check
    _
  $region19: #{cycle_generator_forward.11} parent=0 // pred_check_branch
    %561 = sbr.rel (0) target = $region21
  $region20: #{cycle_generator_forward.11} parent=0 // pred_region
    _
  $region21: #{cycle_generator_forward.11} parent=0 // pred_fallthru
    _
  // Predicated region
  $region22: #{cycle_generator_forward.11} parent=0 // pred_check
    _
  $region23: #{cycle_generator_forward.11} parent=0 // pred_check_branch
    %563 = sbr.rel (0) target = $region25
  $region24: #{cycle_generator_forward.11} parent=0 // pred_region
    _
  $region25: #{cycle_generator_forward.11} parent=0 // pred_fallthru
    _

// kernel: cycle_generator_forward.12
$region0: #{cycle_generator_forward.12}
  #allocation0 [shape = 'u32[]', space=smem, size = 0x4, offset = 0x4, fixed_abs, tag = 'smem constant byte address 0x4 - core index']
  #allocation1 [shape = 'u32[144,128]{1,0:T(1,128)}', space=vmem, size = 0x12000, scoped, tag = 'internal scratch']
  %s0 = inlined_call_operand.vmem [shape: bf16[4,32,64], index: 0, kind: input, shape index: {}]
  %s1 = inlined_call_operand.vmem [shape: bf16[4,64,8], index: 1, kind: input, shape index: {}]
  %s2 = inlined_call_operand.vmem [shape: f32[1,8], index: 2, kind: input, shape index: {}]
  %s3 = inlined_call_operand.vmem [shape: f32[1,8], index: 3, kind: input, shape index: {}]
  %s4 = inlined_call_operand.vmem [shape: bf16[4,32,8], index: 4, kind: output, shape index: {}]
  %s5 = sld [smem:[#allocation0]]
  $region26: #{cycle_generator_forward.12} parent=0
    _
  %s7 = ssub.s32 1, %s5
  %s8 = scalar_select 0, %s7, %s5
  // Predicated region
  $region2: #{cycle_generator_forward.12} parent=0 // pred_check
    _
  $region3: #{cycle_generator_forward.12} parent=0 // pred_check_branch
    %10 = sbr.rel (0) target = $region5
  $region4: #{cycle_generator_forward.12} parent=0 // pred_region
    _
  $region5: #{cycle_generator_forward.12} parent=0 // pred_fallthru
    _
  // Predicated region
  $region6: #{cycle_generator_forward.12} parent=0 // pred_check
    _
  $region7: #{cycle_generator_forward.12} parent=0 // pred_check_branch
    %12 = sbr.rel (0) target = $region9
  $region8: #{cycle_generator_forward.12} parent=0 // pred_region
    _
  $region9: #{cycle_generator_forward.12} parent=0 // pred_fallthru
    _
  // Predicated region
  $region10: #{cycle_generator_forward.12} parent=0 // pred_check
    _
  $region11: #{cycle_generator_forward.12} parent=0 // pred_check_branch
    %14 = sbr.rel (0) target = $region13
  $region12: #{cycle_generator_forward.12} parent=0 // pred_region
    _
  $region13: #{cycle_generator_forward.12} parent=0 // pred_fallthru
    _
  // Predicated region
  $region14: #{cycle_generator_forward.12} parent=0 // pred_check
    _
  $region15: #{cycle_generator_forward.12} parent=0 // pred_check_branch
    %16 = sbr.rel (0) target = $region17
  $region16: #{cycle_generator_forward.12} parent=0 // pred_region
    _
  $region17: #{cycle_generator_forward.12} parent=0 // pred_fallthru
    _
  %v18 = vld [vmem:[%s0] sm:$0xf]
  %v19 = vld [vmem:[%s0 + $0x4] sm:$0xf]
  %v20 = vld [vmem:[%s0 + $0x8] sm:$0xf]
  %v21 = vld [vmem:[%s0 + $0xc] sm:$0xf]
  %v22 = vld [vmem:[%s1] sm:$0xf]
  %v23 = vld [vmem:[%s1 + $0x4] sm:$0xf]
  %v24 = vld [vmem:[%s1 + $0x8] sm:$0xf]
  %v25 = vld [vmem:[%s1 + $0xc] sm:$0xf]
  %v26 = vld [vmem:[%s1 + $0x10] sm:$0xf]
  %v27 = vld [vmem:[%s1 + $0x14] sm:$0xf]
  %v28 = vld [vmem:[%s1 + $0x18] sm:$0xf]
  %v29 = vld [vmem:[%s1 + $0x1c] sm:$0xf]
  %v34 = vunpack.c.l.b16 %v18
  %v35 = vunpack.c.l.b16 %v19
  %v36 = vunpack.c.l.b16 %v20
  %v37 = vunpack.c.l.b16 %v21
  %v38 = vpack.c.b16 %v35, %v34
  %v39 = vpack.c.b16 %v37, %v36
  %v48 = vunpack.c.l.b16 %v22
  %v49 = vunpack.c.l.b16 %v23
  %v50 = vunpack.c.l.b16 %v24
  %v51 = vunpack.c.l.b16 %v25
  %v52 = vunpack.c.l.b16 %v26
  %v53 = vunpack.c.l.b16 %v27
  %v54 = vunpack.c.l.b16 %v28
  %v55 = vunpack.c.l.b16 %v29
  %v56 = vpack.c.b16 %v49, %v48
  %v57 = vpack.c.b16 %v51, %v50
  %v58 = vpack.c.b16 %v53, %v52
  %v59 = vpack.c.b16 %v55, %v54
  %vm64 = vcmask 523264
  %v66 = vsel %vm64, %v38, 0
  %v69 = vsel %vm64, %v39, 0
  %71 = vmatprep.subr.bf16.mxu0 0
  %72 = vmatpush1.bf16.msra.mxu0 0
  %73 = vmatprep.subr.bf16.mxu0 0
  %74 = vmatpush1.bf16.msra.mxu0 0
  %75 = vmatprep.subr.bf16.mxu0 0
  %76 = vmatpush1.bf16.msra.mxu0 0
  %77 = vmatprep.subr.bf16.mxu0 0
  %78 = vmatpush1.bf16.msra.mxu0 0
  %79 = vmatprep.subr.bf16.mxu0 0
  %80 = vmatpush1.bf16.msra.mxu0 %v59
  %81 = vmatprep.subr.bf16.mxu0 0
  %82 = vmatpush1.bf16.msra.mxu0 %v58
  %83 = vmatprep.subr.bf16.mxu0 0
  %84 = vmatpush1.bf16.msra.mxu0 %v57
  %85 = vmatprep.subr.bf16.mxu0 0
  %86 = vmatpush1.bf16.msra.mxu0 %v56
  %87 = vmatprep.subr.bf16.mxu0 0
  %88 = vmatpush2.bf16.msra.mxu0 0
  %89 = vmatprep.subr.bf16.mxu0 0
  %90 = vmatpush2.bf16.msra.mxu0 0
  %91 = vmatprep.subr.bf16.mxu0 0
  %92 = vmatpush2.bf16.msra.mxu0 0
  %93 = vmatprep.subr.bf16.mxu0 0
  %94 = vmatpush2.bf16.msra.mxu0 0
  %95 = vmatprep.subr.bf16.mxu0 0
  %96 = vmatpush2.bf16.msra.mxu0 0
  %97 = vmatprep.subr.bf16.mxu0 0
  %98 = vmatpush2.bf16.msra.mxu0 0
  %99 = vmatprep.subr.bf16.mxu0 0
  %100 = vmatpush2.bf16.msra.mxu0 0
  %101 = vmatprep.subr.bf16.mxu0 0
  %102 = vmatpush2.bf16.msra.mxu0 0
  %103 = vmatprep.mubr.bf16.mxu0 0
  %104 = vmatmul.mubr.bf16.gmra.mxu0 %v66
  %v105 = vpop.f32.mrf.mxu0
  %v106 = vadd.f32 0.0, %v105
  %v107 = vpop.f32.mrf.mxu0
  %v108 = vpop.f32.mrf.mxu0
  %v109 = vadd.f32 0.0, %v108
  %v110 = vpop.f32.mrf.mxu0
  %111 = vmatprep.mubr.bf16.mxu0 0
  %112 = vmatmul.mubr.bf16.gmra.mxu0 %v69
  %v113 = vpop.f32.mrf.mxu0
  %v114 = vadd.f32 0.0, %v113
  %v115 = vpop.f32.mrf.mxu0
  %v116 = vpop.f32.mrf.mxu0
  %v117 = vadd.f32 0.0, %v116
  %v118 = vpop.f32.mrf.mxu0
  %119 = vdwg.mxu0
  %s120 = scalar_lea.vmem %s0, 16
  %v121 = vld [vmem:[%s120] sm:$0xf]
  %v122 = vld [vmem:[%s120 + $0x4] sm:$0xf]
  %v123 = vld [vmem:[%s120 + $0x8] sm:$0xf]
  %v124 = vld [vmem:[%s120 + $0xc] sm:$0xf]
  %s125 = scalar_lea.vmem %s1, 32
  %v126 = vld [vmem:[%s125] sm:$0xf]
  %v127 = vld [vmem:[%s125 + $0x4] sm:$0xf]
  %v128 = vld [vmem:[%s125 + $0x8] sm:$0xf]
  %v129 = vld [vmem:[%s125 + $0xc] sm:$0xf]
  %v130 = vld [vmem:[%s125 + $0x10] sm:$0xf]
  %v131 = vld [vmem:[%s125 + $0x14] sm:$0xf]
  %v132 = vld [vmem:[%s125 + $0x18] sm:$0xf]
  %v133 = vld [vmem:[%s125 + $0x1c] sm:$0xf]
  %v138 = vunpack.c.l.b16 %v121
  %v139 = vunpack.c.l.b16 %v122
  %v140 = vunpack.c.l.b16 %v123
  %v141 = vunpack.c.l.b16 %v124
  %v142 = vpack.c.b16 %v139, %v138
  %v143 = vpack.c.b16 %v141, %v140
  %v152 = vunpack.c.l.b16 %v126
  %v153 = vunpack.c.l.b16 %v127
  %v154 = vunpack.c.l.b16 %v128
  %v155 = vunpack.c.l.b16 %v129
  %v156 = vunpack.c.l.b16 %v130
  %v157 = vunpack.c.l.b16 %v131
  %v158 = vunpack.c.l.b16 %v132
  %v159 = vunpack.c.l.b16 %v133
  %v160 = vpack.c.b16 %v153, %v152
  %v161 = vpack.c.b16 %v155, %v154
  %v162 = vpack.c.b16 %v157, %v156
  %v163 = vpack.c.b16 %v159, %v158
  %v169 = vsel %vm64, %v142, 0
  %v172 = vsel %vm64, %v143, 0
  %174 = vmatprep.subr.bf16.mxu0 0
  %175 = vmatpush1.bf16.msra.mxu0 0
  %176 = vmatprep.subr.bf16.mxu0 0
  %177 = vmatpush1.bf16.msra.mxu0 0
  %178 = vmatprep.subr.bf16.mxu0 0
  %179 = vmatpush1.bf16.msra.mxu0 0
  %180 = vmatprep.subr.bf16.mxu0 0
  %181 = vmatpush1.bf16.msra.mxu0 0
  %182 = vmatprep.subr.bf16.mxu0 0
  %183 = vmatpush1.bf16.msra.mxu0 %v163
  %184 = vmatprep.subr.bf16.mxu0 0
  %185 = vmatpush1.bf16.msra.mxu0 %v162
  %186 = vmatprep.subr.bf16.mxu0 0
  %187 = vmatpush1.bf16.msra.mxu0 %v161
  %188 = vmatprep.subr.bf16.mxu0 0
  %189 = vmatpush1.bf16.msra.mxu0 %v160
  %190 = vmatprep.subr.bf16.mxu0 0
  %191 = vmatpush2.bf16.msra.mxu0 0
  %192 = vmatprep.subr.bf16.mxu0 0
  %193 = vmatpush2.bf16.msra.mxu0 0
  %194 = vmatprep.subr.bf16.mxu0 0
  %195 = vmatpush2.bf16.msra.mxu0 0
  %196 = vmatprep.subr.bf16.mxu0 0
  %197 = vmatpush2.bf16.msra.mxu0 0
  %198 = vmatprep.subr.bf16.mxu0 0
  %199 = vmatpush2.bf16.msra.mxu0 0
  %200 = vmatprep.subr.bf16.mxu0 0
  %201 = vmatpush2.bf16.msra.mxu0 0
  %202 = vmatprep.subr.bf16.mxu0 0
  %203 = vmatpush2.bf16.msra.mxu0 0
  %204 = vmatprep.subr.bf16.mxu0 0
  %205 = vmatpush2.bf16.msra.mxu0 0
  %206 = vmatprep.mubr.bf16.mxu0 0
  %207 = vmatmul.mubr.bf16.gmra.mxu0 %v169
  %v208 = vpop.f32.mrf.mxu0
  %v209 = vadd.f32 0.0, %v208
  %v210 = vpop.f32.mrf.mxu0
  %v211 = vpop.f32.mrf.mxu0
  %v212 = vadd.f32 0.0, %v211
  %v213 = vpop.f32.mrf.mxu0
  %214 = vmatprep.mubr.bf16.mxu0 0
  %215 = vmatmul.mubr.bf16.gmra.mxu0 %v172
  %v216 = vpop.f32.mrf.mxu0
  %v217 = vadd.f32 0.0, %v216
  %v218 = vpop.f32.mrf.mxu0
  %v219 = vpop.f32.mrf.mxu0
  %v220 = vadd.f32 0.0, %v219
  %v221 = vpop.f32.mrf.mxu0
  %222 = vdwg.mxu0
  %s223 = scalar_lea.vmem %s0, 32
  %v224 = vld [vmem:[%s223] sm:$0xf]
  %v225 = vld [vmem:[%s223 + $0x4] sm:$0xf]
  %v226 = vld [vmem:[%s223 + $0x8] sm:$0xf]
  %v227 = vld [vmem:[%s223 + $0xc] sm:$0xf]
  %s228 = scalar_lea.vmem %s1, 64
  %v229 = vld [vmem:[%s228] sm:$0xf]
  %v230 = vld [vmem:[%s228 + $0x4] sm:$0xf]
  %v231 = vld [vmem:[%s228 + $0x8] sm:$0xf]
  %v232 = vld [vmem:[%s228 + $0xc] sm:$0xf]
  %v233 = vld [vmem:[%s228 + $0x10] sm:$0xf]
  %v234 = vld [vmem:[%s228 + $0x14] sm:$0xf]
  %v235 = vld [vmem:[%s228 + $0x18] sm:$0xf]
  %v236 = vld [vmem:[%s228 + $0x1c] sm:$0xf]
  %v241 = vunpack.c.l.b16 %v224
  %v242 = vunpack.c.l.b16 %v225
  %v243 = vunpack.c.l.b16 %v226
  %v244 = vunpack.c.l.b16 %v227
  %v245 = vpack.c.b16 %v242, %v241
  %v246 = vpack.c.b16 %v244, %v243
  %v255 = vunpack.c.l.b16 %v229
  %v256 = vunpack.c.l.b16 %v230
  %v257 = vunpack.c.l.b16 %v231
  %v258 = vunpack.c.l.b16 %v232
  %v259 = vunpack.c.l.b16 %v233
  %v260 = vunpack.c.l.b16 %v234
  %v261 = vunpack.c.l.b16 %v235
  %v262 = vunpack.c.l.b16 %v236
  %v263 = vpack.c.b16 %v256, %v255
  %v264 = vpack.c.b16 %v258, %v257
  %v265 = vpack.c.b16 %v260, %v259
  %v266 = vpack.c.b16 %v262, %v261
  %v272 = vsel %vm64, %v245, 0
  %v275 = vsel %vm64, %v246, 0
  %277 = vmatprep.subr.bf16.mxu0 0
  %278 = vmatpush1.bf16.msra.mxu0 0
  %279 = vmatprep.subr.bf16.mxu0 0
  %280 = vmatpush1.bf16.msra.mxu0 0
  %281 = vmatprep.subr.bf16.mxu0 0
  %282 = vmatpush1.bf16.msra.mxu0 0
  %283 = vmatprep.subr.bf16.mxu0 0
  %284 = vmatpush1.bf16.msra.mxu0 0
  %285 = vmatprep.subr.bf16.mxu0 0
  %286 = vmatpush1.bf16.msra.mxu0 %v266
  %287 = vmatprep.subr.bf16.mxu0 0
  %288 = vmatpush1.bf16.msra.mxu0 %v265
  %289 = vmatprep.subr.bf16.mxu0 0
  %290 = vmatpush1.bf16.msra.mxu0 %v264
  %291 = vmatprep.subr.bf16.mxu0 0
  %292 = vmatpush1.bf16.msra.mxu0 %v263
  %293 = vmatprep.subr.bf16.mxu0 0
  %294 = vmatpush2.bf16.msra.mxu0 0
  %295 = vmatprep.subr.bf16.mxu0 0
  %296 = vmatpush2.bf16.msra.mxu0 0
  %297 = vmatprep.subr.bf16.mxu0 0
  %298 = vmatpush2.bf16.msra.mxu0 0
  %299 = vmatprep.subr.bf16.mxu0 0
  %300 = vmatpush2.bf16.msra.mxu0 0
  %301 = vmatprep.subr.bf16.mxu0 0
  %302 = vmatpush2.bf16.msra.mxu0 0
  %303 = vmatprep.subr.bf16.mxu0 0
  %304 = vmatpush2.bf16.msra.mxu0 0
  %305 = vmatprep.subr.bf16.mxu0 0
  %306 = vmatpush2.bf16.msra.mxu0 0
  %307 = vmatprep.subr.bf16.mxu0 0
  %308 = vmatpush2.bf16.msra.mxu0 0
  %309 = vmatprep.mubr.bf16.mxu0 0
  %310 = vmatmul.mubr.bf16.gmra.mxu0 %v272
  %v311 = vpop.f32.mrf.mxu0
  %v312 = vadd.f32 0.0, %v311
  %v313 = vpop.f32.mrf.mxu0
  %v314 = vpop.f32.mrf.mxu0
  %v315 = vadd.f32 0.0, %v314
  %v316 = vpop.f32.mrf.mxu0
  %317 = vmatprep.mubr.bf16.mxu0 0
  %318 = vmatmul.mubr.bf16.gmra.mxu0 %v275
  %v319 = vpop.f32.mrf.mxu0
  %v320 = vadd.f32 0.0, %v319
  %v321 = vpop.f32.mrf.mxu0
  %v322 = vpop.f32.mrf.mxu0
  %v323 = vadd.f32 0.0, %v322
  %v324 = vpop.f32.mrf.mxu0
  %325 = vdwg.mxu0
  %s326 = scalar_lea.vmem %s0, 48
  %v327 = vld [vmem:[%s326] sm:$0xf]
  %v328 = vld [vmem:[%s326 + $0x4] sm:$0xf]
  %v329 = vld [vmem:[%s326 + $0x8] sm:$0xf]
  %v330 = vld [vmem:[%s326 + $0xc] sm:$0xf]
  %s331 = scalar_lea.vmem %s1, 96
  %v332 = vld [vmem:[%s331] sm:$0xf]
  %v333 = vld [vmem:[%s331 + $0x4] sm:$0xf]
  %v334 = vld [vmem:[%s331 + $0x8] sm:$0xf]
  %v335 = vld [vmem:[%s331 + $0xc] sm:$0xf]
  %v336 = vld [vmem:[%s331 + $0x10] sm:$0xf]
  %v337 = vld [vmem:[%s331 + $0x14] sm:$0xf]
  %v338 = vld [vmem:[%s331 + $0x18] sm:$0xf]
  %v339 = vld [vmem:[%s331 + $0x1c] sm:$0xf]
  %v344 = vunpack.c.l.b16 %v327
  %v345 = vunpack.c.l.b16 %v328
  %v346 = vunpack.c.l.b16 %v329
  %v347 = vunpack.c.l.b16 %v330
  %v348 = vpack.c.b16 %v345, %v344
  %v349 = vpack.c.b16 %v347, %v346
  %v358 = vunpack.c.l.b16 %v332
  %v359 = vunpack.c.l.b16 %v333
  %v360 = vunpack.c.l.b16 %v334
  %v361 = vunpack.c.l.b16 %v335
  %v362 = vunpack.c.l.b16 %v336
  %v363 = vunpack.c.l.b16 %v337
  %v364 = vunpack.c.l.b16 %v338
  %v365 = vunpack.c.l.b16 %v339
  %v366 = vpack.c.b16 %v359, %v358
  %v367 = vpack.c.b16 %v361, %v360
  %v368 = vpack.c.b16 %v363, %v362
  %v369 = vpack.c.b16 %v365, %v364
  %v375 = vsel %vm64, %v348, 0
  %v378 = vsel %vm64, %v349, 0
  %380 = vmatprep.subr.bf16.mxu0 0
  %381 = vmatpush1.bf16.msra.mxu0 0
  %382 = vmatprep.subr.bf16.mxu0 0
  %383 = vmatpush1.bf16.msra.mxu0 0
  %384 = vmatprep.subr.bf16.mxu0 0
  %385 = vmatpush1.bf16.msra.mxu0 0
  %386 = vmatprep.subr.bf16.mxu0 0
  %387 = vmatpush1.bf16.msra.mxu0 0
  %388 = vmatprep.subr.bf16.mxu0 0
  %389 = vmatpush1.bf16.msra.mxu0 %v369
  %390 = vmatprep.subr.bf16.mxu0 0
  %391 = vmatpush1.bf16.msra.mxu0 %v368
  %392 = vmatprep.subr.bf16.mxu0 0
  %393 = vmatpush1.bf16.msra.mxu0 %v367
  %394 = vmatprep.subr.bf16.mxu0 0
  %395 = vmatpush1.bf16.msra.mxu0 %v366
  %396 = vmatprep.subr.bf16.mxu0 0
  %397 = vmatpush2.bf16.msra.mxu0 0
  %398 = vmatprep.subr.bf16.mxu0 0
  %399 = vmatpush2.bf16.msra.mxu0 0
  %400 = vmatprep.subr.bf16.mxu0 0
  %401 = vmatpush2.bf16.msra.mxu0 0
  %402 = vmatprep.subr.bf16.mxu0 0
  %403 = vmatpush2.bf16.msra.mxu0 0
  %404 = vmatprep.subr.bf16.mxu0 0
  %405 = vmatpush2.bf16.msra.mxu0 0
  %406 = vmatprep.subr.bf16.mxu0 0
  %407 = vmatpush2.bf16.msra.mxu0 0
  %408 = vmatprep.subr.bf16.mxu0 0
  %409 = vmatpush2.bf16.msra.mxu0 0
  %410 = vmatprep.subr.bf16.mxu0 0
  %411 = vmatpush2.bf16.msra.mxu0 0
  %412 = vmatprep.mubr.bf16.mxu0 0
  %413 = vmatmul.mubr.bf16.gmra.mxu0 %v375
  %v414 = vpop.f32.mrf.mxu0
  %v415 = vadd.f32 0.0, %v414
  %v416 = vpop.f32.mrf.mxu0
  %v417 = vpop.f32.mrf.mxu0
  %v418 = vadd.f32 0.0, %v417
  %v419 = vpop.f32.mrf.mxu0
  %420 = vmatprep.mubr.bf16.mxu0 0
  %421 = vmatmul.mubr.bf16.gmra.mxu0 %v378
  %v422 = vpop.f32.mrf.mxu0
  %v423 = vadd.f32 0.0, %v422
  %v424 = vpop.f32.mrf.mxu0
  %v425 = vpop.f32.mrf.mxu0
  %v426 = vadd.f32 0.0, %v425
  %v427 = vpop.f32.mrf.mxu0
  %428 = vdwg.mxu0
  %vm429 = vcmask 64512
  %v430 = vsel %vm429, %v106, 0.0
  %v431 = vsel %vm429, %v109, 0.0
  %v432 = vadd.f32 %v430, %v431
  %v433 = vsel %vm429, %v114, 0.0
  %v434 = vadd.f32 %v432, %v433
  %v435 = vsel %vm429, %v117, 0.0
  %v436 = vadd.f32 %v434, %v435
  %v437 = vrot.slane %v436, 4
  %v438 = vadd.f32 %v436, %v437
  %v439 = vrot.slane %v438, 2
  %v440 = vadd.f32 %v438, %v439
  %v441 = vrot.slane %v440, 1
  %v442 = vadd.f32 %v440, %v441
  %v443 = vadd.f32 %v442, 0.0
  %v444 = vsel %vm429, %v209, 0.0
  %v445 = vsel %vm429, %v212, 0.0
  %v446 = vadd.f32 %v444, %v445
  %v447 = vsel %vm429, %v217, 0.0
  %v448 = vadd.f32 %v446, %v447
  %v449 = vsel %vm429, %v220, 0.0
  %v450 = vadd.f32 %v448, %v449
  %v451 = vrot.slane %v450, 4
  %v452 = vadd.f32 %v450, %v451
  %v453 = vrot.slane %v452, 2
  %v454 = vadd.f32 %v452, %v453
  %v455 = vrot.slane %v454, 1
  %v456 = vadd.f32 %v454, %v455
  %v457 = vadd.f32 %v443, %v456
  %v458 = vsel %vm429, %v312, 0.0
  %v459 = vsel %vm429, %v315, 0.0
  %v460 = vadd.f32 %v458, %v459
  %v461 = vsel %vm429, %v320, 0.0
  %v462 = vadd.f32 %v460, %v461
  %v463 = vsel %vm429, %v323, 0.0
  %v464 = vadd.f32 %v462, %v463
  %v465 = vrot.slane %v464, 4
  %v466 = vadd.f32 %v464, %v465
  %v467 = vrot.slane %v466, 2
  %v468 = vadd.f32 %v466, %v467
  %v469 = vrot.slane %v468, 1
  %v470 = vadd.f32 %v468, %v469
  %v471 = vadd.f32 %v457, %v470
  %v472 = vsel %vm429, %v415, 0.0
  %v473 = vsel %vm429, %v418, 0.0
  %v474 = vadd.f32 %v472, %v473
  %v475 = vsel %vm429, %v423, 0.0
  %v476 = vadd.f32 %v474, %v475
  %v477 = vsel %vm429, %v426, 0.0
  %v478 = vadd.f32 %v476, %v477
  %v479 = vrot.slane %v478, 4
  %v480 = vadd.f32 %v478, %v479
  %v481 = vrot.slane %v480, 2
  %v482 = vadd.f32 %v480, %v481
  %v483 = vrot.slane %v482, 1
  %v484 = vadd.f32 %v482, %v483
  %v485 = vadd.f32 %v471, %v484
  %v486 = vmul.f32 %v485, 0.0078125
  %v487 = vsub.f32 %v106, %v486
  %v488 = vsub.f32 %v109, %v486
  %v489 = vsub.f32 %v114, %v486
  %v490 = vsub.f32 %v117, %v486
  %v491 = vsub.f32 %v209, %v486
  %v492 = vsub.f32 %v212, %v486
  %v493 = vsub.f32 %v217, %v486
  %v494 = vsub.f32 %v220, %v486
  %v495 = vsub.f32 %v312, %v486
  %v496 = vsub.f32 %v315, %v486
  %v497 = vsub.f32 %v320, %v486
  %v498 = vsub.f32 %v323, %v486
  %v499 = vsub.f32 %v415, %v486
  %v500 = vsub.f32 %v418, %v486
  %v501 = vsub.f32 %v423, %v486
  %v502 = vsub.f32 %v426, %v486
  %v503 = vmul.f32 %v487, %v487
  %v504 = vmul.f32 %v488, %v488
  %v505 = vmul.f32 %v489, %v489
  %v506 = vmul.f32 %v490, %v490
  %v507 = vsel %vm429, %v503, 0.0
  %v508 = vsel %vm429, %v504, 0.0
  %v509 = vadd.f32 %v507, %v508
  %v510 = vsel %vm429, %v505, 0.0
  %v511 = vadd.f32 %v509, %v510
  %v512 = vsel %vm429, %v506, 0.0
  %v513 = vadd.f32 %v511, %v512
  %v514 = vrot.slane %v513, 4
  %v515 = vadd.f32 %v513, %v514
  %v516 = vrot.slane %v515, 2
  %v517 = vadd.f32 %v515, %v516
  %v518 = vrot.slane %v517, 1
  %v519 = vadd.f32 %v517, %v518
  %v520 = vadd.f32 %v519, 0.0
  %v521 = vmul.f32 %v491, %v491
  %v522 = vmul.f32 %v492, %v492
  %v523 = vmul.f32 %v493, %v493
  %v524 = vmul.f32 %v494, %v494
  %v525 = vsel %vm429, %v521, 0.0
  %v526 = vsel %vm429, %v522, 0.0
  %v527 = vadd.f32 %v525, %v526
  %v528 = vsel %vm429, %v523, 0.0
  %v529 = vadd.f32 %v527, %v528
  %v530 = vsel %vm429, %v524, 0.0
  %v531 = vadd.f32 %v529, %v530
  %v532 = vrot.slane %v531, 4
  %v533 = vadd.f32 %v531, %v532
  %v534 = vrot.slane %v533, 2
  %v535 = vadd.f32 %v533, %v534
  %v536 = vrot.slane %v535, 1
  %v537 = vadd.f32 %v535, %v536
  %v538 = vadd.f32 %v520, %v537
  %v539 = vmul.f32 %v495, %v495
  %v540 = vmul.f32 %v496, %v496
  %v541 = vmul.f32 %v497, %v497
  %v542 = vmul.f32 %v498, %v498
  %v543 = vsel %vm429, %v539, 0.0
  %v544 = vsel %vm429, %v540, 0.0
  %v545 = vadd.f32 %v543, %v544
  %v546 = vsel %vm429, %v541, 0.0
  %v547 = vadd.f32 %v545, %v546
  %v548 = vsel %vm429, %v542, 0.0
  %v549 = vadd.f32 %v547, %v548
  %v550 = vrot.slane %v549, 4
  %v551 = vadd.f32 %v549, %v550
  %v552 = vrot.slane %v551, 2
  %v553 = vadd.f32 %v551, %v552
  %v554 = vrot.slane %v553, 1
  %v555 = vadd.f32 %v553, %v554
  %v556 = vadd.f32 %v538, %v555
  %v557 = vmul.f32 %v499, %v499
  %v558 = vmul.f32 %v500, %v500
  %v559 = vmul.f32 %v501, %v501
  %v560 = vmul.f32 %v502, %v502
  %v561 = vsel %vm429, %v557, 0.0
  %v562 = vsel %vm429, %v558, 0.0
  %v563 = vadd.f32 %v561, %v562
  %v564 = vsel %vm429, %v559, 0.0
  %v565 = vadd.f32 %v563, %v564
  %v566 = vsel %vm429, %v560, 0.0
  %v567 = vadd.f32 %v565, %v566
  %v568 = vrot.slane %v567, 4
  %v569 = vadd.f32 %v567, %v568
  %v570 = vrot.slane %v569, 2
  %v571 = vadd.f32 %v569, %v570
  %v572 = vrot.slane %v571, 1
  %v573 = vadd.f32 %v571, %v572
  %v574 = vadd.f32 %v556, %v573
  %v575 = vmul.f32 %v574, 0.0078125
  %v576 = vld [vmem:[%s2] sm:$0x1]
  %v577 = vadd.f32 %v575, 1e-05
  %v578 = vrsqrt.pop %v577
  %v579 = vmul.f32 %v576, %v578
  %v581 = vlaneseq
  %v582 = vshrl.u32 %v581, 7
  %v583 = vsub.s32 0, %v582
  %v584 = vrot.slane %v579, %v583
  %v586 = vmul.f32 %v487, %v584
  %v587 = vmul.f32 %v488, %v584
  %v588 = vmul.f32 %v489, %v584
  %v589 = vmul.f32 %v490, %v584
  %v590 = vld [vmem:[%s3] sm:$0x1]
  %v592 = vlaneseq
  %v593 = vshrl.u32 %v592, 7
  %v594 = vsub.s32 0, %v593
  %v595 = vrot.slane %v590, %v594
  %v597 = vadd.f32 %v586, %v595
  %v598 = vadd.f32 %v587, %v595
  %v599 = vadd.f32 %v588, %v595
  %v600 = vadd.f32 %v589, %v595
  %v601 = vmul.f32 %v491, %v584
  %v602 = vmul.f32 %v492, %v584
  %v603 = vmul.f32 %v493, %v584
  %v604 = vmul.f32 %v494, %v584
  %v605 = vadd.f32 %v601, %v595
  %v606 = vadd.f32 %v602, %v595
  %v607 = vadd.f32 %v603, %v595
  %v608 = vadd.f32 %v604, %v595
  %v609 = vmul.f32 %v495, %v584
  %v610 = vmul.f32 %v496, %v584
  %v611 = vmul.f32 %v497, %v584
  %v612 = vmul.f32 %v498, %v584
  %v613 = vadd.f32 %v609, %v595
  %v614 = vadd.f32 %v610, %v595
  %v615 = vadd.f32 %v611, %v595
  %v616 = vadd.f32 %v612, %v595
  %v617 = vmul.f32 %v499, %v584
  %v618 = vmul.f32 %v500, %v584
  %v619 = vmul.f32 %v501, %v584
  %v620 = vmul.f32 %v502, %v584
  %v621 = vadd.f32 %v617, %v595
  %v622 = vadd.f32 %v618, %v595
  %v623 = vadd.f32 %v619, %v595
  %v624 = vadd.f32 %v620, %v595
  %v625 = vmax.f32 %v597, 0.0
  %v626 = vmax.f32 %v598, 0.0
  %v627 = vmax.f32 %v599, 0.0
  %v628 = vmax.f32 %v600, 0.0
  %v629 = vpack.c.bf16 %v626, %v625
  %v630 = vpack.c.bf16 %v628, %v627
  %v633 = vunpack.c.l.b16 %v629
  %v634 = vunpack.c.h.b16 %v629
  %v635 = vunpack.c.l.b16 %v630
  %v636 = vunpack.c.h.b16 %v630
  %v637 = vpack.c.b16 %v633, %v633
  %v638 = vpack.c.b16 %v634, %v634
  %v639 = vpack.c.b16 %v635, %v635
  %v640 = vpack.c.b16 %v636, %v636
  %vm645 = vcmask 60416
  %646 = vst.msk [vmem:[%s4] sm:$0xf] %vm645, %v637
  %647 = vst.msk [vmem:[%s4 + $0x4] sm:$0xf] %vm645, %v638
  %648 = vst.msk [vmem:[%s4 + $0x8] sm:$0xf] %vm645, %v639
  %649 = vst.msk [vmem:[%s4 + $0xc] sm:$0xf] %vm645, %v640
  %v650 = vmax.f32 %v605, 0.0
  %v651 = vmax.f32 %v606, 0.0
  %v652 = vmax.f32 %v607, 0.0
  %v653 = vmax.f32 %v608, 0.0
  %v654 = vpack.c.bf16 %v651, %v650
  %v655 = vpack.c.bf16 %v653, %v652
  %v658 = vunpack.c.l.b16 %v654
  %v659 = vunpack.c.h.b16 %v654
  %v660 = vunpack.c.l.b16 %v655
  %v661 = vunpack.c.h.b16 %v655
  %v662 = vpack.c.b16 %v658, %v658
  %v663 = vpack.c.b16 %v659, %v659
  %v664 = vpack.c.b16 %v660, %v660
  %v665 = vpack.c.b16 %v661, %v661
  %s670 = scalar_lea.vmem %s4, 16
  %671 = vst.msk [vmem:[%s670] sm:$0xf] %vm645, %v662
  %672 = vst.msk [vmem:[%s670 + $0x4] sm:$0xf] %vm645, %v663
  %673 = vst.msk [vmem:[%s670 + $0x8] sm:$0xf] %vm645, %v664
  %674 = vst.msk [vmem:[%s670 + $0xc] sm:$0xf] %vm645, %v665
  %v675 = vmax.f32 %v613, 0.0
  %v676 = vmax.f32 %v614, 0.0
  %v677 = vmax.f32 %v615, 0.0
  %v678 = vmax.f32 %v616, 0.0
  %v679 = vpack.c.bf16 %v676, %v675
  %v680 = vpack.c.bf16 %v678, %v677
  %v683 = vunpack.c.l.b16 %v679
  %v684 = vunpack.c.h.b16 %v679
  %v685 = vunpack.c.l.b16 %v680
  %v686 = vunpack.c.h.b16 %v680
  %v687 = vpack.c.b16 %v683, %v683
  %v688 = vpack.c.b16 %v684, %v684
  %v689 = vpack.c.b16 %v685, %v685
  %v690 = vpack.c.b16 %v686, %v686
  %s695 = scalar_lea.vmem %s4, 32
  %696 = vst.msk [vmem:[%s695] sm:$0xf] %vm645, %v687
  %697 = vst.msk [vmem:[%s695 + $0x4] sm:$0xf] %vm645, %v688
  %698 = vst.msk [vmem:[%s695 + $0x8] sm:$0xf] %vm645, %v689
  %699 = vst.msk [vmem:[%s695 + $0xc] sm:$0xf] %vm645, %v690
  %v700 = vmax.f32 %v621, 0.0
  %v701 = vmax.f32 %v622, 0.0
  %v702 = vmax.f32 %v623, 0.0
  %v703 = vmax.f32 %v624, 0.0
  %v704 = vpack.c.bf16 %v701, %v700
  %v705 = vpack.c.bf16 %v703, %v702
  %v708 = vunpack.c.l.b16 %v704
  %v709 = vunpack.c.h.b16 %v704
  %v710 = vunpack.c.l.b16 %v705
  %v711 = vunpack.c.h.b16 %v705
  %v712 = vpack.c.b16 %v708, %v708
  %v713 = vpack.c.b16 %v709, %v709
  %v714 = vpack.c.b16 %v710, %v710
  %v715 = vpack.c.b16 %v711, %v711
  %s720 = scalar_lea.vmem %s4, 48
  %721 = vst.msk [vmem:[%s720] sm:$0xf] %vm645, %v712
  %722 = vst.msk [vmem:[%s720 + $0x4] sm:$0xf] %vm645, %v713
  %723 = vst.msk [vmem:[%s720 + $0x8] sm:$0xf] %vm645, %v714
  %724 = vst.msk [vmem:[%s720 + $0xc] sm:$0xf] %vm645, %v715
  // Predicated region
  $region18: #{cycle_generator_forward.12} parent=0 // pred_check
    _
  $region19: #{cycle_generator_forward.12} parent=0 // pred_check_branch
    %726 = sbr.rel (0) target = $region21
  $region20: #{cycle_generator_forward.12} parent=0 // pred_region
    _
  $region21: #{cycle_generator_forward.12} parent=0 // pred_fallthru
    _
  // Predicated region
  $region22: #{cycle_generator_forward.12} parent=0 // pred_check
    _
  $region23: #{cycle_generator_forward.12} parent=0 // pred_check_branch
    %728 = sbr.rel (0) target = $region25
  $region24: #{cycle_generator_forward.12} parent=0 // pred_region
    _
  $region25: #{cycle_generator_forward.12} parent=0 // pred_fallthru
    _

// kernel: cycle_generator_forward.10
$region0: #{cycle_generator_forward.10}
  #allocation0 [shape = 'u32[]', space=smem, size = 0x4, offset = 0x4, fixed_abs, tag = 'smem constant byte address 0x4 - core index']
  #allocation1 [shape = 'u32[144,128]{1,0:T(1,128)}', space=vmem, size = 0x12000, scoped, tag = 'internal scratch']
  #allocation2 [shape = 'f32[32,32]{1,0:T(8,128)}', space=vmem, size = 0x4000, scoped, tag = 'scratch operand']
  %s0 = inlined_call_operand.vmem [shape: f32[8,32], index: 0, kind: input, shape index: {}]
  %s1 = inlined_call_operand.vmem [shape: bf16[2,9,32,32], index: 1, kind: input, shape index: {}]
  %s2 = inlined_call_operand.vmem [shape: f32[2,1,32], index: 2, kind: input, shape index: {}]
  %s3 = inlined_call_operand.vmem [shape: f32[2,1,32], index: 3, kind: input, shape index: {}]
  %s4 = inlined_call_operand.vmem [shape: bf16[2,9,32,32], index: 4, kind: input, shape index: {}]
  %s5 = inlined_call_operand.vmem [shape: f32[2,1,32], index: 5, kind: input, shape index: {}]
  %s6 = inlined_call_operand.vmem [shape: f32[2,1,32], index: 6, kind: input, shape index: {}]
  %s7 = inlined_call_operand.vmem [shape: f32[22,1], index: 7, kind: input, shape index: {}]
  %s8 = inlined_call_operand.vmem [shape: f32[32,32], index: 8, kind: output, shape index: {}]
  %s9 = sld [smem:[#allocation0]]
  $region42: #{cycle_generator_forward.10} parent=0
    _
  %s11 = ssub.s32 1, %s9
  %s12 = scalar_select 0, %s11, %s9
  // Predicated region
  $region2: #{cycle_generator_forward.10} parent=0 // pred_check
    _
  $region3: #{cycle_generator_forward.10} parent=0 // pred_check_branch
    %14 = sbr.rel (0) target = $region5
  $region4: #{cycle_generator_forward.10} parent=0 // pred_region
    _
  $region5: #{cycle_generator_forward.10} parent=0 // pred_fallthru
    _
  // Predicated region
  $region6: #{cycle_generator_forward.10} parent=0 // pred_check
    _
  $region7: #{cycle_generator_forward.10} parent=0 // pred_check_branch
    %16 = sbr.rel (0) target = $region9
  $region8: #{cycle_generator_forward.10} parent=0 // pred_region
    _
  $region9: #{cycle_generator_forward.10} parent=0 // pred_fallthru
    _
  // Predicated region
  $region10: #{cycle_generator_forward.10} parent=0 // pred_check
    _
  $region11: #{cycle_generator_forward.10} parent=0 // pred_check_branch
    %18 = sbr.rel (0) target = $region13
  $region12: #{cycle_generator_forward.10} parent=0 // pred_region
    _
  $region13: #{cycle_generator_forward.10} parent=0 // pred_fallthru
    _
  // Predicated region
  $region14: #{cycle_generator_forward.10} parent=0 // pred_check
    _
  $region15: #{cycle_generator_forward.10} parent=0 // pred_check_branch
    %20 = sbr.rel (0) target = $region17
  $region16: #{cycle_generator_forward.10} parent=0 // pred_region
    _
  $region17: #{cycle_generator_forward.10} parent=0 // pred_fallthru
    _
  // Predicated region
  $region18: #{cycle_generator_forward.10} parent=0 // pred_check
    _
  $region19: #{cycle_generator_forward.10} parent=0 // pred_check_branch
    %22 = sbr.rel (0) target = $region21
  $region20: #{cycle_generator_forward.10} parent=0 // pred_region
    _
  $region21: #{cycle_generator_forward.10} parent=0 // pred_fallthru
    _
  // Predicated region
  $region22: #{cycle_generator_forward.10} parent=0 // pred_check
    _
  $region23: #{cycle_generator_forward.10} parent=0 // pred_check_branch
    %24 = sbr.rel (0) target = $region25
  $region24: #{cycle_generator_forward.10} parent=0 // pred_region
    _
  $region25: #{cycle_generator_forward.10} parent=0 // pred_fallthru
    _
  // Predicated region
  $region26: #{cycle_generator_forward.10} parent=0 // pred_check
    _
  $region27: #{cycle_generator_forward.10} parent=0 // pred_check_branch
    %26 = sbr.rel (0) target = $region29
  $region28: #{cycle_generator_forward.10} parent=0 // pred_region
    _
  $region29: #{cycle_generator_forward.10} parent=0 // pred_fallthru
    _
  // Predicated region
  $region30: #{cycle_generator_forward.10} parent=0 // pred_check
    _
  $region31: #{cycle_generator_forward.10} parent=0 // pred_check_branch
    %28 = sbr.rel (0) target = $region33
  $region32: #{cycle_generator_forward.10} parent=0 // pred_region
    _
  $region33: #{cycle_generator_forward.10} parent=0 // pred_fallthru
    _
  %vm30 = vcmask 261120
  %31 = vst.msk [vmem:[%s8] sm:$0xff] %vm30, 0.0
  %32 = vst.msk [vmem:[%s8 + $0x8] sm:$0xff] %vm30, 0.0
  %33 = vst.msk [vmem:[%s8 + $0x10] sm:$0xff] %vm30, 0.0
  %34 = vst.msk [vmem:[%s8 + $0x18] sm:$0xff] %vm30, 0.0
  %v35 = vld [vmem:[%s0] sm:$0x3]
  %vm36 = vcmask 254976
  %37 = vst.msk [vmem:[%s8 + $0x5] sm:$0x3] %vm36, %v35
  %v38 = vld [vmem:[%s0 + $0x2] sm:$0x3]
  %39 = vst.msk [vmem:[%s8 + $0x9] sm:$0x3] %vm36, %v38
  %v40 = vld [vmem:[%s0 + $0x4] sm:$0x3]
  %41 = vst.msk [vmem:[%s8 + $0x15] sm:$0x3] %vm36, %v40
  %v42 = vld [vmem:[%s0 + $0x6] sm:$0x3]
  %43 = vst.msk [vmem:[%s8 + $0x19] sm:$0x3] %vm36, %v42
  %v44 = vld [vmem:[%s7] sm:$0xff]
  %v45 = vld [vmem:[%s7 + $0x8] sm:$0xff]
  %v46 = vld [vmem:[%s7 + $0x10] sm:$0x3f]
  %v47 = vld [vmem:[%s8] sm:$0xff]
  %v48 = vld [vmem:[%s8 + $0x8] sm:$0xff]
  %v49 = vld [vmem:[%s8 + $0x10] sm:$0x3f]
  %v50 = vpack.c.bf16 %v48, %v47
  %v51 = vpack.c.bf16 %v49, %v49
  %v52 = vld [vmem:[%s1] sm:$0xf]
  %v53 = vld [vmem:[%s1 + $0x4] sm:$0xf]
  %v54 = vld [vmem:[%s1 + $0x8] sm:$0xf]
  %v55 = vld [vmem:[%s1 + $0xc] sm:$0xf]
  %v56 = vld [vmem:[%s8 + $0x1] sm:$0xff]
  %v57 = vld [vmem:[%s8 + $0x9] sm:$0xff]
  %v58 = vld [vmem:[%s8 + $0x11] sm:$0x3f]
  %v59 = vpack.c.bf16 %v57, %v56
  %v60 = vpack.c.bf16 %v58, %v58
  %s61 = scalar_lea.vmem %s1, 16
  %v62 = vld [vmem:[%s61] sm:$0xf]
  %v63 = vld [vmem:[%s61 + $0x4] sm:$0xf]
  %v64 = vld [vmem:[%s61 + $0x8] sm:$0xf]
  %v65 = vld [vmem:[%s61 + $0xc] sm:$0xf]
  %v70 = vunpack.c.l.b16 %v62
  %v71 = vunpack.c.l.b16 %v63
  %v72 = vunpack.c.l.b16 %v64
  %v73 = vunpack.c.l.b16 %v65
  %v74 = vpack.c.b16 %v71, %v70
  %v75 = vpack.c.b16 %v73, %v72
  %v79 = vsel %vm30, %v59, 0
  %v82 = vsel %vm30, %v60, 0
  %84 = vmatprep.subr.bf16.mxu0 0
  %85 = vmatpush1.bf16.msra.mxu0 0
  %86 = vmatprep.subr.bf16.mxu0 0
  %87 = vmatpush1.bf16.msra.mxu0 0
  %88 = vmatprep.subr.bf16.mxu0 0
  %89 = vmatpush1.bf16.msra.mxu0 0
  %90 = vmatprep.subr.bf16.mxu0 0
  %91 = vmatpush1.bf16.msra.mxu0 0
  %92 = vmatprep.subr.bf16.mxu0 0
  %93 = vmatpush1.bf16.msra.mxu0 0
  %94 = vmatprep.subr.bf16.mxu0 0
  %95 = vmatpush1.bf16.msra.mxu0 0
  %96 = vmatprep.subr.bf16.mxu0 0
  %97 = vmatpush1.bf16.msra.mxu0 %v75
  %98 = vmatprep.subr.bf16.mxu0 0
  %99 = vmatpush1.bf16.msra.mxu0 %v74
  %100 = vmatprep.subr.bf16.mxu0 0
  %101 = vmatpush2.bf16.msra.mxu0 0
  %102 = vmatprep.subr.bf16.mxu0 0
  %103 = vmatpush2.bf16.msra.mxu0 0
  %104 = vmatprep.subr.bf16.mxu0 0
  %105 = vmatpush2.bf16.msra.mxu0 0
  %106 = vmatprep.subr.bf16.mxu0 0
  %107 = vmatpush2.bf16.msra.mxu0 0
  %108 = vmatprep.subr.bf16.mxu0 0
  %109 = vmatpush2.bf16.msra.mxu0 0
  %110 = vmatprep.subr.bf16.mxu0 0
  %111 = vmatpush2.bf16.msra.mxu0 0
  %112 = vmatprep.subr.bf16.mxu0 0
  %113 = vmatpush2.bf16.msra.mxu0 0
  %114 = vmatprep.subr.bf16.mxu0 0
  %115 = vmatpush2.bf16.msra.mxu0 0
  %116 = vmatprep.mubr.bf16.mxu0 0
  %117 = vmatmul.mubr.bf16.gmra.mxu0 %v79
  %v118 = vpop.f32.mrf.mxu0
  %v119 = vadd.f32 0.0, %v118
  %v120 = vpop.f32.mrf.mxu0
  %v121 = vpop.f32.mrf.mxu0
  %v122 = vadd.f32 0.0, %v121
  %v123 = vpop.f32.mrf.mxu0
  %124 = vmatprep.mubr.bf16.mxu0 0
  %125 = vmatmul.mubr.bf16.gmra.mxu0 %v82
  %v126 = vpop.f32.mrf.mxu0
  %v127 = vadd.f32 0.0, %v126
  %v128 = vpop.f32.mrf.mxu0
  %v129 = vpop.f32.mrf.mxu0
  %v130 = vpop.f32.mrf.mxu0
  %131 = vdwg.mxu0
  %v136 = vunpack.c.l.b16 %v52
  %v137 = vunpack.c.l.b16 %v53
  %v138 = vunpack.c.l.b16 %v54
  %v139 = vunpack.c.l.b16 %v55
  %v140 = vpack.c.b16 %v137, %v136
  %v141 = vpack.c.b16 %v139, %v138
  %v145 = vsel %vm30, %v50, 0
  %v148 = vsel %vm30, %v51, 0
  %150 = vmatprep.subr.bf16.mxu0 0
  %151 = vmatpush1.bf16.msra.mxu0 0
  %152 = vmatprep.subr.bf16.mxu0 0
  %153 = vmatpush1.bf16.msra.mxu0 0
  %154 = vmatprep.subr.bf16.mxu0 0
  %155 = vmatpush1.bf16.msra.mxu0 0
  %156 = vmatprep.subr.bf16.mxu0 0
  %157 = vmatpush1.bf16.msra.mxu0 0
  %158 = vmatprep.subr.bf16.mxu0 0
  %159 = vmatpush1.bf16.msra.mxu0 0
  %160 = vmatprep.subr.bf16.mxu0 0
  %161 = vmatpush1.bf16.msra.mxu0 0
  %162 = vmatprep.subr.bf16.mxu0 0
  %163 = vmatpush1.bf16.msra.mxu0 %v141
  %164 = vmatprep.subr.bf16.mxu0 0
  %165 = vmatpush1.bf16.msra.mxu0 %v140
  %166 = vmatprep.subr.bf16.mxu0 0
  %167 = vmatpush2.bf16.msra.mxu0 0
  %168 = vmatprep.subr.bf16.mxu0 0
  %169 = vmatpush2.bf16.msra.mxu0 0
  %170 = vmatprep.subr.bf16.mxu0 0
  %171 = vmatpush2.bf16.msra.mxu0 0
  %172 = vmatprep.subr.bf16.mxu0 0
  %173 = vmatpush2.bf16.msra.mxu0 0
  %174 = vmatprep.subr.bf16.mxu0 0
  %175 = vmatpush2.bf16.msra.mxu0 0
  %176 = vmatprep.subr.bf16.mxu0 0
  %177 = vmatpush2.bf16.msra.mxu0 0
  %178 = vmatprep.subr.bf16.mxu0 0
  %179 = vmatpush2.bf16.msra.mxu0 0
  %180 = vmatprep.subr.bf16.mxu0 0
  %181 = vmatpush2.bf16.msra.mxu0 0
  %182 = vmatprep.mubr.bf16.mxu0 0
  %183 = vmatmul.mubr.bf16.gmra.mxu0 %v145
  %v184 = vpop.f32.mrf.mxu0
  %v185 = vadd.f32 %v119, %v184
  %v186 = vpop.f32.mrf.mxu0
  %v187 = vpop.f32.mrf.mxu0
  %v188 = vadd.f32 %v122, %v187
  %v189 = vpop.f32.mrf.mxu0
  %190 = vmatprep.mubr.bf16.mxu0 0
  %191 = vmatmul.mubr.bf16.gmra.mxu0 %v148
  %v192 = vpop.f32.mrf.mxu0
  %v193 = vadd.f32 %v127, %v192
  %v194 = vpop.f32.mrf.mxu0
  %v195 = vpop.f32.mrf.mxu0
  %v196 = vpop.f32.mrf.mxu0
  %197 = vdwg.mxu0
  %v198 = vld [vmem:[%s8 + $0x2] sm:$0xff]
  %v199 = vld [vmem:[%s8 + $0xa] sm:$0xff]
  %v200 = vld [vmem:[%s8 + $0x12] sm:$0x3f]
  %v201 = vpack.c.bf16 %v199, %v198
  %v202 = vpack.c.bf16 %v200, %v200
  %s203 = scalar_lea.vmem %s1, 32
  %v204 = vld [vmem:[%s203] sm:$0xf]
  %v205 = vld [vmem:[%s203 + $0x4] sm:$0xf]
  %v206 = vld [vmem:[%s203 + $0x8] sm:$0xf]
  %v207 = vld [vmem:[%s203 + $0xc] sm:$0xf]
  %v212 = vunpack.c.l.b16 %v204
  %v213 = vunpack.c.l.b16 %v205
  %v214 = vunpack.c.l.b16 %v206
  %v215 = vunpack.c.l.b16 %v207
  %v216 = vpack.c.b16 %v213, %v212
  %v217 = vpack.c.b16 %v215, %v214
  %v221 = vsel %vm30, %v201, 0
  %v224 = vsel %vm30, %v202, 0
  %226 = vmatprep.subr.bf16.mxu0 0
  %227 = vmatpush1.bf16.msra.mxu0 0
  %228 = vmatprep.subr.bf16.mxu0 0
  %229 = vmatpush1.bf16.msra.mxu0 0
  %230 = vmatprep.subr.bf16.mxu0 0
  %231 = vmatpush1.bf16.msra.mxu0 0
  %232 = vmatprep.subr.bf16.mxu0 0
  %233 = vmatpush1.bf16.msra.mxu0 0
  %234 = vmatprep.subr.bf16.mxu0 0
  %235 = vmatpush1.bf16.msra.mxu0 0
  %236 = vmatprep.subr.bf16.mxu0 0
  %237 = vmatpush1.bf16.msra.mxu0 0
  %238 = vmatprep.subr.bf16.mxu0 0
  %239 = vmatpush1.bf16.msra.mxu0 %v217
  %240 = vmatprep.subr.bf16.mxu0 0
  %241 = vmatpush1.bf16.msra.mxu0 %v216
  %242 = vmatprep.subr.bf16.mxu0 0
  %243 = vmatpush2.bf16.msra.mxu0 0
  %244 = vmatprep.subr.bf16.mxu0 0
  %245 = vmatpush2.bf16.msra.mxu0 0
  %246 = vmatprep.subr.bf16.mxu0 0
  %247 = vmatpush2.bf16.msra.mxu0 0
  %248 = vmatprep.subr.bf16.mxu0 0
  %249 = vmatpush2.bf16.msra.mxu0 0
  %250 = vmatprep.subr.bf16.mxu0 0
  %251 = vmatpush2.bf16.msra.mxu0 0
  %252 = vmatprep.subr.bf16.mxu0 0
  %253 = vmatpush2.bf16.msra.mxu0 0
  %254 = vmatprep.subr.bf16.mxu0 0
  %255 = vmatpush2.bf16.msra.mxu0 0
  %256 = vmatprep.subr.bf16.mxu0 0
  %257 = vmatpush2.bf16.msra.mxu0 0
  %258 = vmatprep.mubr.bf16.mxu0 0
  %259 = vmatmul.mubr.bf16.gmra.mxu0 %v221
  %v260 = vpop.f32.mrf.mxu0
  %v261 = vadd.f32 0.0, %v260
  %v262 = vpop.f32.mrf.mxu0
  %v263 = vpop.f32.mrf.mxu0
  %v264 = vadd.f32 0.0, %v263
  %v265 = vpop.f32.mrf.mxu0
  %266 = vmatprep.mubr.bf16.mxu0 0
  %267 = vmatmul.mubr.bf16.gmra.mxu0 %v224
  %v268 = vpop.f32.mrf.mxu0
  %v269 = vadd.f32 0.0, %v268
  %v270 = vpop.f32.mrf.mxu0
  %v271 = vpop.f32.mrf.mxu0
  %v272 = vpop.f32.mrf.mxu0
  %273 = vdwg.mxu0
  %v274 = vadd.f32 %v185, %v261
  %v275 = vadd.f32 %v188, %v264
  %v276 = vadd.f32 %v193, %v269
  %v277 = vld [vmem:[%s8 + $0x4] sm:$0xff]
  %v278 = vld [vmem:[%s8 + $0xc] sm:$0xff]
  %v279 = vld [vmem:[%s8 + $0x14] sm:$0x3f]
  %v280 = vpack.c.bf16 %v278, %v277
  %v281 = vpack.c.bf16 %v279, %v279
  %s282 = scalar_lea.vmem %s1, 48
  %v283 = vld [vmem:[%s282] sm:$0xf]
  %v284 = vld [vmem:[%s282 + $0x4] sm:$0xf]
  %v285 = vld [vmem:[%s282 + $0x8] sm:$0xf]
  %v286 = vld [vmem:[%s282 + $0xc] sm:$0xf]
  %v291 = vunpack.c.l.b16 %v283
  %v292 = vunpack.c.l.b16 %v284
  %v293 = vunpack.c.l.b16 %v285
  %v294 = vunpack.c.l.b16 %v286
  %v295 = vpack.c.b16 %v292, %v291
  %v296 = vpack.c.b16 %v294, %v293
  %v300 = vsel %vm30, %v280, 0
  %v303 = vsel %vm30, %v281, 0
  %305 = vmatprep.subr.bf16.mxu0 0
  %306 = vmatpush1.bf16.msra.mxu0 0
  %307 = vmatprep.subr.bf16.mxu0 0
  %308 = vmatpush1.bf16.msra.mxu0 0
  %309 = vmatprep.subr.bf16.mxu0 0
  %310 = vmatpush1.bf16.msra.mxu0 0
  %311 = vmatprep.subr.bf16.mxu0 0
  %312 = vmatpush1.bf16.msra.mxu0 0
  %313 = vmatprep.subr.bf16.mxu0 0
  %314 = vmatpush1.bf16.msra.mxu0 0
  %315 = vmatprep.subr.bf16.mxu0 0
  %316 = vmatpush1.bf16.msra.mxu0 0
  %317 = vmatprep.subr.bf16.mxu0 0
  %318 = vmatpush1.bf16.msra.mxu0 %v296
  %319 = vmatprep.subr.bf16.mxu0 0
  %320 = vmatpush1.bf16.msra.mxu0 %v295
  %321 = vmatprep.subr.bf16.mxu0 0
  %322 = vmatpush2.bf16.msra.mxu0 0
  %323 = vmatprep.subr.bf16.mxu0 0
  %324 = vmatpush2.bf16.msra.mxu0 0
  %325 = vmatprep.subr.bf16.mxu0 0
  %326 = vmatpush2.bf16.msra.mxu0 0
  %327 = vmatprep.subr.bf16.mxu0 0
  %328 = vmatpush2.bf16.msra.mxu0 0
  %329 = vmatprep.subr.bf16.mxu0 0
  %330 = vmatpush2.bf16.msra.mxu0 0
  %331 = vmatprep.subr.bf16.mxu0 0
  %332 = vmatpush2.bf16.msra.mxu0 0
  %333 = vmatprep.subr.bf16.mxu0 0
  %334 = vmatpush2.bf16.msra.mxu0 0
  %335 = vmatprep.subr.bf16.mxu0 0
  %336 = vmatpush2.bf16.msra.mxu0 0
  %337 = vmatprep.mubr.bf16.mxu0 0
  %338 = vmatmul.mubr.bf16.gmra.mxu0 %v300
  %v339 = vpop.f32.mrf.mxu0
  %v340 = vadd.f32 0.0, %v339
  %v341 = vpop.f32.mrf.mxu0
  %v342 = vpop.f32.mrf.mxu0
  %v343 = vadd.f32 0.0, %v342
  %v344 = vpop.f32.mrf.mxu0
  %345 = vmatprep.mubr.bf16.mxu0 0
  %346 = vmatmul.mubr.bf16.gmra.mxu0 %v303
  %v347 = vpop.f32.mrf.mxu0
  %v348 = vadd.f32 0.0, %v347
  %v349 = vpop.f32.mrf.mxu0
  %v350 = vpop.f32.mrf.mxu0
  %v351 = vpop.f32.mrf.mxu0
  %352 = vdwg.mxu0
  %v353 = vadd.f32 %v274, %v340
  %v354 = vadd.f32 %v275, %v343
  %v355 = vadd.f32 %v276, %v348
  %v356 = vld [vmem:[%s8 + $0x5] sm:$0xff]
  %v357 = vld [vmem:[%s8 + $0xd] sm:$0xff]
  %v358 = vld [vmem:[%s8 + $0x15] sm:$0x3f]
  %v359 = vpack.c.bf16 %v357, %v356
  %v360 = vpack.c.bf16 %v358, %v358
  %s361 = scalar_lea.vmem %s1, 64
  %v362 = vld [vmem:[%s361] sm:$0xf]
  %v363 = vld [vmem:[%s361 + $0x4] sm:$0xf]
  %v364 = vld [vmem:[%s361 + $0x8] sm:$0xf]
  %v365 = vld [vmem:[%s361 + $0xc] sm:$0xf]
  %v370 = vunpack.c.l.b16 %v362
  %v371 = vunpack.c.l.b16 %v363
  %v372 = vunpack.c.l.b16 %v364
  %v373 = vunpack.c.l.b16 %v365
  %v374 = vpack.c.b16 %v371, %v370
  %v375 = vpack.c.b16 %v373, %v372
  %v379 = vsel %vm30, %v359, 0
  %v382 = vsel %vm30, %v360, 0
  %384 = vmatprep.subr.bf16.mxu0 0
  %385 = vmatpush1.bf16.msra.mxu0 0
  %386 = vmatprep.subr.bf16.mxu0 0
  %387 = vmatpush1.bf16.msra.mxu0 0
  %388 = vmatprep.subr.bf16.mxu0 0
  %389 = vmatpush1.bf16.msra.mxu0 0
  %390 = vmatprep.subr.bf16.mxu0 0
  %391 = vmatpush1.bf16.msra.mxu0 0
  %392 = vmatprep.subr.bf16.mxu0 0
  %393 = vmatpush1.bf16.msra.mxu0 0
  %394 = vmatprep.subr.bf16.mxu0 0
  %395 = vmatpush1.bf16.msra.mxu0 0
  %396 = vmatprep.subr.bf16.mxu0 0
  %397 = vmatpush1.bf16.msra.mxu0 %v375
  %398 = vmatprep.subr.bf16.mxu0 0
  %399 = vmatpush1.bf16.msra.mxu0 %v374
  %400 = vmatprep.subr.bf16.mxu0 0
  %401 = vmatpush2.bf16.msra.mxu0 0
  %402 = vmatprep.subr.bf16.mxu0 0
  %403 = vmatpush2.bf16.msra.mxu0 0
  %404 = vmatprep.subr.bf16.mxu0 0
  %405 = vmatpush2.bf16.msra.mxu0 0
  %406 = vmatprep.subr.bf16.mxu0 0
  %407 = vmatpush2.bf16.msra.mxu0 0
  %408 = vmatprep.subr.bf16.mxu0 0
  %409 = vmatpush2.bf16.msra.mxu0 0
  %410 = vmatprep.subr.bf16.mxu0 0
  %411 = vmatpush2.bf16.msra.mxu0 0
  %412 = vmatprep.subr.bf16.mxu0 0
  %413 = vmatpush2.bf16.msra.mxu0 0
  %414 = vmatprep.subr.bf16.mxu0 0
  %415 = vmatpush2.bf16.msra.mxu0 0
  %416 = vmatprep.mubr.bf16.mxu0 0
  %417 = vmatmul.mubr.bf16.gmra.mxu0 %v379
  %v418 = vpop.f32.mrf.mxu0
  %v419 = vadd.f32 0.0, %v418
  %v420 = vpop.f32.mrf.mxu0
  %v421 = vpop.f32.mrf.mxu0
  %v422 = vadd.f32 0.0, %v421
  %v423 = vpop.f32.mrf.mxu0
  %424 = vmatprep.mubr.bf16.mxu0 0
  %425 = vmatmul.mubr.bf16.gmra.mxu0 %v382
  %v426 = vpop.f32.mrf.mxu0
  %v427 = vadd.f32 0.0, %v426
  %v428 = vpop.f32.mrf.mxu0
  %v429 = vpop.f32.mrf.mxu0
  %v430 = vpop.f32.mrf.mxu0
  %431 = vdwg.mxu0
  %v432 = vadd.f32 %v353, %v419
  %v433 = vadd.f32 %v354, %v422
  %v434 = vadd.f32 %v355, %v427
  %v435 = vld [vmem:[%s8 + $0x6] sm:$0xff]
  %v436 = vld [vmem:[%s8 + $0xe] sm:$0xff]
  %v437 = vld [vmem:[%s8 + $0x16] sm:$0x3f]
  %v438 = vpack.c.bf16 %v436, %v435
  %v439 = vpack.c.bf16 %v437, %v437
  %s440 = scalar_lea.vmem %s1, 80
  %v441 = vld [vmem:[%s440] sm:$0xf]
  %v442 = vld [vmem:[%s440 + $0x4] sm:$0xf]
  %v443 = vld [vmem:[%s440 + $0x8] sm:$0xf]
  %v444 = vld [vmem:[%s440 + $0xc] sm:$0xf]
  %v449 = vunpack.c.l.b16 %v441
  %v450 = vunpack.c.l.b16 %v442
  %v451 = vunpack.c.l.b16 %v443
  %v452 = vunpack.c.l.b16 %v444
  %v453 = vpack.c.b16 %v450, %v449
  %v454 = vpack.c.b16 %v452, %v451
  %v458 = vsel %vm30, %v438, 0
  %v461 = vsel %vm30, %v439, 0
  %463 = vmatprep.subr.bf16.mxu0 0
  %464 = vmatpush1.bf16.msra.mxu0 0
  %465 = vmatprep.subr.bf16.mxu0 0
  %466 = vmatpush1.bf16.msra.mxu0 0
  %467 = vmatprep.subr.bf16.mxu0 0
  %468 = vmatpush1.bf16.msra.mxu0 0
  %469 = vmatprep.subr.bf16.mxu0 0
  %470 = vmatpush1.bf16.msra.mxu0 0
  %471 = vmatprep.subr.bf16.mxu0 0
  %472 = vmatpush1.bf16.msra.mxu0 0
  %473 = vmatprep.subr.bf16.mxu0 0
  %474 = vmatpush1.bf16.msra.mxu0 0
  %475 = vmatprep.subr.bf16.mxu0 0
  %476 = vmatpush1.bf16.msra.mxu0 %v454
  %477 = vmatprep.subr.bf16.mxu0 0
  %478 = vmatpush1.bf16.msra.mxu0 %v453
  %479 = vmatprep.subr.bf16.mxu0 0
  %480 = vmatpush2.bf16.msra.mxu0 0
  %481 = vmatprep.subr.bf16.mxu0 0
  %482 = vmatpush2.bf16.msra.mxu0 0
  %483 = vmatprep.subr.bf16.mxu0 0
  %484 = vmatpush2.bf16.msra.mxu0 0
  %485 = vmatprep.subr.bf16.mxu0 0
  %486 = vmatpush2.bf16.msra.mxu0 0
  %487 = vmatprep.subr.bf16.mxu0 0
  %488 = vmatpush2.bf16.msra.mxu0 0
  %489 = vmatprep.subr.bf16.mxu0 0
  %490 = vmatpush2.bf16.msra.mxu0 0
  %491 = vmatprep.subr.bf16.mxu0 0
  %492 = vmatpush2.bf16.msra.mxu0 0
  %493 = vmatprep.subr.bf16.mxu0 0
  %494 = vmatpush2.bf16.msra.mxu0 0
  %495 = vmatprep.mubr.bf16.mxu0 0
  %496 = vmatmul.mubr.bf16.gmra.mxu0 %v458
  %v497 = vpop.f32.mrf.mxu0
  %v498 = vadd.f32 0.0, %v497
  %v499 = vpop.f32.mrf.mxu0
  %v500 = vpop.f32.mrf.mxu0
  %v501 = vadd.f32 0.0, %v500
  %v502 = vpop.f32.mrf.mxu0
  %503 = vmatprep.mubr.bf16.mxu0 0
  %504 = vmatmul.mubr.bf16.gmra.mxu0 %v461
  %v505 = vpop.f32.mrf.mxu0
  %v506 = vadd.f32 0.0, %v505
  %v507 = vpop.f32.mrf.mxu0
  %v508 = vpop.f32.mrf.mxu0
  %v509 = vpop.f32.mrf.mxu0
  %510 = vdwg.mxu0
  %v511 = vadd.f32 %v432, %v498
  %v512 = vadd.f32 %v433, %v501
  %v513 = vadd.f32 %v434, %v506
  %v514 = vld [vmem:[%s8 + $0x8] sm:$0xff]
  %v515 = vld [vmem:[%s8 + $0x10] sm:$0xff]
  %v516 = vld [vmem:[%s8 + $0x18] sm:$0x3f]
  %v517 = vpack.c.bf16 %v515, %v514
  %v518 = vpack.c.bf16 %v516, %v516
  %s519 = scalar_lea.vmem %s1, 96
  %v520 = vld [vmem:[%s519] sm:$0xf]
  %v521 = vld [vmem:[%s519 + $0x4] sm:$0xf]
  %v522 = vld [vmem:[%s519 + $0x8] sm:$0xf]
  %v523 = vld [vmem:[%s519 + $0xc] sm:$0xf]
  %v528 = vunpack.c.l.b16 %v520
  %v529 = vunpack.c.l.b16 %v521
  %v530 = vunpack.c.l.b16 %v522
  %v531 = vunpack.c.l.b16 %v523
  %v532 = vpack.c.b16 %v529, %v528
  %v533 = vpack.c.b16 %v531, %v530
  %v537 = vsel %vm30, %v517, 0
  %v540 = vsel %vm30, %v518, 0
  %542 = vmatprep.subr.bf16.mxu0 0
  %543 = vmatpush1.bf16.msra.mxu0 0
  %544 = vmatprep.subr.bf16.mxu0 0
  %545 = vmatpush1.bf16.msra.mxu0 0
  %546 = vmatprep.subr.bf16.mxu0 0
  %547 = vmatpush1.bf16.msra.mxu0 0
  %548 = vmatprep.subr.bf16.mxu0 0
  %549 = vmatpush1.bf16.msra.mxu0 0
  %550 = vmatprep.subr.bf16.mxu0 0
  %551 = vmatpush1.bf16.msra.mxu0 0
  %552 = vmatprep.subr.bf16.mxu0 0
  %553 = vmatpush1.bf16.msra.mxu0 0
  %554 = vmatprep.subr.bf16.mxu0 0
  %555 = vmatpush1.bf16.msra.mxu0 %v533
  %556 = vmatprep.subr.bf16.mxu0 0
  %557 = vmatpush1.bf16.msra.mxu0 %v532
  %558 = vmatprep.subr.bf16.mxu0 0
  %559 = vmatpush2.bf16.msra.mxu0 0
  %560 = vmatprep.subr.bf16.mxu0 0
  %561 = vmatpush2.bf16.msra.mxu0 0
  %562 = vmatprep.subr.bf16.mxu0 0
  %563 = vmatpush2.bf16.msra.mxu0 0
  %564 = vmatprep.subr.bf16.mxu0 0
  %565 = vmatpush2.bf16.msra.mxu0 0
  %566 = vmatprep.subr.bf16.mxu0 0
  %567 = vmatpush2.bf16.msra.mxu0 0
  %568 = vmatprep.subr.bf16.mxu0 0
  %569 = vmatpush2.bf16.msra.mxu0 0
  %570 = vmatprep.subr.bf16.mxu0 0
  %571 = vmatpush2.bf16.msra.mxu0 0
  %572 = vmatprep.subr.bf16.mxu0 0
  %573 = vmatpush2.bf16.msra.mxu0 0
  %574 = vmatprep.mubr.bf16.mxu0 0
  %575 = vmatmul.mubr.bf16.gmra.mxu0 %v537
  %v576 = vpop.f32.mrf.mxu0
  %v577 = vadd.f32 0.0, %v576
  %v578 = vpop.f32.mrf.mxu0
  %v579 = vpop.f32.mrf.mxu0
  %v580 = vadd.f32 0.0, %v579
  %v581 = vpop.f32.mrf.mxu0
  %582 = vmatprep.mubr.bf16.mxu0 0
  %583 = vmatmul.mubr.bf16.gmra.mxu0 %v540
  %v584 = vpop.f32.mrf.mxu0
  %v585 = vadd.f32 0.0, %v584
  %v586 = vpop.f32.mrf.mxu0
  %v587 = vpop.f32.mrf.mxu0
  %v588 = vpop.f32.mrf.mxu0
  %589 = vdwg.mxu0
  %v590 = vadd.f32 %v511, %v577
  %v591 = vadd.f32 %v512, %v580
  %v592 = vadd.f32 %v513, %v585
  %v593 = vld [vmem:[%s8 + $0x9] sm:$0xff]
  %v594 = vld [vmem:[%s8 + $0x11] sm:$0xff]
  %v595 = vld [vmem:[%s8 + $0x19] sm:$0x3f]
  %v596 = vpack.c.bf16 %v594, %v593
  %v597 = vpack.c.bf16 %v595, %v595
  %s598 = scalar_lea.vmem %s1, 112
  %v599 = vld [vmem:[%s598] sm:$0xf]
  %v600 = vld [vmem:[%s598 + $0x4] sm:$0xf]
  %v601 = vld [vmem:[%s598 + $0x8] sm:$0xf]
  %v602 = vld [vmem:[%s598 + $0xc] sm:$0xf]
  %v607 = vunpack.c.l.b16 %v599
  %v608 = vunpack.c.l.b16 %v600
  %v609 = vunpack.c.l.b16 %v601
  %v610 = vunpack.c.l.b16 %v602
  %v611 = vpack.c.b16 %v608, %v607
  %v612 = vpack.c.b16 %v610, %v609
  %v616 = vsel %vm30, %v596, 0
  %v619 = vsel %vm30, %v597, 0
  %621 = vmatprep.subr.bf16.mxu0 0
  %622 = vmatpush1.bf16.msra.mxu0 0
  %623 = vmatprep.subr.bf16.mxu0 0
  %624 = vmatpush1.bf16.msra.mxu0 0
  %625 = vmatprep.subr.bf16.mxu0 0
  %626 = vmatpush1.bf16.msra.mxu0 0
  %627 = vmatprep.subr.bf16.mxu0 0
  %628 = vmatpush1.bf16.msra.mxu0 0
  %629 = vmatprep.subr.bf16.mxu0 0
  %630 = vmatpush1.bf16.msra.mxu0 0
  %631 = vmatprep.subr.bf16.mxu0 0
  %632 = vmatpush1.bf16.msra.mxu0 0
  %633 = vmatprep.subr.bf16.mxu0 0
  %634 = vmatpush1.bf16.msra.mxu0 %v612
  %635 = vmatprep.subr.bf16.mxu0 0
  %636 = vmatpush1.bf16.msra.mxu0 %v611
  %637 = vmatprep.subr.bf16.mxu0 0
  %638 = vmatpush2.bf16.msra.mxu0 0
  %639 = vmatprep.subr.bf16.mxu0 0
  %640 = vmatpush2.bf16.msra.mxu0 0
  %641 = vmatprep.subr.bf16.mxu0 0
  %642 = vmatpush2.bf16.msra.mxu0 0
  %643 = vmatprep.subr.bf16.mxu0 0
  %644 = vmatpush2.bf16.msra.mxu0 0
  %645 = vmatprep.subr.bf16.mxu0 0
  %646 = vmatpush2.bf16.msra.mxu0 0
  %647 = vmatprep.subr.bf16.mxu0 0
  %648 = vmatpush2.bf16.msra.mxu0 0
  %649 = vmatprep.subr.bf16.mxu0 0
  %650 = vmatpush2.bf16.msra.mxu0 0
  %651 = vmatprep.subr.bf16.mxu0 0
  %652 = vmatpush2.bf16.msra.mxu0 0
  %653 = vmatprep.mubr.bf16.mxu0 0
  %654 = vmatmul.mubr.bf16.gmra.mxu0 %v616
  %v655 = vpop.f32.mrf.mxu0
  %v656 = vadd.f32 0.0, %v655
  %v657 = vpop.f32.mrf.mxu0
  %v658 = vpop.f32.mrf.mxu0
  %v659 = vadd.f32 0.0, %v658
  %v660 = vpop.f32.mrf.mxu0
  %661 = vmatprep.mubr.bf16.mxu0 0
  %662 = vmatmul.mubr.bf16.gmra.mxu0 %v619
  %v663 = vpop.f32.mrf.mxu0
  %v664 = vadd.f32 0.0, %v663
  %v665 = vpop.f32.mrf.mxu0
  %v666 = vpop.f32.mrf.mxu0
  %v667 = vpop.f32.mrf.mxu0
  %668 = vdwg.mxu0
  %v669 = vadd.f32 %v590, %v656
  %v670 = vadd.f32 %v591, %v659
  %v671 = vadd.f32 %v592, %v664
  %v672 = vld [vmem:[%s8 + $0xa] sm:$0xff]
  %v673 = vld [vmem:[%s8 + $0x12] sm:$0xff]
  %v674 = vld [vmem:[%s8 + $0x1a] sm:$0x3f]
  %v675 = vpack.c.bf16 %v673, %v672
  %v676 = vpack.c.bf16 %v674, %v674
  %s677 = scalar_lea.vmem %s1, 128
  %v678 = vld [vmem:[%s677] sm:$0xf]
  %v679 = vld [vmem:[%s677 + $0x4] sm:$0xf]
  %v680 = vld [vmem:[%s677 + $0x8] sm:$0xf]
  %v681 = vld [vmem:[%s677 + $0xc] sm:$0xf]
  %v686 = vunpack.c.l.b16 %v678
  %v687 = vunpack.c.l.b16 %v679
  %v688 = vunpack.c.l.b16 %v680
  %v689 = vunpack.c.l.b16 %v681
  %v690 = vpack.c.b16 %v687, %v686
  %v691 = vpack.c.b16 %v689, %v688
  %v695 = vsel %vm30, %v675, 0
  %v698 = vsel %vm30, %v676, 0
  %700 = vmatprep.subr.bf16.mxu0 0
  %701 = vmatpush1.bf16.msra.mxu0 0
  %702 = vmatprep.subr.bf16.mxu0 0
  %703 = vmatpush1.bf16.msra.mxu0 0
  %704 = vmatprep.subr.bf16.mxu0 0
  %705 = vmatpush1.bf16.msra.mxu0 0
  %706 = vmatprep.subr.bf16.mxu0 0
  %707 = vmatpush1.bf16.msra.mxu0 0
  %708 = vmatprep.subr.bf16.mxu0 0
  %709 = vmatpush1.bf16.msra.mxu0 0
  %710 = vmatprep.subr.bf16.mxu0 0
  %711 = vmatpush1.bf16.msra.mxu0 0
  %712 = vmatprep.subr.bf16.mxu0 0
  %713 = vmatpush1.bf16.msra.mxu0 %v691
  %714 = vmatprep.subr.bf16.mxu0 0
  %715 = vmatpush1.bf16.msra.mxu0 %v690
  %716 = vmatprep.subr.bf16.mxu0 0
  %717 = vmatpush2.bf16.msra.mxu0 0
  %718 = vmatprep.subr.bf16.mxu0 0
  %719 = vmatpush2.bf16.msra.mxu0 0
  %720 = vmatprep.subr.bf16.mxu0 0
  %721 = vmatpush2.bf16.msra.mxu0 0
  %722 = vmatprep.subr.bf16.mxu0 0
  %723 = vmatpush2.bf16.msra.mxu0 0
  %724 = vmatprep.subr.bf16.mxu0 0
  %725 = vmatpush2.bf16.msra.mxu0 0
  %726 = vmatprep.subr.bf16.mxu0 0
  %727 = vmatpush2.bf16.msra.mxu0 0
  %728 = vmatprep.subr.bf16.mxu0 0
  %729 = vmatpush2.bf16.msra.mxu0 0
  %730 = vmatprep.subr.bf16.mxu0 0
  %731 = vmatpush2.bf16.msra.mxu0 0
  %732 = vmatprep.mubr.bf16.mxu0 0
  %733 = vmatmul.mubr.bf16.gmra.mxu0 %v695
  %v734 = vpop.f32.mrf.mxu0
  %v735 = vadd.f32 0.0, %v734
  %v736 = vpop.f32.mrf.mxu0
  %v737 = vpop.f32.mrf.mxu0
  %v738 = vadd.f32 0.0, %v737
  %v739 = vpop.f32.mrf.mxu0
  %740 = vmatprep.mubr.bf16.mxu0 0
  %741 = vmatmul.mubr.bf16.gmra.mxu0 %v698
  %v742 = vpop.f32.mrf.mxu0
  %v743 = vadd.f32 0.0, %v742
  %v744 = vpop.f32.mrf.mxu0
  %v745 = vpop.f32.mrf.mxu0
  %v746 = vpop.f32.mrf.mxu0
  %747 = vdwg.mxu0
  %v748 = vadd.f32 %v669, %v735
  %v749 = vadd.f32 %v670, %v738
  %v750 = vadd.f32 %v671, %v743
  %v751 = vld [vmem:[%s2] sm:$0x1]
  %v752 = vld [vmem:[%s3] sm:$0x1]
  %754 = vset.pattern.permute.xlu0 0
  %755 = vperm.xlu0 %754, %v44
  %v756 = vpop.permute.xlu0 %755
  %759 = vset.pattern.permute.xlu0 0
  %760 = vperm.xlu0 %759, %v45
  %v761 = vpop.permute.xlu0 %760
  %764 = vset.pattern.permute.xlu0 0
  %765 = vperm.xlu0 %764, %v46
  %v766 = vpop.permute.xlu0 %765
  %v768 = vmul.f32 %v748, %v756
  %v769 = vmul.f32 %v749, %v761
  %v770 = vmul.f32 %v750, %v766
  %v771 = vsel %vm30, %v768, 0.0
  %v772 = vsel %vm30, %v769, 0.0
  %v773 = vadd.f32 %v771, %v772
  %vm774 = vcmask 259072
  %v775 = vsel %vm774, %v770, 0.0
  %v776 = vadd.f32 %v773, %v775
  %v777 = vrot.slane %v776, 4
  %v778 = vadd.f32 %v776, %v777
  %v779 = vrot.slane %v778, 2
  %v780 = vadd.f32 %v778, %v779
  %v781 = vrot.slane %v780, 1
  %v782 = vadd.f32 %v780, %v781
  %v783 = vmul.f32 %v782, 0.125
  %v784 = vsub.f32 %v748, %v783
  %v785 = vsub.f32 %v749, %v783
  %v786 = vsub.f32 %v750, %v783
  %v787 = vmul.f32 %v784, %v784
  %v788 = vmul.f32 %v785, %v785
  %v789 = vmul.f32 %v786, %v786
  %v790 = vmul.f32 %v787, %v756
  %v791 = vmul.f32 %v788, %v761
  %v792 = vmul.f32 %v789, %v766
  %v793 = vsel %vm30, %v790, 0.0
  %v794 = vsel %vm30, %v791, 0.0
  %v795 = vadd.f32 %v793, %v794
  %v796 = vsel %vm774, %v792, 0.0
  %v797 = vadd.f32 %v795, %v796
  %v798 = vrot.slane %v797, 4
  %v799 = vadd.f32 %v797, %v798
  %v800 = vrot.slane %v799, 2
  %v801 = vadd.f32 %v799, %v800
  %v802 = vrot.slane %v801, 1
  %v803 = vadd.f32 %v801, %v802
  %v804 = vmul.f32 %v803, 0.125
  %v805 = vadd.f32 %v804, 1e-05
  %v806 = vrsqrt.pop %v805
  %v807 = vmul.f32 %v751, %v806
  %v809 = vlaneseq
  %v810 = vshrl.u32 %v809, 7
  %v811 = vsub.s32 0, %v810
  %v812 = vrot.slane %v807, %v811
  %v814 = vmul.f32 %v784, %v812
  %v815 = vmul.f32 %v785, %v812
  %v816 = vmul.f32 %v786, %v812
  %v818 = vlaneseq
  %v819 = vshrl.u32 %v818, 7
  %v820 = vsub.s32 0, %v819
  %v821 = vrot.slane %v752, %v820
  %v823 = vadd.f32 %v814, %v821
  %v824 = vadd.f32 %v815, %v821
  %v825 = vadd.f32 %v816, %v821
  %v826 = vmax.f32 %v823, 0.0
  %v827 = vmax.f32 %v824, 0.0
  %v828 = vmax.f32 %v825, 0.0
  %v829 = vmul.f32 %v826, %v756
  %v830 = vmul.f32 %v827, %v761
  %v831 = vmul.f32 %v828, %v766
  %832 = vst.msk [vmem:[#allocation2] sm:$0xff] %vm30, 0.0
  %833 = vst.msk [vmem:[#allocation2 + $0x8] sm:$0xff] %vm30, 0.0
  %834 = vst.msk [vmem:[#allocation2 + $0x10] sm:$0xff] %vm30, 0.0
  %835 = vst.msk [vmem:[#allocation2 + $0x18] sm:$0xff] %vm30, 0.0
  %836 = vst.msk [vmem:[#allocation2 + $0x5] sm:$0xff] %vm30, %v829
  %837 = vst.msk [vmem:[#allocation2 + $0xd] sm:$0xff] %vm30, %v830
  %838 = vst.msk [vmem:[#allocation2 + $0x15] sm:$0x3f] %vm774, %v831
  %v839 = vld [vmem:[#allocation2] sm:$0xff]
  %v840 = vld [vmem:[#allocation2 + $0x8] sm:$0xff]
  %v841 = vld [vmem:[#allocation2 + $0x10] sm:$0x3f]
  %v842 = vpack.c.bf16 %v840, %v839
  %v843 = vpack.c.bf16 %v841, %v841
  %v844 = vld [vmem:[%s4] sm:$0xf]
  %v845 = vld [vmem:[%s4 + $0x4] sm:$0xf]
  %v846 = vld [vmem:[%s4 + $0x8] sm:$0xf]
  %v847 = vld [vmem:[%s4 + $0xc] sm:$0xf]
  %v848 = vld [vmem:[#allocation2 + $0x1] sm:$0xff]
  %v849 = vld [vmem:[#allocation2 + $0x9] sm:$0xff]
  %v850 = vld [vmem:[#allocation2 + $0x11] sm:$0x3f]
  %v851 = vpack.c.bf16 %v849, %v848
  %v852 = vpack.c.bf16 %v850, %v850
  %s853 = scalar_lea.vmem %s4, 16
  %v854 = vld [vmem:[%s853] sm:$0xf]
  %v855 = vld [vmem:[%s853 + $0x4] sm:$0xf]
  %v856 = vld [vmem:[%s853 + $0x8] sm:$0xf]
  %v857 = vld [vmem:[%s853 + $0xc] sm:$0xf]
  %v862 = vunpack.c.l.b16 %v854
  %v863 = vunpack.c.l.b16 %v855
  %v864 = vunpack.c.l.b16 %v856
  %v865 = vunpack.c.l.b16 %v857
  %v866 = vpack.c.b16 %v863, %v862
  %v867 = vpack.c.b16 %v865, %v864
  %v871 = vsel %vm30, %v851, 0
  %v874 = vsel %vm30, %v852, 0
  %876 = vmatprep.subr.bf16.mxu0 0
  %877 = vmatpush1.bf16.msra.mxu0 0
  %878 = vmatprep.subr.bf16.mxu0 0
  %879 = vmatpush1.bf16.msra.mxu0 0
  %880 = vmatprep.subr.bf16.mxu0 0
  %881 = vmatpush1.bf16.msra.mxu0 0
  %882 = vmatprep.subr.bf16.mxu0 0
  %883 = vmatpush1.bf16.msra.mxu0 0
  %884 = vmatprep.subr.bf16.mxu0 0
  %885 = vmatpush1.bf16.msra.mxu0 0
  %886 = vmatprep.subr.bf16.mxu0 0
  %887 = vmatpush1.bf16.msra.mxu0 0
  %888 = vmatprep.subr.bf16.mxu0 0
  %889 = vmatpush1.bf16.msra.mxu0 %v867
  %890 = vmatprep.subr.bf16.mxu0 0
  %891 = vmatpush1.bf16.msra.mxu0 %v866
  %892 = vmatprep.subr.bf16.mxu0 0
  %893 = vmatpush2.bf16.msra.mxu0 0
  %894 = vmatprep.subr.bf16.mxu0 0
  %895 = vmatpush2.bf16.msra.mxu0 0
  %896 = vmatprep.subr.bf16.mxu0 0
  %897 = vmatpush2.bf16.msra.mxu0 0
  %898 = vmatprep.subr.bf16.mxu0 0
  %899 = vmatpush2.bf16.msra.mxu0 0
  %900 = vmatprep.subr.bf16.mxu0 0
  %901 = vmatpush2.bf16.msra.mxu0 0
  %902 = vmatprep.subr.bf16.mxu0 0
  %903 = vmatpush2.bf16.msra.mxu0 0
  %904 = vmatprep.subr.bf16.mxu0 0
  %905 = vmatpush2.bf16.msra.mxu0 0
  %906 = vmatprep.subr.bf16.mxu0 0
  %907 = vmatpush2.bf16.msra.mxu0 0
  %908 = vmatprep.mubr.bf16.mxu0 0
  %909 = vmatmul.mubr.bf16.gmra.mxu0 %v871
  %v910 = vpop.f32.mrf.mxu0
  %v911 = vadd.f32 0.0, %v910
  %v912 = vpop.f32.mrf.mxu0
  %v913 = vpop.f32.mrf.mxu0
  %v914 = vadd.f32 0.0, %v913
  %v915 = vpop.f32.mrf.mxu0
  %916 = vmatprep.mubr.bf16.mxu0 0
  %917 = vmatmul.mubr.bf16.gmra.mxu0 %v874
  %v918 = vpop.f32.mrf.mxu0
  %v919 = vadd.f32 0.0, %v918
  %v920 = vpop.f32.mrf.mxu0
  %v921 = vpop.f32.mrf.mxu0
  %v922 = vpop.f32.mrf.mxu0
  %923 = vdwg.mxu0
  %v928 = vunpack.c.l.b16 %v844
  %v929 = vunpack.c.l.b16 %v845
  %v930 = vunpack.c.l.b16 %v846
  %v931 = vunpack.c.l.b16 %v847
  %v932 = vpack.c.b16 %v929, %v928
  %v933 = vpack.c.b16 %v931, %v930
  %v937 = vsel %vm30, %v842, 0
  %v940 = vsel %vm30, %v843, 0
  %942 = vmatprep.subr.bf16.mxu0 0
  %943 = vmatpush1.bf16.msra.mxu0 0
  %944 = vmatprep.subr.bf16.mxu0 0
  %945 = vmatpush1.bf16.msra.mxu0 0
  %946 = vmatprep.subr.bf16.mxu0 0
  %947 = vmatpush1.bf16.msra.mxu0 0
  %948 = vmatprep.subr.bf16.mxu0 0
  %949 = vmatpush1.bf16.msra.mxu0 0
  %950 = vmatprep.subr.bf16.mxu0 0
  %951 = vmatpush1.bf16.msra.mxu0 0
  %952 = vmatprep.subr.bf16.mxu0 0
  %953 = vmatpush1.bf16.msra.mxu0 0
  %954 = vmatprep.subr.bf16.mxu0 0
  %955 = vmatpush1.bf16.msra.mxu0 %v933
  %956 = vmatprep.subr.bf16.mxu0 0
  %957 = vmatpush1.bf16.msra.mxu0 %v932
  %958 = vmatprep.subr.bf16.mxu0 0
  %959 = vmatpush2.bf16.msra.mxu0 0
  %960 = vmatprep.subr.bf16.mxu0 0
  %961 = vmatpush2.bf16.msra.mxu0 0
  %962 = vmatprep.subr.bf16.mxu0 0
  %963 = vmatpush2.bf16.msra.mxu0 0
  %964 = vmatprep.subr.bf16.mxu0 0
  %965 = vmatpush2.bf16.msra.mxu0 0
  %966 = vmatprep.subr.bf16.mxu0 0
  %967 = vmatpush2.bf16.msra.mxu0 0
  %968 = vmatprep.subr.bf16.mxu0 0
  %969 = vmatpush2.bf16.msra.mxu0 0
  %970 = vmatprep.subr.bf16.mxu0 0
  %971 = vmatpush2.bf16.msra.mxu0 0
  %972 = vmatprep.subr.bf16.mxu0 0
  %973 = vmatpush2.bf16.msra.mxu0 0
  %974 = vmatprep.mubr.bf16.mxu0 0
  %975 = vmatmul.mubr.bf16.gmra.mxu0 %v937
  %v976 = vpop.f32.mrf.mxu0
  %v977 = vadd.f32 %v911, %v976
  %v978 = vpop.f32.mrf.mxu0
  %v979 = vpop.f32.mrf.mxu0
  %v980 = vadd.f32 %v914, %v979
  %v981 = vpop.f32.mrf.mxu0
  %982 = vmatprep.mubr.bf16.mxu0 0
  %983 = vmatmul.mubr.bf16.gmra.mxu0 %v940
  %v984 = vpop.f32.mrf.mxu0
  %v985 = vadd.f32 %v919, %v984
  %v986 = vpop.f32.mrf.mxu0
  %v987 = vpop.f32.mrf.mxu0
  %v988 = vpop.f32.mrf.mxu0
  %989 = vdwg.mxu0
  %v990 = vld [vmem:[#allocation2 + $0x2] sm:$0xff]
  %v991 = vld [vmem:[#allocation2 + $0xa] sm:$0xff]
  %v992 = vld [vmem:[#allocation2 + $0x12] sm:$0x3f]
  %v993 = vpack.c.bf16 %v991, %v990
  %v994 = vpack.c.bf16 %v992, %v992
  %s995 = scalar_lea.vmem %s4, 32
  %v996 = vld [vmem:[%s995] sm:$0xf]
  %v997 = vld [vmem:[%s995 + $0x4] sm:$0xf]
  %v998 = vld [vmem:[%s995 + $0x8] sm:$0xf]
  %v999 = vld [vmem:[%s995 + $0xc] sm:$0xf]
  %v1004 = vunpack.c.l.b16 %v996
  %v1005 = vunpack.c.l.b16 %v997
  %v1006 = vunpack.c.l.b16 %v998
  %v1007 = vunpack.c.l.b16 %v999
  %v1008 = vpack.c.b16 %v1005, %v1004
  %v1009 = vpack.c.b16 %v1007, %v1006
  %v1013 = vsel %vm30, %v993, 0
  %v1016 = vsel %vm30, %v994, 0
  %1018 = vmatprep.subr.bf16.mxu0 0
  %1019 = vmatpush1.bf16.msra.mxu0 0
  %1020 = vmatprep.subr.bf16.mxu0 0
  %1021 = vmatpush1.bf16.msra.mxu0 0
  %1022 = vmatprep.subr.bf16.mxu0 0
  %1023 = vmatpush1.bf16.msra.mxu0 0
  %1024 = vmatprep.subr.bf16.mxu0 0
  %1025 = vmatpush1.bf16.msra.mxu0 0
  %1026 = vmatprep.subr.bf16.mxu0 0
  %1027 = vmatpush1.bf16.msra.mxu0 0
  %1028 = vmatprep.subr.bf16.mxu0 0
  %1029 = vmatpush1.bf16.msra.mxu0 0
  %1030 = vmatprep.subr.bf16.mxu0 0
  %1031 = vmatpush1.bf16.msra.mxu0 %v1009
  %1032 = vmatprep.subr.bf16.mxu0 0
  %1033 = vmatpush1.bf16.msra.mxu0 %v1008
  %1034 = vmatprep.subr.bf16.mxu0 0
  %1035 = vmatpush2.bf16.msra.mxu0 0
  %1036 = vmatprep.subr.bf16.mxu0 0
  %1037 = vmatpush2.bf16.msra.mxu0 0
  %1038 = vmatprep.subr.bf16.mxu0 0
  %1039 = vmatpush2.bf16.msra.mxu0 0
  %1040 = vmatprep.subr.bf16.mxu0 0
  %1041 = vmatpush2.bf16.msra.mxu0 0
  %1042 = vmatprep.subr.bf16.mxu0 0
  %1043 = vmatpush2.bf16.msra.mxu0 0
  %1044 = vmatprep.subr.bf16.mxu0 0
  %1045 = vmatpush2.bf16.msra.mxu0 0
  %1046 = vmatprep.subr.bf16.mxu0 0
  %1047 = vmatpush2.bf16.msra.mxu0 0
  %1048 = vmatprep.subr.bf16.mxu0 0
  %1049 = vmatpush2.bf16.msra.mxu0 0
  %1050 = vmatprep.mubr.bf16.mxu0 0
  %1051 = vmatmul.mubr.bf16.gmra.mxu0 %v1013
  %v1052 = vpop.f32.mrf.mxu0
  %v1053 = vadd.f32 0.0, %v1052
  %v1054 = vpop.f32.mrf.mxu0
  %v1055 = vpop.f32.mrf.mxu0
  %v1056 = vadd.f32 0.0, %v1055
  %v1057 = vpop.f32.mrf.mxu0
  %1058 = vmatprep.mubr.bf16.mxu0 0
  %1059 = vmatmul.mubr.bf16.gmra.mxu0 %v1016
  %v1060 = vpop.f32.mrf.mxu0
  %v1061 = vadd.f32 0.0, %v1060
  %v1062 = vpop.f32.mrf.mxu0
  %v1063 = vpop.f32.mrf.mxu0
  %v1064 = vpop.f32.mrf.mxu0
  %1065 = vdwg.mxu0
  %v1066 = vadd.f32 %v977, %v1053
  %v1067 = vadd.f32 %v980, %v1056
  %v1068 = vadd.f32 %v985, %v1061
  %v1069 = vld [vmem:[#allocation2 + $0x4] sm:$0xff]
  %v1070 = vld [vmem:[#allocation2 + $0xc] sm:$0xff]
  %v1071 = vld [vmem:[#allocation2 + $0x14] sm:$0x3f]
  %v1072 = vpack.c.bf16 %v1070, %v1069
  %v1073 = vpack.c.bf16 %v1071, %v1071
  %s1074 = scalar_lea.vmem %s4, 48
  %v1075 = vld [vmem:[%s1074] sm:$0xf]
  %v1076 = vld [vmem:[%s1074 + $0x4] sm:$0xf]
  %v1077 = vld [vmem:[%s1074 + $0x8] sm:$0xf]
  %v1078 = vld [vmem:[%s1074 + $0xc] sm:$0xf]
  %v1083 = vunpack.c.l.b16 %v1075
  %v1084 = vunpack.c.l.b16 %v1076
  %v1085 = vunpack.c.l.b16 %v1077
  %v1086 = vunpack.c.l.b16 %v1078
  %v1087 = vpack.c.b16 %v1084, %v1083
  %v1088 = vpack.c.b16 %v1086, %v1085
  %v1092 = vsel %vm30, %v1072, 0
  %v1095 = vsel %vm30, %v1073, 0
  %1097 = vmatprep.subr.bf16.mxu0 0
  %1098 = vmatpush1.bf16.msra.mxu0 0
  %1099 = vmatprep.subr.bf16.mxu0 0
  %1100 = vmatpush1.bf16.msra.mxu0 0
  %1101 = vmatprep.subr.bf16.mxu0 0
  %1102 = vmatpush1.bf16.msra.mxu0 0
  %1103 = vmatprep.subr.bf16.mxu0 0
  %1104 = vmatpush1.bf16.msra.mxu0 0
  %1105 = vmatprep.subr.bf16.mxu0 0
  %1106 = vmatpush1.bf16.msra.mxu0 0
  %1107 = vmatprep.subr.bf16.mxu0 0
  %1108 = vmatpush1.bf16.msra.mxu0 0
  %1109 = vmatprep.subr.bf16.mxu0 0
  %1110 = vmatpush1.bf16.msra.mxu0 %v1088
  %1111 = vmatprep.subr.bf16.mxu0 0
  %1112 = vmatpush1.bf16.msra.mxu0 %v1087
  %1113 = vmatprep.subr.bf16.mxu0 0
  %1114 = vmatpush2.bf16.msra.mxu0 0
  %1115 = vmatprep.subr.bf16.mxu0 0
  %1116 = vmatpush2.bf16.msra.mxu0 0
  %1117 = vmatprep.subr.bf16.mxu0 0
  %1118 = vmatpush2.bf16.msra.mxu0 0
  %1119 = vmatprep.subr.bf16.mxu0 0
  %1120 = vmatpush2.bf16.msra.mxu0 0
  %1121 = vmatprep.subr.bf16.mxu0 0
  %1122 = vmatpush2.bf16.msra.mxu0 0
  %1123 = vmatprep.subr.bf16.mxu0 0
  %1124 = vmatpush2.bf16.msra.mxu0 0
  %1125 = vmatprep.subr.bf16.mxu0 0
  %1126 = vmatpush2.bf16.msra.mxu0 0
  %1127 = vmatprep.subr.bf16.mxu0 0
  %1128 = vmatpush2.bf16.msra.mxu0 0
  %1129 = vmatprep.mubr.bf16.mxu0 0
  %1130 = vmatmul.mubr.bf16.gmra.mxu0 %v1092
  %v1131 = vpop.f32.mrf.mxu0
  %v1132 = vadd.f32 0.0, %v1131
  %v1133 = vpop.f32.mrf.mxu0
  %v1134 = vpop.f32.mrf.mxu0
  %v1135 = vadd.f32 0.0, %v1134
  %v1136 = vpop.f32.mrf.mxu0
  %1137 = vmatprep.mubr.bf16.mxu0 0
  %1138 = vmatmul.mubr.bf16.gmra.mxu0 %v1095
  %v1139 = vpop.f32.mrf.mxu0
  %v1140 = vadd.f32 0.0, %v1139
  %v1141 = vpop.f32.mrf.mxu0
  %v1142 = vpop.f32.mrf.mxu0
  %v1143 = vpop.f32.mrf.mxu0
  %1144 = vdwg.mxu0
  %v1145 = vadd.f32 %v1066, %v1132
  %v1146 = vadd.f32 %v1067, %v1135
  %v1147 = vadd.f32 %v1068, %v1140
  %v1148 = vld [vmem:[#allocation2 + $0x5] sm:$0xff]
  %v1149 = vld [vmem:[#allocation2 + $0xd] sm:$0xff]
  %v1150 = vld [vmem:[#allocation2 + $0x15] sm:$0x3f]
  %v1151 = vpack.c.bf16 %v1149, %v1148
  %v1152 = vpack.c.bf16 %v1150, %v1150
  %s1153 = scalar_lea.vmem %s4, 64
  %v1154 = vld [vmem:[%s1153] sm:$0xf]
  %v1155 = vld [vmem:[%s1153 + $0x4] sm:$0xf]
  %v1156 = vld [vmem:[%s1153 + $0x8] sm:$0xf]
  %v1157 = vld [vmem:[%s1153 + $0xc] sm:$0xf]
  %v1162 = vunpack.c.l.b16 %v1154
  %v1163 = vunpack.c.l.b16 %v1155
  %v1164 = vunpack.c.l.b16 %v1156
  %v1165 = vunpack.c.l.b16 %v1157
  %v1166 = vpack.c.b16 %v1163, %v1162
  %v1167 = vpack.c.b16 %v1165, %v1164
  %v1171 = vsel %vm30, %v1151, 0
  %v1174 = vsel %vm30, %v1152, 0
  %1176 = vmatprep.subr.bf16.mxu0 0
  %1177 = vmatpush1.bf16.msra.mxu0 0
  %1178 = vmatprep.subr.bf16.mxu0 0
  %1179 = vmatpush1.bf16.msra.mxu0 0
  %1180 = vmatprep.subr.bf16.mxu0 0
  %1181 = vmatpush1.bf16.msra.mxu0 0
  %1182 = vmatprep.subr.bf16.mxu0 0
  %1183 = vmatpush1.bf16.msra.mxu0 0
  %1184 = vmatprep.subr.bf16.mxu0 0
  %1185 = vmatpush1.bf16.msra.mxu0 0
  %1186 = vmatprep.subr.bf16.mxu0 0
  %1187 = vmatpush1.bf16.msra.mxu0 0
  %1188 = vmatprep.subr.bf16.mxu0 0
  %1189 = vmatpush1.bf16.msra.mxu0 %v1167
  %1190 = vmatprep.subr.bf16.mxu0 0
  %1191 = vmatpush1.bf16.msra.mxu0 %v1166
  %1192 = vmatprep.subr.bf16.mxu0 0
  %1193 = vmatpush2.bf16.msra.mxu0 0
  %1194 = vmatprep.subr.bf16.mxu0 0
  %1195 = vmatpush2.bf16.msra.mxu0 0
  %1196 = vmatprep.subr.bf16.mxu0 0
  %1197 = vmatpush2.bf16.msra.mxu0 0
  %1198 = vmatprep.subr.bf16.mxu0 0
  %1199 = vmatpush2.bf16.msra.mxu0 0
  %1200 = vmatprep.subr.bf16.mxu0 0
  %1201 = vmatpush2.bf16.msra.mxu0 0
  %1202 = vmatprep.subr.bf16.mxu0 0
  %1203 = vmatpush2.bf16.msra.mxu0 0
  %1204 = vmatprep.subr.bf16.mxu0 0
  %1205 = vmatpush2.bf16.msra.mxu0 0
  %1206 = vmatprep.subr.bf16.mxu0 0
  %1207 = vmatpush2.bf16.msra.mxu0 0
  %1208 = vmatprep.mubr.bf16.mxu0 0
  %1209 = vmatmul.mubr.bf16.gmra.mxu0 %v1171
  %v1210 = vpop.f32.mrf.mxu0
  %v1211 = vadd.f32 0.0, %v1210
  %v1212 = vpop.f32.mrf.mxu0
  %v1213 = vpop.f32.mrf.mxu0
  %v1214 = vadd.f32 0.0, %v1213
  %v1215 = vpop.f32.mrf.mxu0
  %1216 = vmatprep.mubr.bf16.mxu0 0
  %1217 = vmatmul.mubr.bf16.gmra.mxu0 %v1174
  %v1218 = vpop.f32.mrf.mxu0
  %v1219 = vadd.f32 0.0, %v1218
  %v1220 = vpop.f32.mrf.mxu0
  %v1221 = vpop.f32.mrf.mxu0
  %v1222 = vpop.f32.mrf.mxu0
  %1223 = vdwg.mxu0
  %v1224 = vadd.f32 %v1145, %v1211
  %v1225 = vadd.f32 %v1146, %v1214
  %v1226 = vadd.f32 %v1147, %v1219
  %v1227 = vld [vmem:[#allocation2 + $0x6] sm:$0xff]
  %v1228 = vld [vmem:[#allocation2 + $0xe] sm:$0xff]
  %v1229 = vld [vmem:[#allocation2 + $0x16] sm:$0x3f]
  %v1230 = vpack.c.bf16 %v1228, %v1227
  %v1231 = vpack.c.bf16 %v1229, %v1229
  %s1232 = scalar_lea.vmem %s4, 80
  %v1233 = vld [vmem:[%s1232] sm:$0xf]
  %v1234 = vld [vmem:[%s1232 + $0x4] sm:$0xf]
  %v1235 = vld [vmem:[%s1232 + $0x8] sm:$0xf]
  %v1236 = vld [vmem:[%s1232 + $0xc] sm:$0xf]
  %v1241 = vunpack.c.l.b16 %v1233
  %v1242 = vunpack.c.l.b16 %v1234
  %v1243 = vunpack.c.l.b16 %v1235
  %v1244 = vunpack.c.l.b16 %v1236
  %v1245 = vpack.c.b16 %v1242, %v1241
  %v1246 = vpack.c.b16 %v1244, %v1243
  %v1250 = vsel %vm30, %v1230, 0
  %v1253 = vsel %vm30, %v1231, 0
  %1255 = vmatprep.subr.bf16.mxu0 0
  %1256 = vmatpush1.bf16.msra.mxu0 0
  %1257 = vmatprep.subr.bf16.mxu0 0
  %1258 = vmatpush1.bf16.msra.mxu0 0
  %1259 = vmatprep.subr.bf16.mxu0 0
  %1260 = vmatpush1.bf16.msra.mxu0 0
  %1261 = vmatprep.subr.bf16.mxu0 0
  %1262 = vmatpush1.bf16.msra.mxu0 0
  %1263 = vmatprep.subr.bf16.mxu0 0
  %1264 = vmatpush1.bf16.msra.mxu0 0
  %1265 = vmatprep.subr.bf16.mxu0 0
  %1266 = vmatpush1.bf16.msra.mxu0 0
  %1267 = vmatprep.subr.bf16.mxu0 0
  %1268 = vmatpush1.bf16.msra.mxu0 %v1246
  %1269 = vmatprep.subr.bf16.mxu0 0
  %1270 = vmatpush1.bf16.msra.mxu0 %v1245
  %1271 = vmatprep.subr.bf16.mxu0 0
  %1272 = vmatpush2.bf16.msra.mxu0 0
  %1273 = vmatprep.subr.bf16.mxu0 0
  %1274 = vmatpush2.bf16.msra.mxu0 0
  %1275 = vmatprep.subr.bf16.mxu0 0
  %1276 = vmatpush2.bf16.msra.mxu0 0
  %1277 = vmatprep.subr.bf16.mxu0 0
  %1278 = vmatpush2.bf16.msra.mxu0 0
  %1279 = vmatprep.subr.bf16.mxu0 0
  %1280 = vmatpush2.bf16.msra.mxu0 0
  %1281 = vmatprep.subr.bf16.mxu0 0
  %1282 = vmatpush2.bf16.msra.mxu0 0
  %1283 = vmatprep.subr.bf16.mxu0 0
  %1284 = vmatpush2.bf16.msra.mxu0 0
  %1285 = vmatprep.subr.bf16.mxu0 0
  %1286 = vmatpush2.bf16.msra.mxu0 0
  %1287 = vmatprep.mubr.bf16.mxu0 0
  %1288 = vmatmul.mubr.bf16.gmra.mxu0 %v1250
  %v1289 = vpop.f32.mrf.mxu0
  %v1290 = vadd.f32 0.0, %v1289
  %v1291 = vpop.f32.mrf.mxu0
  %v1292 = vpop.f32.mrf.mxu0
  %v1293 = vadd.f32 0.0, %v1292
  %v1294 = vpop.f32.mrf.mxu0
  %1295 = vmatprep.mubr.bf16.mxu0 0
  %1296 = vmatmul.mubr.bf16.gmra.mxu0 %v1253
  %v1297 = vpop.f32.mrf.mxu0
  %v1298 = vadd.f32 0.0, %v1297
  %v1299 = vpop.f32.mrf.mxu0
  %v1300 = vpop.f32.mrf.mxu0
  %v1301 = vpop.f32.mrf.mxu0
  %1302 = vdwg.mxu0
  %v1303 = vadd.f32 %v1224, %v1290
  %v1304 = vadd.f32 %v1225, %v1293
  %v1305 = vadd.f32 %v1226, %v1298
  %v1306 = vld [vmem:[#allocation2 + $0x8] sm:$0xff]
  %v1307 = vld [vmem:[#allocation2 + $0x10] sm:$0xff]
  %v1308 = vld [vmem:[#allocation2 + $0x18] sm:$0x3f]
  %v1309 = vpack.c.bf16 %v1307, %v1306
  %v1310 = vpack.c.bf16 %v1308, %v1308
  %s1311 = scalar_lea.vmem %s4, 96
  %v1312 = vld [vmem:[%s1311] sm:$0xf]
  %v1313 = vld [vmem:[%s1311 + $0x4] sm:$0xf]
  %v1314 = vld [vmem:[%s1311 + $0x8] sm:$0xf]
  %v1315 = vld [vmem:[%s1311 + $0xc] sm:$0xf]
  %v1320 = vunpack.c.l.b16 %v1312
  %v1321 = vunpack.c.l.b16 %v1313
  %v1322 = vunpack.c.l.b16 %v1314
  %v1323 = vunpack.c.l.b16 %v1315
  %v1324 = vpack.c.b16 %v1321, %v1320
  %v1325 = vpack.c.b16 %v1323, %v1322
  %v1329 = vsel %vm30, %v1309, 0
  %v1332 = vsel %vm30, %v1310, 0
  %1334 = vmatprep.subr.bf16.mxu0 0
  %1335 = vmatpush1.bf16.msra.mxu0 0
  %1336 = vmatprep.subr.bf16.mxu0 0
  %1337 = vmatpush1.bf16.msra.mxu0 0
  %1338 = vmatprep.subr.bf16.mxu0 0
  %1339 = vmatpush1.bf16.msra.mxu0 0
  %1340 = vmatprep.subr.bf16.mxu0 0
  %1341 = vmatpush1.bf16.msra.mxu0 0
  %1342 = vmatprep.subr.bf16.mxu0 0
  %1343 = vmatpush1.bf16.msra.mxu0 0
  %1344 = vmatprep.subr.bf16.mxu0 0
  %1345 = vmatpush1.bf16.msra.mxu0 0
  %1346 = vmatprep.subr.bf16.mxu0 0
  %1347 = vmatpush1.bf16.msra.mxu0 %v1325
  %1348 = vmatprep.subr.bf16.mxu0 0
  %1349 = vmatpush1.bf16.msra.mxu0 %v1324
  %1350 = vmatprep.subr.bf16.mxu0 0
  %1351 = vmatpush2.bf16.msra.mxu0 0
  %1352 = vmatprep.subr.bf16.mxu0 0
  %1353 = vmatpush2.bf16.msra.mxu0 0
  %1354 = vmatprep.subr.bf16.mxu0 0
  %1355 = vmatpush2.bf16.msra.mxu0 0
  %1356 = vmatprep.subr.bf16.mxu0 0
  %1357 = vmatpush2.bf16.msra.mxu0 0
  %1358 = vmatprep.subr.bf16.mxu0 0
  %1359 = vmatpush2.bf16.msra.mxu0 0
  %1360 = vmatprep.subr.bf16.mxu0 0
  %1361 = vmatpush2.bf16.msra.mxu0 0
  %1362 = vmatprep.subr.bf16.mxu0 0
  %1363 = vmatpush2.bf16.msra.mxu0 0
  %1364 = vmatprep.subr.bf16.mxu0 0
  %1365 = vmatpush2.bf16.msra.mxu0 0
  %1366 = vmatprep.mubr.bf16.mxu0 0
  %1367 = vmatmul.mubr.bf16.gmra.mxu0 %v1329
  %v1368 = vpop.f32.mrf.mxu0
  %v1369 = vadd.f32 0.0, %v1368
  %v1370 = vpop.f32.mrf.mxu0
  %v1371 = vpop.f32.mrf.mxu0
  %v1372 = vadd.f32 0.0, %v1371
  %v1373 = vpop.f32.mrf.mxu0
  %1374 = vmatprep.mubr.bf16.mxu0 0
  %1375 = vmatmul.mubr.bf16.gmra.mxu0 %v1332
  %v1376 = vpop.f32.mrf.mxu0
  %v1377 = vadd.f32 0.0, %v1376
  %v1378 = vpop.f32.mrf.mxu0
  %v1379 = vpop.f32.mrf.mxu0
  %v1380 = vpop.f32.mrf.mxu0
  %1381 = vdwg.mxu0
  %v1382 = vadd.f32 %v1303, %v1369
  %v1383 = vadd.f32 %v1304, %v1372
  %v1384 = vadd.f32 %v1305, %v1377
  %v1385 = vld [vmem:[#allocation2 + $0x9] sm:$0xff]
  %v1386 = vld [vmem:[#allocation2 + $0x11] sm:$0xff]
  %v1387 = vld [vmem:[#allocation2 + $0x19] sm:$0x3f]
  %v1388 = vpack.c.bf16 %v1386, %v1385
  %v1389 = vpack.c.bf16 %v1387, %v1387
  %s1390 = scalar_lea.vmem %s4, 112
  %v1391 = vld [vmem:[%s1390] sm:$0xf]
  %v1392 = vld [vmem:[%s1390 + $0x4] sm:$0xf]
  %v1393 = vld [vmem:[%s1390 + $0x8] sm:$0xf]
  %v1394 = vld [vmem:[%s1390 + $0xc] sm:$0xf]
  %v1399 = vunpack.c.l.b16 %v1391
  %v1400 = vunpack.c.l.b16 %v1392
  %v1401 = vunpack.c.l.b16 %v1393
  %v1402 = vunpack.c.l.b16 %v1394
  %v1403 = vpack.c.b16 %v1400, %v1399
  %v1404 = vpack.c.b16 %v1402, %v1401
  %v1408 = vsel %vm30, %v1388, 0
  %v1411 = vsel %vm30, %v1389, 0
  %1413 = vmatprep.subr.bf16.mxu0 0
  %1414 = vmatpush1.bf16.msra.mxu0 0
  %1415 = vmatprep.subr.bf16.mxu0 0
  %1416 = vmatpush1.bf16.msra.mxu0 0
  %1417 = vmatprep.subr.bf16.mxu0 0
  %1418 = vmatpush1.bf16.msra.mxu0 0
  %1419 = vmatprep.subr.bf16.mxu0 0
  %1420 = vmatpush1.bf16.msra.mxu0 0
  %1421 = vmatprep.subr.bf16.mxu0 0
  %1422 = vmatpush1.bf16.msra.mxu0 0
  %1423 = vmatprep.subr.bf16.mxu0 0
  %1424 = vmatpush1.bf16.msra.mxu0 0
  %1425 = vmatprep.subr.bf16.mxu0 0
  %1426 = vmatpush1.bf16.msra.mxu0 %v1404
  %1427 = vmatprep.subr.bf16.mxu0 0
  %1428 = vmatpush1.bf16.msra.mxu0 %v1403
  %1429 = vmatprep.subr.bf16.mxu0 0
  %1430 = vmatpush2.bf16.msra.mxu0 0
  %1431 = vmatprep.subr.bf16.mxu0 0
  %1432 = vmatpush2.bf16.msra.mxu0 0
  %1433 = vmatprep.subr.bf16.mxu0 0
  %1434 = vmatpush2.bf16.msra.mxu0 0
  %1435 = vmatprep.subr.bf16.mxu0 0
  %1436 = vmatpush2.bf16.msra.mxu0 0
  %1437 = vmatprep.subr.bf16.mxu0 0
  %1438 = vmatpush2.bf16.msra.mxu0 0
  %1439 = vmatprep.subr.bf16.mxu0 0
  %1440 = vmatpush2.bf16.msra.mxu0 0
  %1441 = vmatprep.subr.bf16.mxu0 0
  %1442 = vmatpush2.bf16.msra.mxu0 0
  %1443 = vmatprep.subr.bf16.mxu0 0
  %1444 = vmatpush2.bf16.msra.mxu0 0
  %1445 = vmatprep.mubr.bf16.mxu0 0
  %1446 = vmatmul.mubr.bf16.gmra.mxu0 %v1408
  %v1447 = vpop.f32.mrf.mxu0
  %v1448 = vadd.f32 0.0, %v1447
  %v1449 = vpop.f32.mrf.mxu0
  %v1450 = vpop.f32.mrf.mxu0
  %v1451 = vadd.f32 0.0, %v1450
  %v1452 = vpop.f32.mrf.mxu0
  %1453 = vmatprep.mubr.bf16.mxu0 0
  %1454 = vmatmul.mubr.bf16.gmra.mxu0 %v1411
  %v1455 = vpop.f32.mrf.mxu0
  %v1456 = vadd.f32 0.0, %v1455
  %v1457 = vpop.f32.mrf.mxu0
  %v1458 = vpop.f32.mrf.mxu0
  %v1459 = vpop.f32.mrf.mxu0
  %1460 = vdwg.mxu0
  %v1461 = vadd.f32 %v1382, %v1448
  %v1462 = vadd.f32 %v1383, %v1451
  %v1463 = vadd.f32 %v1384, %v1456
  %v1464 = vld [vmem:[#allocation2 + $0xa] sm:$0xff]
  %v1465 = vld [vmem:[#allocation2 + $0x12] sm:$0xff]
  %v1466 = vld [vmem:[#allocation2 + $0x1a] sm:$0x3f]
  %v1467 = vpack.c.bf16 %v1465, %v1464
  %v1468 = vpack.c.bf16 %v1466, %v1466
  %s1469 = scalar_lea.vmem %s4, 128
  %v1470 = vld [vmem:[%s1469] sm:$0xf]
  %v1471 = vld [vmem:[%s1469 + $0x4] sm:$0xf]
  %v1472 = vld [vmem:[%s1469 + $0x8] sm:$0xf]
  %v1473 = vld [vmem:[%s1469 + $0xc] sm:$0xf]
  %v1478 = vunpack.c.l.b16 %v1470
  %v1479 = vunpack.c.l.b16 %v1471
  %v1480 = vunpack.c.l.b16 %v1472
  %v1481 = vunpack.c.l.b16 %v1473
  %v1482 = vpack.c.b16 %v1479, %v1478
  %v1483 = vpack.c.b16 %v1481, %v1480
  %v1487 = vsel %vm30, %v1467, 0
  %v1490 = vsel %vm30, %v1468, 0
  %1492 = vmatprep.subr.bf16.mxu0 0
  %1493 = vmatpush1.bf16.msra.mxu0 0
  %1494 = vmatprep.subr.bf16.mxu0 0
  %1495 = vmatpush1.bf16.msra.mxu0 0
  %1496 = vmatprep.subr.bf16.mxu0 0
  %1497 = vmatpush1.bf16.msra.mxu0 0
  %1498 = vmatprep.subr.bf16.mxu0 0
  %1499 = vmatpush1.bf16.msra.mxu0 0
  %1500 = vmatprep.subr.bf16.mxu0 0
  %1501 = vmatpush1.bf16.msra.mxu0 0
  %1502 = vmatprep.subr.bf16.mxu0 0
  %1503 = vmatpush1.bf16.msra.mxu0 0
  %1504 = vmatprep.subr.bf16.mxu0 0
  %1505 = vmatpush1.bf16.msra.mxu0 %v1483
  %1506 = vmatprep.subr.bf16.mxu0 0
  %1507 = vmatpush1.bf16.msra.mxu0 %v1482
  %1508 = vmatprep.subr.bf16.mxu0 0
  %1509 = vmatpush2.bf16.msra.mxu0 0
  %1510 = vmatprep.subr.bf16.mxu0 0
  %1511 = vmatpush2.bf16.msra.mxu0 0
  %1512 = vmatprep.subr.bf16.mxu0 0
  %1513 = vmatpush2.bf16.msra.mxu0 0
  %1514 = vmatprep.subr.bf16.mxu0 0
  %1515 = vmatpush2.bf16.msra.mxu0 0
  %1516 = vmatprep.subr.bf16.mxu0 0
  %1517 = vmatpush2.bf16.msra.mxu0 0
  %1518 = vmatprep.subr.bf16.mxu0 0
  %1519 = vmatpush2.bf16.msra.mxu0 0
  %1520 = vmatprep.subr.bf16.mxu0 0
  %1521 = vmatpush2.bf16.msra.mxu0 0
  %1522 = vmatprep.subr.bf16.mxu0 0
  %1523 = vmatpush2.bf16.msra.mxu0 0
  %1524 = vmatprep.mubr.bf16.mxu0 0
  %1525 = vmatmul.mubr.bf16.gmra.mxu0 %v1487
  %v1526 = vpop.f32.mrf.mxu0
  %v1527 = vadd.f32 0.0, %v1526
  %v1528 = vpop.f32.mrf.mxu0
  %v1529 = vpop.f32.mrf.mxu0
  %v1530 = vadd.f32 0.0, %v1529
  %v1531 = vpop.f32.mrf.mxu0
  %1532 = vmatprep.mubr.bf16.mxu0 0
  %1533 = vmatmul.mubr.bf16.gmra.mxu0 %v1490
  %v1534 = vpop.f32.mrf.mxu0
  %v1535 = vadd.f32 0.0, %v1534
  %v1536 = vpop.f32.mrf.mxu0
  %v1537 = vpop.f32.mrf.mxu0
  %v1538 = vpop.f32.mrf.mxu0
  %1539 = vdwg.mxu0
  %v1540 = vadd.f32 %v1461, %v1527
  %v1541 = vadd.f32 %v1462, %v1530
  %v1542 = vadd.f32 %v1463, %v1535
  %v1543 = vld [vmem:[%s5] sm:$0x1]
  %v1544 = vld [vmem:[%s6] sm:$0x1]
  %v1545 = vmul.f32 %v1540, %v756
  %v1546 = vmul.f32 %v1541, %v761
  %v1547 = vmul.f32 %v1542, %v766
  %v1548 = vsel %vm30, %v1545, 0.0
  %v1549 = vsel %vm30, %v1546, 0.0
  %v1550 = vadd.f32 %v1548, %v1549
  %v1551 = vsel %vm774, %v1547, 0.0
  %v1552 = vadd.f32 %v1550, %v1551
  %v1553 = vrot.slane %v1552, 4
  %v1554 = vadd.f32 %v1552, %v1553
  %v1555 = vrot.slane %v1554, 2
  %v1556 = vadd.f32 %v1554, %v1555
  %v1557 = vrot.slane %v1556, 1
  %v1558 = vadd.f32 %v1556, %v1557
  %v1559 = vmul.f32 %v1558, 0.125
  %v1560 = vsub.f32 %v1540, %v1559
  %v1561 = vsub.f32 %v1541, %v1559
  %v1562 = vsub.f32 %v1542, %v1559
  %v1563 = vmul.f32 %v1560, %v1560
  %v1564 = vmul.f32 %v1561, %v1561
  %v1565 = vmul.f32 %v1562, %v1562
  %v1566 = vmul.f32 %v1563, %v756
  %v1567 = vmul.f32 %v1564, %v761
  %v1568 = vmul.f32 %v1565, %v766
  %v1569 = vsel %vm30, %v1566, 0.0
  %v1570 = vsel %vm30, %v1567, 0.0
  %v1571 = vadd.f32 %v1569, %v1570
  %v1572 = vsel %vm774, %v1568, 0.0
  %v1573 = vadd.f32 %v1571, %v1572
  %v1574 = vrot.slane %v1573, 4
  %v1575 = vadd.f32 %v1573, %v1574
  %v1576 = vrot.slane %v1575, 2
  %v1577 = vadd.f32 %v1575, %v1576
  %v1578 = vrot.slane %v1577, 1
  %v1579 = vadd.f32 %v1577, %v1578
  %v1580 = vmul.f32 %v1579, 0.125
  %v1581 = vadd.f32 %v1580, 1e-05
  %v1582 = vrsqrt.pop %v1581
  %v1583 = vmul.f32 %v1543, %v1582
  %v1585 = vlaneseq
  %v1586 = vshrl.u32 %v1585, 7
  %v1587 = vsub.s32 0, %v1586
  %v1588 = vrot.slane %v1583, %v1587
  %v1590 = vmul.f32 %v1560, %v1588
  %v1591 = vmul.f32 %v1561, %v1588
  %v1592 = vmul.f32 %v1562, %v1588
  %v1594 = vlaneseq
  %v1595 = vshrl.u32 %v1594, 7
  %v1596 = vsub.s32 0, %v1595
  %v1597 = vrot.slane %v1544, %v1596
  %v1599 = vadd.f32 %v1590, %v1597
  %v1600 = vadd.f32 %v1591, %v1597
  %v1601 = vadd.f32 %v1592, %v1597
  %v1602 = vmul.f32 %v1599, %v756
  %v1603 = vmul.f32 %v1600, %v761
  %v1604 = vmul.f32 %v1601, %v766
  %v1605 = vld [vmem:[%s8 + $0x5] sm:$0xff]
  %v1606 = vld [vmem:[%s8 + $0xd] sm:$0xff]
  %v1607 = vld [vmem:[%s8 + $0x15] sm:$0x3f]
  %v1608 = vadd.f32 %v1605, %v1602
  %v1609 = vadd.f32 %v1606, %v1603
  %v1610 = vadd.f32 %v1607, %v1604
  %1611 = vst.msk [vmem:[%s8 + $0x5] sm:$0xff] %vm30, %v1608
  %1612 = vst.msk [vmem:[%s8 + $0xd] sm:$0xff] %vm30, %v1609
  %1613 = vst.msk [vmem:[%s8 + $0x15] sm:$0x3f] %vm774, %v1610
  %v1614 = vld [vmem:[%s8] sm:$0xff]
  %v1615 = vld [vmem:[%s8 + $0x8] sm:$0xff]
  %v1616 = vld [vmem:[%s8 + $0x10] sm:$0x3f]
  %v1617 = vpack.c.bf16 %v1615, %v1614
  %v1618 = vpack.c.bf16 %v1616, %v1616
  %s1619 = scalar_lea.vmem %s1, 144
  %v1620 = vld [vmem:[%s1619] sm:$0xf]
  %v1621 = vld [vmem:[%s1619 + $0x4] sm:$0xf]
  %v1622 = vld [vmem:[%s1619 + $0x8] sm:$0xf]
  %v1623 = vld [vmem:[%s1619 + $0xc] sm:$0xf]
  %v1624 = vld [vmem:[%s8 + $0x1] sm:$0xff]
  %v1625 = vld [vmem:[%s8 + $0x9] sm:$0xff]
  %v1626 = vld [vmem:[%s8 + $0x11] sm:$0x3f]
  %v1627 = vpack.c.bf16 %v1625, %v1624
  %v1628 = vpack.c.bf16 %v1626, %v1626
  %s1629 = scalar_lea.vmem %s1, 160
  %v1630 = vld [vmem:[%s1629] sm:$0xf]
  %v1631 = vld [vmem:[%s1629 + $0x4] sm:$0xf]
  %v1632 = vld [vmem:[%s1629 + $0x8] sm:$0xf]
  %v1633 = vld [vmem:[%s1629 + $0xc] sm:$0xf]
  %v1638 = vunpack.c.l.b16 %v1630
  %v1639 = vunpack.c.l.b16 %v1631
  %v1640 = vunpack.c.l.b16 %v1632
  %v1641 = vunpack.c.l.b16 %v1633
  %v1642 = vpack.c.b16 %v1639, %v1638
  %v1643 = vpack.c.b16 %v1641, %v1640
  %v1647 = vsel %vm30, %v1627, 0
  %v1650 = vsel %vm30, %v1628, 0
  %1652 = vmatprep.subr.bf16.mxu0 0
  %1653 = vmatpush1.bf16.msra.mxu0 0
  %1654 = vmatprep.subr.bf16.mxu0 0
  %1655 = vmatpush1.bf16.msra.mxu0 0
  %1656 = vmatprep.subr.bf16.mxu0 0
  %1657 = vmatpush1.bf16.msra.mxu0 0
  %1658 = vmatprep.subr.bf16.mxu0 0
  %1659 = vmatpush1.bf16.msra.mxu0 0
  %1660 = vmatprep.subr.bf16.mxu0 0
  %1661 = vmatpush1.bf16.msra.mxu0 0
  %1662 = vmatprep.subr.bf16.mxu0 0
  %1663 = vmatpush1.bf16.msra.mxu0 0
  %1664 = vmatprep.subr.bf16.mxu0 0
  %1665 = vmatpush1.bf16.msra.mxu0 %v1643
  %1666 = vmatprep.subr.bf16.mxu0 0
  %1667 = vmatpush1.bf16.msra.mxu0 %v1642
  %1668 = vmatprep.subr.bf16.mxu0 0
  %1669 = vmatpush2.bf16.msra.mxu0 0
  %1670 = vmatprep.subr.bf16.mxu0 0
  %1671 = vmatpush2.bf16.msra.mxu0 0
  %1672 = vmatprep.subr.bf16.mxu0 0
  %1673 = vmatpush2.bf16.msra.mxu0 0
  %1674 = vmatprep.subr.bf16.mxu0 0
  %1675 = vmatpush2.bf16.msra.mxu0 0
  %1676 = vmatprep.subr.bf16.mxu0 0
  %1677 = vmatpush2.bf16.msra.mxu0 0
  %1678 = vmatprep.subr.bf16.mxu0 0
  %1679 = vmatpush2.bf16.msra.mxu0 0
  %1680 = vmatprep.subr.bf16.mxu0 0
  %1681 = vmatpush2.bf16.msra.mxu0 0
  %1682 = vmatprep.subr.bf16.mxu0 0
  %1683 = vmatpush2.bf16.msra.mxu0 0
  %1684 = vmatprep.mubr.bf16.mxu0 0
  %1685 = vmatmul.mubr.bf16.gmra.mxu0 %v1647
  %v1686 = vpop.f32.mrf.mxu0
  %v1687 = vadd.f32 0.0, %v1686
  %v1688 = vpop.f32.mrf.mxu0
  %v1689 = vpop.f32.mrf.mxu0
  %v1690 = vadd.f32 0.0, %v1689
  %v1691 = vpop.f32.mrf.mxu0
  %1692 = vmatprep.mubr.bf16.mxu0 0
  %1693 = vmatmul.mubr.bf16.gmra.mxu0 %v1650
  %v1694 = vpop.f32.mrf.mxu0
  %v1695 = vadd.f32 0.0, %v1694
  %v1696 = vpop.f32.mrf.mxu0
  %v1697 = vpop.f32.mrf.mxu0
  %v1698 = vpop.f32.mrf.mxu0
  %1699 = vdwg.mxu0
  %v1704 = vunpack.c.l.b16 %v1620
  %v1705 = vunpack.c.l.b16 %v1621
  %v1706 = vunpack.c.l.b16 %v1622
  %v1707 = vunpack.c.l.b16 %v1623
  %v1708 = vpack.c.b16 %v1705, %v1704
  %v1709 = vpack.c.b16 %v1707, %v1706
  %v1713 = vsel %vm30, %v1617, 0
  %v1716 = vsel %vm30, %v1618, 0
  %1718 = vmatprep.subr.bf16.mxu0 0
  %1719 = vmatpush1.bf16.msra.mxu0 0
  %1720 = vmatprep.subr.bf16.mxu0 0
  %1721 = vmatpush1.bf16.msra.mxu0 0
  %1722 = vmatprep.subr.bf16.mxu0 0
  %1723 = vmatpush1.bf16.msra.mxu0 0
  %1724 = vmatprep.subr.bf16.mxu0 0
  %1725 = vmatpush1.bf16.msra.mxu0 0
  %1726 = vmatprep.subr.bf16.mxu0 0
  %1727 = vmatpush1.bf16.msra.mxu0 0
  %1728 = vmatprep.subr.bf16.mxu0 0
  %1729 = vmatpush1.bf16.msra.mxu0 0
  %1730 = vmatprep.subr.bf16.mxu0 0
  %1731 = vmatpush1.bf16.msra.mxu0 %v1709
  %1732 = vmatprep.subr.bf16.mxu0 0
  %1733 = vmatpush1.bf16.msra.mxu0 %v1708
  %1734 = vmatprep.subr.bf16.mxu0 0
  %1735 = vmatpush2.bf16.msra.mxu0 0
  %1736 = vmatprep.subr.bf16.mxu0 0
  %1737 = vmatpush2.bf16.msra.mxu0 0
  %1738 = vmatprep.subr.bf16.mxu0 0
  %1739 = vmatpush2.bf16.msra.mxu0 0
  %1740 = vmatprep.subr.bf16.mxu0 0
  %1741 = vmatpush2.bf16.msra.mxu0 0
  %1742 = vmatprep.subr.bf16.mxu0 0
  %1743 = vmatpush2.bf16.msra.mxu0 0
  %1744 = vmatprep.subr.bf16.mxu0 0
  %1745 = vmatpush2.bf16.msra.mxu0 0
  %1746 = vmatprep.subr.bf16.mxu0 0
  %1747 = vmatpush2.bf16.msra.mxu0 0
  %1748 = vmatprep.subr.bf16.mxu0 0
  %1749 = vmatpush2.bf16.msra.mxu0 0
  %1750 = vmatprep.mubr.bf16.mxu0 0
  %1751 = vmatmul.mubr.bf16.gmra.mxu0 %v1713
  %v1752 = vpop.f32.mrf.mxu0
  %v1753 = vadd.f32 %v1687, %v1752
  %v1754 = vpop.f32.mrf.mxu0
  %v1755 = vpop.f32.mrf.mxu0
  %v1756 = vadd.f32 %v1690, %v1755
  %v1757 = vpop.f32.mrf.mxu0
  %1758 = vmatprep.mubr.bf16.mxu0 0
  %1759 = vmatmul.mubr.bf16.gmra.mxu0 %v1716
  %v1760 = vpop.f32.mrf.mxu0
  %v1761 = vadd.f32 %v1695, %v1760
  %v1762 = vpop.f32.mrf.mxu0
  %v1763 = vpop.f32.mrf.mxu0
  %v1764 = vpop.f32.mrf.mxu0
  %1765 = vdwg.mxu0
  %v1766 = vld [vmem:[%s8 + $0x2] sm:$0xff]
  %v1767 = vld [vmem:[%s8 + $0xa] sm:$0xff]
  %v1768 = vld [vmem:[%s8 + $0x12] sm:$0x3f]
  %v1769 = vpack.c.bf16 %v1767, %v1766
  %v1770 = vpack.c.bf16 %v1768, %v1768
  %s1771 = scalar_lea.vmem %s1, 176
  %v1772 = vld [vmem:[%s1771] sm:$0xf]
  %v1773 = vld [vmem:[%s1771 + $0x4] sm:$0xf]
  %v1774 = vld [vmem:[%s1771 + $0x8] sm:$0xf]
  %v1775 = vld [vmem:[%s1771 + $0xc] sm:$0xf]
  %v1780 = vunpack.c.l.b16 %v1772
  %v1781 = vunpack.c.l.b16 %v1773
  %v1782 = vunpack.c.l.b16 %v1774
  %v1783 = vunpack.c.l.b16 %v1775
  %v1784 = vpack.c.b16 %v1781, %v1780
  %v1785 = vpack.c.b16 %v1783, %v1782
  %v1789 = vsel %vm30, %v1769, 0
  %v1792 = vsel %vm30, %v1770, 0
  %1794 = vmatprep.subr.bf16.mxu0 0
  %1795 = vmatpush1.bf16.msra.mxu0 0
  %1796 = vmatprep.subr.bf16.mxu0 0
  %1797 = vmatpush1.bf16.msra.mxu0 0
  %1798 = vmatprep.subr.bf16.mxu0 0
  %1799 = vmatpush1.bf16.msra.mxu0 0
  %1800 = vmatprep.subr.bf16.mxu0 0
  %1801 = vmatpush1.bf16.msra.mxu0 0
  %1802 = vmatprep.subr.bf16.mxu0 0
  %1803 = vmatpush1.bf16.msra.mxu0 0
  %1804 = vmatprep.subr.bf16.mxu0 0
  %1805 = vmatpush1.bf16.msra.mxu0 0
  %1806 = vmatprep.subr.bf16.mxu0 0
  %1807 = vmatpush1.bf16.msra.mxu0 %v1785
  %1808 = vmatprep.subr.bf16.mxu0 0
  %1809 = vmatpush1.bf16.msra.mxu0 %v1784
  %1810 = vmatprep.subr.bf16.mxu0 0
  %1811 = vmatpush2.bf16.msra.mxu0 0
  %1812 = vmatprep.subr.bf16.mxu0 0
  %1813 = vmatpush2.bf16.msra.mxu0 0
  %1814 = vmatprep.subr.bf16.mxu0 0
  %1815 = vmatpush2.bf16.msra.mxu0 0
  %1816 = vmatprep.subr.bf16.mxu0 0
  %1817 = vmatpush2.bf16.msra.mxu0 0
  %1818 = vmatprep.subr.bf16.mxu0 0
  %1819 = vmatpush2.bf16.msra.mxu0 0
  %1820 = vmatprep.subr.bf16.mxu0 0
  %1821 = vmatpush2.bf16.msra.mxu0 0
  %1822 = vmatprep.subr.bf16.mxu0 0
  %1823 = vmatpush2.bf16.msra.mxu0 0
  %1824 = vmatprep.subr.bf16.mxu0 0
  %1825 = vmatpush2.bf16.msra.mxu0 0
  %1826 = vmatprep.mubr.bf16.mxu0 0
  %1827 = vmatmul.mubr.bf16.gmra.mxu0 %v1789
  %v1828 = vpop.f32.mrf.mxu0
  %v1829 = vadd.f32 0.0, %v1828
  %v1830 = vpop.f32.mrf.mxu0
  %v1831 = vpop.f32.mrf.mxu0
  %v1832 = vadd.f32 0.0, %v1831
  %v1833 = vpop.f32.mrf.mxu0
  %1834 = vmatprep.mubr.bf16.mxu0 0
  %1835 = vmatmul.mubr.bf16.gmra.mxu0 %v1792
  %v1836 = vpop.f32.mrf.mxu0
  %v1837 = vadd.f32 0.0, %v1836
  %v1838 = vpop.f32.mrf.mxu0
  %v1839 = vpop.f32.mrf.mxu0
  %v1840 = vpop.f32.mrf.mxu0
  %1841 = vdwg.mxu0
  %v1842 = vadd.f32 %v1753, %v1829
  %v1843 = vadd.f32 %v1756, %v1832
  %v1844 = vadd.f32 %v1761, %v1837
  %v1845 = vld [vmem:[%s8 + $0x4] sm:$0xff]
  %v1846 = vld [vmem:[%s8 + $0xc] sm:$0xff]
  %v1847 = vld [vmem:[%s8 + $0x14] sm:$0x3f]
  %v1848 = vpack.c.bf16 %v1846, %v1845
  %v1849 = vpack.c.bf16 %v1847, %v1847
  %s1850 = scalar_lea.vmem %s1, 192
  %v1851 = vld [vmem:[%s1850] sm:$0xf]
  %v1852 = vld [vmem:[%s1850 + $0x4] sm:$0xf]
  %v1853 = vld [vmem:[%s1850 + $0x8] sm:$0xf]
  %v1854 = vld [vmem:[%s1850 + $0xc] sm:$0xf]
  %v1859 = vunpack.c.l.b16 %v1851
  %v1860 = vunpack.c.l.b16 %v1852
  %v1861 = vunpack.c.l.b16 %v1853
  %v1862 = vunpack.c.l.b16 %v1854
  %v1863 = vpack.c.b16 %v1860, %v1859
  %v1864 = vpack.c.b16 %v1862, %v1861
  %v1868 = vsel %vm30, %v1848, 0
  %v1871 = vsel %vm30, %v1849, 0
  %1873 = vmatprep.subr.bf16.mxu0 0
  %1874 = vmatpush1.bf16.msra.mxu0 0
  %1875 = vmatprep.subr.bf16.mxu0 0
  %1876 = vmatpush1.bf16.msra.mxu0 0
  %1877 = vmatprep.subr.bf16.mxu0 0
  %1878 = vmatpush1.bf16.msra.mxu0 0
  %1879 = vmatprep.subr.bf16.mxu0 0
  %1880 = vmatpush1.bf16.msra.mxu0 0
  %1881 = vmatprep.subr.bf16.mxu0 0
  %1882 = vmatpush1.bf16.msra.mxu0 0
  %1883 = vmatprep.subr.bf16.mxu0 0
  %1884 = vmatpush1.bf16.msra.mxu0 0
  %1885 = vmatprep.subr.bf16.mxu0 0
  %1886 = vmatpush1.bf16.msra.mxu0 %v1864
  %1887 = vmatprep.subr.bf16.mxu0 0
  %1888 = vmatpush1.bf16.msra.mxu0 %v1863
  %1889 = vmatprep.subr.bf16.mxu0 0
  %1890 = vmatpush2.bf16.msra.mxu0 0
  %1891 = vmatprep.subr.bf16.mxu0 0
  %1892 = vmatpush2.bf16.msra.mxu0 0
  %1893 = vmatprep.subr.bf16.mxu0 0
  %1894 = vmatpush2.bf16.msra.mxu0 0
  %1895 = vmatprep.subr.bf16.mxu0 0
  %1896 = vmatpush2.bf16.msra.mxu0 0
  %1897 = vmatprep.subr.bf16.mxu0 0
  %1898 = vmatpush2.bf16.msra.mxu0 0
  %1899 = vmatprep.subr.bf16.mxu0 0
  %1900 = vmatpush2.bf16.msra.mxu0 0
  %1901 = vmatprep.subr.bf16.mxu0 0
  %1902 = vmatpush2.bf16.msra.mxu0 0
  %1903 = vmatprep.subr.bf16.mxu0 0
  %1904 = vmatpush2.bf16.msra.mxu0 0
  %1905 = vmatprep.mubr.bf16.mxu0 0
  %1906 = vmatmul.mubr.bf16.gmra.mxu0 %v1868
  %v1907 = vpop.f32.mrf.mxu0
  %v1908 = vadd.f32 0.0, %v1907
  %v1909 = vpop.f32.mrf.mxu0
  %v1910 = vpop.f32.mrf.mxu0
  %v1911 = vadd.f32 0.0, %v1910
  %v1912 = vpop.f32.mrf.mxu0
  %1913 = vmatprep.mubr.bf16.mxu0 0
  %1914 = vmatmul.mubr.bf16.gmra.mxu0 %v1871
  %v1915 = vpop.f32.mrf.mxu0
  %v1916 = vadd.f32 0.0, %v1915
  %v1917 = vpop.f32.mrf.mxu0
  %v1918 = vpop.f32.mrf.mxu0
  %v1919 = vpop.f32.mrf.mxu0
  %1920 = vdwg.mxu0
  %v1921 = vadd.f32 %v1842, %v1908
  %v1922 = vadd.f32 %v1843, %v1911
  %v1923 = vadd.f32 %v1844, %v1916
  %v1924 = vld [vmem:[%s8 + $0x5] sm:$0xff]
  %v1925 = vld [vmem:[%s8 + $0xd] sm:$0xff]
  %v1926 = vld [vmem:[%s8 + $0x15] sm:$0x3f]
  %v1927 = vpack.c.bf16 %v1925, %v1924
  %v1928 = vpack.c.bf16 %v1926, %v1926
  %s1929 = scalar_lea.vmem %s1, 208
  %v1930 = vld [vmem:[%s1929] sm:$0xf]
  %v1931 = vld [vmem:[%s1929 + $0x4] sm:$0xf]
  %v1932 = vld [vmem:[%s1929 + $0x8] sm:$0xf]
  %v1933 = vld [vmem:[%s1929 + $0xc] sm:$0xf]
  %v1938 = vunpack.c.l.b16 %v1930
  %v1939 = vunpack.c.l.b16 %v1931
  %v1940 = vunpack.c.l.b16 %v1932
  %v1941 = vunpack.c.l.b16 %v1933
  %v1942 = vpack.c.b16 %v1939, %v1938
  %v1943 = vpack.c.b16 %v1941, %v1940
  %v1947 = vsel %vm30, %v1927, 0
  %v1950 = vsel %vm30, %v1928, 0
  %1952 = vmatprep.subr.bf16.mxu0 0
  %1953 = vmatpush1.bf16.msra.mxu0 0
  %1954 = vmatprep.subr.bf16.mxu0 0
  %1955 = vmatpush1.bf16.msra.mxu0 0
  %1956 = vmatprep.subr.bf16.mxu0 0
  %1957 = vmatpush1.bf16.msra.mxu0 0
  %1958 = vmatprep.subr.bf16.mxu0 0
  %1959 = vmatpush1.bf16.msra.mxu0 0
  %1960 = vmatprep.subr.bf16.mxu0 0
  %1961 = vmatpush1.bf16.msra.mxu0 0
  %1962 = vmatprep.subr.bf16.mxu0 0
  %1963 = vmatpush1.bf16.msra.mxu0 0
  %1964 = vmatprep.subr.bf16.mxu0 0
  %1965 = vmatpush1.bf16.msra.mxu0 %v1943
  %1966 = vmatprep.subr.bf16.mxu0 0
  %1967 = vmatpush1.bf16.msra.mxu0 %v1942
  %1968 = vmatprep.subr.bf16.mxu0 0
  %1969 = vmatpush2.bf16.msra.mxu0 0
  %1970 = vmatprep.subr.bf16.mxu0 0
  %1971 = vmatpush2.bf16.msra.mxu0 0
  %1972 = vmatprep.subr.bf16.mxu0 0
  %1973 = vmatpush2.bf16.msra.mxu0 0
  %1974 = vmatprep.subr.bf16.mxu0 0
  %1975 = vmatpush2.bf16.msra.mxu0 0
  %1976 = vmatprep.subr.bf16.mxu0 0
  %1977 = vmatpush2.bf16.msra.mxu0 0
  %1978 = vmatprep.subr.bf16.mxu0 0
  %1979 = vmatpush2.bf16.msra.mxu0 0
  %1980 = vmatprep.subr.bf16.mxu0 0
  %1981 = vmatpush2.bf16.msra.mxu0 0
  %1982 = vmatprep.subr.bf16.mxu0 0
  %1983 = vmatpush2.bf16.msra.mxu0 0
  %1984 = vmatprep.mubr.bf16.mxu0 0
  %1985 = vmatmul.mubr.bf16.gmra.mxu0 %v1947
  %v1986 = vpop.f32.mrf.mxu0
  %v1987 = vadd.f32 0.0, %v1986
  %v1988 = vpop.f32.mrf.mxu0
  %v1989 = vpop.f32.mrf.mxu0
  %v1990 = vadd.f32 0.0, %v1989
  %v1991 = vpop.f32.mrf.mxu0
  %1992 = vmatprep.mubr.bf16.mxu0 0
  %1993 = vmatmul.mubr.bf16.gmra.mxu0 %v1950
  %v1994 = vpop.f32.mrf.mxu0
  %v1995 = vadd.f32 0.0, %v1994
  %v1996 = vpop.f32.mrf.mxu0
  %v1997 = vpop.f32.mrf.mxu0
  %v1998 = vpop.f32.mrf.mxu0
  %1999 = vdwg.mxu0
  %v2000 = vadd.f32 %v1921, %v1987
  %v2001 = vadd.f32 %v1922, %v1990
  %v2002 = vadd.f32 %v1923, %v1995
  %v2003 = vld [vmem:[%s8 + $0x6] sm:$0xff]
  %v2004 = vld [vmem:[%s8 + $0xe] sm:$0xff]
  %v2005 = vld [vmem:[%s8 + $0x16] sm:$0x3f]
  %v2006 = vpack.c.bf16 %v2004, %v2003
  %v2007 = vpack.c.bf16 %v2005, %v2005
  %s2008 = scalar_lea.vmem %s1, 224
  %v2009 = vld [vmem:[%s2008] sm:$0xf]
  %v2010 = vld [vmem:[%s2008 + $0x4] sm:$0xf]
  %v2011 = vld [vmem:[%s2008 + $0x8] sm:$0xf]
  %v2012 = vld [vmem:[%s2008 + $0xc] sm:$0xf]
  %v2017 = vunpack.c.l.b16 %v2009
  %v2018 = vunpack.c.l.b16 %v2010
  %v2019 = vunpack.c.l.b16 %v2011
  %v2020 = vunpack.c.l.b16 %v2012
  %v2021 = vpack.c.b16 %v2018, %v2017
  %v2022 = vpack.c.b16 %v2020, %v2019
  %v2026 = vsel %vm30, %v2006, 0
  %v2029 = vsel %vm30, %v2007, 0
  %2031 = vmatprep.subr.bf16.mxu0 0
  %2032 = vmatpush1.bf16.msra.mxu0 0
  %2033 = vmatprep.subr.bf16.mxu0 0
  %2034 = vmatpush1.bf16.msra.mxu0 0
  %2035 = vmatprep.subr.bf16.mxu0 0
  %2036 = vmatpush1.bf16.msra.mxu0 0
  %2037 = vmatprep.subr.bf16.mxu0 0
  %2038 = vmatpush1.bf16.msra.mxu0 0
  %2039 = vmatprep.subr.bf16.mxu0 0
  %2040 = vmatpush1.bf16.msra.mxu0 0
  %2041 = vmatprep.subr.bf16.mxu0 0
  %2042 = vmatpush1.bf16.msra.mxu0 0
  %2043 = vmatprep.subr.bf16.mxu0 0
  %2044 = vmatpush1.bf16.msra.mxu0 %v2022
  %2045 = vmatprep.subr.bf16.mxu0 0
  %2046 = vmatpush1.bf16.msra.mxu0 %v2021
  %2047 = vmatprep.subr.bf16.mxu0 0
  %2048 = vmatpush2.bf16.msra.mxu0 0
  %2049 = vmatprep.subr.bf16.mxu0 0
  %2050 = vmatpush2.bf16.msra.mxu0 0
  %2051 = vmatprep.subr.bf16.mxu0 0
  %2052 = vmatpush2.bf16.msra.mxu0 0
  %2053 = vmatprep.subr.bf16.mxu0 0
  %2054 = vmatpush2.bf16.msra.mxu0 0
  %2055 = vmatprep.subr.bf16.mxu0 0
  %2056 = vmatpush2.bf16.msra.mxu0 0
  %2057 = vmatprep.subr.bf16.mxu0 0
  %2058 = vmatpush2.bf16.msra.mxu0 0
  %2059 = vmatprep.subr.bf16.mxu0 0
  %2060 = vmatpush2.bf16.msra.mxu0 0
  %2061 = vmatprep.subr.bf16.mxu0 0
  %2062 = vmatpush2.bf16.msra.mxu0 0
  %2063 = vmatprep.mubr.bf16.mxu0 0
  %2064 = vmatmul.mubr.bf16.gmra.mxu0 %v2026
  %v2065 = vpop.f32.mrf.mxu0
  %v2066 = vadd.f32 0.0, %v2065
  %v2067 = vpop.f32.mrf.mxu0
  %v2068 = vpop.f32.mrf.mxu0
  %v2069 = vadd.f32 0.0, %v2068
  %v2070 = vpop.f32.mrf.mxu0
  %2071 = vmatprep.mubr.bf16.mxu0 0
  %2072 = vmatmul.mubr.bf16.gmra.mxu0 %v2029
  %v2073 = vpop.f32.mrf.mxu0
  %v2074 = vadd.f32 0.0, %v2073
  %v2075 = vpop.f32.mrf.mxu0
  %v2076 = vpop.f32.mrf.mxu0
  %v2077 = vpop.f32.mrf.mxu0
  %2078 = vdwg.mxu0
  %v2079 = vadd.f32 %v2000, %v2066
  %v2080 = vadd.f32 %v2001, %v2069
  %v2081 = vadd.f32 %v2002, %v2074
  %v2082 = vld [vmem:[%s8 + $0x8] sm:$0xff]
  %v2083 = vld [vmem:[%s8 + $0x10] sm:$0xff]
  %v2084 = vld [vmem:[%s8 + $0x18] sm:$0x3f]
  %v2085 = vpack.c.bf16 %v2083, %v2082
  %v2086 = vpack.c.bf16 %v2084, %v2084
  %s2087 = scalar_lea.vmem %s1, 240
  %v2088 = vld [vmem:[%s2087] sm:$0xf]
  %v2089 = vld [vmem:[%s2087 + $0x4] sm:$0xf]
  %v2090 = vld [vmem:[%s2087 + $0x8] sm:$0xf]
  %v2091 = vld [vmem:[%s2087 + $0xc] sm:$0xf]
  %v2096 = vunpack.c.l.b16 %v2088
  %v2097 = vunpack.c.l.b16 %v2089
  %v2098 = vunpack.c.l.b16 %v2090
  %v2099 = vunpack.c.l.b16 %v2091
  %v2100 = vpack.c.b16 %v2097, %v2096
  %v2101 = vpack.c.b16 %v2099, %v2098
  %v2105 = vsel %vm30, %v2085, 0
  %v2108 = vsel %vm30, %v2086, 0
  %2110 = vmatprep.subr.bf16.mxu0 0
  %2111 = vmatpush1.bf16.msra.mxu0 0
  %2112 = vmatprep.subr.bf16.mxu0 0
  %2113 = vmatpush1.bf16.msra.mxu0 0
  %2114 = vmatprep.subr.bf16.mxu0 0
  %2115 = vmatpush1.bf16.msra.mxu0 0
  %2116 = vmatprep.subr.bf16.mxu0 0
  %2117 = vmatpush1.bf16.msra.mxu0 0
  %2118 = vmatprep.subr.bf16.mxu0 0
  %2119 = vmatpush1.bf16.msra.mxu0 0
  %2120 = vmatprep.subr.bf16.mxu0 0
  %2121 = vmatpush1.bf16.msra.mxu0 0
  %2122 = vmatprep.subr.bf16.mxu0 0
  %2123 = vmatpush1.bf16.msra.mxu0 %v2101
  %2124 = vmatprep.subr.bf16.mxu0 0
  %2125 = vmatpush1.bf16.msra.mxu0 %v2100
  %2126 = vmatprep.subr.bf16.mxu0 0
  %2127 = vmatpush2.bf16.msra.mxu0 0
  %2128 = vmatprep.subr.bf16.mxu0 0
  %2129 = vmatpush2.bf16.msra.mxu0 0
  %2130 = vmatprep.subr.bf16.mxu0 0
  %2131 = vmatpush2.bf16.msra.mxu0 0
  %2132 = vmatprep.subr.bf16.mxu0 0
  %2133 = vmatpush2.bf16.msra.mxu0 0
  %2134 = vmatprep.subr.bf16.mxu0 0
  %2135 = vmatpush2.bf16.msra.mxu0 0
  %2136 = vmatprep.subr.bf16.mxu0 0
  %2137 = vmatpush2.bf16.msra.mxu0 0
  %2138 = vmatprep.subr.bf16.mxu0 0
  %2139 = vmatpush2.bf16.msra.mxu0 0
  %2140 = vmatprep.subr.bf16.mxu0 0
  %2141 = vmatpush2.bf16.msra.mxu0 0
  %2142 = vmatprep.mubr.bf16.mxu0 0
  %2143 = vmatmul.mubr.bf16.gmra.mxu0 %v2105
  %v2144 = vpop.f32.mrf.mxu0
  %v2145 = vadd.f32 0.0, %v2144
  %v2146 = vpop.f32.mrf.mxu0
  %v2147 = vpop.f32.mrf.mxu0
  %v2148 = vadd.f32 0.0, %v2147
  %v2149 = vpop.f32.mrf.mxu0
  %2150 = vmatprep.mubr.bf16.mxu0 0
  %2151 = vmatmul.mubr.bf16.gmra.mxu0 %v2108
  %v2152 = vpop.f32.mrf.mxu0
  %v2153 = vadd.f32 0.0, %v2152
  %v2154 = vpop.f32.mrf.mxu0
  %v2155 = vpop.f32.mrf.mxu0
  %v2156 = vpop.f32.mrf.mxu0
  %2157 = vdwg.mxu0
  %v2158 = vadd.f32 %v2079, %v2145
  %v2159 = vadd.f32 %v2080, %v2148
  %v2160 = vadd.f32 %v2081, %v2153
  %v2161 = vld [vmem:[%s8 + $0x9] sm:$0xff]
  %v2162 = vld [vmem:[%s8 + $0x11] sm:$0xff]
  %v2163 = vld [vmem:[%s8 + $0x19] sm:$0x3f]
  %v2164 = vpack.c.bf16 %v2162, %v2161
  %v2165 = vpack.c.bf16 %v2163, %v2163
  %s2166 = scalar_lea.vmem %s1, 256
  %v2167 = vld [vmem:[%s2166] sm:$0xf]
  %v2168 = vld [vmem:[%s2166 + $0x4] sm:$0xf]
  %v2169 = vld [vmem:[%s2166 + $0x8] sm:$0xf]
  %v2170 = vld [vmem:[%s2166 + $0xc] sm:$0xf]
  %v2175 = vunpack.c.l.b16 %v2167
  %v2176 = vunpack.c.l.b16 %v2168
  %v2177 = vunpack.c.l.b16 %v2169
  %v2178 = vunpack.c.l.b16 %v2170
  %v2179 = vpack.c.b16 %v2176, %v2175
  %v2180 = vpack.c.b16 %v2178, %v2177
  %v2184 = vsel %vm30, %v2164, 0
  %v2187 = vsel %vm30, %v2165, 0
  %2189 = vmatprep.subr.bf16.mxu0 0
  %2190 = vmatpush1.bf16.msra.mxu0 0
  %2191 = vmatprep.subr.bf16.mxu0 0
  %2192 = vmatpush1.bf16.msra.mxu0 0
  %2193 = vmatprep.subr.bf16.mxu0 0
  %2194 = vmatpush1.bf16.msra.mxu0 0
  %2195 = vmatprep.subr.bf16.mxu0 0
  %2196 = vmatpush1.bf16.msra.mxu0 0
  %2197 = vmatprep.subr.bf16.mxu0 0
  %2198 = vmatpush1.bf16.msra.mxu0 0
  %2199 = vmatprep.subr.bf16.mxu0 0
  %2200 = vmatpush1.bf16.msra.mxu0 0
  %2201 = vmatprep.subr.bf16.mxu0 0
  %2202 = vmatpush1.bf16.msra.mxu0 %v2180
  %2203 = vmatprep.subr.bf16.mxu0 0
  %2204 = vmatpush1.bf16.msra.mxu0 %v2179
  %2205 = vmatprep.subr.bf16.mxu0 0
  %2206 = vmatpush2.bf16.msra.mxu0 0
  %2207 = vmatprep.subr.bf16.mxu0 0
  %2208 = vmatpush2.bf16.msra.mxu0 0
  %2209 = vmatprep.subr.bf16.mxu0 0
  %2210 = vmatpush2.bf16.msra.mxu0 0
  %2211 = vmatprep.subr.bf16.mxu0 0
  %2212 = vmatpush2.bf16.msra.mxu0 0
  %2213 = vmatprep.subr.bf16.mxu0 0
  %2214 = vmatpush2.bf16.msra.mxu0 0
  %2215 = vmatprep.subr.bf16.mxu0 0
  %2216 = vmatpush2.bf16.msra.mxu0 0
  %2217 = vmatprep.subr.bf16.mxu0 0
  %2218 = vmatpush2.bf16.msra.mxu0 0
  %2219 = vmatprep.subr.bf16.mxu0 0
  %2220 = vmatpush2.bf16.msra.mxu0 0
  %2221 = vmatprep.mubr.bf16.mxu0 0
  %2222 = vmatmul.mubr.bf16.gmra.mxu0 %v2184
  %v2223 = vpop.f32.mrf.mxu0
  %v2224 = vadd.f32 0.0, %v2223
  %v2225 = vpop.f32.mrf.mxu0
  %v2226 = vpop.f32.mrf.mxu0
  %v2227 = vadd.f32 0.0, %v2226
  %v2228 = vpop.f32.mrf.mxu0
  %2229 = vmatprep.mubr.bf16.mxu0 0
  %2230 = vmatmul.mubr.bf16.gmra.mxu0 %v2187
  %v2231 = vpop.f32.mrf.mxu0
  %v2232 = vadd.f32 0.0, %v2231
  %v2233 = vpop.f32.mrf.mxu0
  %v2234 = vpop.f32.mrf.mxu0
  %v2235 = vpop.f32.mrf.mxu0
  %2236 = vdwg.mxu0
  %v2237 = vadd.f32 %v2158, %v2224
  %v2238 = vadd.f32 %v2159, %v2227
  %v2239 = vadd.f32 %v2160, %v2232
  %v2240 = vld [vmem:[%s8 + $0xa] sm:$0xff]
  %v2241 = vld [vmem:[%s8 + $0x12] sm:$0xff]
  %v2242 = vld [vmem:[%s8 + $0x1a] sm:$0x3f]
  %v2243 = vpack.c.bf16 %v2241, %v2240
  %v2244 = vpack.c.bf16 %v2242, %v2242
  %s2245 = scalar_lea.vmem %s1, 272
  %v2246 = vld [vmem:[%s2245] sm:$0xf]
  %v2247 = vld [vmem:[%s2245 + $0x4] sm:$0xf]
  %v2248 = vld [vmem:[%s2245 + $0x8] sm:$0xf]
  %v2249 = vld [vmem:[%s2245 + $0xc] sm:$0xf]
  %v2254 = vunpack.c.l.b16 %v2246
  %v2255 = vunpack.c.l.b16 %v2247
  %v2256 = vunpack.c.l.b16 %v2248
  %v2257 = vunpack.c.l.b16 %v2249
  %v2258 = vpack.c.b16 %v2255, %v2254
  %v2259 = vpack.c.b16 %v2257, %v2256
  %v2263 = vsel %vm30, %v2243, 0
  %v2266 = vsel %vm30, %v2244, 0
  %2268 = vmatprep.subr.bf16.mxu0 0
  %2269 = vmatpush1.bf16.msra.mxu0 0
  %2270 = vmatprep.subr.bf16.mxu0 0
  %2271 = vmatpush1.bf16.msra.mxu0 0
  %2272 = vmatprep.subr.bf16.mxu0 0
  %2273 = vmatpush1.bf16.msra.mxu0 0
  %2274 = vmatprep.subr.bf16.mxu0 0
  %2275 = vmatpush1.bf16.msra.mxu0 0
  %2276 = vmatprep.subr.bf16.mxu0 0
  %2277 = vmatpush1.bf16.msra.mxu0 0
  %2278 = vmatprep.subr.bf16.mxu0 0
  %2279 = vmatpush1.bf16.msra.mxu0 0
  %2280 = vmatprep.subr.bf16.mxu0 0
  %2281 = vmatpush1.bf16.msra.mxu0 %v2259
  %2282 = vmatprep.subr.bf16.mxu0 0
  %2283 = vmatpush1.bf16.msra.mxu0 %v2258
  %2284 = vmatprep.subr.bf16.mxu0 0
  %2285 = vmatpush2.bf16.msra.mxu0 0
  %2286 = vmatprep.subr.bf16.mxu0 0
  %2287 = vmatpush2.bf16.msra.mxu0 0
  %2288 = vmatprep.subr.bf16.mxu0 0
  %2289 = vmatpush2.bf16.msra.mxu0 0
  %2290 = vmatprep.subr.bf16.mxu0 0
  %2291 = vmatpush2.bf16.msra.mxu0 0
  %2292 = vmatprep.subr.bf16.mxu0 0
  %2293 = vmatpush2.bf16.msra.mxu0 0
  %2294 = vmatprep.subr.bf16.mxu0 0
  %2295 = vmatpush2.bf16.msra.mxu0 0
  %2296 = vmatprep.subr.bf16.mxu0 0
  %2297 = vmatpush2.bf16.msra.mxu0 0
  %2298 = vmatprep.subr.bf16.mxu0 0
  %2299 = vmatpush2.bf16.msra.mxu0 0
  %2300 = vmatprep.mubr.bf16.mxu0 0
  %2301 = vmatmul.mubr.bf16.gmra.mxu0 %v2263
  %v2302 = vpop.f32.mrf.mxu0
  %v2303 = vadd.f32 0.0, %v2302
  %v2304 = vpop.f32.mrf.mxu0
  %v2305 = vpop.f32.mrf.mxu0
  %v2306 = vadd.f32 0.0, %v2305
  %v2307 = vpop.f32.mrf.mxu0
  %2308 = vmatprep.mubr.bf16.mxu0 0
  %2309 = vmatmul.mubr.bf16.gmra.mxu0 %v2266
  %v2310 = vpop.f32.mrf.mxu0
  %v2311 = vadd.f32 0.0, %v2310
  %v2312 = vpop.f32.mrf.mxu0
  %v2313 = vpop.f32.mrf.mxu0
  %v2314 = vpop.f32.mrf.mxu0
  %2315 = vdwg.mxu0
  %v2316 = vadd.f32 %v2237, %v2303
  %v2317 = vadd.f32 %v2238, %v2306
  %v2318 = vadd.f32 %v2239, %v2311
  %s2319 = scalar_lea.vmem %s2, 1
  %v2320 = vld [vmem:[%s2319] sm:$0x1]
  %s2321 = scalar_lea.vmem %s3, 1
  %v2322 = vld [vmem:[%s2321] sm:$0x1]
  %v2323 = vmul.f32 %v2316, %v756
  %v2324 = vmul.f32 %v2317, %v761
  %v2325 = vmul.f32 %v2318, %v766
  %v2326 = vsel %vm30, %v2323, 0.0
  %v2327 = vsel %vm30, %v2324, 0.0
  %v2328 = vadd.f32 %v2326, %v2327
  %v2329 = vsel %vm774, %v2325, 0.0
  %v2330 = vadd.f32 %v2328, %v2329
  %v2331 = vrot.slane %v2330, 4
  %v2332 = vadd.f32 %v2330, %v2331
  %v2333 = vrot.slane %v2332, 2
  %v2334 = vadd.f32 %v2332, %v2333
  %v2335 = vrot.slane %v2334, 1
  %v2336 = vadd.f32 %v2334, %v2335
  %v2337 = vmul.f32 %v2336, 0.125
  %v2338 = vsub.f32 %v2316, %v2337
  %v2339 = vsub.f32 %v2317, %v2337
  %v2340 = vsub.f32 %v2318, %v2337
  %v2341 = vmul.f32 %v2338, %v2338
  %v2342 = vmul.f32 %v2339, %v2339
  %v2343 = vmul.f32 %v2340, %v2340
  %v2344 = vmul.f32 %v2341, %v756
  %v2345 = vmul.f32 %v2342, %v761
  %v2346 = vmul.f32 %v2343, %v766
  %v2347 = vsel %vm30, %v2344, 0.0
  %v2348 = vsel %vm30, %v2345, 0.0
  %v2349 = vadd.f32 %v2347, %v2348
  %v2350 = vsel %vm774, %v2346, 0.0
  %v2351 = vadd.f32 %v2349, %v2350
  %v2352 = vrot.slane %v2351, 4
  %v2353 = vadd.f32 %v2351, %v2352
  %v2354 = vrot.slane %v2353, 2
  %v2355 = vadd.f32 %v2353, %v2354
  %v2356 = vrot.slane %v2355, 1
  %v2357 = vadd.f32 %v2355, %v2356
  %v2358 = vmul.f32 %v2357, 0.125
  %v2359 = vadd.f32 %v2358, 1e-05
  %v2360 = vrsqrt.pop %v2359
  %v2361 = vmul.f32 %v2320, %v2360
  %v2363 = vlaneseq
  %v2364 = vshrl.u32 %v2363, 7
  %v2365 = vsub.s32 0, %v2364
  %v2366 = vrot.slane %v2361, %v2365
  %v2368 = vmul.f32 %v2338, %v2366
  %v2369 = vmul.f32 %v2339, %v2366
  %v2370 = vmul.f32 %v2340, %v2366
  %v2372 = vlaneseq
  %v2373 = vshrl.u32 %v2372, 7
  %v2374 = vsub.s32 0, %v2373
  %v2375 = vrot.slane %v2322, %v2374
  %v2377 = vadd.f32 %v2368, %v2375
  %v2378 = vadd.f32 %v2369, %v2375
  %v2379 = vadd.f32 %v2370, %v2375
  %v2380 = vmax.f32 %v2377, 0.0
  %v2381 = vmax.f32 %v2378, 0.0
  %v2382 = vmax.f32 %v2379, 0.0
  %v2383 = vmul.f32 %v2380, %v756
  %v2384 = vmul.f32 %v2381, %v761
  %v2385 = vmul.f32 %v2382, %v766
  %2386 = vst.msk [vmem:[#allocation2] sm:$0xff] %vm30, 0.0
  %2387 = vst.msk [vmem:[#allocation2 + $0x8] sm:$0xff] %vm30, 0.0
  %2388 = vst.msk [vmem:[#allocation2 + $0x10] sm:$0xff] %vm30, 0.0
  %2389 = vst.msk [vmem:[#allocation2 + $0x18] sm:$0xff] %vm30, 0.0
  %2390 = vst.msk [vmem:[#allocation2 + $0x5] sm:$0xff] %vm30, %v2383
  %2391 = vst.msk [vmem:[#allocation2 + $0xd] sm:$0xff] %vm30, %v2384
  %2392 = vst.msk [vmem:[#allocation2 + $0x15] sm:$0x3f] %vm774, %v2385
  %v2393 = vld [vmem:[#allocation2] sm:$0xff]
  %v2394 = vld [vmem:[#allocation2 + $0x8] sm:$0xff]
  %v2395 = vld [vmem:[#allocation2 + $0x10] sm:$0x3f]
  %v2396 = vpack.c.bf16 %v2394, %v2393
  %v2397 = vpack.c.bf16 %v2395, %v2395
  %s2398 = scalar_lea.vmem %s4, 144
  %v2399 = vld [vmem:[%s2398] sm:$0xf]
  %v2400 = vld [vmem:[%s2398 + $0x4] sm:$0xf]
  %v2401 = vld [vmem:[%s2398 + $0x8] sm:$0xf]
  %v2402 = vld [vmem:[%s2398 + $0xc] sm:$0xf]
  %v2403 = vld [vmem:[#allocation2 + $0x1] sm:$0xff]
  %v2404 = vld [vmem:[#allocation2 + $0x9] sm:$0xff]
  %v2405 = vld [vmem:[#allocation2 + $0x11] sm:$0x3f]
  %v2406 = vpack.c.bf16 %v2404, %v2403
  %v2407 = vpack.c.bf16 %v2405, %v2405
  %s2408 = scalar_lea.vmem %s4, 160
  %v2409 = vld [vmem:[%s2408] sm:$0xf]
  %v2410 = vld [vmem:[%s2408 + $0x4] sm:$0xf]
  %v2411 = vld [vmem:[%s2408 + $0x8] sm:$0xf]
  %v2412 = vld [vmem:[%s2408 + $0xc] sm:$0xf]
  %v2417 = vunpack.c.l.b16 %v2409
  %v2418 = vunpack.c.l.b16 %v2410
  %v2419 = vunpack.c.l.b16 %v2411
  %v2420 = vunpack.c.l.b16 %v2412
  %v2421 = vpack.c.b16 %v2418, %v2417
  %v2422 = vpack.c.b16 %v2420, %v2419
  %v2426 = vsel %vm30, %v2406, 0
  %v2429 = vsel %vm30, %v2407, 0
  %2431 = vmatprep.subr.bf16.mxu0 0
  %2432 = vmatpush1.bf16.msra.mxu0 0
  %2433 = vmatprep.subr.bf16.mxu0 0
  %2434 = vmatpush1.bf16.msra.mxu0 0
  %2435 = vmatprep.subr.bf16.mxu0 0
  %2436 = vmatpush1.bf16.msra.mxu0 0
  %2437 = vmatprep.subr.bf16.mxu0 0
  %2438 = vmatpush1.bf16.msra.mxu0 0
  %2439 = vmatprep.subr.bf16.mxu0 0
  %2440 = vmatpush1.bf16.msra.mxu0 0
  %2441 = vmatprep.subr.bf16.mxu0 0
  %2442 = vmatpush1.bf16.msra.mxu0 0
  %2443 = vmatprep.subr.bf16.mxu0 0
  %2444 = vmatpush1.bf16.msra.mxu0 %v2422
  %2445 = vmatprep.subr.bf16.mxu0 0
  %2446 = vmatpush1.bf16.msra.mxu0 %v2421
  %2447 = vmatprep.subr.bf16.mxu0 0
  %2448 = vmatpush2.bf16.msra.mxu0 0
  %2449 = vmatprep.subr.bf16.mxu0 0
  %2450 = vmatpush2.bf16.msra.mxu0 0
  %2451 = vmatprep.subr.bf16.mxu0 0
  %2452 = vmatpush2.bf16.msra.mxu0 0
  %2453 = vmatprep.subr.bf16.mxu0 0
  %2454 = vmatpush2.bf16.msra.mxu0 0
  %2455 = vmatprep.subr.bf16.mxu0 0
  %2456 = vmatpush2.bf16.msra.mxu0 0
  %2457 = vmatprep.subr.bf16.mxu0 0
  %2458 = vmatpush2.bf16.msra.mxu0 0
  %2459 = vmatprep.subr.bf16.mxu0 0
  %2460 = vmatpush2.bf16.msra.mxu0 0
  %2461 = vmatprep.subr.bf16.mxu0 0
  %2462 = vmatpush2.bf16.msra.mxu0 0
  %2463 = vmatprep.mubr.bf16.mxu0 0
  %2464 = vmatmul.mubr.bf16.gmra.mxu0 %v2426
  %v2465 = vpop.f32.mrf.mxu0
  %v2466 = vadd.f32 0.0, %v2465
  %v2467 = vpop.f32.mrf.mxu0
  %v2468 = vpop.f32.mrf.mxu0
  %v2469 = vadd.f32 0.0, %v2468
  %v2470 = vpop.f32.mrf.mxu0
  %2471 = vmatprep.mubr.bf16.mxu0 0
  %2472 = vmatmul.mubr.bf16.gmra.mxu0 %v2429
  %v2473 = vpop.f32.mrf.mxu0
  %v2474 = vadd.f32 0.0, %v2473
  %v2475 = vpop.f32.mrf.mxu0
  %v2476 = vpop.f32.mrf.mxu0
  %v2477 = vpop.f32.mrf.mxu0
  %2478 = vdwg.mxu0
  %v2483 = vunpack.c.l.b16 %v2399
  %v2484 = vunpack.c.l.b16 %v2400
  %v2485 = vunpack.c.l.b16 %v2401
  %v2486 = vunpack.c.l.b16 %v2402
  %v2487 = vpack.c.b16 %v2484, %v2483
  %v2488 = vpack.c.b16 %v2486, %v2485
  %v2492 = vsel %vm30, %v2396, 0
  %v2495 = vsel %vm30, %v2397, 0
  %2497 = vmatprep.subr.bf16.mxu0 0
  %2498 = vmatpush1.bf16.msra.mxu0 0
  %2499 = vmatprep.subr.bf16.mxu0 0
  %2500 = vmatpush1.bf16.msra.mxu0 0
  %2501 = vmatprep.subr.bf16.mxu0 0
  %2502 = vmatpush1.bf16.msra.mxu0 0
  %2503 = vmatprep.subr.bf16.mxu0 0
  %2504 = vmatpush1.bf16.msra.mxu0 0
  %2505 = vmatprep.subr.bf16.mxu0 0
  %2506 = vmatpush1.bf16.msra.mxu0 0
  %2507 = vmatprep.subr.bf16.mxu0 0
  %2508 = vmatpush1.bf16.msra.mxu0 0
  %2509 = vmatprep.subr.bf16.mxu0 0
  %2510 = vmatpush1.bf16.msra.mxu0 %v2488
  %2511 = vmatprep.subr.bf16.mxu0 0
  %2512 = vmatpush1.bf16.msra.mxu0 %v2487
  %2513 = vmatprep.subr.bf16.mxu0 0
  %2514 = vmatpush2.bf16.msra.mxu0 0
  %2515 = vmatprep.subr.bf16.mxu0 0
  %2516 = vmatpush2.bf16.msra.mxu0 0
  %2517 = vmatprep.subr.bf16.mxu0 0
  %2518 = vmatpush2.bf16.msra.mxu0 0
  %2519 = vmatprep.subr.bf16.mxu0 0
  %2520 = vmatpush2.bf16.msra.mxu0 0
  %2521 = vmatprep.subr.bf16.mxu0 0
  %2522 = vmatpush2.bf16.msra.mxu0 0
  %2523 = vmatprep.subr.bf16.mxu0 0
  %2524 = vmatpush2.bf16.msra.mxu0 0
  %2525 = vmatprep.subr.bf16.mxu0 0
  %2526 = vmatpush2.bf16.msra.mxu0 0
  %2527 = vmatprep.subr.bf16.mxu0 0
  %2528 = vmatpush2.bf16.msra.mxu0 0
  %2529 = vmatprep.mubr.bf16.mxu0 0
  %2530 = vmatmul.mubr.bf16.gmra.mxu0 %v2492
  %v2531 = vpop.f32.mrf.mxu0
  %v2532 = vadd.f32 %v2466, %v2531
  %v2533 = vpop.f32.mrf.mxu0
  %v2534 = vpop.f32.mrf.mxu0
  %v2535 = vadd.f32 %v2469, %v2534
  %v2536 = vpop.f32.mrf.mxu0
  %2537 = vmatprep.mubr.bf16.mxu0 0
  %2538 = vmatmul.mubr.bf16.gmra.mxu0 %v2495
  %v2539 = vpop.f32.mrf.mxu0
  %v2540 = vadd.f32 %v2474, %v2539
  %v2541 = vpop.f32.mrf.mxu0
  %v2542 = vpop.f32.mrf.mxu0
  %v2543 = vpop.f32.mrf.mxu0
  %2544 = vdwg.mxu0
  %v2545 = vld [vmem:[#allocation2 + $0x2] sm:$0xff]
  %v2546 = vld [vmem:[#allocation2 + $0xa] sm:$0xff]
  %v2547 = vld [vmem:[#allocation2 + $0x12] sm:$0x3f]
  %v2548 = vpack.c.bf16 %v2546, %v2545
  %v2549 = vpack.c.bf16 %v2547, %v2547
  %s2550 = scalar_lea.vmem %s4, 176
  %v2551 = vld [vmem:[%s2550] sm:$0xf]
  %v2552 = vld [vmem:[%s2550 + $0x4] sm:$0xf]
  %v2553 = vld [vmem:[%s2550 + $0x8] sm:$0xf]
  %v2554 = vld [vmem:[%s2550 + $0xc] sm:$0xf]
  %v2559 = vunpack.c.l.b16 %v2551
  %v2560 = vunpack.c.l.b16 %v2552
  %v2561 = vunpack.c.l.b16 %v2553
  %v2562 = vunpack.c.l.b16 %v2554
  %v2563 = vpack.c.b16 %v2560, %v2559
  %v2564 = vpack.c.b16 %v2562, %v2561
  %v2568 = vsel %vm30, %v2548, 0
  %v2571 = vsel %vm30, %v2549, 0
  %2573 = vmatprep.subr.bf16.mxu0 0
  %2574 = vmatpush1.bf16.msra.mxu0 0
  %2575 = vmatprep.subr.bf16.mxu0 0
  %2576 = vmatpush1.bf16.msra.mxu0 0
  %2577 = vmatprep.subr.bf16.mxu0 0
  %2578 = vmatpush1.bf16.msra.mxu0 0
  %2579 = vmatprep.subr.bf16.mxu0 0
  %2580 = vmatpush1.bf16.msra.mxu0 0
  %2581 = vmatprep.subr.bf16.mxu0 0
  %2582 = vmatpush1.bf16.msra.mxu0 0
  %2583 = vmatprep.subr.bf16.mxu0 0
  %2584 = vmatpush1.bf16.msra.mxu0 0
  %2585 = vmatprep.subr.bf16.mxu0 0
  %2586 = vmatpush1.bf16.msra.mxu0 %v2564
  %2587 = vmatprep.subr.bf16.mxu0 0
  %2588 = vmatpush1.bf16.msra.mxu0 %v2563
  %2589 = vmatprep.subr.bf16.mxu0 0
  %2590 = vmatpush2.bf16.msra.mxu0 0
  %2591 = vmatprep.subr.bf16.mxu0 0
  %2592 = vmatpush2.bf16.msra.mxu0 0
  %2593 = vmatprep.subr.bf16.mxu0 0
  %2594 = vmatpush2.bf16.msra.mxu0 0
  %2595 = vmatprep.subr.bf16.mxu0 0
  %2596 = vmatpush2.bf16.msra.mxu0 0
  %2597 = vmatprep.subr.bf16.mxu0 0
  %2598 = vmatpush2.bf16.msra.mxu0 0
  %2599 = vmatprep.subr.bf16.mxu0 0
  %2600 = vmatpush2.bf16.msra.mxu0 0
  %2601 = vmatprep.subr.bf16.mxu0 0
  %2602 = vmatpush2.bf16.msra.mxu0 0
  %2603 = vmatprep.subr.bf16.mxu0 0
  %2604 = vmatpush2.bf16.msra.mxu0 0
  %2605 = vmatprep.mubr.bf16.mxu0 0
  %2606 = vmatmul.mubr.bf16.gmra.mxu0 %v2568
  %v2607 = vpop.f32.mrf.mxu0
  %v2608 = vadd.f32 0.0, %v2607
  %v2609 = vpop.f32.mrf.mxu0
  %v2610 = vpop.f32.mrf.mxu0
  %v2611 = vadd.f32 0.0, %v2610
  %v2612 = vpop.f32.mrf.mxu0
  %2613 = vmatprep.mubr.bf16.mxu0 0
  %2614 = vmatmul.mubr.bf16.gmra.mxu0 %v2571
  %v2615 = vpop.f32.mrf.mxu0
  %v2616 = vadd.f32 0.0, %v2615
  %v2617 = vpop.f32.mrf.mxu0
  %v2618 = vpop.f32.mrf.mxu0
  %v2619 = vpop.f32.mrf.mxu0
  %2620 = vdwg.mxu0
  %v2621 = vadd.f32 %v2532, %v2608
  %v2622 = vadd.f32 %v2535, %v2611
  %v2623 = vadd.f32 %v2540, %v2616
  %v2624 = vld [vmem:[#allocation2 + $0x4] sm:$0xff]
  %v2625 = vld [vmem:[#allocation2 + $0xc] sm:$0xff]
  %v2626 = vld [vmem:[#allocation2 + $0x14] sm:$0x3f]
  %v2627 = vpack.c.bf16 %v2625, %v2624
  %v2628 = vpack.c.bf16 %v2626, %v2626
  %s2629 = scalar_lea.vmem %s4, 192
  %v2630 = vld [vmem:[%s2629] sm:$0xf]
  %v2631 = vld [vmem:[%s2629 + $0x4] sm:$0xf]
  %v2632 = vld [vmem:[%s2629 + $0x8] sm:$0xf]
  %v2633 = vld [vmem:[%s2629 + $0xc] sm:$0xf]
  %v2638 = vunpack.c.l.b16 %v2630
  %v2639 = vunpack.c.l.b16 %v2631
  %v2640 = vunpack.c.l.b16 %v2632
  %v2641 = vunpack.c.l.b16 %v2633
  %v2642 = vpack.c.b16 %v2639, %v2638
  %v2643 = vpack.c.b16 %v2641, %v2640
  %v2647 = vsel %vm30, %v2627, 0
  %v2650 = vsel %vm30, %v2628, 0
  %2652 = vmatprep.subr.bf16.mxu0 0
  %2653 = vmatpush1.bf16.msra.mxu0 0
  %2654 = vmatprep.subr.bf16.mxu0 0
  %2655 = vmatpush1.bf16.msra.mxu0 0
  %2656 = vmatprep.subr.bf16.mxu0 0
  %2657 = vmatpush1.bf16.msra.mxu0 0
  %2658 = vmatprep.subr.bf16.mxu0 0
  %2659 = vmatpush1.bf16.msra.mxu0 0
  %2660 = vmatprep.subr.bf16.mxu0 0
  %2661 = vmatpush1.bf16.msra.mxu0 0
  %2662 = vmatprep.subr.bf16.mxu0 0
  %2663 = vmatpush1.bf16.msra.mxu0 0
  %2664 = vmatprep.subr.bf16.mxu0 0
  %2665 = vmatpush1.bf16.msra.mxu0 %v2643
  %2666 = vmatprep.subr.bf16.mxu0 0
  %2667 = vmatpush1.bf16.msra.mxu0 %v2642
  %2668 = vmatprep.subr.bf16.mxu0 0
  %2669 = vmatpush2.bf16.msra.mxu0 0
  %2670 = vmatprep.subr.bf16.mxu0 0
  %2671 = vmatpush2.bf16.msra.mxu0 0
  %2672 = vmatprep.subr.bf16.mxu0 0
  %2673 = vmatpush2.bf16.msra.mxu0 0
  %2674 = vmatprep.subr.bf16.mxu0 0
  %2675 = vmatpush2.bf16.msra.mxu0 0
  %2676 = vmatprep.subr.bf16.mxu0 0
  %2677 = vmatpush2.bf16.msra.mxu0 0
  %2678 = vmatprep.subr.bf16.mxu0 0
  %2679 = vmatpush2.bf16.msra.mxu0 0
  %2680 = vmatprep.subr.bf16.mxu0 0
  %2681 = vmatpush2.bf16.msra.mxu0 0
  %2682 = vmatprep.subr.bf16.mxu0 0
  %2683 = vmatpush2.bf16.msra.mxu0 0
  %2684 = vmatprep.mubr.bf16.mxu0 0
  %2685 = vmatmul.mubr.bf16.gmra.mxu0 %v2647
  %v2686 = vpop.f32.mrf.mxu0
  %v2687 = vadd.f32 0.0, %v2686
  %v2688 = vpop.f32.mrf.mxu0
  %v2689 = vpop.f32.mrf.mxu0
  %v2690 = vadd.f32 0.0, %v2689
  %v2691 = vpop.f32.mrf.mxu0
  %2692 = vmatprep.mubr.bf16.mxu0 0
  %2693 = vmatmul.mubr.bf16.gmra.mxu0 %v2650
  %v2694 = vpop.f32.mrf.mxu0
  %v2695 = vadd.f32 0.0, %v2694
  %v2696 = vpop.f32.mrf.mxu0
  %v2697 = vpop.f32.mrf.mxu0
  %v2698 = vpop.f32.mrf.mxu0
  %2699 = vdwg.mxu0
  %v2700 = vadd.f32 %v2621, %v2687
  %v2701 = vadd.f32 %v2622, %v2690
  %v2702 = vadd.f32 %v2623, %v2695
  %v2703 = vld [vmem:[#allocation2 + $0x5] sm:$0xff]
  %v2704 = vld [vmem:[#allocation2 + $0xd] sm:$0xff]
  %v2705 = vld [vmem:[#allocation2 + $0x15] sm:$0x3f]
  %v2706 = vpack.c.bf16 %v2704, %v2703
  %v2707 = vpack.c.bf16 %v2705, %v2705
  %s2708 = scalar_lea.vmem %s4, 208
  %v2709 = vld [vmem:[%s2708] sm:$0xf]
  %v2710 = vld [vmem:[%s2708 + $0x4] sm:$0xf]
  %v2711 = vld [vmem:[%s2708 + $0x8] sm:$0xf]
  %v2712 = vld [vmem:[%s2708 + $0xc] sm:$0xf]
  %v2717 = vunpack.c.l.b16 %v2709
  %v2718 = vunpack.c.l.b16 %v2710
  %v2719 = vunpack.c.l.b16 %v2711
  %v2720 = vunpack.c.l.b16 %v2712
  %v2721 = vpack.c.b16 %v2718, %v2717
  %v2722 = vpack.c.b16 %v2720, %v2719
  %v2726 = vsel %vm30, %v2706, 0
  %v2729 = vsel %vm30, %v2707, 0
  %2731 = vmatprep.subr.bf16.mxu0 0
  %2732 = vmatpush1.bf16.msra.mxu0 0
  %2733 = vmatprep.subr.bf16.mxu0 0
  %2734 = vmatpush1.bf16.msra.mxu0 0
  %2735 = vmatprep.subr.bf16.mxu0 0
  %2736 = vmatpush1.bf16.msra.mxu0 0
  %2737 = vmatprep.subr.bf16.mxu0 0
  %2738 = vmatpush1.bf16.msra.mxu0 0
  %2739 = vmatprep.subr.bf16.mxu0 0
  %2740 = vmatpush1.bf16.msra.mxu0 0
  %2741 = vmatprep.subr.bf16.mxu0 0
  %2742 = vmatpush1.bf16.msra.mxu0 0
  %2743 = vmatprep.subr.bf16.mxu0 0
  %2744 = vmatpush1.bf16.msra.mxu0 %v2722
  %2745 = vmatprep.subr.bf16.mxu0 0
  %2746 = vmatpush1.bf16.msra.mxu0 %v2721
  %2747 = vmatprep.subr.bf16.mxu0 0
  %2748 = vmatpush2.bf16.msra.mxu0 0
  %2749 = vmatprep.subr.bf16.mxu0 0
  %2750 = vmatpush2.bf16.msra.mxu0 0
  %2751 = vmatprep.subr.bf16.mxu0 0
  %2752 = vmatpush2.bf16.msra.mxu0 0
  %2753 = vmatprep.subr.bf16.mxu0 0
  %2754 = vmatpush2.bf16.msra.mxu0 0
  %2755 = vmatprep.subr.bf16.mxu0 0
  %2756 = vmatpush2.bf16.msra.mxu0 0
  %2757 = vmatprep.subr.bf16.mxu0 0
  %2758 = vmatpush2.bf16.msra.mxu0 0
  %2759 = vmatprep.subr.bf16.mxu0 0
  %2760 = vmatpush2.bf16.msra.mxu0 0
  %2761 = vmatprep.subr.bf16.mxu0 0
  %2762 = vmatpush2.bf16.msra.mxu0 0
  %2763 = vmatprep.mubr.bf16.mxu0 0
  %2764 = vmatmul.mubr.bf16.gmra.mxu0 %v2726
  %v2765 = vpop.f32.mrf.mxu0
  %v2766 = vadd.f32 0.0, %v2765
  %v2767 = vpop.f32.mrf.mxu0
  %v2768 = vpop.f32.mrf.mxu0
  %v2769 = vadd.f32 0.0, %v2768
  %v2770 = vpop.f32.mrf.mxu0
  %2771 = vmatprep.mubr.bf16.mxu0 0
  %2772 = vmatmul.mubr.bf16.gmra.mxu0 %v2729
  %v2773 = vpop.f32.mrf.mxu0
  %v2774 = vadd.f32 0.0, %v2773
  %v2775 = vpop.f32.mrf.mxu0
  %v2776 = vpop.f32.mrf.mxu0
  %v2777 = vpop.f32.mrf.mxu0
  %2778 = vdwg.mxu0
  %v2779 = vadd.f32 %v2700, %v2766
  %v2780 = vadd.f32 %v2701, %v2769
  %v2781 = vadd.f32 %v2702, %v2774
  %v2782 = vld [vmem:[#allocation2 + $0x6] sm:$0xff]
  %v2783 = vld [vmem:[#allocation2 + $0xe] sm:$0xff]
  %v2784 = vld [vmem:[#allocation2 + $0x16] sm:$0x3f]
  %v2785 = vpack.c.bf16 %v2783, %v2782
  %v2786 = vpack.c.bf16 %v2784, %v2784
  %s2787 = scalar_lea.vmem %s4, 224
  %v2788 = vld [vmem:[%s2787] sm:$0xf]
  %v2789 = vld [vmem:[%s2787 + $0x4] sm:$0xf]
  %v2790 = vld [vmem:[%s2787 + $0x8] sm:$0xf]
  %v2791 = vld [vmem:[%s2787 + $0xc] sm:$0xf]
  %v2796 = vunpack.c.l.b16 %v2788
  %v2797 = vunpack.c.l.b16 %v2789
  %v2798 = vunpack.c.l.b16 %v2790
  %v2799 = vunpack.c.l.b16 %v2791
  %v2800 = vpack.c.b16 %v2797, %v2796
  %v2801 = vpack.c.b16 %v2799, %v2798
  %v2805 = vsel %vm30, %v2785, 0
  %v2808 = vsel %vm30, %v2786, 0
  %2810 = vmatprep.subr.bf16.mxu0 0
  %2811 = vmatpush1.bf16.msra.mxu0 0
  %2812 = vmatprep.subr.bf16.mxu0 0
  %2813 = vmatpush1.bf16.msra.mxu0 0
  %2814 = vmatprep.subr.bf16.mxu0 0
  %2815 = vmatpush1.bf16.msra.mxu0 0
  %2816 = vmatprep.subr.bf16.mxu0 0
  %2817 = vmatpush1.bf16.msra.mxu0 0
  %2818 = vmatprep.subr.bf16.mxu0 0
  %2819 = vmatpush1.bf16.msra.mxu0 0
  %2820 = vmatprep.subr.bf16.mxu0 0
  %2821 = vmatpush1.bf16.msra.mxu0 0
  %2822 = vmatprep.subr.bf16.mxu0 0
  %2823 = vmatpush1.bf16.msra.mxu0 %v2801
  %2824 = vmatprep.subr.bf16.mxu0 0
  %2825 = vmatpush1.bf16.msra.mxu0 %v2800
  %2826 = vmatprep.subr.bf16.mxu0 0
  %2827 = vmatpush2.bf16.msra.mxu0 0
  %2828 = vmatprep.subr.bf16.mxu0 0
  %2829 = vmatpush2.bf16.msra.mxu0 0
  %2830 = vmatprep.subr.bf16.mxu0 0
  %2831 = vmatpush2.bf16.msra.mxu0 0
  %2832 = vmatprep.subr.bf16.mxu0 0
  %2833 = vmatpush2.bf16.msra.mxu0 0
  %2834 = vmatprep.subr.bf16.mxu0 0
  %2835 = vmatpush2.bf16.msra.mxu0 0
  %2836 = vmatprep.subr.bf16.mxu0 0
  %2837 = vmatpush2.bf16.msra.mxu0 0
  %2838 = vmatprep.subr.bf16.mxu0 0
  %2839 = vmatpush2.bf16.msra.mxu0 0
  %2840 = vmatprep.subr.bf16.mxu0 0
  %2841 = vmatpush2.bf16.msra.mxu0 0
  %2842 = vmatprep.mubr.bf16.mxu0 0
  %2843 = vmatmul.mubr.bf16.gmra.mxu0 %v2805
  %v2844 = vpop.f32.mrf.mxu0
  %v2845 = vadd.f32 0.0, %v2844
  %v2846 = vpop.f32.mrf.mxu0
  %v2847 = vpop.f32.mrf.mxu0
  %v2848 = vadd.f32 0.0, %v2847
  %v2849 = vpop.f32.mrf.mxu0
  %2850 = vmatprep.mubr.bf16.mxu0 0
  %2851 = vmatmul.mubr.bf16.gmra.mxu0 %v2808
  %v2852 = vpop.f32.mrf.mxu0
  %v2853 = vadd.f32 0.0, %v2852
  %v2854 = vpop.f32.mrf.mxu0
  %v2855 = vpop.f32.mrf.mxu0
  %v2856 = vpop.f32.mrf.mxu0
  %2857 = vdwg.mxu0
  %v2858 = vadd.f32 %v2779, %v2845
  %v2859 = vadd.f32 %v2780, %v2848
  %v2860 = vadd.f32 %v2781, %v2853
  %v2861 = vld [vmem:[#allocation2 + $0x8] sm:$0xff]
  %v2862 = vld [vmem:[#allocation2 + $0x10] sm:$0xff]
  %v2863 = vld [vmem:[#allocation2 + $0x18] sm:$0x3f]
  %v2864 = vpack.c.bf16 %v2862, %v2861
  %v2865 = vpack.c.bf16 %v2863, %v2863
  %s2866 = scalar_lea.vmem %s4, 240
  %v2867 = vld [vmem:[%s2866] sm:$0xf]
  %v2868 = vld [vmem:[%s2866 + $0x4] sm:$0xf]
  %v2869 = vld [vmem:[%s2866 + $0x8] sm:$0xf]
  %v2870 = vld [vmem:[%s2866 + $0xc] sm:$0xf]
  %v2875 = vunpack.c.l.b16 %v2867
  %v2876 = vunpack.c.l.b16 %v2868
  %v2877 = vunpack.c.l.b16 %v2869
  %v2878 = vunpack.c.l.b16 %v2870
  %v2879 = vpack.c.b16 %v2876, %v2875
  %v2880 = vpack.c.b16 %v2878, %v2877
  %v2884 = vsel %vm30, %v2864, 0
  %v2887 = vsel %vm30, %v2865, 0
  %2889 = vmatprep.subr.bf16.mxu0 0
  %2890 = vmatpush1.bf16.msra.mxu0 0
  %2891 = vmatprep.subr.bf16.mxu0 0
  %2892 = vmatpush1.bf16.msra.mxu0 0
  %2893 = vmatprep.subr.bf16.mxu0 0
  %2894 = vmatpush1.bf16.msra.mxu0 0
  %2895 = vmatprep.subr.bf16.mxu0 0
  %2896 = vmatpush1.bf16.msra.mxu0 0
  %2897 = vmatprep.subr.bf16.mxu0 0
  %2898 = vmatpush1.bf16.msra.mxu0 0
  %2899 = vmatprep.subr.bf16.mxu0 0
  %2900 = vmatpush1.bf16.msra.mxu0 0
  %2901 = vmatprep.subr.bf16.mxu0 0
  %2902 = vmatpush1.bf16.msra.mxu0 %v2880
  %2903 = vmatprep.subr.bf16.mxu0 0
  %2904 = vmatpush1.bf16.msra.mxu0 %v2879
  %2905 = vmatprep.subr.bf16.mxu0 0
  %2906 = vmatpush2.bf16.msra.mxu0 0
  %2907 = vmatprep.subr.bf16.mxu0 0
  %2908 = vmatpush2.bf16.msra.mxu0 0
  %2909 = vmatprep.subr.bf16.mxu0 0
  %2910 = vmatpush2.bf16.msra.mxu0 0
  %2911 = vmatprep.subr.bf16.mxu0 0
  %2912 = vmatpush2.bf16.msra.mxu0 0
  %2913 = vmatprep.subr.bf16.mxu0 0
  %2914 = vmatpush2.bf16.msra.mxu0 0
  %2915 = vmatprep.subr.bf16.mxu0 0
  %2916 = vmatpush2.bf16.msra.mxu0 0
  %2917 = vmatprep.subr.bf16.mxu0 0
  %2918 = vmatpush2.bf16.msra.mxu0 0
  %2919 = vmatprep.subr.bf16.mxu0 0
  %2920 = vmatpush2.bf16.msra.mxu0 0
  %2921 = vmatprep.mubr.bf16.mxu0 0
  %2922 = vmatmul.mubr.bf16.gmra.mxu0 %v2884
  %v2923 = vpop.f32.mrf.mxu0
  %v2924 = vadd.f32 0.0, %v2923
  %v2925 = vpop.f32.mrf.mxu0
  %v2926 = vpop.f32.mrf.mxu0
  %v2927 = vadd.f32 0.0, %v2926
  %v2928 = vpop.f32.mrf.mxu0
  %2929 = vmatprep.mubr.bf16.mxu0 0
  %2930 = vmatmul.mubr.bf16.gmra.mxu0 %v2887
  %v2931 = vpop.f32.mrf.mxu0
  %v2932 = vadd.f32 0.0, %v2931
  %v2933 = vpop.f32.mrf.mxu0
  %v2934 = vpop.f32.mrf.mxu0
  %v2935 = vpop.f32.mrf.mxu0
  %2936 = vdwg.mxu0
  %v2937 = vadd.f32 %v2858, %v2924
  %v2938 = vadd.f32 %v2859, %v2927
  %v2939 = vadd.f32 %v2860, %v2932
  %v2940 = vld [vmem:[#allocation2 + $0x9] sm:$0xff]
  %v2941 = vld [vmem:[#allocation2 + $0x11] sm:$0xff]
  %v2942 = vld [vmem:[#allocation2 + $0x19] sm:$0x3f]
  %v2943 = vpack.c.bf16 %v2941, %v2940
  %v2944 = vpack.c.bf16 %v2942, %v2942
  %s2945 = scalar_lea.vmem %s4, 256
  %v2946 = vld [vmem:[%s2945] sm:$0xf]
  %v2947 = vld [vmem:[%s2945 + $0x4] sm:$0xf]
  %v2948 = vld [vmem:[%s2945 + $0x8] sm:$0xf]
  %v2949 = vld [vmem:[%s2945 + $0xc] sm:$0xf]
  %v2954 = vunpack.c.l.b16 %v2946
  %v2955 = vunpack.c.l.b16 %v2947
  %v2956 = vunpack.c.l.b16 %v2948
  %v2957 = vunpack.c.l.b16 %v2949
  %v2958 = vpack.c.b16 %v2955, %v2954
  %v2959 = vpack.c.b16 %v2957, %v2956
  %v2963 = vsel %vm30, %v2943, 0
  %v2966 = vsel %vm30, %v2944, 0
  %2968 = vmatprep.subr.bf16.mxu0 0
  %2969 = vmatpush1.bf16.msra.mxu0 0
  %2970 = vmatprep.subr.bf16.mxu0 0
  %2971 = vmatpush1.bf16.msra.mxu0 0
  %2972 = vmatprep.subr.bf16.mxu0 0
  %2973 = vmatpush1.bf16.msra.mxu0 0
  %2974 = vmatprep.subr.bf16.mxu0 0
  %2975 = vmatpush1.bf16.msra.mxu0 0
  %2976 = vmatprep.subr.bf16.mxu0 0
  %2977 = vmatpush1.bf16.msra.mxu0 0
  %2978 = vmatprep.subr.bf16.mxu0 0
  %2979 = vmatpush1.bf16.msra.mxu0 0
  %2980 = vmatprep.subr.bf16.mxu0 0
  %2981 = vmatpush1.bf16.msra.mxu0 %v2959
  %2982 = vmatprep.subr.bf16.mxu0 0
  %2983 = vmatpush1.bf16.msra.mxu0 %v2958
  %2984 = vmatprep.subr.bf16.mxu0 0
  %2985 = vmatpush2.bf16.msra.mxu0 0
  %2986 = vmatprep.subr.bf16.mxu0 0
  %2987 = vmatpush2.bf16.msra.mxu0 0
  %2988 = vmatprep.subr.bf16.mxu0 0
  %2989 = vmatpush2.bf16.msra.mxu0 0
  %2990 = vmatprep.subr.bf16.mxu0 0
  %2991 = vmatpush2.bf16.msra.mxu0 0
  %2992 = vmatprep.subr.bf16.mxu0 0
  %2993 = vmatpush2.bf16.msra.mxu0 0
  %2994 = vmatprep.subr.bf16.mxu0 0
  %2995 = vmatpush2.bf16.msra.mxu0 0
  %2996 = vmatprep.subr.bf16.mxu0 0
  %2997 = vmatpush2.bf16.msra.mxu0 0
  %2998 = vmatprep.subr.bf16.mxu0 0
  %2999 = vmatpush2.bf16.msra.mxu0 0
  %3000 = vmatprep.mubr.bf16.mxu0 0
  %3001 = vmatmul.mubr.bf16.gmra.mxu0 %v2963
  %v3002 = vpop.f32.mrf.mxu0
  %v3003 = vadd.f32 0.0, %v3002
  %v3004 = vpop.f32.mrf.mxu0
  %v3005 = vpop.f32.mrf.mxu0
  %v3006 = vadd.f32 0.0, %v3005
  %v3007 = vpop.f32.mrf.mxu0
  %3008 = vmatprep.mubr.bf16.mxu0 0
  %3009 = vmatmul.mubr.bf16.gmra.mxu0 %v2966
  %v3010 = vpop.f32.mrf.mxu0
  %v3011 = vadd.f32 0.0, %v3010
  %v3012 = vpop.f32.mrf.mxu0
  %v3013 = vpop.f32.mrf.mxu0
  %v3014 = vpop.f32.mrf.mxu0
  %3015 = vdwg.mxu0
  %v3016 = vadd.f32 %v2937, %v3003
  %v3017 = vadd.f32 %v2938, %v3006
  %v3018 = vadd.f32 %v2939, %v3011
  %v3019 = vld [vmem:[#allocation2 + $0xa] sm:$0xff]
  %v3020 = vld [vmem:[#allocation2 + $0x12] sm:$0xff]
  %v3021 = vld [vmem:[#allocation2 + $0x1a] sm:$0x3f]
  %v3022 = vpack.c.bf16 %v3020, %v3019
  %v3023 = vpack.c.bf16 %v3021, %v3021
  %s3024 = scalar_lea.vmem %s4, 272
  %v3025 = vld [vmem:[%s3024] sm:$0xf]
  %v3026 = vld [vmem:[%s3024 + $0x4] sm:$0xf]
  %v3027 = vld [vmem:[%s3024 + $0x8] sm:$0xf]
  %v3028 = vld [vmem:[%s3024 + $0xc] sm:$0xf]
  %v3033 = vunpack.c.l.b16 %v3025
  %v3034 = vunpack.c.l.b16 %v3026
  %v3035 = vunpack.c.l.b16 %v3027
  %v3036 = vunpack.c.l.b16 %v3028
  %v3037 = vpack.c.b16 %v3034, %v3033
  %v3038 = vpack.c.b16 %v3036, %v3035
  %v3042 = vsel %vm30, %v3022, 0
  %v3045 = vsel %vm30, %v3023, 0
  %3047 = vmatprep.subr.bf16.mxu0 0
  %3048 = vmatpush1.bf16.msra.mxu0 0
  %3049 = vmatprep.subr.bf16.mxu0 0
  %3050 = vmatpush1.bf16.msra.mxu0 0
  %3051 = vmatprep.subr.bf16.mxu0 0
  %3052 = vmatpush1.bf16.msra.mxu0 0
  %3053 = vmatprep.subr.bf16.mxu0 0
  %3054 = vmatpush1.bf16.msra.mxu0 0
  %3055 = vmatprep.subr.bf16.mxu0 0
  %3056 = vmatpush1.bf16.msra.mxu0 0
  %3057 = vmatprep.subr.bf16.mxu0 0
  %3058 = vmatpush1.bf16.msra.mxu0 0
  %3059 = vmatprep.subr.bf16.mxu0 0
  %3060 = vmatpush1.bf16.msra.mxu0 %v3038
  %3061 = vmatprep.subr.bf16.mxu0 0
  %3062 = vmatpush1.bf16.msra.mxu0 %v3037
  %3063 = vmatprep.subr.bf16.mxu0 0
  %3064 = vmatpush2.bf16.msra.mxu0 0
  %3065 = vmatprep.subr.bf16.mxu0 0
  %3066 = vmatpush2.bf16.msra.mxu0 0
  %3067 = vmatprep.subr.bf16.mxu0 0
  %3068 = vmatpush2.bf16.msra.mxu0 0
  %3069 = vmatprep.subr.bf16.mxu0 0
  %3070 = vmatpush2.bf16.msra.mxu0 0
  %3071 = vmatprep.subr.bf16.mxu0 0
  %3072 = vmatpush2.bf16.msra.mxu0 0
  %3073 = vmatprep.subr.bf16.mxu0 0
  %3074 = vmatpush2.bf16.msra.mxu0 0
  %3075 = vmatprep.subr.bf16.mxu0 0
  %3076 = vmatpush2.bf16.msra.mxu0 0
  %3077 = vmatprep.subr.bf16.mxu0 0
  %3078 = vmatpush2.bf16.msra.mxu0 0
  %3079 = vmatprep.mubr.bf16.mxu0 0
  %3080 = vmatmul.mubr.bf16.gmra.mxu0 %v3042
  %v3081 = vpop.f32.mrf.mxu0
  %v3082 = vadd.f32 0.0, %v3081
  %v3083 = vpop.f32.mrf.mxu0
  %v3084 = vpop.f32.mrf.mxu0
  %v3085 = vadd.f32 0.0, %v3084
  %v3086 = vpop.f32.mrf.mxu0
  %3087 = vmatprep.mubr.bf16.mxu0 0
  %3088 = vmatmul.mubr.bf16.gmra.mxu0 %v3045
  %v3089 = vpop.f32.mrf.mxu0
  %v3090 = vadd.f32 0.0, %v3089
  %v3091 = vpop.f32.mrf.mxu0
  %v3092 = vpop.f32.mrf.mxu0
  %v3093 = vpop.f32.mrf.mxu0
  %3094 = vdwg.mxu0
  %v3095 = vadd.f32 %v3016, %v3082
  %v3096 = vadd.f32 %v3017, %v3085
  %v3097 = vadd.f32 %v3018, %v3090
  %s3098 = scalar_lea.vmem %s5, 1
  %v3099 = vld [vmem:[%s3098] sm:$0x1]
  %s3100 = scalar_lea.vmem %s6, 1
  %v3101 = vld [vmem:[%s3100] sm:$0x1]
  %v3102 = vmul.f32 %v3095, %v756
  %v3103 = vmul.f32 %v3096, %v761
  %v3104 = vmul.f32 %v3097, %v766
  %v3105 = vsel %vm30, %v3102, 0.0
  %v3106 = vsel %vm30, %v3103, 0.0
  %v3107 = vadd.f32 %v3105, %v3106
  %v3108 = vsel %vm774, %v3104, 0.0
  %v3109 = vadd.f32 %v3107, %v3108
  %v3110 = vrot.slane %v3109, 4
  %v3111 = vadd.f32 %v3109, %v3110
  %v3112 = vrot.slane %v3111, 2
  %v3113 = vadd.f32 %v3111, %v3112
  %v3114 = vrot.slane %v3113, 1
  %v3115 = vadd.f32 %v3113, %v3114
  %v3116 = vmul.f32 %v3115, 0.125
  %v3117 = vsub.f32 %v3095, %v3116
  %v3118 = vsub.f32 %v3096, %v3116
  %v3119 = vsub.f32 %v3097, %v3116
  %v3120 = vmul.f32 %v3117, %v3117
  %v3121 = vmul.f32 %v3118, %v3118
  %v3122 = vmul.f32 %v3119, %v3119
  %v3123 = vmul.f32 %v3120, %v756
  %v3124 = vmul.f32 %v3121, %v761
  %v3125 = vmul.f32 %v3122, %v766
  %v3126 = vsel %vm30, %v3123, 0.0
  %v3127 = vsel %vm30, %v3124, 0.0
  %v3128 = vadd.f32 %v3126, %v3127
  %v3129 = vsel %vm774, %v3125, 0.0
  %v3130 = vadd.f32 %v3128, %v3129
  %v3131 = vrot.slane %v3130, 4
  %v3132 = vadd.f32 %v3130, %v3131
  %v3133 = vrot.slane %v3132, 2
  %v3134 = vadd.f32 %v3132, %v3133
  %v3135 = vrot.slane %v3134, 1
  %v3136 = vadd.f32 %v3134, %v3135
  %v3137 = vmul.f32 %v3136, 0.125
  %v3138 = vadd.f32 %v3137, 1e-05
  %v3139 = vrsqrt.pop %v3138
  %v3140 = vmul.f32 %v3099, %v3139
  %v3142 = vlaneseq
  %v3143 = vshrl.u32 %v3142, 7
  %v3144 = vsub.s32 0, %v3143
  %v3145 = vrot.slane %v3140, %v3144
  %v3147 = vmul.f32 %v3117, %v3145
  %v3148 = vmul.f32 %v3118, %v3145
  %v3149 = vmul.f32 %v3119, %v3145
  %v3151 = vlaneseq
  %v3152 = vshrl.u32 %v3151, 7
  %v3153 = vsub.s32 0, %v3152
  %v3154 = vrot.slane %v3101, %v3153
  %v3156 = vadd.f32 %v3147, %v3154
  %v3157 = vadd.f32 %v3148, %v3154
  %v3158 = vadd.f32 %v3149, %v3154
  %v3159 = vmul.f32 %v3156, %v756
  %v3160 = vmul.f32 %v3157, %v761
  %v3161 = vmul.f32 %v3158, %v766
  %v3162 = vld [vmem:[%s8 + $0x5] sm:$0xff]
  %v3163 = vld [vmem:[%s8 + $0xd] sm:$0xff]
  %v3164 = vld [vmem:[%s8 + $0x15] sm:$0x3f]
  %v3165 = vadd.f32 %v3162, %v3159
  %v3166 = vadd.f32 %v3163, %v3160
  %v3167 = vadd.f32 %v3164, %v3161
  %3168 = vst.msk [vmem:[%s8 + $0x5] sm:$0xff] %vm30, %v3165
  %3169 = vst.msk [vmem:[%s8 + $0xd] sm:$0xff] %vm30, %v3166
  %3170 = vst.msk [vmem:[%s8 + $0x15] sm:$0x3f] %vm774, %v3167
  // Predicated region
  $region34: #{cycle_generator_forward.10} parent=0 // pred_check
    _
  $region35: #{cycle_generator_forward.10} parent=0 // pred_check_branch
    %3172 = sbr.rel (0) target = $region37
  $region36: #{cycle_generator_forward.10} parent=0 // pred_region
    _
  $region37: #{cycle_generator_forward.10} parent=0 // pred_fallthru
    _
  // Predicated region
  $region38: #{cycle_generator_forward.10} parent=0 // pred_check
    _
  $region39: #{cycle_generator_forward.10} parent=0 // pred_check_branch
    %3174 = sbr.rel (0) target = $region41
  $region40: #{cycle_generator_forward.10} parent=0 // pred_region
    _
  $region41: #{cycle_generator_forward.10} parent=0 // pred_fallthru
    _

// kernel: cycle_generator_forward.13
$region0: #{cycle_generator_forward.13}
  #allocation0 [shape = 'u32[]', space=smem, size = 0x4, offset = 0x4, fixed_abs, tag = 'smem constant byte address 0x4 - core index']
  #allocation1 [shape = 'u32[144,128]{1,0:T(1,128)}', space=vmem, size = 0x12000, scoped, tag = 'internal scratch']
  %s0 = inlined_call_operand.vmem [shape: bf16[4,128,32], index: 0, kind: input, shape index: {}]
  %s1 = inlined_call_operand.vmem [shape: bf16[4,32,3], index: 1, kind: input, shape index: {}]
  %s2 = inlined_call_operand.vmem [shape: f32[4,128,3], index: 2, kind: output, shape index: {}]
  %s3 = sld [smem:[#allocation0]]
  $region18: #{cycle_generator_forward.13} parent=0
    _
  %s5 = ssub.s32 1, %s3
  %s6 = scalar_select 0, %s5, %s3
  // Predicated region
  $region2: #{cycle_generator_forward.13} parent=0 // pred_check
    _
  $region3: #{cycle_generator_forward.13} parent=0 // pred_check_branch
    %8 = sbr.rel (0) target = $region5
  $region4: #{cycle_generator_forward.13} parent=0 // pred_region
    _
  $region5: #{cycle_generator_forward.13} parent=0 // pred_fallthru
    _
  // Predicated region
  $region6: #{cycle_generator_forward.13} parent=0 // pred_check
    _
  $region7: #{cycle_generator_forward.13} parent=0 // pred_check_branch
    %10 = sbr.rel (0) target = $region9
  $region8: #{cycle_generator_forward.13} parent=0 // pred_region
    _
  $region9: #{cycle_generator_forward.13} parent=0 // pred_fallthru
    _
  %v12 = vld [vmem:[%s0] sm:$0xf]
  %v13 = vld [vmem:[%s0 + $0x4] sm:$0xf]
  %v14 = vld [vmem:[%s0 + $0x8] sm:$0xf]
  %v15 = vld [vmem:[%s0 + $0xc] sm:$0xf]
  %v16 = vld [vmem:[%s0 + $0x10] sm:$0xf]
  %v17 = vld [vmem:[%s0 + $0x14] sm:$0xf]
  %v18 = vld [vmem:[%s0 + $0x18] sm:$0xf]
  %v19 = vld [vmem:[%s0 + $0x1c] sm:$0xf]
  %v20 = vld [vmem:[%s0 + $0x20] sm:$0xf]
  %v21 = vld [vmem:[%s0 + $0x24] sm:$0xf]
  %v22 = vld [vmem:[%s0 + $0x28] sm:$0xf]
  %v23 = vld [vmem:[%s0 + $0x2c] sm:$0xf]
  %v24 = vld [vmem:[%s0 + $0x30] sm:$0xf]
  %v25 = vld [vmem:[%s0 + $0x34] sm:$0xf]
  %v26 = vld [vmem:[%s0 + $0x38] sm:$0xf]
  %v27 = vld [vmem:[%s0 + $0x3c] sm:$0xf]
  %v28 = vld [vmem:[%s1] sm:$0xf]
  %v29 = vld [vmem:[%s1 + $0x4] sm:$0xf]
  %v30 = vld [vmem:[%s1 + $0x8] sm:$0xf]
  %v31 = vld [vmem:[%s1 + $0xc] sm:$0xf]
  %v48 = vunpack.c.l.b16 %v12
  %v49 = vunpack.c.l.b16 %v13
  %v50 = vunpack.c.l.b16 %v14
  %v51 = vunpack.c.l.b16 %v15
  %v52 = vunpack.c.l.b16 %v16
  %v53 = vunpack.c.l.b16 %v17
  %v54 = vunpack.c.l.b16 %v18
  %v55 = vunpack.c.l.b16 %v19
  %v56 = vunpack.c.l.b16 %v20
  %v57 = vunpack.c.l.b16 %v21
  %v58 = vunpack.c.l.b16 %v22
  %v59 = vunpack.c.l.b16 %v23
  %v60 = vunpack.c.l.b16 %v24
  %v61 = vunpack.c.l.b16 %v25
  %v62 = vunpack.c.l.b16 %v26
  %v63 = vunpack.c.l.b16 %v27
  %v64 = vpack.c.b16 %v49, %v48
  %v65 = vpack.c.b16 %v51, %v50
  %v66 = vpack.c.b16 %v53, %v52
  %v67 = vpack.c.b16 %v55, %v54
  %v68 = vpack.c.b16 %v57, %v56
  %v69 = vpack.c.b16 %v59, %v58
  %v70 = vpack.c.b16 %v61, %v60
  %v71 = vpack.c.b16 %v63, %v62
  %v76 = vunpack.c.l.b16 %v28
  %v77 = vunpack.c.l.b16 %v29
  %v78 = vunpack.c.l.b16 %v30
  %v79 = vunpack.c.l.b16 %v31
  %v80 = vpack.c.b16 %v77, %v76
  %v81 = vpack.c.b16 %v79, %v78
  %vm84 = vcmask 261120
  %v86 = vsel %vm84, %v64, 0
  %v89 = vsel %vm84, %v65, 0
  %v92 = vsel %vm84, %v66, 0
  %v95 = vsel %vm84, %v67, 0
  %v98 = vsel %vm84, %v68, 0
  %v101 = vsel %vm84, %v69, 0
  %v104 = vsel %vm84, %v70, 0
  %v107 = vsel %vm84, %v71, 0
  %109 = vmatprep.subr.bf16.mxu0 0
  %110 = vmatpush1.bf16.msra.mxu0 0
  %111 = vmatprep.subr.bf16.mxu0 0
  %112 = vmatpush1.bf16.msra.mxu0 0
  %113 = vmatprep.subr.bf16.mxu0 0
  %114 = vmatpush1.bf16.msra.mxu0 0
  %115 = vmatprep.subr.bf16.mxu0 0
  %116 = vmatpush1.bf16.msra.mxu0 0
  %117 = vmatprep.subr.bf16.mxu0 0
  %118 = vmatpush1.bf16.msra.mxu0 0
  %119 = vmatprep.subr.bf16.mxu0 0
  %120 = vmatpush1.bf16.msra.mxu0 0
  %121 = vmatprep.subr.bf16.mxu0 0
  %122 = vmatpush1.bf16.msra.mxu0 %v81
  %123 = vmatprep.subr.bf16.mxu0 0
  %124 = vmatpush1.bf16.msra.mxu0 %v80
  %125 = vmatprep.subr.bf16.mxu0 0
  %126 = vmatpush2.bf16.msra.mxu0 0
  %127 = vmatprep.subr.bf16.mxu0 0
  %128 = vmatpush2.bf16.msra.mxu0 0
  %129 = vmatprep.subr.bf16.mxu0 0
  %130 = vmatpush2.bf16.msra.mxu0 0
  %131 = vmatprep.subr.bf16.mxu0 0
  %132 = vmatpush2.bf16.msra.mxu0 0
  %133 = vmatprep.subr.bf16.mxu0 0
  %134 = vmatpush2.bf16.msra.mxu0 0
  %135 = vmatprep.subr.bf16.mxu0 0
  %136 = vmatpush2.bf16.msra.mxu0 0
  %137 = vmatprep.subr.bf16.mxu0 0
  %138 = vmatpush2.bf16.msra.mxu0 0
  %139 = vmatprep.subr.bf16.mxu0 0
  %140 = vmatpush2.bf16.msra.mxu0 0
  %141 = vmatprep.mubr.bf16.mxu0 0
  %142 = vmatmul.mubr.bf16.gmra.mxu0 %v86
  %v143 = vpop.f32.mrf.mxu0
  %v144 = vadd.f32 0.0, %v143
  %v145 = vpop.f32.mrf.mxu0
  %v146 = vpop.f32.mrf.mxu0
  %v147 = vadd.f32 0.0, %v146
  %v148 = vpop.f32.mrf.mxu0
  %149 = vmatprep.mubr.bf16.mxu0 0
  %150 = vmatmul.mubr.bf16.gmra.mxu0 %v89
  %v151 = vpop.f32.mrf.mxu0
  %v152 = vadd.f32 0.0, %v151
  %v153 = vpop.f32.mrf.mxu0
  %v154 = vpop.f32.mrf.mxu0
  %v155 = vadd.f32 0.0, %v154
  %v156 = vpop.f32.mrf.mxu0
  %157 = vmatprep.mubr.bf16.mxu0 0
  %158 = vmatmul.mubr.bf16.gmra.mxu0 %v92
  %v159 = vpop.f32.mrf.mxu0
  %v160 = vadd.f32 0.0, %v159
  %v161 = vpop.f32.mrf.mxu0
  %v162 = vpop.f32.mrf.mxu0
  %v163 = vadd.f32 0.0, %v162
  %v164 = vpop.f32.mrf.mxu0
  %165 = vmatprep.mubr.bf16.mxu0 0
  %166 = vmatmul.mubr.bf16.gmra.mxu0 %v95
  %v167 = vpop.f32.mrf.mxu0
  %v168 = vadd.f32 0.0, %v167
  %v169 = vpop.f32.mrf.mxu0
  %v170 = vpop.f32.mrf.mxu0
  %v171 = vadd.f32 0.0, %v170
  %v172 = vpop.f32.mrf.mxu0
  %173 = vmatprep.mubr.bf16.mxu0 0
  %174 = vmatmul.mubr.bf16.gmra.mxu0 %v98
  %v175 = vpop.f32.mrf.mxu0
  %v176 = vadd.f32 0.0, %v175
  %v177 = vpop.f32.mrf.mxu0
  %v178 = vpop.f32.mrf.mxu0
  %v179 = vadd.f32 0.0, %v178
  %v180 = vpop.f32.mrf.mxu0
  %181 = vmatprep.mubr.bf16.mxu0 0
  %182 = vmatmul.mubr.bf16.gmra.mxu0 %v101
  %v183 = vpop.f32.mrf.mxu0
  %v184 = vadd.f32 0.0, %v183
  %v185 = vpop.f32.mrf.mxu0
  %v186 = vpop.f32.mrf.mxu0
  %v187 = vadd.f32 0.0, %v186
  %v188 = vpop.f32.mrf.mxu0
  %189 = vmatprep.mubr.bf16.mxu0 0
  %190 = vmatmul.mubr.bf16.gmra.mxu0 %v104
  %v191 = vpop.f32.mrf.mxu0
  %v192 = vadd.f32 0.0, %v191
  %v193 = vpop.f32.mrf.mxu0
  %v194 = vpop.f32.mrf.mxu0
  %v195 = vadd.f32 0.0, %v194
  %v196 = vpop.f32.mrf.mxu0
  %197 = vmatprep.mubr.bf16.mxu0 0
  %198 = vmatmul.mubr.bf16.gmra.mxu0 %v107
  %v199 = vpop.f32.mrf.mxu0
  %v200 = vadd.f32 0.0, %v199
  %v201 = vpop.f32.mrf.mxu0
  %v202 = vpop.f32.mrf.mxu0
  %v203 = vadd.f32 0.0, %v202
  %v204 = vpop.f32.mrf.mxu0
  %205 = vdwg.mxu0
  %s206 = scalar_lea.vmem %s0, 64
  %v207 = vld [vmem:[%s206] sm:$0xf]
  %v208 = vld [vmem:[%s206 + $0x4] sm:$0xf]
  %v209 = vld [vmem:[%s206 + $0x8] sm:$0xf]
  %v210 = vld [vmem:[%s206 + $0xc] sm:$0xf]
  %v211 = vld [vmem:[%s206 + $0x10] sm:$0xf]
  %v212 = vld [vmem:[%s206 + $0x14] sm:$0xf]
  %v213 = vld [vmem:[%s206 + $0x18] sm:$0xf]
  %v214 = vld [vmem:[%s206 + $0x1c] sm:$0xf]
  %v215 = vld [vmem:[%s206 + $0x20] sm:$0xf]
  %v216 = vld [vmem:[%s206 + $0x24] sm:$0xf]
  %v217 = vld [vmem:[%s206 + $0x28] sm:$0xf]
  %v218 = vld [vmem:[%s206 + $0x2c] sm:$0xf]
  %v219 = vld [vmem:[%s206 + $0x30] sm:$0xf]
  %v220 = vld [vmem:[%s206 + $0x34] sm:$0xf]
  %v221 = vld [vmem:[%s206 + $0x38] sm:$0xf]
  %v222 = vld [vmem:[%s206 + $0x3c] sm:$0xf]
  %s223 = scalar_lea.vmem %s1, 16
  %v224 = vld [vmem:[%s223] sm:$0xf]
  %v225 = vld [vmem:[%s223 + $0x4] sm:$0xf]
  %v226 = vld [vmem:[%s223 + $0x8] sm:$0xf]
  %v227 = vld [vmem:[%s223 + $0xc] sm:$0xf]
  %v244 = vunpack.c.l.b16 %v207
  %v245 = vunpack.c.l.b16 %v208
  %v246 = vunpack.c.l.b16 %v209
  %v247 = vunpack.c.l.b16 %v210
  %v248 = vunpack.c.l.b16 %v211
  %v249 = vunpack.c.l.b16 %v212
  %v250 = vunpack.c.l.b16 %v213
  %v251 = vunpack.c.l.b16 %v214
  %v252 = vunpack.c.l.b16 %v215
  %v253 = vunpack.c.l.b16 %v216
  %v254 = vunpack.c.l.b16 %v217
  %v255 = vunpack.c.l.b16 %v218
  %v256 = vunpack.c.l.b16 %v219
  %v257 = vunpack.c.l.b16 %v220
  %v258 = vunpack.c.l.b16 %v221
  %v259 = vunpack.c.l.b16 %v222
  %v260 = vpack.c.b16 %v245, %v244
  %v261 = vpack.c.b16 %v247, %v246
  %v262 = vpack.c.b16 %v249, %v248
  %v263 = vpack.c.b16 %v251, %v250
  %v264 = vpack.c.b16 %v253, %v252
  %v265 = vpack.c.b16 %v255, %v254
  %v266 = vpack.c.b16 %v257, %v256
  %v267 = vpack.c.b16 %v259, %v258
  %v272 = vunpack.c.l.b16 %v224
  %v273 = vunpack.c.l.b16 %v225
  %v274 = vunpack.c.l.b16 %v226
  %v275 = vunpack.c.l.b16 %v227
  %v276 = vpack.c.b16 %v273, %v272
  %v277 = vpack.c.b16 %v275, %v274
  %v281 = vsel %vm84, %v260, 0
  %v284 = vsel %vm84, %v261, 0
  %v287 = vsel %vm84, %v262, 0
  %v290 = vsel %vm84, %v263, 0
  %v293 = vsel %vm84, %v264, 0
  %v296 = vsel %vm84, %v265, 0
  %v299 = vsel %vm84, %v266, 0
  %v302 = vsel %vm84, %v267, 0
  %304 = vmatprep.subr.bf16.mxu0 0
  %305 = vmatpush1.bf16.msra.mxu0 0
  %306 = vmatprep.subr.bf16.mxu0 0
  %307 = vmatpush1.bf16.msra.mxu0 0
  %308 = vmatprep.subr.bf16.mxu0 0
  %309 = vmatpush1.bf16.msra.mxu0 0
  %310 = vmatprep.subr.bf16.mxu0 0
  %311 = vmatpush1.bf16.msra.mxu0 0
  %312 = vmatprep.subr.bf16.mxu0 0
  %313 = vmatpush1.bf16.msra.mxu0 0
  %314 = vmatprep.subr.bf16.mxu0 0
  %315 = vmatpush1.bf16.msra.mxu0 0
  %316 = vmatprep.subr.bf16.mxu0 0
  %317 = vmatpush1.bf16.msra.mxu0 %v277
  %318 = vmatprep.subr.bf16.mxu0 0
  %319 = vmatpush1.bf16.msra.mxu0 %v276
  %320 = vmatprep.subr.bf16.mxu0 0
  %321 = vmatpush2.bf16.msra.mxu0 0
  %322 = vmatprep.subr.bf16.mxu0 0
  %323 = vmatpush2.bf16.msra.mxu0 0
  %324 = vmatprep.subr.bf16.mxu0 0
  %325 = vmatpush2.bf16.msra.mxu0 0
  %326 = vmatprep.subr.bf16.mxu0 0
  %327 = vmatpush2.bf16.msra.mxu0 0
  %328 = vmatprep.subr.bf16.mxu0 0
  %329 = vmatpush2.bf16.msra.mxu0 0
  %330 = vmatprep.subr.bf16.mxu0 0
  %331 = vmatpush2.bf16.msra.mxu0 0
  %332 = vmatprep.subr.bf16.mxu0 0
  %333 = vmatpush2.bf16.msra.mxu0 0
  %334 = vmatprep.subr.bf16.mxu0 0
  %335 = vmatpush2.bf16.msra.mxu0 0
  %336 = vmatprep.mubr.bf16.mxu0 0
  %337 = vmatmul.mubr.bf16.gmra.mxu0 %v281
  %v338 = vpop.f32.mrf.mxu0
  %v339 = vadd.f32 0.0, %v338
  %v340 = vpop.f32.mrf.mxu0
  %v341 = vpop.f32.mrf.mxu0
  %v342 = vadd.f32 0.0, %v341
  %v343 = vpop.f32.mrf.mxu0
  %344 = vmatprep.mubr.bf16.mxu0 0
  %345 = vmatmul.mubr.bf16.gmra.mxu0 %v284
  %v346 = vpop.f32.mrf.mxu0
  %v347 = vadd.f32 0.0, %v346
  %v348 = vpop.f32.mrf.mxu0
  %v349 = vpop.f32.mrf.mxu0
  %v350 = vadd.f32 0.0, %v349
  %v351 = vpop.f32.mrf.mxu0
  %352 = vmatprep.mubr.bf16.mxu0 0
  %353 = vmatmul.mubr.bf16.gmra.mxu0 %v287
  %v354 = vpop.f32.mrf.mxu0
  %v355 = vadd.f32 0.0, %v354
  %v356 = vpop.f32.mrf.mxu0
  %v357 = vpop.f32.mrf.mxu0
  %v358 = vadd.f32 0.0, %v357
  %v359 = vpop.f32.mrf.mxu0
  %360 = vmatprep.mubr.bf16.mxu0 0
  %361 = vmatmul.mubr.bf16.gmra.mxu0 %v290
  %v362 = vpop.f32.mrf.mxu0
  %v363 = vadd.f32 0.0, %v362
  %v364 = vpop.f32.mrf.mxu0
  %v365 = vpop.f32.mrf.mxu0
  %v366 = vadd.f32 0.0, %v365
  %v367 = vpop.f32.mrf.mxu0
  %368 = vmatprep.mubr.bf16.mxu0 0
  %369 = vmatmul.mubr.bf16.gmra.mxu0 %v293
  %v370 = vpop.f32.mrf.mxu0
  %v371 = vadd.f32 0.0, %v370
  %v372 = vpop.f32.mrf.mxu0
  %v373 = vpop.f32.mrf.mxu0
  %v374 = vadd.f32 0.0, %v373
  %v375 = vpop.f32.mrf.mxu0
  %376 = vmatprep.mubr.bf16.mxu0 0
  %377 = vmatmul.mubr.bf16.gmra.mxu0 %v296
  %v378 = vpop.f32.mrf.mxu0
  %v379 = vadd.f32 0.0, %v378
  %v380 = vpop.f32.mrf.mxu0
  %v381 = vpop.f32.mrf.mxu0
  %v382 = vadd.f32 0.0, %v381
  %v383 = vpop.f32.mrf.mxu0
  %384 = vmatprep.mubr.bf16.mxu0 0
  %385 = vmatmul.mubr.bf16.gmra.mxu0 %v299
  %v386 = vpop.f32.mrf.mxu0
  %v387 = vadd.f32 0.0, %v386
  %v388 = vpop.f32.mrf.mxu0
  %v389 = vpop.f32.mrf.mxu0
  %v390 = vadd.f32 0.0, %v389
  %v391 = vpop.f32.mrf.mxu0
  %392 = vmatprep.mubr.bf16.mxu0 0
  %393 = vmatmul.mubr.bf16.gmra.mxu0 %v302
  %v394 = vpop.f32.mrf.mxu0
  %v395 = vadd.f32 0.0, %v394
  %v396 = vpop.f32.mrf.mxu0
  %v397 = vpop.f32.mrf.mxu0
  %v398 = vadd.f32 0.0, %v397
  %v399 = vpop.f32.mrf.mxu0
  %400 = vdwg.mxu0
  %s401 = scalar_lea.vmem %s0, 128
  %v402 = vld [vmem:[%s401] sm:$0xf]
  %v403 = vld [vmem:[%s401 + $0x4] sm:$0xf]
  %v404 = vld [vmem:[%s401 + $0x8] sm:$0xf]
  %v405 = vld [vmem:[%s401 + $0xc] sm:$0xf]
  %v406 = vld [vmem:[%s401 + $0x10] sm:$0xf]
  %v407 = vld [vmem:[%s401 + $0x14] sm:$0xf]
  %v408 = vld [vmem:[%s401 + $0x18] sm:$0xf]
  %v409 = vld [vmem:[%s401 + $0x1c] sm:$0xf]
  %v410 = vld [vmem:[%s401 + $0x20] sm:$0xf]
  %v411 = vld [vmem:[%s401 + $0x24] sm:$0xf]
  %v412 = vld [vmem:[%s401 + $0x28] sm:$0xf]
  %v413 = vld [vmem:[%s401 + $0x2c] sm:$0xf]
  %v414 = vld [vmem:[%s401 + $0x30] sm:$0xf]
  %v415 = vld [vmem:[%s401 + $0x34] sm:$0xf]
  %v416 = vld [vmem:[%s401 + $0x38] sm:$0xf]
  %v417 = vld [vmem:[%s401 + $0x3c] sm:$0xf]
  %s418 = scalar_lea.vmem %s1, 32
  %v419 = vld [vmem:[%s418] sm:$0xf]
  %v420 = vld [vmem:[%s418 + $0x4] sm:$0xf]
  %v421 = vld [vmem:[%s418 + $0x8] sm:$0xf]
  %v422 = vld [vmem:[%s418 + $0xc] sm:$0xf]
  %v439 = vunpack.c.l.b16 %v402
  %v440 = vunpack.c.l.b16 %v403
  %v441 = vunpack.c.l.b16 %v404
  %v442 = vunpack.c.l.b16 %v405
  %v443 = vunpack.c.l.b16 %v406
  %v444 = vunpack.c.l.b16 %v407
  %v445 = vunpack.c.l.b16 %v408
  %v446 = vunpack.c.l.b16 %v409
  %v447 = vunpack.c.l.b16 %v410
  %v448 = vunpack.c.l.b16 %v411
  %v449 = vunpack.c.l.b16 %v412
  %v450 = vunpack.c.l.b16 %v413
  %v451 = vunpack.c.l.b16 %v414
  %v452 = vunpack.c.l.b16 %v415
  %v453 = vunpack.c.l.b16 %v416
  %v454 = vunpack.c.l.b16 %v417
  %v455 = vpack.c.b16 %v440, %v439
  %v456 = vpack.c.b16 %v442, %v441
  %v457 = vpack.c.b16 %v444, %v443
  %v458 = vpack.c.b16 %v446, %v445
  %v459 = vpack.c.b16 %v448, %v447
  %v460 = vpack.c.b16 %v450, %v449
  %v461 = vpack.c.b16 %v452, %v451
  %v462 = vpack.c.b16 %v454, %v453
  %v467 = vunpack.c.l.b16 %v419
  %v468 = vunpack.c.l.b16 %v420
  %v469 = vunpack.c.l.b16 %v421
  %v470 = vunpack.c.l.b16 %v422
  %v471 = vpack.c.b16 %v468, %v467
  %v472 = vpack.c.b16 %v470, %v469
  %v476 = vsel %vm84, %v455, 0
  %v479 = vsel %vm84, %v456, 0
  %v482 = vsel %vm84, %v457, 0
  %v485 = vsel %vm84, %v458, 0
  %v488 = vsel %vm84, %v459, 0
  %v491 = vsel %vm84, %v460, 0
  %v494 = vsel %vm84, %v461, 0
  %v497 = vsel %vm84, %v462, 0
  %499 = vmatprep.subr.bf16.mxu0 0
  %500 = vmatpush1.bf16.msra.mxu0 0
  %501 = vmatprep.subr.bf16.mxu0 0
  %502 = vmatpush1.bf16.msra.mxu0 0
  %503 = vmatprep.subr.bf16.mxu0 0
  %504 = vmatpush1.bf16.msra.mxu0 0
  %505 = vmatprep.subr.bf16.mxu0 0
  %506 = vmatpush1.bf16.msra.mxu0 0
  %507 = vmatprep.subr.bf16.mxu0 0
  %508 = vmatpush1.bf16.msra.mxu0 0
  %509 = vmatprep.subr.bf16.mxu0 0
  %510 = vmatpush1.bf16.msra.mxu0 0
  %511 = vmatprep.subr.bf16.mxu0 0
  %512 = vmatpush1.bf16.msra.mxu0 %v472
  %513 = vmatprep.subr.bf16.mxu0 0
  %514 = vmatpush1.bf16.msra.mxu0 %v471
  %515 = vmatprep.subr.bf16.mxu0 0
  %516 = vmatpush2.bf16.msra.mxu0 0
  %517 = vmatprep.subr.bf16.mxu0 0
  %518 = vmatpush2.bf16.msra.mxu0 0
  %519 = vmatprep.subr.bf16.mxu0 0
  %520 = vmatpush2.bf16.msra.mxu0 0
  %521 = vmatprep.subr.bf16.mxu0 0
  %522 = vmatpush2.bf16.msra.mxu0 0
  %523 = vmatprep.subr.bf16.mxu0 0
  %524 = vmatpush2.bf16.msra.mxu0 0
  %525 = vmatprep.subr.bf16.mxu0 0
  %526 = vmatpush2.bf16.msra.mxu0 0
  %527 = vmatprep.subr.bf16.mxu0 0
  %528 = vmatpush2.bf16.msra.mxu0 0
  %529 = vmatprep.subr.bf16.mxu0 0
  %530 = vmatpush2.bf16.msra.mxu0 0
  %531 = vmatprep.mubr.bf16.mxu0 0
  %532 = vmatmul.mubr.bf16.gmra.mxu0 %v476
  %v533 = vpop.f32.mrf.mxu0
  %v534 = vadd.f32 0.0, %v533
  %v535 = vpop.f32.mrf.mxu0
  %v536 = vpop.f32.mrf.mxu0
  %v537 = vadd.f32 0.0, %v536
  %v538 = vpop.f32.mrf.mxu0
  %539 = vmatprep.mubr.bf16.mxu0 0
  %540 = vmatmul.mubr.bf16.gmra.mxu0 %v479
  %v541 = vpop.f32.mrf.mxu0
  %v542 = vadd.f32 0.0, %v541
  %v543 = vpop.f32.mrf.mxu0
  %v544 = vpop.f32.mrf.mxu0
  %v545 = vadd.f32 0.0, %v544
  %v546 = vpop.f32.mrf.mxu0
  %547 = vmatprep.mubr.bf16.mxu0 0
  %548 = vmatmul.mubr.bf16.gmra.mxu0 %v482
  %v549 = vpop.f32.mrf.mxu0
  %v550 = vadd.f32 0.0, %v549
  %v551 = vpop.f32.mrf.mxu0
  %v552 = vpop.f32.mrf.mxu0
  %v553 = vadd.f32 0.0, %v552
  %v554 = vpop.f32.mrf.mxu0
  %555 = vmatprep.mubr.bf16.mxu0 0
  %556 = vmatmul.mubr.bf16.gmra.mxu0 %v485
  %v557 = vpop.f32.mrf.mxu0
  %v558 = vadd.f32 0.0, %v557
  %v559 = vpop.f32.mrf.mxu0
  %v560 = vpop.f32.mrf.mxu0
  %v561 = vadd.f32 0.0, %v560
  %v562 = vpop.f32.mrf.mxu0
  %563 = vmatprep.mubr.bf16.mxu0 0
  %564 = vmatmul.mubr.bf16.gmra.mxu0 %v488
  %v565 = vpop.f32.mrf.mxu0
  %v566 = vadd.f32 0.0, %v565
  %v567 = vpop.f32.mrf.mxu0
  %v568 = vpop.f32.mrf.mxu0
  %v569 = vadd.f32 0.0, %v568
  %v570 = vpop.f32.mrf.mxu0
  %571 = vmatprep.mubr.bf16.mxu0 0
  %572 = vmatmul.mubr.bf16.gmra.mxu0 %v491
  %v573 = vpop.f32.mrf.mxu0
  %v574 = vadd.f32 0.0, %v573
  %v575 = vpop.f32.mrf.mxu0
  %v576 = vpop.f32.mrf.mxu0
  %v577 = vadd.f32 0.0, %v576
  %v578 = vpop.f32.mrf.mxu0
  %579 = vmatprep.mubr.bf16.mxu0 0
  %580 = vmatmul.mubr.bf16.gmra.mxu0 %v494
  %v581 = vpop.f32.mrf.mxu0
  %v582 = vadd.f32 0.0, %v581
  %v583 = vpop.f32.mrf.mxu0
  %v584 = vpop.f32.mrf.mxu0
  %v585 = vadd.f32 0.0, %v584
  %v586 = vpop.f32.mrf.mxu0
  %587 = vmatprep.mubr.bf16.mxu0 0
  %588 = vmatmul.mubr.bf16.gmra.mxu0 %v497
  %v589 = vpop.f32.mrf.mxu0
  %v590 = vadd.f32 0.0, %v589
  %v591 = vpop.f32.mrf.mxu0
  %v592 = vpop.f32.mrf.mxu0
  %v593 = vadd.f32 0.0, %v592
  %v594 = vpop.f32.mrf.mxu0
  %595 = vdwg.mxu0
  %s596 = scalar_lea.vmem %s0, 192
  %v597 = vld [vmem:[%s596] sm:$0xf]
  %v598 = vld [vmem:[%s596 + $0x4] sm:$0xf]
  %v599 = vld [vmem:[%s596 + $0x8] sm:$0xf]
  %v600 = vld [vmem:[%s596 + $0xc] sm:$0xf]
  %v601 = vld [vmem:[%s596 + $0x10] sm:$0xf]
  %v602 = vld [vmem:[%s596 + $0x14] sm:$0xf]
  %v603 = vld [vmem:[%s596 + $0x18] sm:$0xf]
  %v604 = vld [vmem:[%s596 + $0x1c] sm:$0xf]
  %v605 = vld [vmem:[%s596 + $0x20] sm:$0xf]
  %v606 = vld [vmem:[%s596 + $0x24] sm:$0xf]
  %v607 = vld [vmem:[%s596 + $0x28] sm:$0xf]
  %v608 = vld [vmem:[%s596 + $0x2c] sm:$0xf]
  %v609 = vld [vmem:[%s596 + $0x30] sm:$0xf]
  %v610 = vld [vmem:[%s596 + $0x34] sm:$0xf]
  %v611 = vld [vmem:[%s596 + $0x38] sm:$0xf]
  %v612 = vld [vmem:[%s596 + $0x3c] sm:$0xf]
  %s613 = scalar_lea.vmem %s1, 48
  %v614 = vld [vmem:[%s613] sm:$0xf]
  %v615 = vld [vmem:[%s613 + $0x4] sm:$0xf]
  %v616 = vld [vmem:[%s613 + $0x8] sm:$0xf]
  %v617 = vld [vmem:[%s613 + $0xc] sm:$0xf]
  %v634 = vunpack.c.l.b16 %v597
  %v635 = vunpack.c.l.b16 %v598
  %v636 = vunpack.c.l.b16 %v599
  %v637 = vunpack.c.l.b16 %v600
  %v638 = vunpack.c.l.b16 %v601
  %v639 = vunpack.c.l.b16 %v602
  %v640 = vunpack.c.l.b16 %v603
  %v641 = vunpack.c.l.b16 %v604
  %v642 = vunpack.c.l.b16 %v605
  %v643 = vunpack.c.l.b16 %v606
  %v644 = vunpack.c.l.b16 %v607
  %v645 = vunpack.c.l.b16 %v608
  %v646 = vunpack.c.l.b16 %v609
  %v647 = vunpack.c.l.b16 %v610
  %v648 = vunpack.c.l.b16 %v611
  %v649 = vunpack.c.l.b16 %v612
  %v650 = vpack.c.b16 %v635, %v634
  %v651 = vpack.c.b16 %v637, %v636
  %v652 = vpack.c.b16 %v639, %v638
  %v653 = vpack.c.b16 %v641, %v640
  %v654 = vpack.c.b16 %v643, %v642
  %v655 = vpack.c.b16 %v645, %v644
  %v656 = vpack.c.b16 %v647, %v646
  %v657 = vpack.c.b16 %v649, %v648
  %v662 = vunpack.c.l.b16 %v614
  %v663 = vunpack.c.l.b16 %v615
  %v664 = vunpack.c.l.b16 %v616
  %v665 = vunpack.c.l.b16 %v617
  %v666 = vpack.c.b16 %v663, %v662
  %v667 = vpack.c.b16 %v665, %v664
  %v671 = vsel %vm84, %v650, 0
  %v674 = vsel %vm84, %v651, 0
  %v677 = vsel %vm84, %v652, 0
  %v680 = vsel %vm84, %v653, 0
  %v683 = vsel %vm84, %v654, 0
  %v686 = vsel %vm84, %v655, 0
  %v689 = vsel %vm84, %v656, 0
  %v692 = vsel %vm84, %v657, 0
  %694 = vmatprep.subr.bf16.mxu0 0
  %695 = vmatpush1.bf16.msra.mxu0 0
  %696 = vmatprep.subr.bf16.mxu0 0
  %697 = vmatpush1.bf16.msra.mxu0 0
  %698 = vmatprep.subr.bf16.mxu0 0
  %699 = vmatpush1.bf16.msra.mxu0 0
  %700 = vmatprep.subr.bf16.mxu0 0
  %701 = vmatpush1.bf16.msra.mxu0 0
  %702 = vmatprep.subr.bf16.mxu0 0
  %703 = vmatpush1.bf16.msra.mxu0 0
  %704 = vmatprep.subr.bf16.mxu0 0
  %705 = vmatpush1.bf16.msra.mxu0 0
  %706 = vmatprep.subr.bf16.mxu0 0
  %707 = vmatpush1.bf16.msra.mxu0 %v667
  %708 = vmatprep.subr.bf16.mxu0 0
  %709 = vmatpush1.bf16.msra.mxu0 %v666
  %710 = vmatprep.subr.bf16.mxu0 0
  %711 = vmatpush2.bf16.msra.mxu0 0
  %712 = vmatprep.subr.bf16.mxu0 0
  %713 = vmatpush2.bf16.msra.mxu0 0
  %714 = vmatprep.subr.bf16.mxu0 0
  %715 = vmatpush2.bf16.msra.mxu0 0
  %716 = vmatprep.subr.bf16.mxu0 0
  %717 = vmatpush2.bf16.msra.mxu0 0
  %718 = vmatprep.subr.bf16.mxu0 0
  %719 = vmatpush2.bf16.msra.mxu0 0
  %720 = vmatprep.subr.bf16.mxu0 0
  %721 = vmatpush2.bf16.msra.mxu0 0
  %722 = vmatprep.subr.bf16.mxu0 0
  %723 = vmatpush2.bf16.msra.mxu0 0
  %724 = vmatprep.subr.bf16.mxu0 0
  %725 = vmatpush2.bf16.msra.mxu0 0
  %726 = vmatprep.mubr.bf16.mxu0 0
  %727 = vmatmul.mubr.bf16.gmra.mxu0 %v671
  %v728 = vpop.f32.mrf.mxu0
  %v729 = vadd.f32 0.0, %v728
  %v730 = vpop.f32.mrf.mxu0
  %v731 = vpop.f32.mrf.mxu0
  %v732 = vadd.f32 0.0, %v731
  %v733 = vpop.f32.mrf.mxu0
  %734 = vmatprep.mubr.bf16.mxu0 0
  %735 = vmatmul.mubr.bf16.gmra.mxu0 %v674
  %v736 = vpop.f32.mrf.mxu0
  %v737 = vadd.f32 0.0, %v736
  %v738 = vpop.f32.mrf.mxu0
  %v739 = vpop.f32.mrf.mxu0
  %v740 = vadd.f32 0.0, %v739
  %v741 = vpop.f32.mrf.mxu0
  %742 = vmatprep.mubr.bf16.mxu0 0
  %743 = vmatmul.mubr.bf16.gmra.mxu0 %v677
  %v744 = vpop.f32.mrf.mxu0
  %v745 = vadd.f32 0.0, %v744
  %v746 = vpop.f32.mrf.mxu0
  %v747 = vpop.f32.mrf.mxu0
  %v748 = vadd.f32 0.0, %v747
  %v749 = vpop.f32.mrf.mxu0
  %750 = vmatprep.mubr.bf16.mxu0 0
  %751 = vmatmul.mubr.bf16.gmra.mxu0 %v680
  %v752 = vpop.f32.mrf.mxu0
  %v753 = vadd.f32 0.0, %v752
  %v754 = vpop.f32.mrf.mxu0
  %v755 = vpop.f32.mrf.mxu0
  %v756 = vadd.f32 0.0, %v755
  %v757 = vpop.f32.mrf.mxu0
  %758 = vmatprep.mubr.bf16.mxu0 0
  %759 = vmatmul.mubr.bf16.gmra.mxu0 %v683
  %v760 = vpop.f32.mrf.mxu0
  %v761 = vadd.f32 0.0, %v760
  %v762 = vpop.f32.mrf.mxu0
  %v763 = vpop.f32.mrf.mxu0
  %v764 = vadd.f32 0.0, %v763
  %v765 = vpop.f32.mrf.mxu0
  %766 = vmatprep.mubr.bf16.mxu0 0
  %767 = vmatmul.mubr.bf16.gmra.mxu0 %v686
  %v768 = vpop.f32.mrf.mxu0
  %v769 = vadd.f32 0.0, %v768
  %v770 = vpop.f32.mrf.mxu0
  %v771 = vpop.f32.mrf.mxu0
  %v772 = vadd.f32 0.0, %v771
  %v773 = vpop.f32.mrf.mxu0
  %774 = vmatprep.mubr.bf16.mxu0 0
  %775 = vmatmul.mubr.bf16.gmra.mxu0 %v689
  %v776 = vpop.f32.mrf.mxu0
  %v777 = vadd.f32 0.0, %v776
  %v778 = vpop.f32.mrf.mxu0
  %v779 = vpop.f32.mrf.mxu0
  %v780 = vadd.f32 0.0, %v779
  %v781 = vpop.f32.mrf.mxu0
  %782 = vmatprep.mubr.bf16.mxu0 0
  %783 = vmatmul.mubr.bf16.gmra.mxu0 %v692
  %v784 = vpop.f32.mrf.mxu0
  %v785 = vadd.f32 0.0, %v784
  %v786 = vpop.f32.mrf.mxu0
  %v787 = vpop.f32.mrf.mxu0
  %v788 = vadd.f32 0.0, %v787
  %v789 = vpop.f32.mrf.mxu0
  %790 = vdwg.mxu0
  %v791 = vtanh.pop %v144
  %v792 = vtanh.pop %v147
  %v793 = vtanh.pop %v152
  %v794 = vtanh.pop %v155
  %v795 = vtanh.pop %v160
  %v796 = vtanh.pop %v163
  %v797 = vtanh.pop %v168
  %v798 = vtanh.pop %v171
  %v799 = vtanh.pop %v176
  %v800 = vtanh.pop %v179
  %v801 = vtanh.pop %v184
  %v802 = vtanh.pop %v187
  %v803 = vtanh.pop %v192
  %v804 = vtanh.pop %v195
  %v805 = vtanh.pop %v200
  %v806 = vtanh.pop %v203
  %vm807 = vcmask 23552
  %808 = vst.msk [vmem:[%s2] sm:$0xff] %vm807, %v791
  %809 = vst.msk [vmem:[%s2 + $0x8] sm:$0xff] %vm807, %v792
  %810 = vst.msk [vmem:[%s2 + $0x10] sm:$0xff] %vm807, %v793
  %811 = vst.msk [vmem:[%s2 + $0x18] sm:$0xff] %vm807, %v794
  %812 = vst.msk [vmem:[%s2 + $0x20] sm:$0xff] %vm807, %v795
  %813 = vst.msk [vmem:[%s2 + $0x28] sm:$0xff] %vm807, %v796
  %814 = vst.msk [vmem:[%s2 + $0x30] sm:$0xff] %vm807, %v797
  %815 = vst.msk [vmem:[%s2 + $0x38] sm:$0xff] %vm807, %v798
  %816 = vst.msk [vmem:[%s2 + $0x40] sm:$0xff] %vm807, %v799
  %817 = vst.msk [vmem:[%s2 + $0x48] sm:$0xff] %vm807, %v800
  %818 = vst.msk [vmem:[%s2 + $0x50] sm:$0xff] %vm807, %v801
  %819 = vst.msk [vmem:[%s2 + $0x58] sm:$0xff] %vm807, %v802
  %820 = vst.msk [vmem:[%s2 + $0x60] sm:$0xff] %vm807, %v803
  %821 = vst.msk [vmem:[%s2 + $0x68] sm:$0xff] %vm807, %v804
  %822 = vst.msk [vmem:[%s2 + $0x70] sm:$0xff] %vm807, %v805
  %823 = vst.msk [vmem:[%s2 + $0x78] sm:$0xff] %vm807, %v806
  %v824 = vtanh.pop %v339
  %v825 = vtanh.pop %v342
  %v826 = vtanh.pop %v347
  %v827 = vtanh.pop %v350
  %v828 = vtanh.pop %v355
  %v829 = vtanh.pop %v358
  %v830 = vtanh.pop %v363
  %v831 = vtanh.pop %v366
  %v832 = vtanh.pop %v371
  %v833 = vtanh.pop %v374
  %v834 = vtanh.pop %v379
  %v835 = vtanh.pop %v382
  %v836 = vtanh.pop %v387
  %v837 = vtanh.pop %v390
  %v838 = vtanh.pop %v395
  %v839 = vtanh.pop %v398
  %s840 = scalar_lea.vmem %s2, 128
  %841 = vst.msk [vmem:[%s840] sm:$0xff] %vm807, %v824
  %842 = vst.msk [vmem:[%s840 + $0x8] sm:$0xff] %vm807, %v825
  %843 = vst.msk [vmem:[%s840 + $0x10] sm:$0xff] %vm807, %v826
  %844 = vst.msk [vmem:[%s840 + $0x18] sm:$0xff] %vm807, %v827
  %845 = vst.msk [vmem:[%s840 + $0x20] sm:$0xff] %vm807, %v828
  %846 = vst.msk [vmem:[%s840 + $0x28] sm:$0xff] %vm807, %v829
  %847 = vst.msk [vmem:[%s840 + $0x30] sm:$0xff] %vm807, %v830
  %848 = vst.msk [vmem:[%s840 + $0x38] sm:$0xff] %vm807, %v831
  %849 = vst.msk [vmem:[%s840 + $0x40] sm:$0xff] %vm807, %v832
  %850 = vst.msk [vmem:[%s840 + $0x48] sm:$0xff] %vm807, %v833
  %851 = vst.msk [vmem:[%s840 + $0x50] sm:$0xff] %vm807, %v834
  %852 = vst.msk [vmem:[%s840 + $0x58] sm:$0xff] %vm807, %v835
  %853 = vst.msk [vmem:[%s840 + $0x60] sm:$0xff] %vm807, %v836
  %854 = vst.msk [vmem:[%s840 + $0x68] sm:$0xff] %vm807, %v837
  %855 = vst.msk [vmem:[%s840 + $0x70] sm:$0xff] %vm807, %v838
  %856 = vst.msk [vmem:[%s840 + $0x78] sm:$0xff] %vm807, %v839
  %v857 = vtanh.pop %v534
  %v858 = vtanh.pop %v537
  %v859 = vtanh.pop %v542
  %v860 = vtanh.pop %v545
  %v861 = vtanh.pop %v550
  %v862 = vtanh.pop %v553
  %v863 = vtanh.pop %v558
  %v864 = vtanh.pop %v561
  %v865 = vtanh.pop %v566
  %v866 = vtanh.pop %v569
  %v867 = vtanh.pop %v574
  %v868 = vtanh.pop %v577
  %v869 = vtanh.pop %v582
  %v870 = vtanh.pop %v585
  %v871 = vtanh.pop %v590
  %v872 = vtanh.pop %v593
  %s873 = scalar_lea.vmem %s2, 256
  %874 = vst.msk [vmem:[%s873] sm:$0xff] %vm807, %v857
  %875 = vst.msk [vmem:[%s873 + $0x8] sm:$0xff] %vm807, %v858
  %876 = vst.msk [vmem:[%s873 + $0x10] sm:$0xff] %vm807, %v859
  %877 = vst.msk [vmem:[%s873 + $0x18] sm:$0xff] %vm807, %v860
  %878 = vst.msk [vmem:[%s873 + $0x20] sm:$0xff] %vm807, %v861
  %879 = vst.msk [vmem:[%s873 + $0x28] sm:$0xff] %vm807, %v862
  %880 = vst.msk [vmem:[%s873 + $0x30] sm:$0xff] %vm807, %v863
  %881 = vst.msk [vmem:[%s873 + $0x38] sm:$0xff] %vm807, %v864
  %882 = vst.msk [vmem:[%s873 + $0x40] sm:$0xff] %vm807, %v865
  %883 = vst.msk [vmem:[%s873 + $0x48] sm:$0xff] %vm807, %v866
  %884 = vst.msk [vmem:[%s873 + $0x50] sm:$0xff] %vm807, %v867
  %885 = vst.msk [vmem:[%s873 + $0x58] sm:$0xff] %vm807, %v868
  %886 = vst.msk [vmem:[%s873 + $0x60] sm:$0xff] %vm807, %v869
  %887 = vst.msk [vmem:[%s873 + $0x68] sm:$0xff] %vm807, %v870
  %888 = vst.msk [vmem:[%s873 + $0x70] sm:$0xff] %vm807, %v871
  %889 = vst.msk [vmem:[%s873 + $0x78] sm:$0xff] %vm807, %v872
  %v890 = vtanh.pop %v729
  %v891 = vtanh.pop %v732
  %v892 = vtanh.pop %v737
  %v893 = vtanh.pop %v740
  %v894 = vtanh.pop %v745
  %v895 = vtanh.pop %v748
  %v896 = vtanh.pop %v753
  %v897 = vtanh.pop %v756
  %v898 = vtanh.pop %v761
  %v899 = vtanh.pop %v764
  %v900 = vtanh.pop %v769
  %v901 = vtanh.pop %v772
  %v902 = vtanh.pop %v777
  %v903 = vtanh.pop %v780
  %v904 = vtanh.pop %v785
  %v905 = vtanh.pop %v788
  %s906 = scalar_lea.vmem %s2, 384
  %907 = vst.msk [vmem:[%s906] sm:$0xff] %vm807, %v890
  %908 = vst.msk [vmem:[%s906 + $0x8] sm:$0xff] %vm807, %v891
  %909 = vst.msk [vmem:[%s906 + $0x10] sm:$0xff] %vm807, %v892
  %910 = vst.msk [vmem:[%s906 + $0x18] sm:$0xff] %vm807, %v893
  %911 = vst.msk [vmem:[%s906 + $0x20] sm:$0xff] %vm807, %v894
  %912 = vst.msk [vmem:[%s906 + $0x28] sm:$0xff] %vm807, %v895
  %913 = vst.msk [vmem:[%s906 + $0x30] sm:$0xff] %vm807, %v896
  %914 = vst.msk [vmem:[%s906 + $0x38] sm:$0xff] %vm807, %v897
  %915 = vst.msk [vmem:[%s906 + $0x40] sm:$0xff] %vm807, %v898
  %916 = vst.msk [vmem:[%s906 + $0x48] sm:$0xff] %vm807, %v899
  %917 = vst.msk [vmem:[%s906 + $0x50] sm:$0xff] %vm807, %v900
  %918 = vst.msk [vmem:[%s906 + $0x58] sm:$0xff] %vm807, %v901
  %919 = vst.msk [vmem:[%s906 + $0x60] sm:$0xff] %vm807, %v902
  %920 = vst.msk [vmem:[%s906 + $0x68] sm:$0xff] %vm807, %v903
  %921 = vst.msk [vmem:[%s906 + $0x70] sm:$0xff] %vm807, %v904
  %922 = vst.msk [vmem:[%s906 + $0x78] sm:$0xff] %vm807, %v905
  // Predicated region
  $region10: #{cycle_generator_forward.13} parent=0 // pred_check
    _
  $region11: #{cycle_generator_forward.13} parent=0 // pred_check_branch
    %924 = sbr.rel (0) target = $region13
  $region12: #{cycle_generator_forward.13} parent=0 // pred_region
    _
  $region13: #{cycle_generator_forward.13} parent=0 // pred_fallthru
    _
  // Predicated region
  $region14: #{cycle_generator_forward.13} parent=0 // pred_check
    _
  $region15: #{cycle_generator_forward.13} parent=0 // pred_check_branch
    %926 = sbr.rel (0) target = $region17
  $region16: #{cycle_generator_forward.13} parent=0 // pred_region
    _
  $region17: #{cycle_generator_forward.13} parent=0 // pred_fallthru
    _

</llo_original>
